<compile_context>
chip_gen: v7x
topology: tpu7x:2x2x1
jax: 0.10.0
libtpu: 0.0.40
codegen_flags: <defaults>
</compile_context>

<pallas_src>
import jax
import jax.numpy as jnp
from jax import lax
from jax.experimental import pallas as pl
from jax.experimental.pallas import tpu as pltpu


LANE = 128
ROWS = 8          # sublane group used for the in-kernel partial-stat reduction


def _round_up(x, m):
    return (x + m - 1) // m * m


def _row_tiling(M, cap=512):
    """Return (padded row count, row tile).

    tm is a multiple of 8, and whenever M >= 16 the grid has >= 2 steps so the
    'parallel' grid axis can shard across v7x's two TensorCores.  Rows are
    padded with zeros up to a multiple of tm (zero patch rows contribute
    nothing to the BN statistics and are sliced away afterwards).
    """
    if M >= 2 * cap:
        tm = cap
    elif M >= 16:
        tm = _round_up(_round_up(M, 16) // 2, 8)
    else:
        tm = _round_up(M, 8)
    return _round_up(M, tm), tm


# ---------------------------------------------------------------------------
# Pallas kernels
# ---------------------------------------------------------------------------
def _matmul_bn_stats_kernel(p_ref, w_ref, o_ref, sum_ref, sq_ref):
    """out = patches @ w (bf16 operands, f32 accumulate, bf16 activation out).

    Also emits per-tile partial BatchNorm statistics reduced down to ROWS
    sublanes, computed from the f32 accumulator BEFORE the bf16 cast.
    """
    y = jnp.dot(p_ref[...], w_ref[...], preferred_element_type=jnp.float32)
    o_ref[...] = y.astype(o_ref.dtype)
    tm, c = y.shape
    yg = y.reshape(tm // ROWS, ROWS, c)
    sum_ref[0] = jnp.sum(yg, axis=0)
    sq_ref[0] = jnp.sum(yg * yg, axis=0)


def matmul_bn_stats(patches, w):
    M, K = patches.shape
    _, C = w.shape                       # C is a multiple of 128
    Mp, tm = _row_tiling(M)
    if Mp != M:
        patches = jnp.pad(patches, ((0, Mp - M), (0, 0)))
    nt = Mp // tm
    out, psum, psq = pl.pallas_call(
        _matmul_bn_stats_kernel,
        out_shape=(jax.ShapeDtypeStruct((Mp, C), jnp.bfloat16),
                   jax.ShapeDtypeStruct((nt, ROWS, C), jnp.float32),
                   jax.ShapeDtypeStruct((nt, ROWS, C), jnp.float32)),
        grid=(nt,),
        in_specs=[pl.BlockSpec((tm, K), lambda i: (i, 0)),
                  pl.BlockSpec((K, C), lambda i: (0, 0))],   # weight resident
        out_specs=(pl.BlockSpec((tm, C), lambda i: (i, 0)),
                   pl.BlockSpec((1, ROWS, C), lambda i: (i, 0, 0)),
                   pl.BlockSpec((1, ROWS, C), lambda i: (i, 0, 0))),
        compiler_params=pltpu.CompilerParams(
            dimension_semantics=("parallel",)),
    )(patches, w)
    return out, psum, psq, tm


def _matmul_bias_tanh_kernel(p_ref, w_ref, b_ref, o_ref):
    y = jnp.dot(p_ref[...], w_ref[...], preferred_element_type=jnp.float32)
    o_ref[...] = jnp.tanh(y + b_ref[...])


def matmul_bias_tanh(patches, w, b):
    M, K = patches.shape
    _, C = w.shape
    Mp, tm = _row_tiling(M)
    if Mp != M:
        patches = jnp.pad(patches, ((0, Mp - M), (0, 0)))
    return pl.pallas_call(
        _matmul_bias_tanh_kernel,
        out_shape=jax.ShapeDtypeStruct((Mp, C), jnp.float32),
        grid=(Mp // tm,),
        in_specs=[pl.BlockSpec((tm, K), lambda i: (i, 0)),
                  pl.BlockSpec((K, C), lambda i: (0, 0)),
                  pl.BlockSpec((1, C), lambda i: (0, 0))],
        out_specs=pl.BlockSpec((tm, C), lambda i: (i, 0)),
        compiler_params=pltpu.CompilerParams(
            dimension_semantics=("parallel",)),
    )(patches, w, b)


def _bn_relu_kernel(x_ref, s_ref, t_ref, o_ref):
    y = x_ref[...].astype(jnp.float32) * s_ref[...] + t_ref[...]
    o_ref[...] = jnp.maximum(y, 0.0).astype(o_ref.dtype)


def bn_relu(x, scale, shift, tm):
    """Per-channel affine + ReLU; bf16 in/out, f32 scale/shift."""
    M, C = x.shape
    return pl.pallas_call(
        _bn_relu_kernel,
        out_shape=jax.ShapeDtypeStruct((M, C), jnp.bfloat16),
        grid=(M // tm,),
        in_specs=[pl.BlockSpec((tm, C), lambda i: (i, 0)),
                  pl.BlockSpec((1, C), lambda i: (0, 0)),
                  pl.BlockSpec((1, C), lambda i: (0, 0))],
        out_specs=pl.BlockSpec((tm, C), lambda i: (i, 0)),
        compiler_params=pltpu.CompilerParams(
            dimension_semantics=("parallel",)),
    )(x, scale, shift)


# ---------------------------------------------------------------------------
# Plain-JAX glue: patch extraction (layout plumbing only)
# ---------------------------------------------------------------------------
def _im2col_k(x, k, pad):
    """Generic kxk stride-1 patches with symmetric zero pad (layer 0)."""
    N, H, W, C = x.shape
    xp = jnp.pad(x, ((0, 0), (pad, pad), (pad, pad), (0, 0)))
    Ho, Wo = H + 2 * pad - k + 1, W + 2 * pad - k + 1
    cols = [xp[:, u:u + Ho, v:v + Wo, :] for u in range(k) for v in range(k)]
    patches = jnp.concatenate(cols, axis=-1)
    return patches.reshape(N * Ho * Wo, k * k * C), (N, Ho, Wo)


def _im2col3(x):
    """3x3 stride-1 patches with pad=1: (N,H,W,C) -> (N*H*W, 9*C)."""
    N, H, W, C = x.shape
    xp = jnp.pad(x, ((0, 0), (1, 1), (1, 1), (0, 0)))
    cols = [xp[:, u:u + H, v:v + W, :] for u in range(3) for v in range(3)]
    patches = jnp.concatenate(cols, axis=-1)
    return patches.reshape(N * H * W, 9 * C)


# ---------------------------------------------------------------------------
# Parameters
# ---------------------------------------------------------------------------
def init_params(key, noise, channels_img, features_g):
    chans = [noise, features_g * 16, features_g * 8, features_g * 4,
             features_g * 2, channels_img]
    params = []
    for li in range(5):
        key, kw_, kb_ = jax.random.split(key, 3)
        cin, cout = chans[li], chans[li + 1]
        w = jax.random.normal(kw_, (cin, cout, 4, 4), jnp.float32) * 0.05
        b = jax.random.normal(kb_, (cout,), jnp.float32) * 0.01
        if li < 4:
            gamma = jnp.ones((cout,), jnp.float32)    # PyTorch BatchNorm2d default
            beta = jnp.zeros((cout,), jnp.float32)
        else:
            gamma = beta = None
        params.append(dict(w=w, b=b, gamma=gamma, beta=beta))
    return params


def _subpixel_weight(w):
    """ConvTranspose2d(k=4, s=2, p=1) weight (Cin, Cout, 4, 4) -> sub-pixel
    direct-conv matrix (9*Cin, 4*Cout).

    Output pixel (2m+a, 2n+b) only ever touches the 3x3 input window centred
    at (m, n); per phase (a, b) the active (window-tap -> kernel-index)
    mapping is {0:3, 1:1} for a/b = 0 and {1:2, 2:0} for a/b = 1 (derived from
    kh = p - 2i + 1).  Output-channel blocks are ordered by phase 2a+b so the
    depth-to-space interleave is a plain reshape/transpose.
    """
    cin, cout, _, _ = w.shape
    tap = {(0, 0): 3, (0, 1): 1, (1, 1): 2, (1, 2): 0}   # (phase, window pos) -> k idx
    wm = jnp.zeros((3, 3, cin, 4, cout), w.dtype)
    for a in range(2):
        for b in range(2):
            for u in range(3):
                for v in range(3):
                    if (a, u) in tap and (b, v) in tap:
                        wm = wm.at[u, v, :, 2 * a + b, :].set(
                            w[:, :, tap[(a, u)], tap[(b, v)]])
    return wm.reshape(9 * cin, 4 * cout)


def prepare_params(params):
    """Fold PyTorch-layout weights into lane-dense bf16 matmul operands.

    Layer 0: flipped-kernel direct-conv matrix (16*Cin, pad(Cout, 128)).
    Layers 1-4: sub-pixel matrix (9*Cin, pad(4*Cout, 128)).
    Conv bias of BN layers is dropped (train-mode batch statistics cancel a
    constant per-channel shift exactly); gamma/beta/bias stay f32.
    """
    prepped = []
    for li, p in enumerate(params):
        wt = p["w"]
        cin, cout, k, _ = wt.shape
        if li == 0:
            wmat = jnp.transpose(wt[:, :, ::-1, ::-1],
                                 (2, 3, 0, 1)).reshape(k * k * cin, cout)
            cc = cout
        else:
            wmat = _subpixel_weight(wt)                       # (9*Cin, 4*Cout)
            cc = 4 * cout
        cpad = _round_up(cc, LANE)
        wmat = jnp.pad(wmat, ((0, 0), (0, cpad - cc))).astype(jnp.bfloat16)
        entry = dict(w=wmat, cout=cout, cc=cc, cpad=cpad, subpixel=(li != 0))
        if p["gamma"] is not None:
            entry["gamma"] = p["gamma"]                       # (cout,) f32
            entry["beta"] = p["beta"]
            entry["bias"] = None
        else:
            entry["gamma"] = entry["beta"] = None
            bias = jnp.tile(p["b"], 4 if li != 0 else 1)      # one copy per phase
            entry["bias"] = jnp.pad(bias, (0, cpad - cc)).reshape(1, cpad)
        prepped.append(entry)
    return prepped


# ---------------------------------------------------------------------------
# Generator forward
# ---------------------------------------------------------------------------
def generator_forward(x_nchw, prepped):
    x = jnp.transpose(x_nchw, (0, 2, 3, 1)).astype(jnp.bfloat16)   # NCHW -> NHWC
    for p in prepped:
        N, H, W, _ = x.shape
        if p["subpixel"]:
            patches = _im2col3(x)                     # (N*H*W, 9*Cin), bf16
            Ho, Wo = H, W                             # per-phase output grid
        else:
            patches, (N, Ho, Wo) = _im2col_k(x, 4, pad=3)          # layer 0
        patches = patches.astype(jnp.bfloat16)
        M = patches.shape[0]
        cout, cc = p["cout"], p["cc"]

        if p["gamma"] is not None:
            # ConvT (bias cancelled by BN) + fused f32 partial BN statistics.
            out, psum, psq, tm = matmul_bn_stats(patches, p["w"])
            nph = cc // cout                          # phases sharing a channel
            tot = jnp.sum(psum, axis=(0, 1))[:cc].reshape(nph, cout).sum(0)
            tot_sq = jnp.sum(psq, axis=(0, 1))[:cc].reshape(nph, cout).sum(0)
            cnt = float(M * nph)                      # true output-pixel count
            mean = tot / cnt
            var = jnp.maximum(tot_sq / cnt - mean * mean, 0.0)     # biased var
            scale_c = p["gamma"] * lax.rsqrt(var + 1e-5)
            shift_c = p["beta"] - mean * scale_c
            scale = jnp.pad(jnp.tile(scale_c, nph),
                            (0, p["cpad"] - cc)).reshape(1, -1)
            shift = jnp.pad(jnp.tile(shift_c, nph),
                            (0, p["cpad"] - cc)).reshape(1, -1)
            out = bn_relu(out, scale, shift, tm)      # (Mp, cpad) bf16
        else:
            # Final layer: bias + tanh fused into the matmul epilogue.
            out = matmul_bias_tanh(patches, p["w"], p["bias"])     # f32

        # Slice padded rows / lanes and de-interleave phases in cheap glue.
        out = out[:M, :cc]
        if p["subpixel"]:
            out = out.reshape(N, Ho, Wo, 2, 2, cout)
            x = jnp.transpose(out, (0, 1, 3, 2, 4, 5)).reshape(
                N, 2 * Ho, 2 * Wo, cout)
        else:
            x = out.reshape(N, Ho, Wo, cout)
    return jnp.transpose(x, (0, 3, 1, 2))             # NHWC -> NCHW, f32


if __name__ == "__main__":
    noise, channels_img, features_g = 64, 3, 8
    key = jax.random.PRNGKey(0)
    kp, kx = jax.random.split(key)
    params = init_params(kp, noise, channels_img, features_g)
    prepped = prepare_params(params)
    x = jax.random.normal(kx, (2, noise, 1, 1), jnp.float32)        # NCHW latent

    fwd = jax.jit(lambda inp: generator_forward(inp, prepped))
    out = jax.block_until_ready(fwd(x))

    assert out.shape == (2, channels_img, 64, 64), out.shape
    assert bool(jnp.all(jnp.isfinite(out)))
    assert bool(jnp.all(jnp.abs(out) <= 1.0 + 1e-6))                # Tanh range
    print("KERNEL_OK")
</pallas_src>

<mosaic_0001>
module attributes {stable_mosaic.version = 11 : i64} {
  func.func @_matmul_bn_stats_kernel(%arg0: i32, %arg1: memref<16x1024xbf16, #tpu.memory_space<vmem>>, %arg2: memref<1024x128xbf16, #tpu.memory_space<vmem>>, %arg3: memref<16x128xbf16, #tpu.memory_space<vmem>>, %arg4: memref<1x8x128xf32, #tpu.memory_space<vmem>>, %arg5: memref<1x8x128xf32, #tpu.memory_space<vmem>>) attributes {dimension_semantics = [#tpu.dimension_semantics<parallel>], iteration_bounds = array<i64: 2>, scalar_prefetch = 0 : i64, scratch_operands = 0 : i64, tpu.core_type = #tpu.core_type<tc>, window_params = [{transform_indices = @transform_0, window_bounds = array<i64: 16, 1024>}, {pipeline_mode = #tpu.pipeline_mode<synchronous>, transform_indices = @transform_1, window_bounds = array<i64: 1024, 128>}, {transform_indices = @transform_2, window_bounds = array<i64: 16, 128>}, {transform_indices = @transform_3, window_bounds = array<i64: 1, 8, 128>}, {transform_indices = @transform_4, window_bounds = array<i64: 1, 8, 128>}]} {
    %c0 = arith.constant 0 : index
    %c0_0 = arith.constant 0 : index
    %0 = vector.load %arg1[%c0, %c0_0] : memref<16x1024xbf16, #tpu.memory_space<vmem>>, vector<16x1024xbf16>
    %c0_1 = arith.constant 0 : index
    %c0_2 = arith.constant 0 : index
    %1 = vector.load %arg2[%c0_1, %c0_2] : memref<1024x128xbf16, #tpu.memory_space<vmem>>, vector<1024x128xbf16>
    %cst = arith.constant dense<0.000000e+00> : vector<16x128xf32>
    %2 = tpu.matmul %0, %1, %cst {dimension_numbers = #tpu.dot_dimension_numbers<[1], [0], [0], [1], [0, 0, 1, 1], [], []>} : vector<16x1024xbf16>, vector<1024x128xbf16>, vector<16x128xf32> -> vector<16x128xf32>
    %3 = arith.truncf %2 : vector<16x128xf32> to vector<16x128xbf16>
    %c0_3 = arith.constant 0 : index
    %c0_4 = arith.constant 0 : index
    %4 = vector.load %arg3[%c0_3, %c0_4] : memref<16x128xbf16, #tpu.memory_space<vmem>>, vector<16x128xbf16>
    tpu.vector_store %arg3[%c0_3, %c0_4], %3 {strides = array<i32>} : memref<16x128xbf16, #tpu.memory_space<vmem>>, vector<16x128xbf16>,
    %5 = vector.shape_cast %2 : vector<16x128xf32> to vector<2x8x128xf32>
    %cst_5 = arith.constant dense<0.000000e+00> : vector<8x128xf32>
    %6 = vector.multi_reduction <add>, %5, %cst_5 [0] : vector<2x8x128xf32> to vector<8x128xf32>
    %c0_6 = arith.constant 0 : index
    %c0_7 = arith.constant 0 : index
    %c0_8 = arith.constant 0 : index
    %7 = vector.load %arg4[%c0_6, %c0_7, %c0_8] : memref<1x8x128xf32, #tpu.memory_space<vmem>>, vector<1x8x128xf32>
    %8 = vector.shape_cast %7 : vector<1x8x128xf32> to vector<8x128xf32>
    %9 = vector.shape_cast %6 : vector<8x128xf32> to vector<1x8x128xf32>
    tpu.vector_store %arg4[%c0_6, %c0_7, %c0_8], %9 {strides = array<i32>} : memref<1x8x128xf32, #tpu.memory_space<vmem>>, vector<1x8x128xf32>,
    %10 = arith.mulf %5, %5 : vector<2x8x128xf32>
    %cst_9 = arith.constant dense<0.000000e+00> : vector<8x128xf32>
    %11 = vector.multi_reduction <add>, %10, %cst_9 [0] : vector<2x8x128xf32> to vector<8x128xf32>
    %c0_10 = arith.constant 0 : index
    %c0_11 = arith.constant 0 : index
    %c0_12 = arith.constant 0 : index
    %12 = vector.load %arg5[%c0_10, %c0_11, %c0_12] : memref<1x8x128xf32, #tpu.memory_space<vmem>>, vector<1x8x128xf32>
    %13 = vector.shape_cast %12 : vector<1x8x128xf32> to vector<8x128xf32>
    %14 = vector.shape_cast %11 : vector<8x128xf32> to vector<1x8x128xf32>
    tpu.vector_store %arg5[%c0_10, %c0_11, %c0_12], %14 {strides = array<i32>} : memref<1x8x128xf32, #tpu.memory_space<vmem>>, vector<1x8x128xf32>,
    return
  }
  func.func @transform_0(%arg0: i32) -> (i32, i32) {
    %c0_i32 = arith.constant 0 : i32
    %c0_i32_0 = arith.constant 0 : i32
    return %arg0, %c0_i32 : i32, i32
  }
  func.func @transform_1(%arg0: i32) -> (i32, i32) {
    %c0_i32 = arith.constant 0 : i32
    %c0_i32_0 = arith.constant 0 : i32
    %c0_i32_1 = arith.constant 0 : i32
    return %c0_i32, %c0_i32_0 : i32, i32
  }
  func.func @transform_2(%arg0: i32) -> (i32, i32) {
    %c0_i32 = arith.constant 0 : i32
    %c0_i32_0 = arith.constant 0 : i32
    return %arg0, %c0_i32 : i32, i32
  }
  func.func @transform_3(%arg0: i32) -> (i32, i32, i32) {
    %c0_i32 = arith.constant 0 : i32
    %c0_i32_0 = arith.constant 0 : i32
    %c0_i32_1 = arith.constant 0 : i32
    return %arg0, %c0_i32, %c0_i32_0 : i32, i32, i32
  }
  func.func @transform_4(%arg0: i32) -> (i32, i32, i32) {
    %c0_i32 = arith.constant 0 : i32
    %c0_i32_0 = arith.constant 0 : i32
    %c0_i32_1 = arith.constant 0 : i32
    return %arg0, %c0_i32, %c0_i32_0 : i32, i32, i32
  }
}

module attributes {stable_mosaic.version = 11 : i64} {
  func.func @_bn_relu_kernel(%arg0: i32, %arg1: memref<16x128xbf16, #tpu.memory_space<vmem>>, %arg2: memref<1x128xf32, #tpu.memory_space<vmem>>, %arg3: memref<1x128xf32, #tpu.memory_space<vmem>>, %arg4: memref<16x128xbf16, #tpu.memory_space<vmem>>) attributes {dimension_semantics = [#tpu.dimension_semantics<parallel>], iteration_bounds = array<i64: 2>, scalar_prefetch = 0 : i64, scratch_operands = 0 : i64, tpu.core_type = #tpu.core_type<tc>, window_params = [{transform_indices = @transform_0, window_bounds = array<i64: 16, 128>}, {pipeline_mode = #tpu.pipeline_mode<synchronous>, transform_indices = @transform_1, window_bounds = array<i64: 1, 128>}, {pipeline_mode = #tpu.pipeline_mode<synchronous>, transform_indices = @transform_2, window_bounds = array<i64: 1, 128>}, {transform_indices = @transform_3, window_bounds = array<i64: 16, 128>}]} {
    %c0 = arith.constant 0 : index
    %c0_0 = arith.constant 0 : index
    %0 = vector.load %arg1[%c0, %c0_0] : memref<16x128xbf16, #tpu.memory_space<vmem>>, vector<16x128xbf16>
    %1 = arith.extf %0 : vector<16x128xbf16> to vector<16x128xf32>
    %c0_1 = arith.constant 0 : index
    %c0_2 = arith.constant 0 : index
    %2 = vector.load %arg2[%c0_1, %c0_2] : memref<1x128xf32, #tpu.memory_space<vmem>>, vector<1x128xf32>
    %3 = vector.broadcast %2 : vector<1x128xf32> to vector<16x128xf32>
    %4 = arith.mulf %1, %3 : vector<16x128xf32>
    %c0_3 = arith.constant 0 : index
    %c0_4 = arith.constant 0 : index
    %5 = vector.load %arg3[%c0_3, %c0_4] : memref<1x128xf32, #tpu.memory_space<vmem>>, vector<1x128xf32>
    %6 = vector.broadcast %5 : vector<1x128xf32> to vector<16x128xf32>
    %7 = arith.addf %4, %6 : vector<16x128xf32>
    %cst = arith.constant 0.000000e+00 : f32
    %8 = vector.broadcast %cst : f32 to vector<16x128xf32>
    %9 = arith.maximumf %7, %8 : vector<16x128xf32>
    %10 = arith.truncf %9 : vector<16x128xf32> to vector<16x128xbf16>
    %c0_5 = arith.constant 0 : index
    %c0_6 = arith.constant 0 : index
    %11 = vector.load %arg4[%c0_5, %c0_6] : memref<16x128xbf16, #tpu.memory_space<vmem>>, vector<16x128xbf16>
    tpu.vector_store %arg4[%c0_5, %c0_6], %10 {strides = array<i32>} : memref<16x128xbf16, #tpu.memory_space<vmem>>, vector<16x128xbf16>,
    return
  }
  func.func @transform_0(%arg0: i32) -> (i32, i32) {
    %c0_i32 = arith.constant 0 : i32
    %c0_i32_0 = arith.constant 0 : i32
    return %arg0, %c0_i32 : i32, i32
  }
  func.func @transform_1(%arg0: i32) -> (i32, i32) {
    %c0_i32 = arith.constant 0 : i32
    %c0_i32_0 = arith.constant 0 : i32
    %c0_i32_1 = arith.constant 0 : i32
    return %c0_i32, %c0_i32_0 : i32, i32
  }
  func.func @transform_2(%arg0: i32) -> (i32, i32) {
    %c0_i32 = arith.constant 0 : i32
    %c0_i32_0 = arith.constant 0 : i32
    %c0_i32_1 = arith.constant 0 : i32
    return %c0_i32, %c0_i32_0 : i32, i32
  }
  func.func @transform_3(%arg0: i32) -> (i32, i32) {
    %c0_i32 = arith.constant 0 : i32
    %c0_i32_0 = arith.constant 0 : i32
    return %arg0, %c0_i32 : i32, i32
  }
}

module attributes {stable_mosaic.version = 11 : i64} {
  func.func @_matmul_bn_stats_kernel(%arg0: i32, %arg1: memref<16x1152xbf16, #tpu.memory_space<vmem>>, %arg2: memref<1152x256xbf16, #tpu.memory_space<vmem>>, %arg3: memref<16x256xbf16, #tpu.memory_space<vmem>>, %arg4: memref<1x8x256xf32, #tpu.memory_space<vmem>>, %arg5: memref<1x8x256xf32, #tpu.memory_space<vmem>>) attributes {dimension_semantics = [#tpu.dimension_semantics<parallel>], iteration_bounds = array<i64: 2>, scalar_prefetch = 0 : i64, scratch_operands = 0 : i64, tpu.core_type = #tpu.core_type<tc>, window_params = [{transform_indices = @transform_0, window_bounds = array<i64: 16, 1152>}, {pipeline_mode = #tpu.pipeline_mode<synchronous>, transform_indices = @transform_1, window_bounds = array<i64: 1152, 256>}, {transform_indices = @transform_2, window_bounds = array<i64: 16, 256>}, {transform_indices = @transform_3, window_bounds = array<i64: 1, 8, 256>}, {transform_indices = @transform_4, window_bounds = array<i64: 1, 8, 256>}]} {
    %c0 = arith.constant 0 : index
    %c0_0 = arith.constant 0 : index
    %0 = vector.load %arg1[%c0, %c0_0] : memref<16x1152xbf16, #tpu.memory_space<vmem>>, vector<16x1152xbf16>
    %c0_1 = arith.constant 0 : index
    %c0_2 = arith.constant 0 : index
    %1 = vector.load %arg2[%c0_1, %c0_2] : memref<1152x256xbf16, #tpu.memory_space<vmem>>, vector<1152x256xbf16>
    %cst = arith.constant dense<0.000000e+00> : vector<16x256xf32>
    %2 = tpu.matmul %0, %1, %cst {dimension_numbers = #tpu.dot_dimension_numbers<[1], [0], [0], [1], [0, 0, 1, 1], [], []>} : vector<16x1152xbf16>, vector<1152x256xbf16>, vector<16x256xf32> -> vector<16x256xf32>
    %3 = arith.truncf %2 : vector<16x256xf32> to vector<16x256xbf16>
    %c0_3 = arith.constant 0 : index
    %c0_4 = arith.constant 0 : index
    %4 = vector.load %arg3[%c0_3, %c0_4] : memref<16x256xbf16, #tpu.memory_space<vmem>>, vector<16x256xbf16>
    tpu.vector_store %arg3[%c0_3, %c0_4], %3 {strides = array<i32>} : memref<16x256xbf16, #tpu.memory_space<vmem>>, vector<16x256xbf16>,
    %5 = vector.shape_cast %2 : vector<16x256xf32> to vector<2x8x256xf32>
    %cst_5 = arith.constant dense<0.000000e+00> : vector<8x256xf32>
    %6 = vector.multi_reduction <add>, %5, %cst_5 [0] : vector<2x8x256xf32> to vector<8x256xf32>
    %c0_6 = arith.constant 0 : index
    %c0_7 = arith.constant 0 : index
    %c0_8 = arith.constant 0 : index
    %7 = vector.load %arg4[%c0_6, %c0_7, %c0_8] : memref<1x8x256xf32, #tpu.memory_space<vmem>>, vector<1x8x256xf32>
    %8 = vector.shape_cast %7 : vector<1x8x256xf32> to vector<8x256xf32>
    %9 = vector.shape_cast %6 : vector<8x256xf32> to vector<1x8x256xf32>
    tpu.vector_store %arg4[%c0_6, %c0_7, %c0_8], %9 {strides = array<i32>} : memref<1x8x256xf32, #tpu.memory_space<vmem>>, vector<1x8x256xf32>,
    %10 = arith.mulf %5, %5 : vector<2x8x256xf32>
    %cst_9 = arith.constant dense<0.000000e+00> : vector<8x256xf32>
    %11 = vector.multi_reduction <add>, %10, %cst_9 [0] : vector<2x8x256xf32> to vector<8x256xf32>
    %c0_10 = arith.constant 0 : index
    %c0_11 = arith.constant 0 : index
    %c0_12 = arith.constant 0 : index
    %12 = vector.load %arg5[%c0_10, %c0_11, %c0_12] : memref<1x8x256xf32, #tpu.memory_space<vmem>>, vector<1x8x256xf32>
    %13 = vector.shape_cast %12 : vector<1x8x256xf32> to vector<8x256xf32>
    %14 = vector.shape_cast %11 : vector<8x256xf32> to vector<1x8x256xf32>
    tpu.vector_store %arg5[%c0_10, %c0_11, %c0_12], %14 {strides = array<i32>} : memref<1x8x256xf32, #tpu.memory_space<vmem>>, vector<1x8x256xf32>,
    return
  }
  func.func @transform_0(%arg0: i32) -> (i32, i32) {
    %c0_i32 = arith.constant 0 : i32
    %c0_i32_0 = arith.constant 0 : i32
    return %arg0, %c0_i32 : i32, i32
  }
  func.func @transform_1(%arg0: i32) -> (i32, i32) {
    %c0_i32 = arith.constant 0 : i32
    %c0_i32_0 = arith.constant 0 : i32
    %c0_i32_1 = arith.constant 0 : i32
    return %c0_i32, %c0_i32_0 : i32, i32
  }
  func.func @transform_2(%arg0: i32) -> (i32, i32) {
    %c0_i32 = arith.constant 0 : i32
    %c0_i32_0 = arith.constant 0 : i32
    return %arg0, %c0_i32 : i32, i32
  }
  func.func @transform_3(%arg0: i32) -> (i32, i32, i32) {
    %c0_i32 = arith.constant 0 : i32
    %c0_i32_0 = arith.constant 0 : i32
    %c0_i32_1 = arith.constant 0 : i32
    return %arg0, %c0_i32, %c0_i32_0 : i32, i32, i32
  }
  func.func @transform_4(%arg0: i32) -> (i32, i32, i32) {
    %c0_i32 = arith.constant 0 : i32
    %c0_i32_0 = arith.constant 0 : i32
    %c0_i32_1 = arith.constant 0 : i32
    return %arg0, %c0_i32, %c0_i32_0 : i32, i32, i32
  }
}

module attributes {stable_mosaic.version = 11 : i64} {
  func.func @_bn_relu_kernel(%arg0: i32, %arg1: memref<16x256xbf16, #tpu.memory_space<vmem>>, %arg2: memref<1x256xf32, #tpu.memory_space<vmem>>, %arg3: memref<1x256xf32, #tpu.memory_space<vmem>>, %arg4: memref<16x256xbf16, #tpu.memory_space<vmem>>) attributes {dimension_semantics = [#tpu.dimension_semantics<parallel>], iteration_bounds = array<i64: 2>, scalar_prefetch = 0 : i64, scratch_operands = 0 : i64, tpu.core_type = #tpu.core_type<tc>, window_params = [{transform_indices = @transform_0, window_bounds = array<i64: 16, 256>}, {pipeline_mode = #tpu.pipeline_mode<synchronous>, transform_indices = @transform_1, window_bounds = array<i64: 1, 256>}, {pipeline_mode = #tpu.pipeline_mode<synchronous>, transform_indices = @transform_2, window_bounds = array<i64: 1, 256>}, {transform_indices = @transform_3, window_bounds = array<i64: 16, 256>}]} {
    %c0 = arith.constant 0 : index
    %c0_0 = arith.constant 0 : index
    %0 = vector.load %arg1[%c0, %c0_0] : memref<16x256xbf16, #tpu.memory_space<vmem>>, vector<16x256xbf16>
    %1 = arith.extf %0 : vector<16x256xbf16> to vector<16x256xf32>
    %c0_1 = arith.constant 0 : index
    %c0_2 = arith.constant 0 : index
    %2 = vector.load %arg2[%c0_1, %c0_2] : memref<1x256xf32, #tpu.memory_space<vmem>>, vector<1x256xf32>
    %3 = vector.broadcast %2 : vector<1x256xf32> to vector<16x256xf32>
    %4 = arith.mulf %1, %3 : vector<16x256xf32>
    %c0_3 = arith.constant 0 : index
    %c0_4 = arith.constant 0 : index
    %5 = vector.load %arg3[%c0_3, %c0_4] : memref<1x256xf32, #tpu.memory_space<vmem>>, vector<1x256xf32>
    %6 = vector.broadcast %5 : vector<1x256xf32> to vector<16x256xf32>
    %7 = arith.addf %4, %6 : vector<16x256xf32>
    %cst = arith.constant 0.000000e+00 : f32
    %8 = vector.broadcast %cst : f32 to vector<16x256xf32>
    %9 = arith.maximumf %7, %8 : vector<16x256xf32>
    %10 = arith.truncf %9 : vector<16x256xf32> to vector<16x256xbf16>
    %c0_5 = arith.constant 0 : index
    %c0_6 = arith.constant 0 : index
    %11 = vector.load %arg4[%c0_5, %c0_6] : memref<16x256xbf16, #tpu.memory_space<vmem>>, vector<16x256xbf16>
    tpu.vector_store %arg4[%c0_5, %c0_6], %10 {strides = array<i32>} : memref<16x256xbf16, #tpu.memory_space<vmem>>, vector<16x256xbf16>,
    return
  }
  func.func @transform_0(%arg0: i32) -> (i32, i32) {
    %c0_i32 = arith.constant 0 : i32
    %c0_i32_0 = arith.constant 0 : i32
    return %arg0, %c0_i32 : i32, i32
  }
  func.func @transform_1(%arg0: i32) -> (i32, i32) {
    %c0_i32 = arith.constant 0 : i32
    %c0_i32_0 = arith.constant 0 : i32
    %c0_i32_1 = arith.constant 0 : i32
    return %c0_i32, %c0_i32_0 : i32, i32
  }
  func.func @transform_2(%arg0: i32) -> (i32, i32) {
    %c0_i32 = arith.constant 0 : i32
    %c0_i32_0 = arith.constant 0 : i32
    %c0_i32_1 = arith.constant 0 : i32
    return %c0_i32, %c0_i32_0 : i32, i32
  }
  func.func @transform_3(%arg0: i32) -> (i32, i32) {
    %c0_i32 = arith.constant 0 : i32
    %c0_i32_0 = arith.constant 0 : i32
    return %arg0, %c0_i32 : i32, i32
  }
}

module attributes {stable_mosaic.version = 11 : i64} {
  func.func @_matmul_bn_stats_kernel(%arg0: i32, %arg1: memref<64x576xbf16, #tpu.memory_space<vmem>>, %arg2: memref<576x128xbf16, #tpu.memory_space<vmem>>, %arg3: memref<64x128xbf16, #tpu.memory_space<vmem>>, %arg4: memref<1x8x128xf32, #tpu.memory_space<vmem>>, %arg5: memref<1x8x128xf32, #tpu.memory_space<vmem>>) attributes {dimension_semantics = [#tpu.dimension_semantics<parallel>], iteration_bounds = array<i64: 2>, scalar_prefetch = 0 : i64, scratch_operands = 0 : i64, tpu.core_type = #tpu.core_type<tc>, window_params = [{transform_indices = @transform_0, window_bounds = array<i64: 64, 576>}, {pipeline_mode = #tpu.pipeline_mode<synchronous>, transform_indices = @transform_1, window_bounds = array<i64: 576, 128>}, {transform_indices = @transform_2, window_bounds = array<i64: 64, 128>}, {transform_indices = @transform_3, window_bounds = array<i64: 1, 8, 128>}, {transform_indices = @transform_4, window_bounds = array<i64: 1, 8, 128>}]} {
    %c0 = arith.constant 0 : index
    %c0_0 = arith.constant 0 : index
    %0 = vector.load %arg1[%c0, %c0_0] : memref<64x576xbf16, #tpu.memory_space<vmem>>, vector<64x576xbf16>
    %c0_1 = arith.constant 0 : index
    %c0_2 = arith.constant 0 : index
    %1 = vector.load %arg2[%c0_1, %c0_2] : memref<576x128xbf16, #tpu.memory_space<vmem>>, vector<576x128xbf16>
    %cst = arith.constant dense<0.000000e+00> : vector<64x128xf32>
    %2 = tpu.matmul %0, %1, %cst {dimension_numbers = #tpu.dot_dimension_numbers<[1], [0], [0], [1], [0, 0, 1, 1], [], []>} : vector<64x576xbf16>, vector<576x128xbf16>, vector<64x128xf32> -> vector<64x128xf32>
    %3 = arith.truncf %2 : vector<64x128xf32> to vector<64x128xbf16>
    %c0_3 = arith.constant 0 : index
    %c0_4 = arith.constant 0 : index
    %4 = vector.load %arg3[%c0_3, %c0_4] : memref<64x128xbf16, #tpu.memory_space<vmem>>, vector<64x128xbf16>
    tpu.vector_store %arg3[%c0_3, %c0_4], %3 {strides = array<i32>} : memref<64x128xbf16, #tpu.memory_space<vmem>>, vector<64x128xbf16>,
    %5 = vector.shape_cast %2 : vector<64x128xf32> to vector<8x8x128xf32>
    %cst_5 = arith.constant dense<0.000000e+00> : vector<8x128xf32>
    %6 = vector.multi_reduction <add>, %5, %cst_5 [0] : vector<8x8x128xf32> to vector<8x128xf32>
    %c0_6 = arith.constant 0 : index
    %c0_7 = arith.constant 0 : index
    %c0_8 = arith.constant 0 : index
    %7 = vector.load %arg4[%c0_6, %c0_7, %c0_8] : memref<1x8x128xf32, #tpu.memory_space<vmem>>, vector<1x8x128xf32>
    %8 = vector.shape_cast %7 : vector<1x8x128xf32> to vector<8x128xf32>
    %9 = vector.shape_cast %6 : vector<8x128xf32> to vector<1x8x128xf32>
    tpu.vector_store %arg4[%c0_6, %c0_7, %c0_8], %9 {strides = array<i32>} : memref<1x8x128xf32, #tpu.memory_space<vmem>>, vector<1x8x128xf32>,
    %10 = arith.mulf %5, %5 : vector<8x8x128xf32>
    %cst_9 = arith.constant dense<0.000000e+00> : vector<8x128xf32>
    %11 = vector.multi_reduction <add>, %10, %cst_9 [0] : vector<8x8x128xf32> to vector<8x128xf32>
    %c0_10 = arith.constant 0 : index
    %c0_11 = arith.constant 0 : index
    %c0_12 = arith.constant 0 : index
    %12 = vector.load %arg5[%c0_10, %c0_11, %c0_12] : memref<1x8x128xf32, #tpu.memory_space<vmem>>, vector<1x8x128xf32>
    %13 = vector.shape_cast %12 : vector<1x8x128xf32> to vector<8x128xf32>
    %14 = vector.shape_cast %11 : vector<8x128xf32> to vector<1x8x128xf32>
    tpu.vector_store %arg5[%c0_10, %c0_11, %c0_12], %14 {strides = array<i32>} : memref<1x8x128xf32, #tpu.memory_space<vmem>>, vector<1x8x128xf32>,
    return
  }
  func.func @transform_0(%arg0: i32) -> (i32, i32) {
    %c0_i32 = arith.constant 0 : i32
    %c0_i32_0 = arith.constant 0 : i32
    return %arg0, %c0_i32 : i32, i32
  }
  func.func @transform_1(%arg0: i32) -> (i32, i32) {
    %c0_i32 = arith.constant 0 : i32
    %c0_i32_0 = arith.constant 0 : i32
    %c0_i32_1 = arith.constant 0 : i32
    return %c0_i32, %c0_i32_0 : i32, i32
  }
  func.func @transform_2(%arg0: i32) -> (i32, i32) {
    %c0_i32 = arith.constant 0 : i32
    %c0_i32_0 = arith.constant 0 : i32
    return %arg0, %c0_i32 : i32, i32
  }
  func.func @transform_3(%arg0: i32) -> (i32, i32, i32) {
    %c0_i32 = arith.constant 0 : i32
    %c0_i32_0 = arith.constant 0 : i32
    %c0_i32_1 = arith.constant 0 : i32
    return %arg0, %c0_i32, %c0_i32_0 : i32, i32, i32
  }
  func.func @transform_4(%arg0: i32) -> (i32, i32, i32) {
    %c0_i32 = arith.constant 0 : i32
    %c0_i32_0 = arith.constant 0 : i32
    %c0_i32_1 = arith.constant 0 : i32
    return %arg0, %c0_i32, %c0_i32_0 : i32, i32, i32
  }
}

module attributes {stable_mosaic.version = 11 : i64} {
  func.func @_bn_relu_kernel(%arg0: i32, %arg1: memref<64x128xbf16, #tpu.memory_space<vmem>>, %arg2: memref<1x128xf32, #tpu.memory_space<vmem>>, %arg3: memref<1x128xf32, #tpu.memory_space<vmem>>, %arg4: memref<64x128xbf16, #tpu.memory_space<vmem>>) attributes {dimension_semantics = [#tpu.dimension_semantics<parallel>], iteration_bounds = array<i64: 2>, scalar_prefetch = 0 : i64, scratch_operands = 0 : i64, tpu.core_type = #tpu.core_type<tc>, window_params = [{transform_indices = @transform_0, window_bounds = array<i64: 64, 128>}, {pipeline_mode = #tpu.pipeline_mode<synchronous>, transform_indices = @transform_1, window_bounds = array<i64: 1, 128>}, {pipeline_mode = #tpu.pipeline_mode<synchronous>, transform_indices = @transform_2, window_bounds = array<i64: 1, 128>}, {transform_indices = @transform_3, window_bounds = array<i64: 64, 128>}]} {
    %c0 = arith.constant 0 : index
    %c0_0 = arith.constant 0 : index
    %0 = vector.load %arg1[%c0, %c0_0] : memref<64x128xbf16, #tpu.memory_space<vmem>>, vector<64x128xbf16>
    %1 = arith.extf %0 : vector<64x128xbf16> to vector<64x128xf32>
    %c0_1 = arith.constant 0 : index
    %c0_2 = arith.constant 0 : index
    %2 = vector.load %arg2[%c0_1, %c0_2] : memref<1x128xf32, #tpu.memory_space<vmem>>, vector<1x128xf32>
    %3 = vector.broadcast %2 : vector<1x128xf32> to vector<64x128xf32>
    %4 = arith.mulf %1, %3 : vector<64x128xf32>
    %c0_3 = arith.constant 0 : index
    %c0_4 = arith.constant 0 : index
    %5 = vector.load %arg3[%c0_3, %c0_4] : memref<1x128xf32, #tpu.memory_space<vmem>>, vector<1x128xf32>
    %6 = vector.broadcast %5 : vector<1x128xf32> to vector<64x128xf32>
    %7 = arith.addf %4, %6 : vector<64x128xf32>
    %cst = arith.constant 0.000000e+00 : f32
    %8 = vector.broadcast %cst : f32 to vector<64x128xf32>
    %9 = arith.maximumf %7, %8 : vector<64x128xf32>
    %10 = arith.truncf %9 : vector<64x128xf32> to vector<64x128xbf16>
    %c0_5 = arith.constant 0 : index
    %c0_6 = arith.constant 0 : index
    %11 = vector.load %arg4[%c0_5, %c0_6] : memref<64x128xbf16, #tpu.memory_space<vmem>>, vector<64x128xbf16>
    tpu.vector_store %arg4[%c0_5, %c0_6], %10 {strides = array<i32>} : memref<64x128xbf16, #tpu.memory_space<vmem>>, vector<64x128xbf16>,
    return
  }
  func.func @transform_0(%arg0: i32) -> (i32, i32) {
    %c0_i32 = arith.constant 0 : i32
    %c0_i32_0 = arith.constant 0 : i32
    return %arg0, %c0_i32 : i32, i32
  }
  func.func @transform_1(%arg0: i32) -> (i32, i32) {
    %c0_i32 = arith.constant 0 : i32
    %c0_i32_0 = arith.constant 0 : i32
    %c0_i32_1 = arith.constant 0 : i32
    return %c0_i32, %c0_i32_0 : i32, i32
  }
  func.func @transform_2(%arg0: i32) -> (i32, i32) {
    %c0_i32 = arith.constant 0 : i32
    %c0_i32_0 = arith.constant 0 : i32
    %c0_i32_1 = arith.constant 0 : i32
    return %c0_i32, %c0_i32_0 : i32, i32
  }
  func.func @transform_3(%arg0: i32) -> (i32, i32) {
    %c0_i32 = arith.constant 0 : i32
    %c0_i32_0 = arith.constant 0 : i32
    return %arg0, %c0_i32 : i32, i32
  }
}

module attributes {stable_mosaic.version = 11 : i64} {
  func.func @_matmul_bn_stats_kernel(%arg0: i32, %arg1: memref<256x288xbf16, #tpu.memory_space<vmem>>, %arg2: memref<288x128xbf16, #tpu.memory_space<vmem>>, %arg3: memref<256x128xbf16, #tpu.memory_space<vmem>>, %arg4: memref<1x8x128xf32, #tpu.memory_space<vmem>>, %arg5: memref<1x8x128xf32, #tpu.memory_space<vmem>>) attributes {dimension_semantics = [#tpu.dimension_semantics<parallel>], iteration_bounds = array<i64: 2>, scalar_prefetch = 0 : i64, scratch_operands = 0 : i64, tpu.core_type = #tpu.core_type<tc>, window_params = [{transform_indices = @transform_0, window_bounds = array<i64: 256, 288>}, {pipeline_mode = #tpu.pipeline_mode<synchronous>, transform_indices = @transform_1, window_bounds = array<i64: 288, 128>}, {transform_indices = @transform_2, window_bounds = array<i64: 256, 128>}, {transform_indices = @transform_3, window_bounds = array<i64: 1, 8, 128>}, {transform_indices = @transform_4, window_bounds = array<i64: 1, 8, 128>}]} {
    %c0 = arith.constant 0 : index
    %c0_0 = arith.constant 0 : index
    %0 = vector.load %arg1[%c0, %c0_0] : memref<256x288xbf16, #tpu.memory_space<vmem>>, vector<256x288xbf16>
    %c0_1 = arith.constant 0 : index
    %c0_2 = arith.constant 0 : index
    %1 = vector.load %arg2[%c0_1, %c0_2] : memref<288x128xbf16, #tpu.memory_space<vmem>>, vector<288x128xbf16>
    %cst = arith.constant dense<0.000000e+00> : vector<256x128xf32>
    %2 = tpu.matmul %0, %1, %cst {dimension_numbers = #tpu.dot_dimension_numbers<[1], [0], [0], [1], [0, 0, 1, 1], [], []>} : vector<256x288xbf16>, vector<288x128xbf16>, vector<256x128xf32> -> vector<256x128xf32>
    %3 = arith.truncf %2 : vector<256x128xf32> to vector<256x128xbf16>
    %c0_3 = arith.constant 0 : index
    %c0_4 = arith.constant 0 : index
    %4 = vector.load %arg3[%c0_3, %c0_4] : memref<256x128xbf16, #tpu.memory_space<vmem>>, vector<256x128xbf16>
    tpu.vector_store %arg3[%c0_3, %c0_4], %3 {strides = array<i32>} : memref<256x128xbf16, #tpu.memory_space<vmem>>, vector<256x128xbf16>,
    %5 = vector.shape_cast %2 : vector<256x128xf32> to vector<32x8x128xf32>
    %cst_5 = arith.constant dense<0.000000e+00> : vector<8x128xf32>
    %6 = vector.multi_reduction <add>, %5, %cst_5 [0] : vector<32x8x128xf32> to vector<8x128xf32>
    %c0_6 = arith.constant 0 : index
    %c0_7 = arith.constant 0 : index
    %c0_8 = arith.constant 0 : index
    %7 = vector.load %arg4[%c0_6, %c0_7, %c0_8] : memref<1x8x128xf32, #tpu.memory_space<vmem>>, vector<1x8x128xf32>
    %8 = vector.shape_cast %7 : vector<1x8x128xf32> to vector<8x128xf32>
    %9 = vector.shape_cast %6 : vector<8x128xf32> to vector<1x8x128xf32>
    tpu.vector_store %arg4[%c0_6, %c0_7, %c0_8], %9 {strides = array<i32>} : memref<1x8x128xf32, #tpu.memory_space<vmem>>, vector<1x8x128xf32>,
    %10 = arith.mulf %5, %5 : vector<32x8x128xf32>
    %cst_9 = arith.constant dense<0.000000e+00> : vector<8x128xf32>
    %11 = vector.multi_reduction <add>, %10, %cst_9 [0] : vector<32x8x128xf32> to vector<8x128xf32>
    %c0_10 = arith.constant 0 : index
    %c0_11 = arith.constant 0 : index
    %c0_12 = arith.constant 0 : index
    %12 = vector.load %arg5[%c0_10, %c0_11, %c0_12] : memref<1x8x128xf32, #tpu.memory_space<vmem>>, vector<1x8x128xf32>
    %13 = vector.shape_cast %12 : vector<1x8x128xf32> to vector<8x128xf32>
    %14 = vector.shape_cast %11 : vector<8x128xf32> to vector<1x8x128xf32>
    tpu.vector_store %arg5[%c0_10, %c0_11, %c0_12], %14 {strides = array<i32>} : memref<1x8x128xf32, #tpu.memory_space<vmem>>, vector<1x8x128xf32>,
    return
  }
  func.func @transform_0(%arg0: i32) -> (i32, i32) {
    %c0_i32 = arith.constant 0 : i32
    %c0_i32_0 = arith.constant 0 : i32
    return %arg0, %c0_i32 : i32, i32
  }
  func.func @transform_1(%arg0: i32) -> (i32, i32) {
    %c0_i32 = arith.constant 0 : i32
    %c0_i32_0 = arith.constant 0 : i32
    %c0_i32_1 = arith.constant 0 : i32
    return %c0_i32, %c0_i32_0 : i32, i32
  }
  func.func @transform_2(%arg0: i32) -> (i32, i32) {
    %c0_i32 = arith.constant 0 : i32
    %c0_i32_0 = arith.constant 0 : i32
    return %arg0, %c0_i32 : i32, i32
  }
  func.func @transform_3(%arg0: i32) -> (i32, i32, i32) {
    %c0_i32 = arith.constant 0 : i32
    %c0_i32_0 = arith.constant 0 : i32
    %c0_i32_1 = arith.constant 0 : i32
    return %arg0, %c0_i32, %c0_i32_0 : i32, i32, i32
  }
  func.func @transform_4(%arg0: i32) -> (i32, i32, i32) {
    %c0_i32 = arith.constant 0 : i32
    %c0_i32_0 = arith.constant 0 : i32
    %c0_i32_1 = arith.constant 0 : i32
    return %arg0, %c0_i32, %c0_i32_0 : i32, i32, i32
  }
}

module attributes {stable_mosaic.version = 11 : i64} {
  func.func @_bn_relu_kernel(%arg0: i32, %arg1: memref<256x128xbf16, #tpu.memory_space<vmem>>, %arg2: memref<1x128xf32, #tpu.memory_space<vmem>>, %arg3: memref<1x128xf32, #tpu.memory_space<vmem>>, %arg4: memref<256x128xbf16, #tpu.memory_space<vmem>>) attributes {dimension_semantics = [#tpu.dimension_semantics<parallel>], iteration_bounds = array<i64: 2>, scalar_prefetch = 0 : i64, scratch_operands = 0 : i64, tpu.core_type = #tpu.core_type<tc>, window_params = [{transform_indices = @transform_0, window_bounds = array<i64: 256, 128>}, {pipeline_mode = #tpu.pipeline_mode<synchronous>, transform_indices = @transform_1, window_bounds = array<i64: 1, 128>}, {pipeline_mode = #tpu.pipeline_mode<synchronous>, transform_indices = @transform_2, window_bounds = array<i64: 1, 128>}, {transform_indices = @transform_3, window_bounds = array<i64: 256, 128>}]} {
    %c0 = arith.constant 0 : index
    %c0_0 = arith.constant 0 : index
    %0 = vector.load %arg1[%c0, %c0_0] : memref<256x128xbf16, #tpu.memory_space<vmem>>, vector<256x128xbf16>
    %1 = arith.extf %0 : vector<256x128xbf16> to vector<256x128xf32>
    %c0_1 = arith.constant 0 : index
    %c0_2 = arith.constant 0 : index
    %2 = vector.load %arg2[%c0_1, %c0_2] : memref<1x128xf32, #tpu.memory_space<vmem>>, vector<1x128xf32>
    %3 = vector.broadcast %2 : vector<1x128xf32> to vector<256x128xf32>
    %4 = arith.mulf %1, %3 : vector<256x128xf32>
    %c0_3 = arith.constant 0 : index
    %c0_4 = arith.constant 0 : index
    %5 = vector.load %arg3[%c0_3, %c0_4] : memref<1x128xf32, #tpu.memory_space<vmem>>, vector<1x128xf32>
    %6 = vector.broadcast %5 : vector<1x128xf32> to vector<256x128xf32>
    %7 = arith.addf %4, %6 : vector<256x128xf32>
    %cst = arith.constant 0.000000e+00 : f32
    %8 = vector.broadcast %cst : f32 to vector<256x128xf32>
    %9 = arith.maximumf %7, %8 : vector<256x128xf32>
    %10 = arith.truncf %9 : vector<256x128xf32> to vector<256x128xbf16>
    %c0_5 = arith.constant 0 : index
    %c0_6 = arith.constant 0 : index
    %11 = vector.load %arg4[%c0_5, %c0_6] : memref<256x128xbf16, #tpu.memory_space<vmem>>, vector<256x128xbf16>
    tpu.vector_store %arg4[%c0_5, %c0_6], %10 {strides = array<i32>} : memref<256x128xbf16, #tpu.memory_space<vmem>>, vector<256x128xbf16>,
    return
  }
  func.func @transform_0(%arg0: i32) -> (i32, i32) {
    %c0_i32 = arith.constant 0 : i32
    %c0_i32_0 = arith.constant 0 : i32
    return %arg0, %c0_i32 : i32, i32
  }
  func.func @transform_1(%arg0: i32) -> (i32, i32) {
    %c0_i32 = arith.constant 0 : i32
    %c0_i32_0 = arith.constant 0 : i32
    %c0_i32_1 = arith.constant 0 : i32
    return %c0_i32, %c0_i32_0 : i32, i32
  }
  func.func @transform_2(%arg0: i32) -> (i32, i32) {
    %c0_i32 = arith.constant 0 : i32
    %c0_i32_0 = arith.constant 0 : i32
    %c0_i32_1 = arith.constant 0 : i32
    return %c0_i32, %c0_i32_0 : i32, i32
  }
  func.func @transform_3(%arg0: i32) -> (i32, i32) {
    %c0_i32 = arith.constant 0 : i32
    %c0_i32_0 = arith.constant 0 : i32
    return %arg0, %c0_i32 : i32, i32
  }
}

module attributes {stable_mosaic.version = 11 : i64} {
  func.func @_matmul_bias_tanh_kernel(%arg0: i32, %arg1: memref<512x144xbf16, #tpu.memory_space<vmem>>, %arg2: memref<144x128xbf16, #tpu.memory_space<vmem>>, %arg3: memref<1x128xf32, #tpu.memory_space<vmem>>, %arg4: memref<512x128xf32, #tpu.memory_space<vmem>>) attributes {dimension_semantics = [#tpu.dimension_semantics<parallel>], iteration_bounds = array<i64: 4>, scalar_prefetch = 0 : i64, scratch_operands = 0 : i64, tpu.core_type = #tpu.core_type<tc>, window_params = [{transform_indices = @transform_0, window_bounds = array<i64: 512, 144>}, {pipeline_mode = #tpu.pipeline_mode<synchronous>, transform_indices = @transform_1, window_bounds = array<i64: 144, 128>}, {pipeline_mode = #tpu.pipeline_mode<synchronous>, transform_indices = @transform_2, window_bounds = array<i64: 1, 128>}, {transform_indices = @transform_3, window_bounds = array<i64: 512, 128>}]} {
    %c0 = arith.constant 0 : index
    %c0_0 = arith.constant 0 : index
    %0 = vector.load %arg1[%c0, %c0_0] : memref<512x144xbf16, #tpu.memory_space<vmem>>, vector<512x144xbf16>
    %c0_1 = arith.constant 0 : index
    %c0_2 = arith.constant 0 : index
    %1 = vector.load %arg2[%c0_1, %c0_2] : memref<144x128xbf16, #tpu.memory_space<vmem>>, vector<144x128xbf16>
    %cst = arith.constant dense<0.000000e+00> : vector<512x128xf32>
    %2 = tpu.matmul %0, %1, %cst {dimension_numbers = #tpu.dot_dimension_numbers<[1], [0], [0], [1], [0, 0, 1, 1], [], []>} : vector<512x144xbf16>, vector<144x128xbf16>, vector<512x128xf32> -> vector<512x128xf32>
    %c0_3 = arith.constant 0 : index
    %c0_4 = arith.constant 0 : index
    %3 = vector.load %arg3[%c0_3, %c0_4] : memref<1x128xf32, #tpu.memory_space<vmem>>, vector<1x128xf32>
    %4 = vector.broadcast %3 : vector<1x128xf32> to vector<512x128xf32>
    %5 = arith.addf %2, %4 : vector<512x128xf32>
    %6 = math.tanh %5 : vector<512x128xf32>
    %c0_5 = arith.constant 0 : index
    %c0_6 = arith.constant 0 : index
    %7 = vector.load %arg4[%c0_5, %c0_6] : memref<512x128xf32, #tpu.memory_space<vmem>>, vector<512x128xf32>
    tpu.vector_store %arg4[%c0_5, %c0_6], %6 {strides = array<i32>} : memref<512x128xf32, #tpu.memory_space<vmem>>, vector<512x128xf32>,
    return
  }
  func.func @transform_0(%arg0: i32) -> (i32, i32) {
    %c0_i32 = arith.constant 0 : i32
    %c0_i32_0 = arith.constant 0 : i32
    return %arg0, %c0_i32 : i32, i32
  }
  func.func @transform_1(%arg0: i32) -> (i32, i32) {
    %c0_i32 = arith.constant 0 : i32
    %c0_i32_0 = arith.constant 0 : i32
    %c0_i32_1 = arith.constant 0 : i32
    return %c0_i32, %c0_i32_0 : i32, i32
  }
  func.func @transform_2(%arg0: i32) -> (i32, i32) {
    %c0_i32 = arith.constant 0 : i32
    %c0_i32_0 = arith.constant 0 : i32
    %c0_i32_1 = arith.constant 0 : i32
    return %c0_i32, %c0_i32_0 : i32, i32
  }
  func.func @transform_3(%arg0: i32) -> (i32, i32) {
    %c0_i32 = arith.constant 0 : i32
    %c0_i32_0 = arith.constant 0 : i32
    return %arg0, %c0_i32 : i32, i32
  }
}

</mosaic_0001>

<llo_original>
// kernel: _lambda_.10
$region0: #{_lambda_.10}
  #allocation0 [shape = 'u32[]', space=smem, size = 0x4, offset = 0x4, fixed_abs, tag = 'smem constant byte address 0x4 - core index']
  #allocation1 [shape = 'u32[144,128]{1,0:T(1,128)}', space=vmem, size = 0x12000, scoped, tag = 'internal scratch']
  %s0 = inlined_call_operand.vmem [shape: bf16[32,128], index: 0, kind: input, shape index: {}]
  %s1 = inlined_call_operand.vmem [shape: f32[1,128], index: 1, kind: input, shape index: {}]
  %s2 = inlined_call_operand.vmem [shape: f32[1,128], index: 2, kind: input, shape index: {}]
  %s3 = inlined_call_operand.vmem [shape: bf16[32,128], index: 3, kind: output, shape index: {}]
  %s4 = sld [smem:[#allocation0]]
  $region45: #{_lambda_.10} parent=0
    _
  %s6 = ssub.s32 1, %s4
  %s7 = scalar_select 0, %s6, %s4
  loop: start=0, step=1, limit=4
  $region2: #{_lambda_.10} parent=0 // loop_pre_header
    _
  $region3: #{_lambda_.10} parent=0 // loop_header
    %s9 = sphi 0, %s13
    %p10 = scmp.ge.s32.totalorder %s9, 4
    %s19 = sphi 0, %s21
    %s22 = sphi 0, %s19
    %s23 = sphi 0, %s22
    %s39 = sphi 0, %s23
    %s43 = sphi 0, %s43
    %s45 = sphi 0, %s43
    %s46 = sphi 0, %s45
    %s60 = sphi 0, %s46
    %s64 = sphi 0, %s64
    %s66 = sphi 0, %s64
    %s67 = sphi 0, %s66
    %s81 = sphi 0, %s67
    %s87 = sphi 0, %s89
    %s90 = sphi 0, %s87
    %s91 = sphi 0, %s90
    %s107 = sphi 0, %s91
  $region4: #{_lambda_.10} parent=0 // loop_header_branch
    %12 = sbr.rel (%p10) target = $region8
  $region5: #{_lambda_.10} parent=0 // loop_body
    %s14 = ssub.s32 %s9, 1
    %s15 = ssub.s32 %s9, 2
    %s16 = sadd.s32 %s9, 1
    %s17 = ssub.s32 %s9, %s16
    %p18 = scmp.eq.s32.totalorder %s17, 0
    %s20 = sadd.s32 %s19, 1
    %s21 = scalar_select %p18, %s19, %s20
    %p24 = pneg %p18
    %p25 = scmp.eq.s32.totalorder %s9, 1
    %p26 = por %p24, %p25
    %p27 = scmp.ne.s32.totalorder %s19, %s22
    %p28 = scmp.eq.s32.totalorder %s9, 0
    %p29 = por %p27, %p28
    %p30 = scmp.ne.s32.totalorder %s19, %s22
    %p31 = scmp.eq.s32.totalorder %s14, 1
    %p32 = por %p30, %p31
    %p33 = scmp.ne.s32.totalorder %s22, %s23
    %p34 = scmp.eq.s32.totalorder %s14, 0
    %p35 = por %p33, %p34
    %p36 = scmp.ne.s32.totalorder %s22, %s23
    %p37 = scmp.eq.s32.totalorder %s15, 1
    %p38 = por %p36, %p37
    %p40 = scmp.ne.s32.totalorder %s23, %s39
    %p41 = scmp.eq.s32.totalorder %s15, 0
    %p42 = por %p40, %p41
    %s44 = sadd.s32 %s43, 1
    %p47 = scmp.eq.s32.totalorder %s9, 1
    %p48 = scmp.ne.s32.totalorder %s43, %s45
    %p49 = scmp.eq.s32.totalorder %s9, 0
    %p50 = por %p48, %p49
    %p51 = scmp.ne.s32.totalorder %s43, %s45
    %p52 = scmp.eq.s32.totalorder %s14, 1
    %p53 = por %p51, %p52
    %p54 = scmp.ne.s32.totalorder %s45, %s46
    %p55 = scmp.eq.s32.totalorder %s14, 0
    %p56 = por %p54, %p55
    %p57 = scmp.ne.s32.totalorder %s45, %s46
    %p58 = scmp.eq.s32.totalorder %s15, 1
    %p59 = por %p57, %p58
    %p61 = scmp.ne.s32.totalorder %s46, %s60
    %p62 = scmp.eq.s32.totalorder %s15, 0
    %p63 = por %p61, %p62
    %s65 = sadd.s32 %s64, 1
    %p68 = scmp.eq.s32.totalorder %s9, 1
    %p69 = scmp.ne.s32.totalorder %s64, %s66
    %p70 = scmp.eq.s32.totalorder %s9, 0
    %p71 = por %p69, %p70
    %p72 = scmp.ne.s32.totalorder %s64, %s66
    %p73 = scmp.eq.s32.totalorder %s14, 1
    %p74 = por %p72, %p73
    %p75 = scmp.ne.s32.totalorder %s66, %s67
    %p76 = scmp.eq.s32.totalorder %s14, 0
    %p77 = por %p75, %p76
    %p78 = scmp.ne.s32.totalorder %s66, %s67
    %p79 = scmp.eq.s32.totalorder %s15, 1
    %p80 = por %p78, %p79
    %p82 = scmp.ne.s32.totalorder %s67, %s81
    %p83 = scmp.eq.s32.totalorder %s15, 0
    %p84 = por %p82, %p83
    %s85 = ssub.s32 %s9, %s16
    %p86 = scmp.eq.s32.totalorder %s85, 0
    %s88 = sadd.s32 %s87, 1
    %s89 = scalar_select %p86, %s87, %s88
    %p92 = pneg %p86
    %p93 = scmp.eq.s32.totalorder %s9, 1
    %p94 = por %p92, %p93
    %p95 = scmp.ne.s32.totalorder %s87, %s90
    %p96 = scmp.eq.s32.totalorder %s9, 0
    %p97 = por %p95, %p96
    %p98 = scmp.ne.s32.totalorder %s87, %s90
    %p99 = scmp.eq.s32.totalorder %s14, 1
    %p100 = por %p98, %p99
    %p101 = scmp.ne.s32.totalorder %s90, %s91
    %p102 = scmp.eq.s32.totalorder %s14, 0
    %p103 = por %p101, %p102
    %p104 = scmp.ne.s32.totalorder %s90, %s91
    %p105 = scmp.eq.s32.totalorder %s15, 1
    %p106 = por %p104, %p105
    %p108 = scmp.ne.s32.totalorder %s91, %s107
    %p109 = scmp.eq.s32.totalorder %s15, 0
    %p110 = por %p108, %p109
    %p111 = scmp.le.s32.totalorder 1, %s9
    %p112 = scmp.lt.s32.totalorder %s9, 3
    %p113 = pnand %p111, %p112
    %p114 = pneg %p113
    // Predicated region
    $region9: #{_lambda_.10} parent=5 // pred_check
      _
    $region10: #{_lambda_.10} parent=5 // pred_check_branch
      %116 = sbr.rel (%p113) target = $region12
    $region11: #{_lambda_.10} parent=5 // pred_region
      %s117 = ssub.s32 %s9, 1
      // Predicated region
      $region13: #{_lambda_.10} parent=11 // pred_check
        %p118 = pneg %p56
      $region14: #{_lambda_.10} parent=11 // pred_check_branch
        %120 = sbr.rel (%p118) target = $region16
      $region15: #{_lambda_.10} parent=11 // pred_region
        _
      $region16: #{_lambda_.10} parent=11 // pred_fallthru
        _
      // Predicated region
      $region17: #{_lambda_.10} parent=11 // pred_check
        %p121 = pneg %p77
      $region18: #{_lambda_.10} parent=11 // pred_check_branch
        %123 = sbr.rel (%p121) target = $region20
      $region19: #{_lambda_.10} parent=11 // pred_region
        _
      $region20: #{_lambda_.10} parent=11 // pred_fallthru
        _
    $region12: #{_lambda_.10} parent=5 // pred_fallthru
      _
    %p124 = scmp.lt.s32.totalorder %s9, 2
    // Predicated region
    $region21: #{_lambda_.10} parent=5 // pred_check
      %p125 = pneg %p124
    $region22: #{_lambda_.10} parent=5 // pred_check_branch
      %127 = sbr.rel (%p125) target = $region24
    $region23: #{_lambda_.10} parent=5 // pred_region
      // Predicated region
      $region25: #{_lambda_.10} parent=23 // pred_check
        %p128 = pneg %p29
      $region26: #{_lambda_.10} parent=23 // pred_check_branch
        %130 = sbr.rel (%p128) target = $region28
      $region27: #{_lambda_.10} parent=23 // pred_region
        %s131 = smul.u32 2, %s9
        %p132 = scmp.lt.s32.totalorder %s131, 3
        %s133 = scalar_select %p132, %s131, 3
        %s134 = smul.addr %s133, 4
        %s135 = scalar_lea.vmem %s0, %s134
        %s136 = smul.u32 2, %s9
      $region28: #{_lambda_.10} parent=23 // pred_fallthru
        _
    $region24: #{_lambda_.10} parent=5 // pred_fallthru
      _
    %p137 = scmp.le.s32.totalorder 1, %s9
    %p138 = scmp.lt.s32.totalorder %s9, 3
    %p139 = pnand %p137, %p138
    %p140 = pneg %p139
    // Predicated region
    $region29: #{_lambda_.10} parent=5 // pred_check
      _
    $region30: #{_lambda_.10} parent=5 // pred_check_branch
      %142 = sbr.rel (%p139) target = $region32
    $region31: #{_lambda_.10} parent=5 // pred_region
      %s143 = ssub.s32 %s9, 1
      %s144 = smul.u32 2, %s14
      %p145 = scmp.lt.s32.totalorder %s144, 3
      %s146 = scalar_select %p145, %s144, 3
      %s147 = smul.addr %s146, 4
      %s148 = scalar_lea.vmem %s0, %s147
      %p149 = pneg %p35
      %p150 = pneg %p32
      %p151 = pneg %p56
      %p152 = pneg %p53
      %p153 = pneg %p77
      %p154 = pneg %p74
      %p155 = pneg %p103
      %p156 = pneg %p100
      %s157 = smul.u32 2, %s14
      %p158 = scmp.lt.s32.totalorder %s157, 3
      %s159 = scalar_select %p158, %s157, 3
      %s160 = smul.addr %s159, 4
      %s161 = scalar_lea.vmem %s3, %s160
      %s162 = smul.u32 2, %s14
      %p163 = scmp.lt.s32.totalorder %s162, 3
      %s164 = scalar_select %p163, %s162, 3
      %s165 = smul.addr %s164, 4
      %s166 = scalar_lea.vmem %s0, %s165
      %s167 = smul.u32 2, %s14
      %s168 = smul.u32 2, %s14
      %p169 = scmp.lt.s32.totalorder %s168, 3
      %s170 = scalar_select %p169, %s168, 3
      %s171 = smul.addr %s170, 4
      %s172 = scalar_lea.vmem %s3, %s171
      %s173 = smul.u32 2, %s14
      %v174 = vld [vmem:[%s166] sm:$0xf]
      %v175 = vld [vmem:[%s166 + $0x4] sm:$0xf]
      %v176 = vunpack.c.l.bf16 %v174
      %v177 = vunpack.c.l.bf16 %v175
      %v178 = vld [vmem:[%s1] sm:$0x1]
      %v180 = vlaneseq
      %v181 = vshrl.u32 %v180, 7
      %v182 = vsub.s32 0, %v181
      %v183 = vrot.slane %v178, %v182
      %v185 = vmul.f32 %v176, %v183
      %v186 = vmul.f32 %v177, %v183
      %v187 = vld [vmem:[%s2] sm:$0x1]
      %v189 = vlaneseq
      %v190 = vshrl.u32 %v189, 7
      %v191 = vsub.s32 0, %v190
      %v192 = vrot.slane %v187, %v191
      %v194 = vadd.f32 %v185, %v192
      %v195 = vadd.f32 %v186, %v192
      %v196 = vmax.f32 %v194, 0.0
      %v197 = vmax.f32 %v195, 0.0
      %v198 = vpack.c.bf16 %v197, %v196
      %v200 = vunpack.c.l.b16 %v198
      %v201 = vunpack.c.h.b16 %v198
      %v202 = vpack.c.b16 %v200, %v200
      %v203 = vpack.c.b16 %v201, %v201
      %206 = vst [vmem:[%s172] sm:$0xf] %v202
      %207 = vst [vmem:[%s172 + $0x4] sm:$0xf] %v203
      %s208 = smul.u32 2, %s14
      %p209 = scmp.lt.s32.totalorder %s208, 3
      %s210 = scalar_select %p209, %s208, 3
      %s211 = smul.addr %s210, 4
      %s212 = scalar_lea.vmem %s3, %s211
      // Predicated region
      $region33: #{_lambda_.10} parent=31 // pred_check
        %p213 = pneg %p100
      $region34: #{_lambda_.10} parent=31 // pred_check_branch
        %215 = sbr.rel (%p213) target = $region36
      $region35: #{_lambda_.10} parent=31 // pred_region
        %s216 = smul.u32 2, %s14
      $region36: #{_lambda_.10} parent=31 // pred_fallthru
        _
    $region32: #{_lambda_.10} parent=5 // pred_fallthru
      _
    %p217 = scmp.le.s32.totalorder 2, %s9
    // Predicated region
    $region37: #{_lambda_.10} parent=5 // pred_check
      %p218 = pneg %p217
    $region38: #{_lambda_.10} parent=5 // pred_check_branch
      %220 = sbr.rel (%p218) target = $region40
    $region39: #{_lambda_.10} parent=5 // pred_region
      %s221 = ssub.s32 %s9, 2
      // Predicated region
      $region41: #{_lambda_.10} parent=39 // pred_check
        %p222 = pneg %p106
      $region42: #{_lambda_.10} parent=39 // pred_check_branch
        %224 = sbr.rel (%p222) target = $region44
      $region43: #{_lambda_.10} parent=39 // pred_region
        %s225 = smul.u32 2, %s15
        %p226 = scmp.lt.s32.totalorder %s225, 3
        %s227 = scalar_select %p226, %s225, 3
        %s228 = smul.addr %s227, 4
        %s229 = scalar_lea.vmem %s3, %s228
      $region44: #{_lambda_.10} parent=39 // pred_fallthru
        _
    $region40: #{_lambda_.10} parent=5 // pred_fallthru
      _
  $region6: #{_lambda_.10} parent=0 // loop_footer
    %s13 = sadd.s32 1, %s9
  $region7: #{_lambda_.10} parent=0 // loop_footer_branch
    %8 = sbr.rel target = $region3
  $region8: #{_lambda_.10} parent=0 // loop_exit
    _

// kernel: tile.38
$region0: #{tile.38}
  #allocation0 [shape = 's32[1]{0}', space=sflag, size = 0x4, scoped, tag = 'scoped memory for tile.38']
  %s0 = inlined_call_operand.vmem [shape: f32[64], index: 0, kind: input, shape index: {}]
  %s1 = inlined_call_operand.vmem [shape: f32[4,64], index: 1, kind: output, shape index: {}]
  // Predicated region
  $region2: #{tile.38} parent=0 // pred_check
    _
  $region3: #{tile.38} parent=0 // pred_check_branch
    %3 = sbr.rel (0) target = $region5
  $region4: #{tile.38} parent=0 // pred_region
    _
  $region5: #{tile.38} parent=0 // pred_fallthru
    _
  %v4 = vld [vmem:[%s0] ss:$0 sm:$0xff]
  %5 = vst [vmem:[%s1] sm:$0xf] %v4

// kernel: _lambda_.9
$region0: #{_lambda_.9}
  #allocation0 [shape = 'u32[]', space=smem, size = 0x4, offset = 0x4, fixed_abs, tag = 'smem constant byte address 0x4 - core index']
  #allocation1 [shape = 'u32[144,128]{1,0:T(1,128)}', space=vmem, size = 0x12000, scoped, tag = 'internal scratch']
  %s0 = inlined_call_operand.vmem [shape: bf16[32,1024], index: 0, kind: input, shape index: {}]
  %s1 = inlined_call_operand.hbm [shape: bf16[1024,128], index: 1, kind: input, shape index: {}]
  %s2 = inlined_call_operand.vmem [shape: bf16[32,128], index: 2, kind: output, shape index: {0}]
  %s3 = inlined_call_operand.vmem [shape: f32[2,8,128], index: 3, kind: output, shape index: {1}]
  %s4 = inlined_call_operand.vmem [shape: f32[2,8,128], index: 4, kind: output, shape index: {2}]
  %5 = xla_tuple %s2, %s3, %s4
  %s6 = sld [smem:[#allocation0]]
  $region61: #{_lambda_.9} parent=0
    _
  %s8 = ssub.s32 1, %s6
  %s9 = scalar_select 0, %s8, %s6
  $region1: #{_lambda_.9} parent=0
    #allocation2 [shape = 'u8[262144]{0}', space=vmem, size = 0x40000, scoped, tag = 'input window, operand 1, single buffered']
    #allocation3 [shape = 's32[2]{0}', space=sflag, size = 0x8, scoped, tag = 'scoped memory for _lambda_.9']
    %10 = vsyncpa [#allocation3], 0
    loop: start=0, step=1, limit=4
    $region2: #{_lambda_.9} parent=1 // loop_pre_header
      _
    $region3: #{_lambda_.9} parent=1 // loop_header
      %s12 = sphi 0, %s16
      %p13 = scmp.ge.s32.totalorder %s12, 4
      %s22 = sphi 0, %s24
      %s25 = sphi 0, %s22
      %s26 = sphi 0, %s25
      %s42 = sphi 0, %s26
      %s46 = sphi 0, %s46
      %s48 = sphi 0, %s46
      %s49 = sphi 0, %s48
      %s63 = sphi 0, %s49
      %s69 = sphi 0, %s71
      %s72 = sphi 0, %s69
      %s73 = sphi 0, %s72
      %s89 = sphi 0, %s73
      %s95 = sphi 0, %s97
      %s98 = sphi 0, %s95
      %s99 = sphi 0, %s98
      %s115 = sphi 0, %s99
      %s121 = sphi 0, %s123
      %s124 = sphi 0, %s121
      %s125 = sphi 0, %s124
      %s141 = sphi 0, %s125
    $region4: #{_lambda_.9} parent=1 // loop_header_branch
      %15 = sbr.rel (%p13) target = $region8
    $region5: #{_lambda_.9} parent=1 // loop_body
      %s17 = ssub.s32 %s12, 1
      %s18 = ssub.s32 %s12, 2
      %s19 = sadd.s32 %s12, 1
      %s20 = ssub.s32 %s12, %s19
      %p21 = scmp.eq.s32.totalorder %s20, 0
      %s23 = sadd.s32 %s22, 1
      %s24 = scalar_select %p21, %s22, %s23
      %p27 = pneg %p21
      %p28 = scmp.eq.s32.totalorder %s12, 1
      %p29 = por %p27, %p28
      %p30 = scmp.ne.s32.totalorder %s22, %s25
      %p31 = scmp.eq.s32.totalorder %s12, 0
      %p32 = por %p30, %p31
      %p33 = scmp.ne.s32.totalorder %s22, %s25
      %p34 = scmp.eq.s32.totalorder %s17, 1
      %p35 = por %p33, %p34
      %p36 = scmp.ne.s32.totalorder %s25, %s26
      %p37 = scmp.eq.s32.totalorder %s17, 0
      %p38 = por %p36, %p37
      %p39 = scmp.ne.s32.totalorder %s25, %s26
      %p40 = scmp.eq.s32.totalorder %s18, 1
      %p41 = por %p39, %p40
      %p43 = scmp.ne.s32.totalorder %s26, %s42
      %p44 = scmp.eq.s32.totalorder %s18, 0
      %p45 = por %p43, %p44
      %s47 = sadd.s32 %s46, 1
      %p50 = scmp.eq.s32.totalorder %s12, 1
      %p51 = scmp.ne.s32.totalorder %s46, %s48
      %p52 = scmp.eq.s32.totalorder %s12, 0
      %p53 = por %p51, %p52
      %p54 = scmp.ne.s32.totalorder %s46, %s48
      %p55 = scmp.eq.s32.totalorder %s17, 1
      %p56 = por %p54, %p55
      %p57 = scmp.ne.s32.totalorder %s48, %s49
      %p58 = scmp.eq.s32.totalorder %s17, 0
      %p59 = por %p57, %p58
      %p60 = scmp.ne.s32.totalorder %s48, %s49
      %p61 = scmp.eq.s32.totalorder %s18, 1
      %p62 = por %p60, %p61
      %p64 = scmp.ne.s32.totalorder %s49, %s63
      %p65 = scmp.eq.s32.totalorder %s18, 0
      %p66 = por %p64, %p65
      %s67 = ssub.s32 %s12, %s19
      %p68 = scmp.eq.s32.totalorder %s67, 0
      %s70 = sadd.s32 %s69, 1
      %s71 = scalar_select %p68, %s69, %s70
      %p74 = pneg %p68
      %p75 = scmp.eq.s32.totalorder %s12, 1
      %p76 = por %p74, %p75
      %p77 = scmp.ne.s32.totalorder %s69, %s72
      %p78 = scmp.eq.s32.totalorder %s12, 0
      %p79 = por %p77, %p78
      %p80 = scmp.ne.s32.totalorder %s69, %s72
      %p81 = scmp.eq.s32.totalorder %s17, 1
      %p82 = por %p80, %p81
      %p83 = scmp.ne.s32.totalorder %s72, %s73
      %p84 = scmp.eq.s32.totalorder %s17, 0
      %p85 = por %p83, %p84
      %p86 = scmp.ne.s32.totalorder %s72, %s73
      %p87 = scmp.eq.s32.totalorder %s18, 1
      %p88 = por %p86, %p87
      %p90 = scmp.ne.s32.totalorder %s73, %s89
      %p91 = scmp.eq.s32.totalorder %s18, 0
      %p92 = por %p90, %p91
      %s93 = ssub.s32 %s12, %s19
      %p94 = scmp.eq.s32.totalorder %s93, 0
      %s96 = sadd.s32 %s95, 1
      %s97 = scalar_select %p94, %s95, %s96
      %p100 = pneg %p94
      %p101 = scmp.eq.s32.totalorder %s12, 1
      %p102 = por %p100, %p101
      %p103 = scmp.ne.s32.totalorder %s95, %s98
      %p104 = scmp.eq.s32.totalorder %s12, 0
      %p105 = por %p103, %p104
      %p106 = scmp.ne.s32.totalorder %s95, %s98
      %p107 = scmp.eq.s32.totalorder %s17, 1
      %p108 = por %p106, %p107
      %p109 = scmp.ne.s32.totalorder %s98, %s99
      %p110 = scmp.eq.s32.totalorder %s17, 0
      %p111 = por %p109, %p110
      %p112 = scmp.ne.s32.totalorder %s98, %s99
      %p113 = scmp.eq.s32.totalorder %s18, 1
      %p114 = por %p112, %p113
      %p116 = scmp.ne.s32.totalorder %s99, %s115
      %p117 = scmp.eq.s32.totalorder %s18, 0
      %p118 = por %p116, %p117
      %s119 = ssub.s32 %s12, %s19
      %p120 = scmp.eq.s32.totalorder %s119, 0
      %s122 = sadd.s32 %s121, 1
      %s123 = scalar_select %p120, %s121, %s122
      %p126 = pneg %p120
      %p127 = scmp.eq.s32.totalorder %s12, 1
      %p128 = por %p126, %p127
      %p129 = scmp.ne.s32.totalorder %s121, %s124
      %p130 = scmp.eq.s32.totalorder %s12, 0
      %p131 = por %p129, %p130
      %p132 = scmp.ne.s32.totalorder %s121, %s124
      %p133 = scmp.eq.s32.totalorder %s17, 1
      %p134 = por %p132, %p133
      %p135 = scmp.ne.s32.totalorder %s124, %s125
      %p136 = scmp.eq.s32.totalorder %s17, 0
      %p137 = por %p135, %p136
      %p138 = scmp.ne.s32.totalorder %s124, %s125
      %p139 = scmp.eq.s32.totalorder %s18, 1
      %p140 = por %p138, %p139
      %p142 = scmp.ne.s32.totalorder %s125, %s141
      %p143 = scmp.eq.s32.totalorder %s18, 0
      %p144 = por %p142, %p143
      %p145 = scmp.le.s32.totalorder 1, %s12
      %p146 = scmp.lt.s32.totalorder %s12, 3
      %p147 = pnand %p145, %p146
      %p148 = pneg %p147
      // Predicated region
      $region9: #{_lambda_.9} parent=5 // pred_check
        _
      $region10: #{_lambda_.9} parent=5 // pred_check_branch
        %150 = sbr.rel (%p147) target = $region12
      $region11: #{_lambda_.9} parent=5 // pred_region
        %s151 = ssub.s32 %s12, 1
        // Predicated region
        $region13: #{_lambda_.9} parent=11 // pred_check
          %p152 = pneg %p59
        $region14: #{_lambda_.9} parent=11 // pred_check_branch
          %154 = sbr.rel (%p152) target = $region16
        $region15: #{_lambda_.9} parent=11 // pred_region
          %s156 = ssub.s32 8192, 8192
          %157 = vsyncadd [#allocation3], %s156
          %s158 = sshll.u32 [#allocation2], 4
          %s159 = int_to_ptr.vmem [resolvable:$true] %s158
          %164 = dma.hbm_to_vmem [thread:$0]  %s1, 8192, %s159, [#allocation3], 64, 64, 4
        $region16: #{_lambda_.9} parent=11 // pred_fallthru
          _
      $region12: #{_lambda_.9} parent=5 // pred_fallthru
        _
      %p165 = scmp.lt.s32.totalorder %s12, 2
      // Predicated region
      $region17: #{_lambda_.9} parent=5 // pred_check
        %p166 = pneg %p165
      $region18: #{_lambda_.9} parent=5 // pred_check_branch
        %168 = sbr.rel (%p166) target = $region20
      $region19: #{_lambda_.9} parent=5 // pred_region
        // Predicated region
        $region21: #{_lambda_.9} parent=19 // pred_check
          %p169 = pneg %p32
        $region22: #{_lambda_.9} parent=19 // pred_check_branch
          %171 = sbr.rel (%p169) target = $region24
        $region23: #{_lambda_.9} parent=19 // pred_region
          %s172 = smul.u32 2, %s12
          %p173 = scmp.lt.s32.totalorder %s172, 3
          %s174 = scalar_select %p173, %s172, 3
          %s175 = smul.addr %s174, 8
          %s176 = smul.addr %s175, 4
          %s177 = scalar_lea.vmem %s0, %s176
          %s178 = smul.u32 2, %s12
        $region24: #{_lambda_.9} parent=19 // pred_fallthru
          _
      $region20: #{_lambda_.9} parent=5 // pred_fallthru
        _
      %p179 = scmp.le.s32.totalorder 1, %s12
      %p180 = scmp.lt.s32.totalorder %s12, 3
      %p181 = pnand %p179, %p180
      %p182 = pneg %p181
      // Predicated region
      $region25: #{_lambda_.9} parent=5 // pred_check
        _
      $region26: #{_lambda_.9} parent=5 // pred_check_branch
        %184 = sbr.rel (%p181) target = $region28
      $region27: #{_lambda_.9} parent=5 // pred_region
        %s185 = ssub.s32 %s12, 1
        // Predicated region
        $region29: #{_lambda_.9} parent=27 // pred_check
          %p186 = pneg %p59
        $region30: #{_lambda_.9} parent=27 // pred_check_branch
          %188 = sbr.rel (%p186) target = $region32
        $region31: #{_lambda_.9} parent=27 // pred_region
          %189 = dma.done [#allocation3], 8192
        $region32: #{_lambda_.9} parent=27 // pred_fallthru
          _
        %s190 = smul.u32 2, %s17
        %p191 = scmp.lt.s32.totalorder %s190, 3
        %s192 = scalar_select %p191, %s190, 3
        %s193 = smul.addr %s192, 8
        %s194 = smul.addr %s193, 4
        %s195 = scalar_lea.vmem %s0, %s194
        %p196 = pneg %p38
        %p197 = pneg %p35
        %p198 = pneg %p59
        %p199 = pneg %p56
        %p200 = pneg %p85
        %p201 = pneg %p82
        %s202 = smul.u32 2, %s17
        %p203 = scmp.lt.s32.totalorder %s202, 3
        %s204 = scalar_select %p203, %s202, 3
        %s205 = smul.addr %s204, 4
        %s206 = scalar_lea.vmem %s2, %s205
        %p207 = pneg %p111
        %p208 = pneg %p108
        %p209 = scmp.lt.s32.totalorder %s17, 1
        %s210 = scalar_select %p209, %s17, 1
        %s211 = smul.addr %s210, 8
        %s212 = scalar_lea.vmem %s3, %s211
        %p213 = pneg %p137
        %p214 = pneg %p134
        %p215 = scmp.lt.s32.totalorder %s17, 1
        %s216 = scalar_select %p215, %s17, 1
        %s217 = smul.addr %s216, 8
        %s218 = scalar_lea.vmem %s4, %s217
        %s219 = smul.u32 2, %s17
        %p220 = scmp.lt.s32.totalorder %s219, 3
        %s221 = scalar_select %p220, %s219, 3
        %s222 = smul.addr %s221, 8
        %s223 = smul.addr %s222, 4
        %s224 = scalar_lea.vmem %s0, %s223
        %s225 = smul.u32 2, %s17
        %s226 = smul.u32 2, %s17
        %p227 = scmp.lt.s32.totalorder %s226, 3
        %s228 = scalar_select %p227, %s226, 3
        %s229 = smul.addr %s228, 4
        %s230 = scalar_lea.vmem %s2, %s229
        %s231 = smul.u32 2, %s17
        %p232 = scmp.lt.s32.totalorder %s17, 1
        %s233 = scalar_select %p232, %s17, 1
        %s234 = smul.addr %s233, 8
        %s235 = scalar_lea.vmem %s3, %s234
        %p236 = scmp.lt.s32.totalorder %s17, 1
        %s237 = scalar_select %p236, %s17, 1
        %s238 = smul.addr %s237, 8
        %s239 = scalar_lea.vmem %s4, %s238
        %v241 = vld [vmem:[%s224] sm:$0xff]
        %v242 = vld [vmem:[%s224 + $0x8] sm:$0xff]
        %v243 = vld [vmem:[%s224 + $0x10] sm:$0xff]
        %v244 = vld [vmem:[%s224 + $0x18] sm:$0xff]
        %v245 = vld [vmem:[%s224 + $0x20] sm:$0xff]
        %v246 = vld [vmem:[%s224 + $0x28] sm:$0xff]
        %v247 = vld [vmem:[%s224 + $0x30] sm:$0xff]
        %v248 = vld [vmem:[%s224 + $0x38] sm:$0xff]
        %v249 = vld [vmem:[#allocation2] sm:$0xf]
        %v250 = vld [vmem:[#allocation2 + $0x4] sm:$0xf]
        %v251 = vld [vmem:[#allocation2 + $0x8] sm:$0xf]
        %v252 = vld [vmem:[#allocation2 + $0xc] sm:$0xf]
        %v253 = vld [vmem:[#allocation2 + $0x10] sm:$0xf]
        %v254 = vld [vmem:[#allocation2 + $0x14] sm:$0xf]
        %v255 = vld [vmem:[#allocation2 + $0x18] sm:$0xf]
        %v256 = vld [vmem:[#allocation2 + $0x1c] sm:$0xf]
        %v257 = vld [vmem:[#allocation2 + $0x20] sm:$0xf]
        %v258 = vld [vmem:[#allocation2 + $0x24] sm:$0xf]
        %v259 = vld [vmem:[#allocation2 + $0x28] sm:$0xf]
        %v260 = vld [vmem:[#allocation2 + $0x2c] sm:$0xf]
        %v261 = vld [vmem:[#allocation2 + $0x30] sm:$0xf]
        %v262 = vld [vmem:[#allocation2 + $0x34] sm:$0xf]
        %v263 = vld [vmem:[#allocation2 + $0x38] sm:$0xf]
        %v264 = vld [vmem:[#allocation2 + $0x3c] sm:$0xf]
        %v265 = vld [vmem:[#allocation2 + $0x40] sm:$0xf]
        %v266 = vld [vmem:[#allocation2 + $0x44] sm:$0xf]
        %v267 = vld [vmem:[#allocation2 + $0x48] sm:$0xf]
        %v268 = vld [vmem:[#allocation2 + $0x4c] sm:$0xf]
        %v269 = vld [vmem:[#allocation2 + $0x50] sm:$0xf]
        %v270 = vld [vmem:[#allocation2 + $0x54] sm:$0xf]
        %v271 = vld [vmem:[#allocation2 + $0x58] sm:$0xf]
        %v272 = vld [vmem:[#allocation2 + $0x5c] sm:$0xf]
        %v273 = vld [vmem:[#allocation2 + $0x60] sm:$0xf]
        %v274 = vld [vmem:[#allocation2 + $0x64] sm:$0xf]
        %v275 = vld [vmem:[#allocation2 + $0x68] sm:$0xf]
        %v276 = vld [vmem:[#allocation2 + $0x6c] sm:$0xf]
        %v277 = vld [vmem:[#allocation2 + $0x70] sm:$0xf]
        %v278 = vld [vmem:[#allocation2 + $0x74] sm:$0xf]
        %v279 = vld [vmem:[#allocation2 + $0x78] sm:$0xf]
        %v280 = vld [vmem:[#allocation2 + $0x7c] sm:$0xf]
        %v281 = vld [vmem:[#allocation2 + $0x80] sm:$0xf]
        %v282 = vld [vmem:[#allocation2 + $0x84] sm:$0xf]
        %v283 = vld [vmem:[#allocation2 + $0x88] sm:$0xf]
        %v284 = vld [vmem:[#allocation2 + $0x8c] sm:$0xf]
        %v285 = vld [vmem:[#allocation2 + $0x90] sm:$0xf]
        %v286 = vld [vmem:[#allocation2 + $0x94] sm:$0xf]
        %v287 = vld [vmem:[#allocation2 + $0x98] sm:$0xf]
        %v288 = vld [vmem:[#allocation2 + $0x9c] sm:$0xf]
        %v289 = vld [vmem:[#allocation2 + $0xa0] sm:$0xf]
        %v290 = vld [vmem:[#allocation2 + $0xa4] sm:$0xf]
        %v291 = vld [vmem:[#allocation2 + $0xa8] sm:$0xf]
        %v292 = vld [vmem:[#allocation2 + $0xac] sm:$0xf]
        %v293 = vld [vmem:[#allocation2 + $0xb0] sm:$0xf]
        %v294 = vld [vmem:[#allocation2 + $0xb4] sm:$0xf]
        %v295 = vld [vmem:[#allocation2 + $0xb8] sm:$0xf]
        %v296 = vld [vmem:[#allocation2 + $0xbc] sm:$0xf]
        %v297 = vld [vmem:[#allocation2 + $0xc0] sm:$0xf]
        %v298 = vld [vmem:[#allocation2 + $0xc4] sm:$0xf]
        %v299 = vld [vmem:[#allocation2 + $0xc8] sm:$0xf]
        %v300 = vld [vmem:[#allocation2 + $0xcc] sm:$0xf]
        %v301 = vld [vmem:[#allocation2 + $0xd0] sm:$0xf]
        %v302 = vld [vmem:[#allocation2 + $0xd4] sm:$0xf]
        %v303 = vld [vmem:[#allocation2 + $0xd8] sm:$0xf]
        %v304 = vld [vmem:[#allocation2 + $0xdc] sm:$0xf]
        %v305 = vld [vmem:[#allocation2 + $0xe0] sm:$0xf]
        %v306 = vld [vmem:[#allocation2 + $0xe4] sm:$0xf]
        %v307 = vld [vmem:[#allocation2 + $0xe8] sm:$0xf]
        %v308 = vld [vmem:[#allocation2 + $0xec] sm:$0xf]
        %v309 = vld [vmem:[#allocation2 + $0xf0] sm:$0xf]
        %v310 = vld [vmem:[#allocation2 + $0xf4] sm:$0xf]
        %v311 = vld [vmem:[#allocation2 + $0xf8] sm:$0xf]
        %v312 = vld [vmem:[#allocation2 + $0xfc] sm:$0xf]
        %v313 = vld [vmem:[#allocation2 + $0x100] sm:$0xf]
        %v314 = vld [vmem:[#allocation2 + $0x104] sm:$0xf]
        %v315 = vld [vmem:[#allocation2 + $0x108] sm:$0xf]
        %v316 = vld [vmem:[#allocation2 + $0x10c] sm:$0xf]
        %v317 = vld [vmem:[#allocation2 + $0x110] sm:$0xf]
        %v318 = vld [vmem:[#allocation2 + $0x114] sm:$0xf]
        %v319 = vld [vmem:[#allocation2 + $0x118] sm:$0xf]
        %v320 = vld [vmem:[#allocation2 + $0x11c] sm:$0xf]
        %v321 = vld [vmem:[#allocation2 + $0x120] sm:$0xf]
        %v322 = vld [vmem:[#allocation2 + $0x124] sm:$0xf]
        %v323 = vld [vmem:[#allocation2 + $0x128] sm:$0xf]
        %v324 = vld [vmem:[#allocation2 + $0x12c] sm:$0xf]
        %v325 = vld [vmem:[#allocation2 + $0x130] sm:$0xf]
        %v326 = vld [vmem:[#allocation2 + $0x134] sm:$0xf]
        %v327 = vld [vmem:[#allocation2 + $0x138] sm:$0xf]
        %v328 = vld [vmem:[#allocation2 + $0x13c] sm:$0xf]
        %v329 = vld [vmem:[#allocation2 + $0x140] sm:$0xf]
        %v330 = vld [vmem:[#allocation2 + $0x144] sm:$0xf]
        %v331 = vld [vmem:[#allocation2 + $0x148] sm:$0xf]
        %v332 = vld [vmem:[#allocation2 + $0x14c] sm:$0xf]
        %v333 = vld [vmem:[#allocation2 + $0x150] sm:$0xf]
        %v334 = vld [vmem:[#allocation2 + $0x154] sm:$0xf]
        %v335 = vld [vmem:[#allocation2 + $0x158] sm:$0xf]
        %v336 = vld [vmem:[#allocation2 + $0x15c] sm:$0xf]
        %v337 = vld [vmem:[#allocation2 + $0x160] sm:$0xf]
        %v338 = vld [vmem:[#allocation2 + $0x164] sm:$0xf]
        %v339 = vld [vmem:[#allocation2 + $0x168] sm:$0xf]
        %v340 = vld [vmem:[#allocation2 + $0x16c] sm:$0xf]
        %v341 = vld [vmem:[#allocation2 + $0x170] sm:$0xf]
        %v342 = vld [vmem:[#allocation2 + $0x174] sm:$0xf]
        %v343 = vld [vmem:[#allocation2 + $0x178] sm:$0xf]
        %v344 = vld [vmem:[#allocation2 + $0x17c] sm:$0xf]
        %v345 = vld [vmem:[#allocation2 + $0x180] sm:$0xf]
        %v346 = vld [vmem:[#allocation2 + $0x184] sm:$0xf]
        %v347 = vld [vmem:[#allocation2 + $0x188] sm:$0xf]
        %v348 = vld [vmem:[#allocation2 + $0x18c] sm:$0xf]
        %v349 = vld [vmem:[#allocation2 + $0x190] sm:$0xf]
        %v350 = vld [vmem:[#allocation2 + $0x194] sm:$0xf]
        %v351 = vld [vmem:[#allocation2 + $0x198] sm:$0xf]
        %v352 = vld [vmem:[#allocation2 + $0x19c] sm:$0xf]
        %v353 = vld [vmem:[#allocation2 + $0x1a0] sm:$0xf]
        %v354 = vld [vmem:[#allocation2 + $0x1a4] sm:$0xf]
        %v355 = vld [vmem:[#allocation2 + $0x1a8] sm:$0xf]
        %v356 = vld [vmem:[#allocation2 + $0x1ac] sm:$0xf]
        %v357 = vld [vmem:[#allocation2 + $0x1b0] sm:$0xf]
        %v358 = vld [vmem:[#allocation2 + $0x1b4] sm:$0xf]
        %v359 = vld [vmem:[#allocation2 + $0x1b8] sm:$0xf]
        %v360 = vld [vmem:[#allocation2 + $0x1bc] sm:$0xf]
        %v361 = vld [vmem:[#allocation2 + $0x1c0] sm:$0xf]
        %v362 = vld [vmem:[#allocation2 + $0x1c4] sm:$0xf]
        %v363 = vld [vmem:[#allocation2 + $0x1c8] sm:$0xf]
        %v364 = vld [vmem:[#allocation2 + $0x1cc] sm:$0xf]
        %v365 = vld [vmem:[#allocation2 + $0x1d0] sm:$0xf]
        %v366 = vld [vmem:[#allocation2 + $0x1d4] sm:$0xf]
        %v367 = vld [vmem:[#allocation2 + $0x1d8] sm:$0xf]
        %v368 = vld [vmem:[#allocation2 + $0x1dc] sm:$0xf]
        %v369 = vld [vmem:[#allocation2 + $0x1e0] sm:$0xf]
        %v370 = vld [vmem:[#allocation2 + $0x1e4] sm:$0xf]
        %v371 = vld [vmem:[#allocation2 + $0x1e8] sm:$0xf]
        %v372 = vld [vmem:[#allocation2 + $0x1ec] sm:$0xf]
        %v373 = vld [vmem:[#allocation2 + $0x1f0] sm:$0xf]
        %v374 = vld [vmem:[#allocation2 + $0x1f4] sm:$0xf]
        %v375 = vld [vmem:[#allocation2 + $0x1f8] sm:$0xf]
        %v376 = vld [vmem:[#allocation2 + $0x1fc] sm:$0xf]
        %v385 = vunpack.c.l.b16 %v241
        %v386 = vunpack.c.h.b16 %v241
        %v387 = vunpack.c.l.b16 %v242
        %v388 = vunpack.c.h.b16 %v242
        %v389 = vunpack.c.l.b16 %v243
        %v390 = vunpack.c.h.b16 %v243
        %v391 = vunpack.c.l.b16 %v244
        %v392 = vunpack.c.h.b16 %v244
        %v393 = vunpack.c.l.b16 %v245
        %v394 = vunpack.c.h.b16 %v245
        %v395 = vunpack.c.l.b16 %v246
        %v396 = vunpack.c.h.b16 %v246
        %v397 = vunpack.c.l.b16 %v247
        %v398 = vunpack.c.h.b16 %v247
        %v399 = vunpack.c.l.b16 %v248
        %v400 = vunpack.c.h.b16 %v248
        %v401 = vpack.c.b16 %v393, %v385
        %v402 = vpack.c.b16 %v394, %v386
        %v403 = vpack.c.b16 %v395, %v387
        %v404 = vpack.c.b16 %v396, %v388
        %v405 = vpack.c.b16 %v397, %v389
        %v406 = vpack.c.b16 %v398, %v390
        %v407 = vpack.c.b16 %v399, %v391
        %v408 = vpack.c.b16 %v400, %v392
        %v545 = vunpack.c.l.b16 %v249
        %v546 = vunpack.c.l.b16 %v250
        %v547 = vunpack.c.l.b16 %v251
        %v548 = vunpack.c.l.b16 %v252
        %v549 = vunpack.c.l.b16 %v253
        %v550 = vunpack.c.l.b16 %v254
        %v551 = vunpack.c.l.b16 %v255
        %v552 = vunpack.c.l.b16 %v256
        %v553 = vunpack.c.l.b16 %v257
        %v554 = vunpack.c.l.b16 %v258
        %v555 = vunpack.c.l.b16 %v259
        %v556 = vunpack.c.l.b16 %v260
        %v557 = vunpack.c.l.b16 %v261
        %v558 = vunpack.c.l.b16 %v262
        %v559 = vunpack.c.l.b16 %v263
        %v560 = vunpack.c.l.b16 %v264
        %v561 = vunpack.c.l.b16 %v265
        %v562 = vunpack.c.l.b16 %v266
        %v563 = vunpack.c.l.b16 %v267
        %v564 = vunpack.c.l.b16 %v268
        %v565 = vunpack.c.l.b16 %v269
        %v566 = vunpack.c.l.b16 %v270
        %v567 = vunpack.c.l.b16 %v271
        %v568 = vunpack.c.l.b16 %v272
        %v569 = vunpack.c.l.b16 %v273
        %v570 = vunpack.c.l.b16 %v274
        %v571 = vunpack.c.l.b16 %v275
        %v572 = vunpack.c.l.b16 %v276
        %v573 = vunpack.c.l.b16 %v277
        %v574 = vunpack.c.l.b16 %v278
        %v575 = vunpack.c.l.b16 %v279
        %v576 = vunpack.c.l.b16 %v280
        %v577 = vunpack.c.l.b16 %v281
        %v578 = vunpack.c.l.b16 %v282
        %v579 = vunpack.c.l.b16 %v283
        %v580 = vunpack.c.l.b16 %v284
        %v581 = vunpack.c.l.b16 %v285
        %v582 = vunpack.c.l.b16 %v286
        %v583 = vunpack.c.l.b16 %v287
        %v584 = vunpack.c.l.b16 %v288
        %v585 = vunpack.c.l.b16 %v289
        %v586 = vunpack.c.l.b16 %v290
        %v587 = vunpack.c.l.b16 %v291
        %v588 = vunpack.c.l.b16 %v292
        %v589 = vunpack.c.l.b16 %v293
        %v590 = vunpack.c.l.b16 %v294
        %v591 = vunpack.c.l.b16 %v295
        %v592 = vunpack.c.l.b16 %v296
        %v593 = vunpack.c.l.b16 %v297
        %v594 = vunpack.c.l.b16 %v298
        %v595 = vunpack.c.l.b16 %v299
        %v596 = vunpack.c.l.b16 %v300
        %v597 = vunpack.c.l.b16 %v301
        %v598 = vunpack.c.l.b16 %v302
        %v599 = vunpack.c.l.b16 %v303
        %v600 = vunpack.c.l.b16 %v304
        %v601 = vunpack.c.l.b16 %v305
        %v602 = vunpack.c.l.b16 %v306
        %v603 = vunpack.c.l.b16 %v307
        %v604 = vunpack.c.l.b16 %v308
        %v605 = vunpack.c.l.b16 %v309
        %v606 = vunpack.c.l.b16 %v310
        %v607 = vunpack.c.l.b16 %v311
        %v608 = vunpack.c.l.b16 %v312
        %v609 = vunpack.c.l.b16 %v313
        %v610 = vunpack.c.l.b16 %v314
        %v611 = vunpack.c.l.b16 %v315
        %v612 = vunpack.c.l.b16 %v316
        %v613 = vunpack.c.l.b16 %v317
        %v614 = vunpack.c.l.b16 %v318
        %v615 = vunpack.c.l.b16 %v319
        %v616 = vunpack.c.l.b16 %v320
        %v617 = vunpack.c.l.b16 %v321
        %v618 = vunpack.c.l.b16 %v322
        %v619 = vunpack.c.l.b16 %v323
        %v620 = vunpack.c.l.b16 %v324
        %v621 = vunpack.c.l.b16 %v325
        %v622 = vunpack.c.l.b16 %v326
        %v623 = vunpack.c.l.b16 %v327
        %v624 = vunpack.c.l.b16 %v328
        %v625 = vunpack.c.l.b16 %v329
        %v626 = vunpack.c.l.b16 %v330
        %v627 = vunpack.c.l.b16 %v331
        %v628 = vunpack.c.l.b16 %v332
        %v629 = vunpack.c.l.b16 %v333
        %v630 = vunpack.c.l.b16 %v334
        %v631 = vunpack.c.l.b16 %v335
        %v632 = vunpack.c.l.b16 %v336
        %v633 = vunpack.c.l.b16 %v337
        %v634 = vunpack.c.l.b16 %v338
        %v635 = vunpack.c.l.b16 %v339
        %v636 = vunpack.c.l.b16 %v340
        %v637 = vunpack.c.l.b16 %v341
        %v638 = vunpack.c.l.b16 %v342
        %v639 = vunpack.c.l.b16 %v343
        %v640 = vunpack.c.l.b16 %v344
        %v641 = vunpack.c.l.b16 %v345
        %v642 = vunpack.c.l.b16 %v346
        %v643 = vunpack.c.l.b16 %v347
        %v644 = vunpack.c.l.b16 %v348
        %v645 = vunpack.c.l.b16 %v349
        %v646 = vunpack.c.l.b16 %v350
        %v647 = vunpack.c.l.b16 %v351
        %v648 = vunpack.c.l.b16 %v352
        %v649 = vunpack.c.l.b16 %v353
        %v650 = vunpack.c.l.b16 %v354
        %v651 = vunpack.c.l.b16 %v355
        %v652 = vunpack.c.l.b16 %v356
        %v653 = vunpack.c.l.b16 %v357
        %v654 = vunpack.c.l.b16 %v358
        %v655 = vunpack.c.l.b16 %v359
        %v656 = vunpack.c.l.b16 %v360
        %v657 = vunpack.c.l.b16 %v361
        %v658 = vunpack.c.l.b16 %v362
        %v659 = vunpack.c.l.b16 %v363
        %v660 = vunpack.c.l.b16 %v364
        %v661 = vunpack.c.l.b16 %v365
        %v662 = vunpack.c.l.b16 %v366
        %v663 = vunpack.c.l.b16 %v367
        %v664 = vunpack.c.l.b16 %v368
        %v665 = vunpack.c.l.b16 %v369
        %v666 = vunpack.c.l.b16 %v370
        %v667 = vunpack.c.l.b16 %v371
        %v668 = vunpack.c.l.b16 %v372
        %v669 = vunpack.c.l.b16 %v373
        %v670 = vunpack.c.l.b16 %v374
        %v671 = vunpack.c.l.b16 %v375
        %v672 = vunpack.c.l.b16 %v376
        %v673 = vpack.c.b16 %v546, %v545
        %v674 = vpack.c.b16 %v548, %v547
        %v675 = vpack.c.b16 %v550, %v549
        %v676 = vpack.c.b16 %v552, %v551
        %v677 = vpack.c.b16 %v554, %v553
        %v678 = vpack.c.b16 %v556, %v555
        %v679 = vpack.c.b16 %v558, %v557
        %v680 = vpack.c.b16 %v560, %v559
        %v681 = vpack.c.b16 %v562, %v561
        %v682 = vpack.c.b16 %v564, %v563
        %v683 = vpack.c.b16 %v566, %v565
        %v684 = vpack.c.b16 %v568, %v567
        %v685 = vpack.c.b16 %v570, %v569
        %v686 = vpack.c.b16 %v572, %v571
        %v687 = vpack.c.b16 %v574, %v573
        %v688 = vpack.c.b16 %v576, %v575
        %v689 = vpack.c.b16 %v578, %v577
        %v690 = vpack.c.b16 %v580, %v579
        %v691 = vpack.c.b16 %v582, %v581
        %v692 = vpack.c.b16 %v584, %v583
        %v693 = vpack.c.b16 %v586, %v585
        %v694 = vpack.c.b16 %v588, %v587
        %v695 = vpack.c.b16 %v590, %v589
        %v696 = vpack.c.b16 %v592, %v591
        %v697 = vpack.c.b16 %v594, %v593
        %v698 = vpack.c.b16 %v596, %v595
        %v699 = vpack.c.b16 %v598, %v597
        %v700 = vpack.c.b16 %v600, %v599
        %v701 = vpack.c.b16 %v602, %v601
        %v702 = vpack.c.b16 %v604, %v603
        %v703 = vpack.c.b16 %v606, %v605
        %v704 = vpack.c.b16 %v608, %v607
        %v705 = vpack.c.b16 %v610, %v609
        %v706 = vpack.c.b16 %v612, %v611
        %v707 = vpack.c.b16 %v614, %v613
        %v708 = vpack.c.b16 %v616, %v615
        %v709 = vpack.c.b16 %v618, %v617
        %v710 = vpack.c.b16 %v620, %v619
        %v711 = vpack.c.b16 %v622, %v621
        %v712 = vpack.c.b16 %v624, %v623
        %v713 = vpack.c.b16 %v626, %v625
        %v714 = vpack.c.b16 %v628, %v627
        %v715 = vpack.c.b16 %v630, %v629
        %v716 = vpack.c.b16 %v632, %v631
        %v717 = vpack.c.b16 %v634, %v633
        %v718 = vpack.c.b16 %v636, %v635
        %v719 = vpack.c.b16 %v638, %v637
        %v720 = vpack.c.b16 %v640, %v639
        %v721 = vpack.c.b16 %v642, %v641
        %v722 = vpack.c.b16 %v644, %v643
        %v723 = vpack.c.b16 %v646, %v645
        %v724 = vpack.c.b16 %v648, %v647
        %v725 = vpack.c.b16 %v650, %v649
        %v726 = vpack.c.b16 %v652, %v651
        %v727 = vpack.c.b16 %v654, %v653
        %v728 = vpack.c.b16 %v656, %v655
        %v729 = vpack.c.b16 %v658, %v657
        %v730 = vpack.c.b16 %v660, %v659
        %v731 = vpack.c.b16 %v662, %v661
        %v732 = vpack.c.b16 %v664, %v663
        %v733 = vpack.c.b16 %v666, %v665
        %v734 = vpack.c.b16 %v668, %v667
        %v735 = vpack.c.b16 %v670, %v669
        %v736 = vpack.c.b16 %v672, %v671
        %801 = vmatprep.subr.bf16.mxu0 0
        %802 = vmatpush1.bf16.msra.mxu0 %v673
        %803 = vmatprep.subr.bf16.mxu0 0
        %804 = vmatpush1.bf16.msra.mxu0 %v674
        %805 = vmatprep.subr.bf16.mxu0 0
        %806 = vmatpush1.bf16.msra.mxu0 %v675
        %807 = vmatprep.subr.bf16.mxu0 0
        %808 = vmatpush1.bf16.msra.mxu0 %v676
        %809 = vmatprep.subr.bf16.mxu0 0
        %810 = vmatpush1.bf16.msra.mxu0 %v677
        %811 = vmatprep.subr.bf16.mxu0 0
        %812 = vmatpush1.bf16.msra.mxu0 %v678
        %813 = vmatprep.subr.bf16.mxu0 0
        %814 = vmatpush1.bf16.msra.mxu0 %v679
        %815 = vmatprep.subr.bf16.mxu0 0
        %816 = vmatpush1.bf16.msra.mxu0 %v680
        %817 = vmatprep.subr.bf16.mxu0 0
        %818 = vmatpush1.bf16.msra.mxu0 %v681
        %819 = vmatprep.subr.bf16.mxu0 0
        %820 = vmatpush1.bf16.msra.mxu0 %v682
        %821 = vmatprep.subr.bf16.mxu0 0
        %822 = vmatpush1.bf16.msra.mxu0 %v683
        %823 = vmatprep.subr.bf16.mxu0 0
        %824 = vmatpush1.bf16.msra.mxu0 %v684
        %825 = vmatprep.subr.bf16.mxu0 0
        %826 = vmatpush1.bf16.msra.mxu0 %v685
        %827 = vmatprep.subr.bf16.mxu0 0
        %828 = vmatpush1.bf16.msra.mxu0 %v686
        %829 = vmatprep.subr.bf16.mxu0 0
        %830 = vmatpush1.bf16.msra.mxu0 %v687
        %831 = vmatprep.subr.bf16.mxu0 0
        %832 = vmatpush1.bf16.msra.mxu0 %v688
        %833 = vmatprep.mubr.bf16.mxu0 %v402
        %834 = vmatmul.mubr.bf16.gmra.mrb[0].mxu0 %v401
        %v835 = vpop.f32.mrb[0].mxu0
        %v836 = vadd.f32 0.0, %v835
        %v837 = vpop.f32.mrb[0].mxu0
        %v838 = vpop.f32.mrb[0].mxu0
        %v839 = vadd.f32 0.0, %v838
        %v840 = vpop.f32.mrb[0].mxu0
        %841 = vdwg.mxu0
        %842 = vmatprep.subr.bf16.mxu0 0
        %843 = vmatpush1.bf16.msra.mxu0 %v689
        %844 = vmatprep.subr.bf16.mxu0 0
        %845 = vmatpush1.bf16.msra.mxu0 %v690
        %846 = vmatprep.subr.bf16.mxu0 0
        %847 = vmatpush1.bf16.msra.mxu0 %v691
        %848 = vmatprep.subr.bf16.mxu0 0
        %849 = vmatpush1.bf16.msra.mxu0 %v692
        %850 = vmatprep.subr.bf16.mxu0 0
        %851 = vmatpush1.bf16.msra.mxu0 %v693
        %852 = vmatprep.subr.bf16.mxu0 0
        %853 = vmatpush1.bf16.msra.mxu0 %v694
        %854 = vmatprep.subr.bf16.mxu0 0
        %855 = vmatpush1.bf16.msra.mxu0 %v695
        %856 = vmatprep.subr.bf16.mxu0 0
        %857 = vmatpush1.bf16.msra.mxu0 %v696
        %858 = vmatprep.subr.bf16.mxu0 0
        %859 = vmatpush1.bf16.msra.mxu0 %v697
        %860 = vmatprep.subr.bf16.mxu0 0
        %861 = vmatpush1.bf16.msra.mxu0 %v698
        %862 = vmatprep.subr.bf16.mxu0 0
        %863 = vmatpush1.bf16.msra.mxu0 %v699
        %864 = vmatprep.subr.bf16.mxu0 0
        %865 = vmatpush1.bf16.msra.mxu0 %v700
        %866 = vmatprep.subr.bf16.mxu0 0
        %867 = vmatpush1.bf16.msra.mxu0 %v701
        %868 = vmatprep.subr.bf16.mxu0 0
        %869 = vmatpush1.bf16.msra.mxu0 %v702
        %870 = vmatprep.subr.bf16.mxu0 0
        %871 = vmatpush1.bf16.msra.mxu0 %v703
        %872 = vmatprep.subr.bf16.mxu0 0
        %873 = vmatpush1.bf16.msra.mxu0 %v704
        %874 = vmatprep.mubr.bf16.mxu0 %v404
        %875 = vmatmul.mubr.bf16.gmra.mrb[0].mxu0 %v403
        %v876 = vpop.f32.mrb[0].mxu0
        %v877 = vadd.f32 %v836, %v876
        %v878 = vpop.f32.mrb[0].mxu0
        %v879 = vpop.f32.mrb[0].mxu0
        %v880 = vadd.f32 %v839, %v879
        %v881 = vpop.f32.mrb[0].mxu0
        %882 = vdwg.mxu0
        %883 = vmatprep.subr.bf16.mxu0 0
        %884 = vmatpush1.bf16.msra.mxu0 %v705
        %885 = vmatprep.subr.bf16.mxu0 0
        %886 = vmatpush1.bf16.msra.mxu0 %v706
        %887 = vmatprep.subr.bf16.mxu0 0
        %888 = vmatpush1.bf16.msra.mxu0 %v707
        %889 = vmatprep.subr.bf16.mxu0 0
        %890 = vmatpush1.bf16.msra.mxu0 %v708
        %891 = vmatprep.subr.bf16.mxu0 0
        %892 = vmatpush1.bf16.msra.mxu0 %v709
        %893 = vmatprep.subr.bf16.mxu0 0
        %894 = vmatpush1.bf16.msra.mxu0 %v710
        %895 = vmatprep.subr.bf16.mxu0 0
        %896 = vmatpush1.bf16.msra.mxu0 %v711
        %897 = vmatprep.subr.bf16.mxu0 0
        %898 = vmatpush1.bf16.msra.mxu0 %v712
        %899 = vmatprep.subr.bf16.mxu0 0
        %900 = vmatpush1.bf16.msra.mxu0 %v713
        %901 = vmatprep.subr.bf16.mxu0 0
        %902 = vmatpush1.bf16.msra.mxu0 %v714
        %903 = vmatprep.subr.bf16.mxu0 0
        %904 = vmatpush1.bf16.msra.mxu0 %v715
        %905 = vmatprep.subr.bf16.mxu0 0
        %906 = vmatpush1.bf16.msra.mxu0 %v716
        %907 = vmatprep.subr.bf16.mxu0 0
        %908 = vmatpush1.bf16.msra.mxu0 %v717
        %909 = vmatprep.subr.bf16.mxu0 0
        %910 = vmatpush1.bf16.msra.mxu0 %v718
        %911 = vmatprep.subr.bf16.mxu0 0
        %912 = vmatpush1.bf16.msra.mxu0 %v719
        %913 = vmatprep.subr.bf16.mxu0 0
        %914 = vmatpush1.bf16.msra.mxu0 %v720
        %915 = vmatprep.mubr.bf16.mxu0 %v406
        %916 = vmatmul.mubr.bf16.gmra.mrb[0].mxu0 %v405
        %v917 = vpop.f32.mrb[0].mxu0
        %v918 = vadd.f32 %v877, %v917
        %v919 = vpop.f32.mrb[0].mxu0
        %v920 = vpop.f32.mrb[0].mxu0
        %v921 = vadd.f32 %v880, %v920
        %v922 = vpop.f32.mrb[0].mxu0
        %923 = vdwg.mxu0
        %924 = vmatprep.subr.bf16.mxu0 0
        %925 = vmatpush1.bf16.msra.mxu0 %v721
        %926 = vmatprep.subr.bf16.mxu0 0
        %927 = vmatpush1.bf16.msra.mxu0 %v722
        %928 = vmatprep.subr.bf16.mxu0 0
        %929 = vmatpush1.bf16.msra.mxu0 %v723
        %930 = vmatprep.subr.bf16.mxu0 0
        %931 = vmatpush1.bf16.msra.mxu0 %v724
        %932 = vmatprep.subr.bf16.mxu0 0
        %933 = vmatpush1.bf16.msra.mxu0 %v725
        %934 = vmatprep.subr.bf16.mxu0 0
        %935 = vmatpush1.bf16.msra.mxu0 %v726
        %936 = vmatprep.subr.bf16.mxu0 0
        %937 = vmatpush1.bf16.msra.mxu0 %v727
        %938 = vmatprep.subr.bf16.mxu0 0
        %939 = vmatpush1.bf16.msra.mxu0 %v728
        %940 = vmatprep.subr.bf16.mxu0 0
        %941 = vmatpush1.bf16.msra.mxu0 %v729
        %942 = vmatprep.subr.bf16.mxu0 0
        %943 = vmatpush1.bf16.msra.mxu0 %v730
        %944 = vmatprep.subr.bf16.mxu0 0
        %945 = vmatpush1.bf16.msra.mxu0 %v731
        %946 = vmatprep.subr.bf16.mxu0 0
        %947 = vmatpush1.bf16.msra.mxu0 %v732
        %948 = vmatprep.subr.bf16.mxu0 0
        %949 = vmatpush1.bf16.msra.mxu0 %v733
        %950 = vmatprep.subr.bf16.mxu0 0
        %951 = vmatpush1.bf16.msra.mxu0 %v734
        %952 = vmatprep.subr.bf16.mxu0 0
        %953 = vmatpush1.bf16.msra.mxu0 %v735
        %954 = vmatprep.subr.bf16.mxu0 0
        %955 = vmatpush1.bf16.msra.mxu0 %v736
        %956 = vmatprep.mubr.bf16.mxu0 %v408
        %957 = vmatmul.mubr.bf16.gmra.mrb[0].mxu0 %v407
        %v958 = vpop.f32.mrb[0].mxu0
        %v959 = vadd.f32 %v918, %v958
        %v960 = vpop.f32.mrb[0].mxu0
        %v961 = vpop.f32.mrb[0].mxu0
        %v962 = vadd.f32 %v921, %v961
        %v963 = vpop.f32.mrb[0].mxu0
        %964 = vdwg.mxu0
        %v965 = vpack.c.bf16 %v962, %v959
        %v967 = vunpack.c.l.b16 %v965
        %v968 = vunpack.c.h.b16 %v965
        %v969 = vpack.c.b16 %v967, %v967
        %v970 = vpack.c.b16 %v968, %v968
        %973 = vst [vmem:[%s230] sm:$0xf] %v969
        %974 = vst [vmem:[%s230 + $0x4] sm:$0xf] %v970
        %v975 = vadd.f32 %v959, %v962
        %976 = vst [vmem:[%s235] sm:$0xff] %v975
        %v977 = vmul.f32 %v959, %v959
        %v978 = vmul.f32 %v962, %v962
        %v979 = vadd.f32 %v977, %v978
        %980 = vst [vmem:[%s239] sm:$0xff] %v979
        %s981 = smul.u32 2, %s17
        %p982 = scmp.lt.s32.totalorder %s981, 3
        %s983 = scalar_select %p982, %s981, 3
        %s984 = smul.addr %s983, 4
        %s985 = scalar_lea.vmem %s2, %s984
        %p986 = scmp.lt.s32.totalorder %s17, 1
        %s987 = scalar_select %p986, %s17, 1
        %s988 = smul.addr %s987, 8
        %s989 = scalar_lea.vmem %s3, %s988
        %p990 = scmp.lt.s32.totalorder %s17, 1
        %s991 = scalar_select %p990, %s17, 1
        %s992 = smul.addr %s991, 8
        %s993 = scalar_lea.vmem %s4, %s992
        // Predicated region
        $region33: #{_lambda_.9} parent=27 // pred_check
          %p994 = pneg %p82
        $region34: #{_lambda_.9} parent=27 // pred_check_branch
          %996 = sbr.rel (%p994) target = $region36
        $region35: #{_lambda_.9} parent=27 // pred_region
          %s997 = smul.u32 2, %s17
        $region36: #{_lambda_.9} parent=27 // pred_fallthru
          _
        // Predicated region
        $region37: #{_lambda_.9} parent=27 // pred_check
          %p998 = pneg %p108
        $region38: #{_lambda_.9} parent=27 // pred_check_branch
          %1000 = sbr.rel (%p998) target = $region40
        $region39: #{_lambda_.9} parent=27 // pred_region
          _
        $region40: #{_lambda_.9} parent=27 // pred_fallthru
          _
        // Predicated region
        $region41: #{_lambda_.9} parent=27 // pred_check
          %p1001 = pneg %p134
        $region42: #{_lambda_.9} parent=27 // pred_check_branch
          %1003 = sbr.rel (%p1001) target = $region44
        $region43: #{_lambda_.9} parent=27 // pred_region
          _
        $region44: #{_lambda_.9} parent=27 // pred_fallthru
          _
      $region28: #{_lambda_.9} parent=5 // pred_fallthru
        _
      %p1004 = scmp.le.s32.totalorder 2, %s12
      // Predicated region
      $region45: #{_lambda_.9} parent=5 // pred_check
        %p1005 = pneg %p1004
      $region46: #{_lambda_.9} parent=5 // pred_check_branch
        %1007 = sbr.rel (%p1005) target = $region48
      $region47: #{_lambda_.9} parent=5 // pred_region
        %s1008 = ssub.s32 %s12, 2
        // Predicated region
        $region49: #{_lambda_.9} parent=47 // pred_check
          %p1009 = pneg %p88
        $region50: #{_lambda_.9} parent=47 // pred_check_branch
          %1011 = sbr.rel (%p1009) target = $region52
        $region51: #{_lambda_.9} parent=47 // pred_region
          %s1012 = smul.u32 2, %s18
          %p1013 = scmp.lt.s32.totalorder %s1012, 3
          %s1014 = scalar_select %p1013, %s1012, 3
          %s1015 = smul.addr %s1014, 4
          %s1016 = scalar_lea.vmem %s2, %s1015
        $region52: #{_lambda_.9} parent=47 // pred_fallthru
          _
        // Predicated region
        $region53: #{_lambda_.9} parent=47 // pred_check
          %p1017 = pneg %p114
        $region54: #{_lambda_.9} parent=47 // pred_check_branch
          %1019 = sbr.rel (%p1017) target = $region56
        $region55: #{_lambda_.9} parent=47 // pred_region
          %p1020 = scmp.lt.s32.totalorder %s18, 1
          %s1021 = scalar_select %p1020, %s18, 1
          %s1022 = smul.addr %s1021, 8
          %s1023 = scalar_lea.vmem %s3, %s1022
        $region56: #{_lambda_.9} parent=47 // pred_fallthru
          _
        // Predicated region
        $region57: #{_lambda_.9} parent=47 // pred_check
          %p1024 = pneg %p140
        $region58: #{_lambda_.9} parent=47 // pred_check_branch
          %1026 = sbr.rel (%p1024) target = $region60
        $region59: #{_lambda_.9} parent=47 // pred_region
          %p1027 = scmp.lt.s32.totalorder %s18, 1
          %s1028 = scalar_select %p1027, %s18, 1
          %s1029 = smul.addr %s1028, 8
          %s1030 = scalar_lea.vmem %s4, %s1029
        $region60: #{_lambda_.9} parent=47 // pred_fallthru
          _
      $region48: #{_lambda_.9} parent=5 // pred_fallthru
        _
    $region6: #{_lambda_.9} parent=1 // loop_footer
      %s16 = sadd.s32 1, %s12
    $region7: #{_lambda_.9} parent=1 // loop_footer_branch
      %11 = sbr.rel target = $region3
    $region8: #{_lambda_.9} parent=1 // loop_exit
      _
    %1031 = vsyncpa [#allocation3], 1
    %s1032 = scalar_lea.sflag [#allocation3], 1
    %1033 = vsyncpa %s1032, 1

// kernel: _lambda_.12
$region0: #{_lambda_.12}
  #allocation0 [shape = 'u32[]', space=smem, size = 0x4, offset = 0x4, fixed_abs, tag = 'smem constant byte address 0x4 - core index']
  #allocation1 [shape = 'u32[144,128]{1,0:T(1,128)}', space=vmem, size = 0x12000, scoped, tag = 'internal scratch']
  %s0 = inlined_call_operand.vmem [shape: bf16[32,256], index: 0, kind: input, shape index: {}]
  %s1 = inlined_call_operand.vmem [shape: f32[1,256], index: 1, kind: input, shape index: {}]
  %s2 = inlined_call_operand.vmem [shape: f32[1,256], index: 2, kind: input, shape index: {}]
  %s3 = inlined_call_operand.vmem [shape: bf16[32,256], index: 3, kind: output, shape index: {}]
  %s4 = sld [smem:[#allocation0]]
  $region45: #{_lambda_.12} parent=0
    _
  %s6 = ssub.s32 1, %s4
  %s7 = scalar_select 0, %s6, %s4
  loop: start=0, step=1, limit=4
  $region2: #{_lambda_.12} parent=0 // loop_pre_header
    _
  $region3: #{_lambda_.12} parent=0 // loop_header
    %s9 = sphi 0, %s13
    %p10 = scmp.ge.s32.totalorder %s9, 4
    %s19 = sphi 0, %s21
    %s22 = sphi 0, %s19
    %s23 = sphi 0, %s22
    %s39 = sphi 0, %s23
    %s43 = sphi 0, %s43
    %s45 = sphi 0, %s43
    %s46 = sphi 0, %s45
    %s60 = sphi 0, %s46
    %s64 = sphi 0, %s64
    %s66 = sphi 0, %s64
    %s67 = sphi 0, %s66
    %s81 = sphi 0, %s67
    %s87 = sphi 0, %s89
    %s90 = sphi 0, %s87
    %s91 = sphi 0, %s90
    %s107 = sphi 0, %s91
  $region4: #{_lambda_.12} parent=0 // loop_header_branch
    %12 = sbr.rel (%p10) target = $region8
  $region5: #{_lambda_.12} parent=0 // loop_body
    %s14 = ssub.s32 %s9, 1
    %s15 = ssub.s32 %s9, 2
    %s16 = sadd.s32 %s9, 1
    %s17 = ssub.s32 %s9, %s16
    %p18 = scmp.eq.s32.totalorder %s17, 0
    %s20 = sadd.s32 %s19, 1
    %s21 = scalar_select %p18, %s19, %s20
    %p24 = pneg %p18
    %p25 = scmp.eq.s32.totalorder %s9, 1
    %p26 = por %p24, %p25
    %p27 = scmp.ne.s32.totalorder %s19, %s22
    %p28 = scmp.eq.s32.totalorder %s9, 0
    %p29 = por %p27, %p28
    %p30 = scmp.ne.s32.totalorder %s19, %s22
    %p31 = scmp.eq.s32.totalorder %s14, 1
    %p32 = por %p30, %p31
    %p33 = scmp.ne.s32.totalorder %s22, %s23
    %p34 = scmp.eq.s32.totalorder %s14, 0
    %p35 = por %p33, %p34
    %p36 = scmp.ne.s32.totalorder %s22, %s23
    %p37 = scmp.eq.s32.totalorder %s15, 1
    %p38 = por %p36, %p37
    %p40 = scmp.ne.s32.totalorder %s23, %s39
    %p41 = scmp.eq.s32.totalorder %s15, 0
    %p42 = por %p40, %p41
    %s44 = sadd.s32 %s43, 1
    %p47 = scmp.eq.s32.totalorder %s9, 1
    %p48 = scmp.ne.s32.totalorder %s43, %s45
    %p49 = scmp.eq.s32.totalorder %s9, 0
    %p50 = por %p48, %p49
    %p51 = scmp.ne.s32.totalorder %s43, %s45
    %p52 = scmp.eq.s32.totalorder %s14, 1
    %p53 = por %p51, %p52
    %p54 = scmp.ne.s32.totalorder %s45, %s46
    %p55 = scmp.eq.s32.totalorder %s14, 0
    %p56 = por %p54, %p55
    %p57 = scmp.ne.s32.totalorder %s45, %s46
    %p58 = scmp.eq.s32.totalorder %s15, 1
    %p59 = por %p57, %p58
    %p61 = scmp.ne.s32.totalorder %s46, %s60
    %p62 = scmp.eq.s32.totalorder %s15, 0
    %p63 = por %p61, %p62
    %s65 = sadd.s32 %s64, 1
    %p68 = scmp.eq.s32.totalorder %s9, 1
    %p69 = scmp.ne.s32.totalorder %s64, %s66
    %p70 = scmp.eq.s32.totalorder %s9, 0
    %p71 = por %p69, %p70
    %p72 = scmp.ne.s32.totalorder %s64, %s66
    %p73 = scmp.eq.s32.totalorder %s14, 1
    %p74 = por %p72, %p73
    %p75 = scmp.ne.s32.totalorder %s66, %s67
    %p76 = scmp.eq.s32.totalorder %s14, 0
    %p77 = por %p75, %p76
    %p78 = scmp.ne.s32.totalorder %s66, %s67
    %p79 = scmp.eq.s32.totalorder %s15, 1
    %p80 = por %p78, %p79
    %p82 = scmp.ne.s32.totalorder %s67, %s81
    %p83 = scmp.eq.s32.totalorder %s15, 0
    %p84 = por %p82, %p83
    %s85 = ssub.s32 %s9, %s16
    %p86 = scmp.eq.s32.totalorder %s85, 0
    %s88 = sadd.s32 %s87, 1
    %s89 = scalar_select %p86, %s87, %s88
    %p92 = pneg %p86
    %p93 = scmp.eq.s32.totalorder %s9, 1
    %p94 = por %p92, %p93
    %p95 = scmp.ne.s32.totalorder %s87, %s90
    %p96 = scmp.eq.s32.totalorder %s9, 0
    %p97 = por %p95, %p96
    %p98 = scmp.ne.s32.totalorder %s87, %s90
    %p99 = scmp.eq.s32.totalorder %s14, 1
    %p100 = por %p98, %p99
    %p101 = scmp.ne.s32.totalorder %s90, %s91
    %p102 = scmp.eq.s32.totalorder %s14, 0
    %p103 = por %p101, %p102
    %p104 = scmp.ne.s32.totalorder %s90, %s91
    %p105 = scmp.eq.s32.totalorder %s15, 1
    %p106 = por %p104, %p105
    %p108 = scmp.ne.s32.totalorder %s91, %s107
    %p109 = scmp.eq.s32.totalorder %s15, 0
    %p110 = por %p108, %p109
    %p111 = scmp.le.s32.totalorder 1, %s9
    %p112 = scmp.lt.s32.totalorder %s9, 3
    %p113 = pnand %p111, %p112
    %p114 = pneg %p113
    // Predicated region
    $region9: #{_lambda_.12} parent=5 // pred_check
      _
    $region10: #{_lambda_.12} parent=5 // pred_check_branch
      %116 = sbr.rel (%p113) target = $region12
    $region11: #{_lambda_.12} parent=5 // pred_region
      %s117 = ssub.s32 %s9, 1
      // Predicated region
      $region13: #{_lambda_.12} parent=11 // pred_check
        %p118 = pneg %p56
      $region14: #{_lambda_.12} parent=11 // pred_check_branch
        %120 = sbr.rel (%p118) target = $region16
      $region15: #{_lambda_.12} parent=11 // pred_region
        _
      $region16: #{_lambda_.12} parent=11 // pred_fallthru
        _
      // Predicated region
      $region17: #{_lambda_.12} parent=11 // pred_check
        %p121 = pneg %p77
      $region18: #{_lambda_.12} parent=11 // pred_check_branch
        %123 = sbr.rel (%p121) target = $region20
      $region19: #{_lambda_.12} parent=11 // pred_region
        _
      $region20: #{_lambda_.12} parent=11 // pred_fallthru
        _
    $region12: #{_lambda_.12} parent=5 // pred_fallthru
      _
    %p124 = scmp.lt.s32.totalorder %s9, 2
    // Predicated region
    $region21: #{_lambda_.12} parent=5 // pred_check
      %p125 = pneg %p124
    $region22: #{_lambda_.12} parent=5 // pred_check_branch
      %127 = sbr.rel (%p125) target = $region24
    $region23: #{_lambda_.12} parent=5 // pred_region
      // Predicated region
      $region25: #{_lambda_.12} parent=23 // pred_check
        %p128 = pneg %p29
      $region26: #{_lambda_.12} parent=23 // pred_check_branch
        %130 = sbr.rel (%p128) target = $region28
      $region27: #{_lambda_.12} parent=23 // pred_region
        %s131 = smul.u32 2, %s9
        %p132 = scmp.lt.s32.totalorder %s131, 3
        %s133 = scalar_select %p132, %s131, 3
        %s134 = smul.addr %s133, 2
        %s135 = smul.addr %s134, 4
        %s136 = scalar_lea.vmem %s0, %s135
        %s137 = smul.u32 2, %s9
      $region28: #{_lambda_.12} parent=23 // pred_fallthru
        _
    $region24: #{_lambda_.12} parent=5 // pred_fallthru
      _
    %p138 = scmp.le.s32.totalorder 1, %s9
    %p139 = scmp.lt.s32.totalorder %s9, 3
    %p140 = pnand %p138, %p139
    %p141 = pneg %p140
    // Predicated region
    $region29: #{_lambda_.12} parent=5 // pred_check
      _
    $region30: #{_lambda_.12} parent=5 // pred_check_branch
      %143 = sbr.rel (%p140) target = $region32
    $region31: #{_lambda_.12} parent=5 // pred_region
      %s144 = ssub.s32 %s9, 1
      %s145 = smul.u32 2, %s14
      %p146 = scmp.lt.s32.totalorder %s145, 3
      %s147 = scalar_select %p146, %s145, 3
      %s148 = smul.addr %s147, 2
      %s149 = smul.addr %s148, 4
      %s150 = scalar_lea.vmem %s0, %s149
      %p151 = pneg %p35
      %p152 = pneg %p32
      %p153 = pneg %p56
      %p154 = pneg %p53
      %p155 = pneg %p77
      %p156 = pneg %p74
      %p157 = pneg %p103
      %p158 = pneg %p100
      %s159 = smul.u32 2, %s14
      %p160 = scmp.lt.s32.totalorder %s159, 3
      %s161 = scalar_select %p160, %s159, 3
      %s162 = smul.addr %s161, 2
      %s163 = smul.addr %s162, 4
      %s164 = scalar_lea.vmem %s3, %s163
      %s165 = smul.u32 2, %s14
      %p166 = scmp.lt.s32.totalorder %s165, 3
      %s167 = scalar_select %p166, %s165, 3
      %s168 = smul.addr %s167, 2
      %s169 = smul.addr %s168, 4
      %s170 = scalar_lea.vmem %s0, %s169
      %s171 = smul.u32 2, %s14
      %s172 = smul.u32 2, %s14
      %p173 = scmp.lt.s32.totalorder %s172, 3
      %s174 = scalar_select %p173, %s172, 3
      %s175 = smul.addr %s174, 2
      %s176 = smul.addr %s175, 4
      %s177 = scalar_lea.vmem %s3, %s176
      %s178 = smul.u32 2, %s14
      %v179 = vld [vmem:[%s170] sm:$0xff]
      %v180 = vld [vmem:[%s170 + $0x8] sm:$0xff]
      %v181 = vunpack.c.l.bf16 %v179
      %v182 = vunpack.c.h.bf16 %v179
      %v183 = vunpack.c.l.bf16 %v180
      %v184 = vunpack.c.h.bf16 %v180
      %v185 = vld [vmem:[%s1] sm:$0x3]
      %v187 = vlaneseq
      %v188 = vshrl.u32 %v187, 7
      %v189 = vsub.s32 0, %v188
      %v190 = vrot.slane %v185, %v189
      %v191 = vlaneseq
      %v192 = vshrl.u32 %v191, 7
      %v193 = vsub.s32 1, %v192
      %v194 = vrot.slane %v185, %v193
      %v197 = vmul.f32 %v181, %v190
      %v198 = vmul.f32 %v182, %v194
      %v199 = vmul.f32 %v183, %v190
      %v200 = vmul.f32 %v184, %v194
      %v201 = vld [vmem:[%s2] sm:$0x3]
      %v203 = vlaneseq
      %v204 = vshrl.u32 %v203, 7
      %v205 = vsub.s32 0, %v204
      %v206 = vrot.slane %v201, %v205
      %v207 = vlaneseq
      %v208 = vshrl.u32 %v207, 7
      %v209 = vsub.s32 1, %v208
      %v210 = vrot.slane %v201, %v209
      %v213 = vadd.f32 %v197, %v206
      %v214 = vadd.f32 %v198, %v210
      %v215 = vadd.f32 %v199, %v206
      %v216 = vadd.f32 %v200, %v210
      %v217 = vmax.f32 %v213, 0.0
      %v218 = vmax.f32 %v214, 0.0
      %v219 = vmax.f32 %v215, 0.0
      %v220 = vmax.f32 %v216, 0.0
      %v221 = vpack.c.bf16 %v219, %v217
      %v222 = vpack.c.bf16 %v220, %v218
      %v225 = vunpack.c.l.b16 %v221
      %v226 = vunpack.c.l.b16 %v222
      %v227 = vunpack.c.h.b16 %v221
      %v228 = vunpack.c.h.b16 %v222
      %v229 = vpack.c.b16 %v226, %v225
      %v230 = vpack.c.b16 %v228, %v227
      %233 = vst [vmem:[%s177] sm:$0xff] %v229
      %234 = vst [vmem:[%s177 + $0x8] sm:$0xff] %v230
      %s235 = smul.u32 2, %s14
      %p236 = scmp.lt.s32.totalorder %s235, 3
      %s237 = scalar_select %p236, %s235, 3
      %s238 = smul.addr %s237, 2
      %s239 = smul.addr %s238, 4
      %s240 = scalar_lea.vmem %s3, %s239
      // Predicated region
      $region33: #{_lambda_.12} parent=31 // pred_check
        %p241 = pneg %p100
      $region34: #{_lambda_.12} parent=31 // pred_check_branch
        %243 = sbr.rel (%p241) target = $region36
      $region35: #{_lambda_.12} parent=31 // pred_region
        %s244 = smul.u32 2, %s14
      $region36: #{_lambda_.12} parent=31 // pred_fallthru
        _
    $region32: #{_lambda_.12} parent=5 // pred_fallthru
      _
    %p245 = scmp.le.s32.totalorder 2, %s9
    // Predicated region
    $region37: #{_lambda_.12} parent=5 // pred_check
      %p246 = pneg %p245
    $region38: #{_lambda_.12} parent=5 // pred_check_branch
      %248 = sbr.rel (%p246) target = $region40
    $region39: #{_lambda_.12} parent=5 // pred_region
      %s249 = ssub.s32 %s9, 2
      // Predicated region
      $region41: #{_lambda_.12} parent=39 // pred_check
        %p250 = pneg %p106
      $region42: #{_lambda_.12} parent=39 // pred_check_branch
        %252 = sbr.rel (%p250) target = $region44
      $region43: #{_lambda_.12} parent=39 // pred_region
        %s253 = smul.u32 2, %s15
        %p254 = scmp.lt.s32.totalorder %s253, 3
        %s255 = scalar_select %p254, %s253, 3
        %s256 = smul.addr %s255, 2
        %s257 = smul.addr %s256, 4
        %s258 = scalar_lea.vmem %s3, %s257
      $region44: #{_lambda_.12} parent=39 // pred_fallthru
        _
    $region40: #{_lambda_.12} parent=5 // pred_fallthru
      _
  $region6: #{_lambda_.12} parent=0 // loop_footer
    %s13 = sadd.s32 1, %s9
  $region7: #{_lambda_.12} parent=0 // loop_footer_branch
    %8 = sbr.rel target = $region3
  $region8: #{_lambda_.12} parent=0 // loop_exit
    _

// kernel: _lambda_.11
$region0: #{_lambda_.11}
  #allocation0 [shape = 'u32[]', space=smem, size = 0x4, offset = 0x4, fixed_abs, tag = 'smem constant byte address 0x4 - core index']
  #allocation1 [shape = 'u32[144,128]{1,0:T(1,128)}', space=vmem, size = 0x12000, scoped, tag = 'internal scratch']
  %s0 = inlined_call_operand.vmem [shape: bf16[32,1152], index: 0, kind: input, shape index: {}]
  %s1 = inlined_call_operand.vmem [shape: bf16[1152,256], index: 1, kind: input, shape index: {}]
  %s2 = inlined_call_operand.vmem [shape: bf16[32,256], index: 2, kind: output, shape index: {0}]
  %s3 = inlined_call_operand.vmem [shape: f32[2,8,256], index: 3, kind: output, shape index: {1}]
  %s4 = inlined_call_operand.vmem [shape: f32[2,8,256], index: 4, kind: output, shape index: {2}]
  %5 = xla_tuple %s2, %s3, %s4
  %s6 = sld [smem:[#allocation0]]
  $region57: #{_lambda_.11} parent=0
    _
  %s8 = ssub.s32 1, %s6
  %s9 = scalar_select 0, %s8, %s6
  loop: start=0, step=1, limit=4
  $region2: #{_lambda_.11} parent=0 // loop_pre_header
    _
  $region3: #{_lambda_.11} parent=0 // loop_header
    %s11 = sphi 0, %s15
    %p12 = scmp.ge.s32.totalorder %s11, 4
    %s21 = sphi 0, %s23
    %s24 = sphi 0, %s21
    %s25 = sphi 0, %s24
    %s41 = sphi 0, %s25
    %s45 = sphi 0, %s45
    %s47 = sphi 0, %s45
    %s48 = sphi 0, %s47
    %s62 = sphi 0, %s48
    %s68 = sphi 0, %s70
    %s71 = sphi 0, %s68
    %s72 = sphi 0, %s71
    %s88 = sphi 0, %s72
    %s94 = sphi 0, %s96
    %s97 = sphi 0, %s94
    %s98 = sphi 0, %s97
    %s114 = sphi 0, %s98
    %s120 = sphi 0, %s122
    %s123 = sphi 0, %s120
    %s124 = sphi 0, %s123
    %s140 = sphi 0, %s124
  $region4: #{_lambda_.11} parent=0 // loop_header_branch
    %14 = sbr.rel (%p12) target = $region8
  $region5: #{_lambda_.11} parent=0 // loop_body
    %s16 = ssub.s32 %s11, 1
    %s17 = ssub.s32 %s11, 2
    %s18 = sadd.s32 %s11, 1
    %s19 = ssub.s32 %s11, %s18
    %p20 = scmp.eq.s32.totalorder %s19, 0
    %s22 = sadd.s32 %s21, 1
    %s23 = scalar_select %p20, %s21, %s22
    %p26 = pneg %p20
    %p27 = scmp.eq.s32.totalorder %s11, 1
    %p28 = por %p26, %p27
    %p29 = scmp.ne.s32.totalorder %s21, %s24
    %p30 = scmp.eq.s32.totalorder %s11, 0
    %p31 = por %p29, %p30
    %p32 = scmp.ne.s32.totalorder %s21, %s24
    %p33 = scmp.eq.s32.totalorder %s16, 1
    %p34 = por %p32, %p33
    %p35 = scmp.ne.s32.totalorder %s24, %s25
    %p36 = scmp.eq.s32.totalorder %s16, 0
    %p37 = por %p35, %p36
    %p38 = scmp.ne.s32.totalorder %s24, %s25
    %p39 = scmp.eq.s32.totalorder %s17, 1
    %p40 = por %p38, %p39
    %p42 = scmp.ne.s32.totalorder %s25, %s41
    %p43 = scmp.eq.s32.totalorder %s17, 0
    %p44 = por %p42, %p43
    %s46 = sadd.s32 %s45, 1
    %p49 = scmp.eq.s32.totalorder %s11, 1
    %p50 = scmp.ne.s32.totalorder %s45, %s47
    %p51 = scmp.eq.s32.totalorder %s11, 0
    %p52 = por %p50, %p51
    %p53 = scmp.ne.s32.totalorder %s45, %s47
    %p54 = scmp.eq.s32.totalorder %s16, 1
    %p55 = por %p53, %p54
    %p56 = scmp.ne.s32.totalorder %s47, %s48
    %p57 = scmp.eq.s32.totalorder %s16, 0
    %p58 = por %p56, %p57
    %p59 = scmp.ne.s32.totalorder %s47, %s48
    %p60 = scmp.eq.s32.totalorder %s17, 1
    %p61 = por %p59, %p60
    %p63 = scmp.ne.s32.totalorder %s48, %s62
    %p64 = scmp.eq.s32.totalorder %s17, 0
    %p65 = por %p63, %p64
    %s66 = ssub.s32 %s11, %s18
    %p67 = scmp.eq.s32.totalorder %s66, 0
    %s69 = sadd.s32 %s68, 1
    %s70 = scalar_select %p67, %s68, %s69
    %p73 = pneg %p67
    %p74 = scmp.eq.s32.totalorder %s11, 1
    %p75 = por %p73, %p74
    %p76 = scmp.ne.s32.totalorder %s68, %s71
    %p77 = scmp.eq.s32.totalorder %s11, 0
    %p78 = por %p76, %p77
    %p79 = scmp.ne.s32.totalorder %s68, %s71
    %p80 = scmp.eq.s32.totalorder %s16, 1
    %p81 = por %p79, %p80
    %p82 = scmp.ne.s32.totalorder %s71, %s72
    %p83 = scmp.eq.s32.totalorder %s16, 0
    %p84 = por %p82, %p83
    %p85 = scmp.ne.s32.totalorder %s71, %s72
    %p86 = scmp.eq.s32.totalorder %s17, 1
    %p87 = por %p85, %p86
    %p89 = scmp.ne.s32.totalorder %s72, %s88
    %p90 = scmp.eq.s32.totalorder %s17, 0
    %p91 = por %p89, %p90
    %s92 = ssub.s32 %s11, %s18
    %p93 = scmp.eq.s32.totalorder %s92, 0
    %s95 = sadd.s32 %s94, 1
    %s96 = scalar_select %p93, %s94, %s95
    %p99 = pneg %p93
    %p100 = scmp.eq.s32.totalorder %s11, 1
    %p101 = por %p99, %p100
    %p102 = scmp.ne.s32.totalorder %s94, %s97
    %p103 = scmp.eq.s32.totalorder %s11, 0
    %p104 = por %p102, %p103
    %p105 = scmp.ne.s32.totalorder %s94, %s97
    %p106 = scmp.eq.s32.totalorder %s16, 1
    %p107 = por %p105, %p106
    %p108 = scmp.ne.s32.totalorder %s97, %s98
    %p109 = scmp.eq.s32.totalorder %s16, 0
    %p110 = por %p108, %p109
    %p111 = scmp.ne.s32.totalorder %s97, %s98
    %p112 = scmp.eq.s32.totalorder %s17, 1
    %p113 = por %p111, %p112
    %p115 = scmp.ne.s32.totalorder %s98, %s114
    %p116 = scmp.eq.s32.totalorder %s17, 0
    %p117 = por %p115, %p116
    %s118 = ssub.s32 %s11, %s18
    %p119 = scmp.eq.s32.totalorder %s118, 0
    %s121 = sadd.s32 %s120, 1
    %s122 = scalar_select %p119, %s120, %s121
    %p125 = pneg %p119
    %p126 = scmp.eq.s32.totalorder %s11, 1
    %p127 = por %p125, %p126
    %p128 = scmp.ne.s32.totalorder %s120, %s123
    %p129 = scmp.eq.s32.totalorder %s11, 0
    %p130 = por %p128, %p129
    %p131 = scmp.ne.s32.totalorder %s120, %s123
    %p132 = scmp.eq.s32.totalorder %s16, 1
    %p133 = por %p131, %p132
    %p134 = scmp.ne.s32.totalorder %s123, %s124
    %p135 = scmp.eq.s32.totalorder %s16, 0
    %p136 = por %p134, %p135
    %p137 = scmp.ne.s32.totalorder %s123, %s124
    %p138 = scmp.eq.s32.totalorder %s17, 1
    %p139 = por %p137, %p138
    %p141 = scmp.ne.s32.totalorder %s124, %s140
    %p142 = scmp.eq.s32.totalorder %s17, 0
    %p143 = por %p141, %p142
    %p144 = scmp.le.s32.totalorder 1, %s11
    %p145 = scmp.lt.s32.totalorder %s11, 3
    %p146 = pnand %p144, %p145
    %p147 = pneg %p146
    // Predicated region
    $region9: #{_lambda_.11} parent=5 // pred_check
      _
    $region10: #{_lambda_.11} parent=5 // pred_check_branch
      %149 = sbr.rel (%p146) target = $region12
    $region11: #{_lambda_.11} parent=5 // pred_region
      %s150 = ssub.s32 %s11, 1
      // Predicated region
      $region13: #{_lambda_.11} parent=11 // pred_check
        %p151 = pneg %p58
      $region14: #{_lambda_.11} parent=11 // pred_check_branch
        %153 = sbr.rel (%p151) target = $region16
      $region15: #{_lambda_.11} parent=11 // pred_region
        _
      $region16: #{_lambda_.11} parent=11 // pred_fallthru
        _
    $region12: #{_lambda_.11} parent=5 // pred_fallthru
      _
    %p154 = scmp.lt.s32.totalorder %s11, 2
    // Predicated region
    $region17: #{_lambda_.11} parent=5 // pred_check
      %p155 = pneg %p154
    $region18: #{_lambda_.11} parent=5 // pred_check_branch
      %157 = sbr.rel (%p155) target = $region20
    $region19: #{_lambda_.11} parent=5 // pred_region
      // Predicated region
      $region21: #{_lambda_.11} parent=19 // pred_check
        %p158 = pneg %p31
      $region22: #{_lambda_.11} parent=19 // pred_check_branch
        %160 = sbr.rel (%p158) target = $region24
      $region23: #{_lambda_.11} parent=19 // pred_region
        %s161 = smul.u32 2, %s11
        %p162 = scmp.lt.s32.totalorder %s161, 3
        %s163 = scalar_select %p162, %s161, 3
        %s164 = smul.addr %s163, 9
        %s165 = smul.addr %s164, 4
        %s166 = scalar_lea.vmem %s0, %s165
        %s167 = smul.u32 2, %s11
      $region24: #{_lambda_.11} parent=19 // pred_fallthru
        _
    $region20: #{_lambda_.11} parent=5 // pred_fallthru
      _
    %p168 = scmp.le.s32.totalorder 1, %s11
    %p169 = scmp.lt.s32.totalorder %s11, 3
    %p170 = pnand %p168, %p169
    %p171 = pneg %p170
    // Predicated region
    $region25: #{_lambda_.11} parent=5 // pred_check
      _
    $region26: #{_lambda_.11} parent=5 // pred_check_branch
      %173 = sbr.rel (%p170) target = $region28
    $region27: #{_lambda_.11} parent=5 // pred_region
      %s174 = ssub.s32 %s11, 1
      %s175 = smul.u32 2, %s16
      %p176 = scmp.lt.s32.totalorder %s175, 3
      %s177 = scalar_select %p176, %s175, 3
      %s178 = smul.addr %s177, 9
      %s179 = smul.addr %s178, 4
      %s180 = scalar_lea.vmem %s0, %s179
      %p181 = pneg %p37
      %p182 = pneg %p34
      %p183 = pneg %p58
      %p184 = pneg %p55
      %p185 = pneg %p84
      %p186 = pneg %p81
      %s187 = smul.u32 2, %s16
      %p188 = scmp.lt.s32.totalorder %s187, 3
      %s189 = scalar_select %p188, %s187, 3
      %s190 = smul.addr %s189, 2
      %s191 = smul.addr %s190, 4
      %s192 = scalar_lea.vmem %s2, %s191
      %p193 = pneg %p110
      %p194 = pneg %p107
      %p195 = scmp.lt.s32.totalorder %s16, 1
      %s196 = scalar_select %p195, %s16, 1
      %s197 = smul.addr %s196, 2
      %s198 = smul.addr %s197, 8
      %s199 = scalar_lea.vmem %s3, %s198
      %p200 = pneg %p136
      %p201 = pneg %p133
      %p202 = scmp.lt.s32.totalorder %s16, 1
      %s203 = scalar_select %p202, %s16, 1
      %s204 = smul.addr %s203, 2
      %s205 = smul.addr %s204, 8
      %s206 = scalar_lea.vmem %s4, %s205
      %s207 = smul.u32 2, %s16
      %p208 = scmp.lt.s32.totalorder %s207, 3
      %s209 = scalar_select %p208, %s207, 3
      %s210 = smul.addr %s209, 9
      %s211 = smul.addr %s210, 4
      %s212 = scalar_lea.vmem %s0, %s211
      %s213 = smul.u32 2, %s16
      %s214 = smul.u32 2, %s16
      %p215 = scmp.lt.s32.totalorder %s214, 3
      %s216 = scalar_select %p215, %s214, 3
      %s217 = smul.addr %s216, 2
      %s218 = smul.addr %s217, 4
      %s219 = scalar_lea.vmem %s2, %s218
      %s220 = smul.u32 2, %s16
      %p221 = scmp.lt.s32.totalorder %s16, 1
      %s222 = scalar_select %p221, %s16, 1
      %s223 = smul.addr %s222, 2
      %s224 = smul.addr %s223, 8
      %s225 = scalar_lea.vmem %s3, %s224
      %p226 = scmp.lt.s32.totalorder %s16, 1
      %s227 = scalar_select %p226, %s16, 1
      %s228 = smul.addr %s227, 2
      %s229 = smul.addr %s228, 8
      %s230 = scalar_lea.vmem %s4, %s229
      %v232 = vld [vmem:[%s212] sm:$0xff]
      %v233 = vld [vmem:[%s212 + $0x8] sm:$0xff]
      %v234 = vld [vmem:[%s212 + $0x10] sm:$0xff]
      %v235 = vld [vmem:[%s212 + $0x18] sm:$0xff]
      %v236 = vld [vmem:[%s212 + $0x20] sm:$0xf]
      %v237 = vld [vmem:[%s212 + $0x24] sm:$0xff]
      %v238 = vld [vmem:[%s212 + $0x2c] sm:$0xff]
      %v239 = vld [vmem:[%s212 + $0x34] sm:$0xff]
      %v240 = vld [vmem:[%s212 + $0x3c] sm:$0xff]
      %v241 = vld [vmem:[%s212 + $0x44] sm:$0xf]
      %v242 = vld [vmem:[%s1] sm:$0xff]
      %v243 = vld [vmem:[%s1 + $0x8] sm:$0xff]
      %v244 = vld [vmem:[%s1 + $0x10] sm:$0xff]
      %v245 = vld [vmem:[%s1 + $0x18] sm:$0xff]
      %v246 = vld [vmem:[%s1 + $0x20] sm:$0xff]
      %v247 = vld [vmem:[%s1 + $0x28] sm:$0xff]
      %v248 = vld [vmem:[%s1 + $0x30] sm:$0xff]
      %v249 = vld [vmem:[%s1 + $0x38] sm:$0xff]
      %v250 = vld [vmem:[%s1 + $0x40] sm:$0xff]
      %v251 = vld [vmem:[%s1 + $0x48] sm:$0xff]
      %v252 = vld [vmem:[%s1 + $0x50] sm:$0xff]
      %v253 = vld [vmem:[%s1 + $0x58] sm:$0xff]
      %v254 = vld [vmem:[%s1 + $0x60] sm:$0xff]
      %v255 = vld [vmem:[%s1 + $0x68] sm:$0xff]
      %v256 = vld [vmem:[%s1 + $0x70] sm:$0xff]
      %v257 = vld [vmem:[%s1 + $0x78] sm:$0xff]
      %v258 = vld [vmem:[%s1 + $0x80] sm:$0xff]
      %v259 = vld [vmem:[%s1 + $0x88] sm:$0xff]
      %v260 = vld [vmem:[%s1 + $0x90] sm:$0xff]
      %v261 = vld [vmem:[%s1 + $0x98] sm:$0xff]
      %v262 = vld [vmem:[%s1 + $0xa0] sm:$0xff]
      %v263 = vld [vmem:[%s1 + $0xa8] sm:$0xff]
      %v264 = vld [vmem:[%s1 + $0xb0] sm:$0xff]
      %v265 = vld [vmem:[%s1 + $0xb8] sm:$0xff]
      %v266 = vld [vmem:[%s1 + $0xc0] sm:$0xff]
      %v267 = vld [vmem:[%s1 + $0xc8] sm:$0xff]
      %v268 = vld [vmem:[%s1 + $0xd0] sm:$0xff]
      %v269 = vld [vmem:[%s1 + $0xd8] sm:$0xff]
      %v270 = vld [vmem:[%s1 + $0xe0] sm:$0xff]
      %v271 = vld [vmem:[%s1 + $0xe8] sm:$0xff]
      %v272 = vld [vmem:[%s1 + $0xf0] sm:$0xff]
      %v273 = vld [vmem:[%s1 + $0xf8] sm:$0xff]
      %v274 = vld [vmem:[%s1 + $0x100] sm:$0xff]
      %v275 = vld [vmem:[%s1 + $0x108] sm:$0xff]
      %v276 = vld [vmem:[%s1 + $0x110] sm:$0xff]
      %v277 = vld [vmem:[%s1 + $0x118] sm:$0xff]
      %v278 = vld [vmem:[%s1 + $0x120] sm:$0xff]
      %v279 = vld [vmem:[%s1 + $0x128] sm:$0xff]
      %v280 = vld [vmem:[%s1 + $0x130] sm:$0xff]
      %v281 = vld [vmem:[%s1 + $0x138] sm:$0xff]
      %v282 = vld [vmem:[%s1 + $0x140] sm:$0xff]
      %v283 = vld [vmem:[%s1 + $0x148] sm:$0xff]
      %v284 = vld [vmem:[%s1 + $0x150] sm:$0xff]
      %v285 = vld [vmem:[%s1 + $0x158] sm:$0xff]
      %v286 = vld [vmem:[%s1 + $0x160] sm:$0xff]
      %v287 = vld [vmem:[%s1 + $0x168] sm:$0xff]
      %v288 = vld [vmem:[%s1 + $0x170] sm:$0xff]
      %v289 = vld [vmem:[%s1 + $0x178] sm:$0xff]
      %v290 = vld [vmem:[%s1 + $0x180] sm:$0xff]
      %v291 = vld [vmem:[%s1 + $0x188] sm:$0xff]
      %v292 = vld [vmem:[%s1 + $0x190] sm:$0xff]
      %v293 = vld [vmem:[%s1 + $0x198] sm:$0xff]
      %v294 = vld [vmem:[%s1 + $0x1a0] sm:$0xff]
      %v295 = vld [vmem:[%s1 + $0x1a8] sm:$0xff]
      %v296 = vld [vmem:[%s1 + $0x1b0] sm:$0xff]
      %v297 = vld [vmem:[%s1 + $0x1b8] sm:$0xff]
      %v298 = vld [vmem:[%s1 + $0x1c0] sm:$0xff]
      %v299 = vld [vmem:[%s1 + $0x1c8] sm:$0xff]
      %v300 = vld [vmem:[%s1 + $0x1d0] sm:$0xff]
      %v301 = vld [vmem:[%s1 + $0x1d8] sm:$0xff]
      %v302 = vld [vmem:[%s1 + $0x1e0] sm:$0xff]
      %v303 = vld [vmem:[%s1 + $0x1e8] sm:$0xff]
      %v304 = vld [vmem:[%s1 + $0x1f0] sm:$0xff]
      %v305 = vld [vmem:[%s1 + $0x1f8] sm:$0xff]
      %v306 = vld [vmem:[%s1 + $0x200] sm:$0xff]
      %v307 = vld [vmem:[%s1 + $0x208] sm:$0xff]
      %v308 = vld [vmem:[%s1 + $0x210] sm:$0xff]
      %v309 = vld [vmem:[%s1 + $0x218] sm:$0xff]
      %v310 = vld [vmem:[%s1 + $0x220] sm:$0xff]
      %v311 = vld [vmem:[%s1 + $0x228] sm:$0xff]
      %v312 = vld [vmem:[%s1 + $0x230] sm:$0xff]
      %v313 = vld [vmem:[%s1 + $0x238] sm:$0xff]
      %v314 = vld [vmem:[%s1 + $0x240] sm:$0xff]
      %v315 = vld [vmem:[%s1 + $0x248] sm:$0xff]
      %v316 = vld [vmem:[%s1 + $0x250] sm:$0xff]
      %v317 = vld [vmem:[%s1 + $0x258] sm:$0xff]
      %v318 = vld [vmem:[%s1 + $0x260] sm:$0xff]
      %v319 = vld [vmem:[%s1 + $0x268] sm:$0xff]
      %v320 = vld [vmem:[%s1 + $0x270] sm:$0xff]
      %v321 = vld [vmem:[%s1 + $0x278] sm:$0xff]
      %v322 = vld [vmem:[%s1 + $0x280] sm:$0xff]
      %v323 = vld [vmem:[%s1 + $0x288] sm:$0xff]
      %v324 = vld [vmem:[%s1 + $0x290] sm:$0xff]
      %v325 = vld [vmem:[%s1 + $0x298] sm:$0xff]
      %v326 = vld [vmem:[%s1 + $0x2a0] sm:$0xff]
      %v327 = vld [vmem:[%s1 + $0x2a8] sm:$0xff]
      %v328 = vld [vmem:[%s1 + $0x2b0] sm:$0xff]
      %v329 = vld [vmem:[%s1 + $0x2b8] sm:$0xff]
      %v330 = vld [vmem:[%s1 + $0x2c0] sm:$0xff]
      %v331 = vld [vmem:[%s1 + $0x2c8] sm:$0xff]
      %v332 = vld [vmem:[%s1 + $0x2d0] sm:$0xff]
      %v333 = vld [vmem:[%s1 + $0x2d8] sm:$0xff]
      %v334 = vld [vmem:[%s1 + $0x2e0] sm:$0xff]
      %v335 = vld [vmem:[%s1 + $0x2e8] sm:$0xff]
      %v336 = vld [vmem:[%s1 + $0x2f0] sm:$0xff]
      %v337 = vld [vmem:[%s1 + $0x2f8] sm:$0xff]
      %v338 = vld [vmem:[%s1 + $0x300] sm:$0xff]
      %v339 = vld [vmem:[%s1 + $0x308] sm:$0xff]
      %v340 = vld [vmem:[%s1 + $0x310] sm:$0xff]
      %v341 = vld [vmem:[%s1 + $0x318] sm:$0xff]
      %v342 = vld [vmem:[%s1 + $0x320] sm:$0xff]
      %v343 = vld [vmem:[%s1 + $0x328] sm:$0xff]
      %v344 = vld [vmem:[%s1 + $0x330] sm:$0xff]
      %v345 = vld [vmem:[%s1 + $0x338] sm:$0xff]
      %v346 = vld [vmem:[%s1 + $0x340] sm:$0xff]
      %v347 = vld [vmem:[%s1 + $0x348] sm:$0xff]
      %v348 = vld [vmem:[%s1 + $0x350] sm:$0xff]
      %v349 = vld [vmem:[%s1 + $0x358] sm:$0xff]
      %v350 = vld [vmem:[%s1 + $0x360] sm:$0xff]
      %v351 = vld [vmem:[%s1 + $0x368] sm:$0xff]
      %v352 = vld [vmem:[%s1 + $0x370] sm:$0xff]
      %v353 = vld [vmem:[%s1 + $0x378] sm:$0xff]
      %v354 = vld [vmem:[%s1 + $0x380] sm:$0xff]
      %v355 = vld [vmem:[%s1 + $0x388] sm:$0xff]
      %v356 = vld [vmem:[%s1 + $0x390] sm:$0xff]
      %v357 = vld [vmem:[%s1 + $0x398] sm:$0xff]
      %v358 = vld [vmem:[%s1 + $0x3a0] sm:$0xff]
      %v359 = vld [vmem:[%s1 + $0x3a8] sm:$0xff]
      %v360 = vld [vmem:[%s1 + $0x3b0] sm:$0xff]
      %v361 = vld [vmem:[%s1 + $0x3b8] sm:$0xff]
      %v362 = vld [vmem:[%s1 + $0x3c0] sm:$0xff]
      %v363 = vld [vmem:[%s1 + $0x3c8] sm:$0xff]
      %v364 = vld [vmem:[%s1 + $0x3d0] sm:$0xff]
      %v365 = vld [vmem:[%s1 + $0x3d8] sm:$0xff]
      %v366 = vld [vmem:[%s1 + $0x3e0] sm:$0xff]
      %v367 = vld [vmem:[%s1 + $0x3e8] sm:$0xff]
      %v368 = vld [vmem:[%s1 + $0x3f0] sm:$0xff]
      %v369 = vld [vmem:[%s1 + $0x3f8] sm:$0xff]
      %v370 = vld [vmem:[%s1 + $0x400] sm:$0xff]
      %v371 = vld [vmem:[%s1 + $0x408] sm:$0xff]
      %v372 = vld [vmem:[%s1 + $0x410] sm:$0xff]
      %v373 = vld [vmem:[%s1 + $0x418] sm:$0xff]
      %v374 = vld [vmem:[%s1 + $0x420] sm:$0xff]
      %v375 = vld [vmem:[%s1 + $0x428] sm:$0xff]
      %v376 = vld [vmem:[%s1 + $0x430] sm:$0xff]
      %v377 = vld [vmem:[%s1 + $0x438] sm:$0xff]
      %v378 = vld [vmem:[%s1 + $0x440] sm:$0xff]
      %v379 = vld [vmem:[%s1 + $0x448] sm:$0xff]
      %v380 = vld [vmem:[%s1 + $0x450] sm:$0xff]
      %v381 = vld [vmem:[%s1 + $0x458] sm:$0xff]
      %v382 = vld [vmem:[%s1 + $0x460] sm:$0xff]
      %v383 = vld [vmem:[%s1 + $0x468] sm:$0xff]
      %v384 = vld [vmem:[%s1 + $0x470] sm:$0xff]
      %v385 = vld [vmem:[%s1 + $0x478] sm:$0xff]
      %v396 = vunpack.c.l.b16 %v232
      %v397 = vunpack.c.h.b16 %v232
      %v398 = vunpack.c.l.b16 %v233
      %v399 = vunpack.c.h.b16 %v233
      %v400 = vunpack.c.l.b16 %v234
      %v401 = vunpack.c.h.b16 %v234
      %v402 = vunpack.c.l.b16 %v235
      %v403 = vunpack.c.h.b16 %v235
      %v404 = vunpack.c.l.b16 %v236
      %v405 = vunpack.c.l.b16 %v237
      %v406 = vunpack.c.h.b16 %v237
      %v407 = vunpack.c.l.b16 %v238
      %v408 = vunpack.c.h.b16 %v238
      %v409 = vunpack.c.l.b16 %v239
      %v410 = vunpack.c.h.b16 %v239
      %v411 = vunpack.c.l.b16 %v240
      %v412 = vunpack.c.h.b16 %v240
      %v413 = vunpack.c.l.b16 %v241
      %v414 = vpack.c.b16 %v405, %v396
      %v415 = vpack.c.b16 %v406, %v397
      %v416 = vpack.c.b16 %v407, %v398
      %v417 = vpack.c.b16 %v408, %v399
      %v418 = vpack.c.b16 %v409, %v400
      %v419 = vpack.c.b16 %v410, %v401
      %v420 = vpack.c.b16 %v411, %v402
      %v421 = vpack.c.b16 %v412, %v403
      %v422 = vpack.c.b16 %v413, %v404
      %v576 = vunpack.c.l.b16 %v242
      %v577 = vunpack.c.h.b16 %v242
      %v578 = vunpack.c.l.b16 %v243
      %v579 = vunpack.c.h.b16 %v243
      %v580 = vunpack.c.l.b16 %v244
      %v581 = vunpack.c.h.b16 %v244
      %v582 = vunpack.c.l.b16 %v245
      %v583 = vunpack.c.h.b16 %v245
      %v584 = vunpack.c.l.b16 %v246
      %v585 = vunpack.c.h.b16 %v246
      %v586 = vunpack.c.l.b16 %v247
      %v587 = vunpack.c.h.b16 %v247
      %v588 = vunpack.c.l.b16 %v248
      %v589 = vunpack.c.h.b16 %v248
      %v590 = vunpack.c.l.b16 %v249
      %v591 = vunpack.c.h.b16 %v249
      %v592 = vunpack.c.l.b16 %v250
      %v593 = vunpack.c.h.b16 %v250
      %v594 = vunpack.c.l.b16 %v251
      %v595 = vunpack.c.h.b16 %v251
      %v596 = vunpack.c.l.b16 %v252
      %v597 = vunpack.c.h.b16 %v252
      %v598 = vunpack.c.l.b16 %v253
      %v599 = vunpack.c.h.b16 %v253
      %v600 = vunpack.c.l.b16 %v254
      %v601 = vunpack.c.h.b16 %v254
      %v602 = vunpack.c.l.b16 %v255
      %v603 = vunpack.c.h.b16 %v255
      %v604 = vunpack.c.l.b16 %v256
      %v605 = vunpack.c.h.b16 %v256
      %v606 = vunpack.c.l.b16 %v257
      %v607 = vunpack.c.h.b16 %v257
      %v608 = vunpack.c.l.b16 %v258
      %v609 = vunpack.c.h.b16 %v258
      %v610 = vunpack.c.l.b16 %v259
      %v611 = vunpack.c.h.b16 %v259
      %v612 = vunpack.c.l.b16 %v260
      %v613 = vunpack.c.h.b16 %v260
      %v614 = vunpack.c.l.b16 %v261
      %v615 = vunpack.c.h.b16 %v261
      %v616 = vunpack.c.l.b16 %v262
      %v617 = vunpack.c.h.b16 %v262
      %v618 = vunpack.c.l.b16 %v263
      %v619 = vunpack.c.h.b16 %v263
      %v620 = vunpack.c.l.b16 %v264
      %v621 = vunpack.c.h.b16 %v264
      %v622 = vunpack.c.l.b16 %v265
      %v623 = vunpack.c.h.b16 %v265
      %v624 = vunpack.c.l.b16 %v266
      %v625 = vunpack.c.h.b16 %v266
      %v626 = vunpack.c.l.b16 %v267
      %v627 = vunpack.c.h.b16 %v267
      %v628 = vunpack.c.l.b16 %v268
      %v629 = vunpack.c.h.b16 %v268
      %v630 = vunpack.c.l.b16 %v269
      %v631 = vunpack.c.h.b16 %v269
      %v632 = vunpack.c.l.b16 %v270
      %v633 = vunpack.c.h.b16 %v270
      %v634 = vunpack.c.l.b16 %v271
      %v635 = vunpack.c.h.b16 %v271
      %v636 = vunpack.c.l.b16 %v272
      %v637 = vunpack.c.h.b16 %v272
      %v638 = vunpack.c.l.b16 %v273
      %v639 = vunpack.c.h.b16 %v273
      %v640 = vunpack.c.l.b16 %v274
      %v641 = vunpack.c.h.b16 %v274
      %v642 = vunpack.c.l.b16 %v275
      %v643 = vunpack.c.h.b16 %v275
      %v644 = vunpack.c.l.b16 %v276
      %v645 = vunpack.c.h.b16 %v276
      %v646 = vunpack.c.l.b16 %v277
      %v647 = vunpack.c.h.b16 %v277
      %v648 = vunpack.c.l.b16 %v278
      %v649 = vunpack.c.h.b16 %v278
      %v650 = vunpack.c.l.b16 %v279
      %v651 = vunpack.c.h.b16 %v279
      %v652 = vunpack.c.l.b16 %v280
      %v653 = vunpack.c.h.b16 %v280
      %v654 = vunpack.c.l.b16 %v281
      %v655 = vunpack.c.h.b16 %v281
      %v656 = vunpack.c.l.b16 %v282
      %v657 = vunpack.c.h.b16 %v282
      %v658 = vunpack.c.l.b16 %v283
      %v659 = vunpack.c.h.b16 %v283
      %v660 = vunpack.c.l.b16 %v284
      %v661 = vunpack.c.h.b16 %v284
      %v662 = vunpack.c.l.b16 %v285
      %v663 = vunpack.c.h.b16 %v285
      %v664 = vunpack.c.l.b16 %v286
      %v665 = vunpack.c.h.b16 %v286
      %v666 = vunpack.c.l.b16 %v287
      %v667 = vunpack.c.h.b16 %v287
      %v668 = vunpack.c.l.b16 %v288
      %v669 = vunpack.c.h.b16 %v288
      %v670 = vunpack.c.l.b16 %v289
      %v671 = vunpack.c.h.b16 %v289
      %v672 = vunpack.c.l.b16 %v290
      %v673 = vunpack.c.h.b16 %v290
      %v674 = vunpack.c.l.b16 %v291
      %v675 = vunpack.c.h.b16 %v291
      %v676 = vunpack.c.l.b16 %v292
      %v677 = vunpack.c.h.b16 %v292
      %v678 = vunpack.c.l.b16 %v293
      %v679 = vunpack.c.h.b16 %v293
      %v680 = vunpack.c.l.b16 %v294
      %v681 = vunpack.c.h.b16 %v294
      %v682 = vunpack.c.l.b16 %v295
      %v683 = vunpack.c.h.b16 %v295
      %v684 = vunpack.c.l.b16 %v296
      %v685 = vunpack.c.h.b16 %v296
      %v686 = vunpack.c.l.b16 %v297
      %v687 = vunpack.c.h.b16 %v297
      %v688 = vunpack.c.l.b16 %v298
      %v689 = vunpack.c.h.b16 %v298
      %v690 = vunpack.c.l.b16 %v299
      %v691 = vunpack.c.h.b16 %v299
      %v692 = vunpack.c.l.b16 %v300
      %v693 = vunpack.c.h.b16 %v300
      %v694 = vunpack.c.l.b16 %v301
      %v695 = vunpack.c.h.b16 %v301
      %v696 = vunpack.c.l.b16 %v302
      %v697 = vunpack.c.h.b16 %v302
      %v698 = vunpack.c.l.b16 %v303
      %v699 = vunpack.c.h.b16 %v303
      %v700 = vunpack.c.l.b16 %v304
      %v701 = vunpack.c.h.b16 %v304
      %v702 = vunpack.c.l.b16 %v305
      %v703 = vunpack.c.h.b16 %v305
      %v704 = vunpack.c.l.b16 %v306
      %v705 = vunpack.c.h.b16 %v306
      %v706 = vunpack.c.l.b16 %v307
      %v707 = vunpack.c.h.b16 %v307
      %v708 = vunpack.c.l.b16 %v308
      %v709 = vunpack.c.h.b16 %v308
      %v710 = vunpack.c.l.b16 %v309
      %v711 = vunpack.c.h.b16 %v309
      %v712 = vunpack.c.l.b16 %v310
      %v713 = vunpack.c.h.b16 %v310
      %v714 = vunpack.c.l.b16 %v311
      %v715 = vunpack.c.h.b16 %v311
      %v716 = vunpack.c.l.b16 %v312
      %v717 = vunpack.c.h.b16 %v312
      %v718 = vunpack.c.l.b16 %v313
      %v719 = vunpack.c.h.b16 %v313
      %v720 = vunpack.c.l.b16 %v314
      %v721 = vunpack.c.h.b16 %v314
      %v722 = vunpack.c.l.b16 %v315
      %v723 = vunpack.c.h.b16 %v315
      %v724 = vunpack.c.l.b16 %v316
      %v725 = vunpack.c.h.b16 %v316
      %v726 = vunpack.c.l.b16 %v317
      %v727 = vunpack.c.h.b16 %v317
      %v728 = vunpack.c.l.b16 %v318
      %v729 = vunpack.c.h.b16 %v318
      %v730 = vunpack.c.l.b16 %v319
      %v731 = vunpack.c.h.b16 %v319
      %v732 = vunpack.c.l.b16 %v320
      %v733 = vunpack.c.h.b16 %v320
      %v734 = vunpack.c.l.b16 %v321
      %v735 = vunpack.c.h.b16 %v321
      %v736 = vunpack.c.l.b16 %v322
      %v737 = vunpack.c.h.b16 %v322
      %v738 = vunpack.c.l.b16 %v323
      %v739 = vunpack.c.h.b16 %v323
      %v740 = vunpack.c.l.b16 %v324
      %v741 = vunpack.c.h.b16 %v324
      %v742 = vunpack.c.l.b16 %v325
      %v743 = vunpack.c.h.b16 %v325
      %v744 = vunpack.c.l.b16 %v326
      %v745 = vunpack.c.h.b16 %v326
      %v746 = vunpack.c.l.b16 %v327
      %v747 = vunpack.c.h.b16 %v327
      %v748 = vunpack.c.l.b16 %v328
      %v749 = vunpack.c.h.b16 %v328
      %v750 = vunpack.c.l.b16 %v329
      %v751 = vunpack.c.h.b16 %v329
      %v752 = vunpack.c.l.b16 %v330
      %v753 = vunpack.c.h.b16 %v330
      %v754 = vunpack.c.l.b16 %v331
      %v755 = vunpack.c.h.b16 %v331
      %v756 = vunpack.c.l.b16 %v332
      %v757 = vunpack.c.h.b16 %v332
      %v758 = vunpack.c.l.b16 %v333
      %v759 = vunpack.c.h.b16 %v333
      %v760 = vunpack.c.l.b16 %v334
      %v761 = vunpack.c.h.b16 %v334
      %v762 = vunpack.c.l.b16 %v335
      %v763 = vunpack.c.h.b16 %v335
      %v764 = vunpack.c.l.b16 %v336
      %v765 = vunpack.c.h.b16 %v336
      %v766 = vunpack.c.l.b16 %v337
      %v767 = vunpack.c.h.b16 %v337
      %v768 = vunpack.c.l.b16 %v338
      %v769 = vunpack.c.h.b16 %v338
      %v770 = vunpack.c.l.b16 %v339
      %v771 = vunpack.c.h.b16 %v339
      %v772 = vunpack.c.l.b16 %v340
      %v773 = vunpack.c.h.b16 %v340
      %v774 = vunpack.c.l.b16 %v341
      %v775 = vunpack.c.h.b16 %v341
      %v776 = vunpack.c.l.b16 %v342
      %v777 = vunpack.c.h.b16 %v342
      %v778 = vunpack.c.l.b16 %v343
      %v779 = vunpack.c.h.b16 %v343
      %v780 = vunpack.c.l.b16 %v344
      %v781 = vunpack.c.h.b16 %v344
      %v782 = vunpack.c.l.b16 %v345
      %v783 = vunpack.c.h.b16 %v345
      %v784 = vunpack.c.l.b16 %v346
      %v785 = vunpack.c.h.b16 %v346
      %v786 = vunpack.c.l.b16 %v347
      %v787 = vunpack.c.h.b16 %v347
      %v788 = vunpack.c.l.b16 %v348
      %v789 = vunpack.c.h.b16 %v348
      %v790 = vunpack.c.l.b16 %v349
      %v791 = vunpack.c.h.b16 %v349
      %v792 = vunpack.c.l.b16 %v350
      %v793 = vunpack.c.h.b16 %v350
      %v794 = vunpack.c.l.b16 %v351
      %v795 = vunpack.c.h.b16 %v351
      %v796 = vunpack.c.l.b16 %v352
      %v797 = vunpack.c.h.b16 %v352
      %v798 = vunpack.c.l.b16 %v353
      %v799 = vunpack.c.h.b16 %v353
      %v800 = vunpack.c.l.b16 %v354
      %v801 = vunpack.c.h.b16 %v354
      %v802 = vunpack.c.l.b16 %v355
      %v803 = vunpack.c.h.b16 %v355
      %v804 = vunpack.c.l.b16 %v356
      %v805 = vunpack.c.h.b16 %v356
      %v806 = vunpack.c.l.b16 %v357
      %v807 = vunpack.c.h.b16 %v357
      %v808 = vunpack.c.l.b16 %v358
      %v809 = vunpack.c.h.b16 %v358
      %v810 = vunpack.c.l.b16 %v359
      %v811 = vunpack.c.h.b16 %v359
      %v812 = vunpack.c.l.b16 %v360
      %v813 = vunpack.c.h.b16 %v360
      %v814 = vunpack.c.l.b16 %v361
      %v815 = vunpack.c.h.b16 %v361
      %v816 = vunpack.c.l.b16 %v362
      %v817 = vunpack.c.h.b16 %v362
      %v818 = vunpack.c.l.b16 %v363
      %v819 = vunpack.c.h.b16 %v363
      %v820 = vunpack.c.l.b16 %v364
      %v821 = vunpack.c.h.b16 %v364
      %v822 = vunpack.c.l.b16 %v365
      %v823 = vunpack.c.h.b16 %v365
      %v824 = vunpack.c.l.b16 %v366
      %v825 = vunpack.c.h.b16 %v366
      %v826 = vunpack.c.l.b16 %v367
      %v827 = vunpack.c.h.b16 %v367
      %v828 = vunpack.c.l.b16 %v368
      %v829 = vunpack.c.h.b16 %v368
      %v830 = vunpack.c.l.b16 %v369
      %v831 = vunpack.c.h.b16 %v369
      %v832 = vunpack.c.l.b16 %v370
      %v833 = vunpack.c.h.b16 %v370
      %v834 = vunpack.c.l.b16 %v371
      %v835 = vunpack.c.h.b16 %v371
      %v836 = vunpack.c.l.b16 %v372
      %v837 = vunpack.c.h.b16 %v372
      %v838 = vunpack.c.l.b16 %v373
      %v839 = vunpack.c.h.b16 %v373
      %v840 = vunpack.c.l.b16 %v374
      %v841 = vunpack.c.h.b16 %v374
      %v842 = vunpack.c.l.b16 %v375
      %v843 = vunpack.c.h.b16 %v375
      %v844 = vunpack.c.l.b16 %v376
      %v845 = vunpack.c.h.b16 %v376
      %v846 = vunpack.c.l.b16 %v377
      %v847 = vunpack.c.h.b16 %v377
      %v848 = vunpack.c.l.b16 %v378
      %v849 = vunpack.c.h.b16 %v378
      %v850 = vunpack.c.l.b16 %v379
      %v851 = vunpack.c.h.b16 %v379
      %v852 = vunpack.c.l.b16 %v380
      %v853 = vunpack.c.h.b16 %v380
      %v854 = vunpack.c.l.b16 %v381
      %v855 = vunpack.c.h.b16 %v381
      %v856 = vunpack.c.l.b16 %v382
      %v857 = vunpack.c.h.b16 %v382
      %v858 = vunpack.c.l.b16 %v383
      %v859 = vunpack.c.h.b16 %v383
      %v860 = vunpack.c.l.b16 %v384
      %v861 = vunpack.c.h.b16 %v384
      %v862 = vunpack.c.l.b16 %v385
      %v863 = vunpack.c.h.b16 %v385
      %v864 = vpack.c.b16 %v578, %v576
      %v865 = vpack.c.b16 %v579, %v577
      %v866 = vpack.c.b16 %v582, %v580
      %v867 = vpack.c.b16 %v583, %v581
      %v868 = vpack.c.b16 %v586, %v584
      %v869 = vpack.c.b16 %v587, %v585
      %v870 = vpack.c.b16 %v590, %v588
      %v871 = vpack.c.b16 %v591, %v589
      %v872 = vpack.c.b16 %v594, %v592
      %v873 = vpack.c.b16 %v595, %v593
      %v874 = vpack.c.b16 %v598, %v596
      %v875 = vpack.c.b16 %v599, %v597
      %v876 = vpack.c.b16 %v602, %v600
      %v877 = vpack.c.b16 %v603, %v601
      %v878 = vpack.c.b16 %v606, %v604
      %v879 = vpack.c.b16 %v607, %v605
      %v880 = vpack.c.b16 %v610, %v608
      %v881 = vpack.c.b16 %v611, %v609
      %v882 = vpack.c.b16 %v614, %v612
      %v883 = vpack.c.b16 %v615, %v613
      %v884 = vpack.c.b16 %v618, %v616
      %v885 = vpack.c.b16 %v619, %v617
      %v886 = vpack.c.b16 %v622, %v620
      %v887 = vpack.c.b16 %v623, %v621
      %v888 = vpack.c.b16 %v626, %v624
      %v889 = vpack.c.b16 %v627, %v625
      %v890 = vpack.c.b16 %v630, %v628
      %v891 = vpack.c.b16 %v631, %v629
      %v892 = vpack.c.b16 %v634, %v632
      %v893 = vpack.c.b16 %v635, %v633
      %v894 = vpack.c.b16 %v638, %v636
      %v895 = vpack.c.b16 %v639, %v637
      %v896 = vpack.c.b16 %v642, %v640
      %v897 = vpack.c.b16 %v643, %v641
      %v898 = vpack.c.b16 %v646, %v644
      %v899 = vpack.c.b16 %v647, %v645
      %v900 = vpack.c.b16 %v650, %v648
      %v901 = vpack.c.b16 %v651, %v649
      %v902 = vpack.c.b16 %v654, %v652
      %v903 = vpack.c.b16 %v655, %v653
      %v904 = vpack.c.b16 %v658, %v656
      %v905 = vpack.c.b16 %v659, %v657
      %v906 = vpack.c.b16 %v662, %v660
      %v907 = vpack.c.b16 %v663, %v661
      %v908 = vpack.c.b16 %v666, %v664
      %v909 = vpack.c.b16 %v667, %v665
      %v910 = vpack.c.b16 %v670, %v668
      %v911 = vpack.c.b16 %v671, %v669
      %v912 = vpack.c.b16 %v674, %v672
      %v913 = vpack.c.b16 %v675, %v673
      %v914 = vpack.c.b16 %v678, %v676
      %v915 = vpack.c.b16 %v679, %v677
      %v916 = vpack.c.b16 %v682, %v680
      %v917 = vpack.c.b16 %v683, %v681
      %v918 = vpack.c.b16 %v686, %v684
      %v919 = vpack.c.b16 %v687, %v685
      %v920 = vpack.c.b16 %v690, %v688
      %v921 = vpack.c.b16 %v691, %v689
      %v922 = vpack.c.b16 %v694, %v692
      %v923 = vpack.c.b16 %v695, %v693
      %v924 = vpack.c.b16 %v698, %v696
      %v925 = vpack.c.b16 %v699, %v697
      %v926 = vpack.c.b16 %v702, %v700
      %v927 = vpack.c.b16 %v703, %v701
      %v928 = vpack.c.b16 %v706, %v704
      %v929 = vpack.c.b16 %v707, %v705
      %v930 = vpack.c.b16 %v710, %v708
      %v931 = vpack.c.b16 %v711, %v709
      %v932 = vpack.c.b16 %v714, %v712
      %v933 = vpack.c.b16 %v715, %v713
      %v934 = vpack.c.b16 %v718, %v716
      %v935 = vpack.c.b16 %v719, %v717
      %v936 = vpack.c.b16 %v722, %v720
      %v937 = vpack.c.b16 %v723, %v721
      %v938 = vpack.c.b16 %v726, %v724
      %v939 = vpack.c.b16 %v727, %v725
      %v940 = vpack.c.b16 %v730, %v728
      %v941 = vpack.c.b16 %v731, %v729
      %v942 = vpack.c.b16 %v734, %v732
      %v943 = vpack.c.b16 %v735, %v733
      %v944 = vpack.c.b16 %v738, %v736
      %v945 = vpack.c.b16 %v739, %v737
      %v946 = vpack.c.b16 %v742, %v740
      %v947 = vpack.c.b16 %v743, %v741
      %v948 = vpack.c.b16 %v746, %v744
      %v949 = vpack.c.b16 %v747, %v745
      %v950 = vpack.c.b16 %v750, %v748
      %v951 = vpack.c.b16 %v751, %v749
      %v952 = vpack.c.b16 %v754, %v752
      %v953 = vpack.c.b16 %v755, %v753
      %v954 = vpack.c.b16 %v758, %v756
      %v955 = vpack.c.b16 %v759, %v757
      %v956 = vpack.c.b16 %v762, %v760
      %v957 = vpack.c.b16 %v763, %v761
      %v958 = vpack.c.b16 %v766, %v764
      %v959 = vpack.c.b16 %v767, %v765
      %v960 = vpack.c.b16 %v770, %v768
      %v961 = vpack.c.b16 %v771, %v769
      %v962 = vpack.c.b16 %v774, %v772
      %v963 = vpack.c.b16 %v775, %v773
      %v964 = vpack.c.b16 %v778, %v776
      %v965 = vpack.c.b16 %v779, %v777
      %v966 = vpack.c.b16 %v782, %v780
      %v967 = vpack.c.b16 %v783, %v781
      %v968 = vpack.c.b16 %v786, %v784
      %v969 = vpack.c.b16 %v787, %v785
      %v970 = vpack.c.b16 %v790, %v788
      %v971 = vpack.c.b16 %v791, %v789
      %v972 = vpack.c.b16 %v794, %v792
      %v973 = vpack.c.b16 %v795, %v793
      %v974 = vpack.c.b16 %v798, %v796
      %v975 = vpack.c.b16 %v799, %v797
      %v976 = vpack.c.b16 %v802, %v800
      %v977 = vpack.c.b16 %v803, %v801
      %v978 = vpack.c.b16 %v806, %v804
      %v979 = vpack.c.b16 %v807, %v805
      %v980 = vpack.c.b16 %v810, %v808
      %v981 = vpack.c.b16 %v811, %v809
      %v982 = vpack.c.b16 %v814, %v812
      %v983 = vpack.c.b16 %v815, %v813
      %v984 = vpack.c.b16 %v818, %v816
      %v985 = vpack.c.b16 %v819, %v817
      %v986 = vpack.c.b16 %v822, %v820
      %v987 = vpack.c.b16 %v823, %v821
      %v988 = vpack.c.b16 %v826, %v824
      %v989 = vpack.c.b16 %v827, %v825
      %v990 = vpack.c.b16 %v830, %v828
      %v991 = vpack.c.b16 %v831, %v829
      %v992 = vpack.c.b16 %v834, %v832
      %v993 = vpack.c.b16 %v835, %v833
      %v994 = vpack.c.b16 %v838, %v836
      %v995 = vpack.c.b16 %v839, %v837
      %v996 = vpack.c.b16 %v842, %v840
      %v997 = vpack.c.b16 %v843, %v841
      %v998 = vpack.c.b16 %v846, %v844
      %v999 = vpack.c.b16 %v847, %v845
      %v1000 = vpack.c.b16 %v850, %v848
      %v1001 = vpack.c.b16 %v851, %v849
      %v1002 = vpack.c.b16 %v854, %v852
      %v1003 = vpack.c.b16 %v855, %v853
      %v1004 = vpack.c.b16 %v858, %v856
      %v1005 = vpack.c.b16 %v859, %v857
      %v1006 = vpack.c.b16 %v862, %v860
      %v1007 = vpack.c.b16 %v863, %v861
      %1152 = vmatprep.subr.bf16.mxu0 %v865
      %1153 = vmatpush1.bf16.msra.mxu0 %v864
      %1154 = vmatprep.subr.bf16.mxu0 %v867
      %1155 = vmatpush1.bf16.msra.mxu0 %v866
      %1156 = vmatprep.subr.bf16.mxu0 %v869
      %1157 = vmatpush1.bf16.msra.mxu0 %v868
      %1158 = vmatprep.subr.bf16.mxu0 %v871
      %1159 = vmatpush1.bf16.msra.mxu0 %v870
      %1160 = vmatprep.subr.bf16.mxu0 %v873
      %1161 = vmatpush1.bf16.msra.mxu0 %v872
      %1162 = vmatprep.subr.bf16.mxu0 %v875
      %1163 = vmatpush1.bf16.msra.mxu0 %v874
      %1164 = vmatprep.subr.bf16.mxu0 %v877
      %1165 = vmatpush1.bf16.msra.mxu0 %v876
      %1166 = vmatprep.subr.bf16.mxu0 %v879
      %1167 = vmatpush1.bf16.msra.mxu0 %v878
      %1168 = vmatprep.subr.bf16.mxu0 %v881
      %1169 = vmatpush1.bf16.msra.mxu0 %v880
      %1170 = vmatprep.subr.bf16.mxu0 %v883
      %1171 = vmatpush1.bf16.msra.mxu0 %v882
      %1172 = vmatprep.subr.bf16.mxu0 %v885
      %1173 = vmatpush1.bf16.msra.mxu0 %v884
      %1174 = vmatprep.subr.bf16.mxu0 %v887
      %1175 = vmatpush1.bf16.msra.mxu0 %v886
      %1176 = vmatprep.subr.bf16.mxu0 %v889
      %1177 = vmatpush1.bf16.msra.mxu0 %v888
      %1178 = vmatprep.subr.bf16.mxu0 %v891
      %1179 = vmatpush1.bf16.msra.mxu0 %v890
      %1180 = vmatprep.subr.bf16.mxu0 %v893
      %1181 = vmatpush1.bf16.msra.mxu0 %v892
      %1182 = vmatprep.subr.bf16.mxu0 %v895
      %1183 = vmatpush1.bf16.msra.mxu0 %v894
      %1184 = vmatprep.mubr.bf16.mxu0 %v415
      %1185 = vmatmul.mubr.bf16.gmra.mrb[0].mxu0 %v414
      %v1186 = vpop.f32.mrb[0].mxu0
      %v1187 = vadd.f32 0.0, %v1186
      %v1188 = vpop.f32.mrb[0].mxu0
      %v1189 = vadd.f32 0.0, %v1188
      %v1190 = vpop.f32.mrb[0].mxu0
      %v1191 = vadd.f32 0.0, %v1190
      %v1192 = vpop.f32.mrb[0].mxu0
      %v1193 = vadd.f32 0.0, %v1192
      %1194 = vdwg.mxu0
      %1195 = vmatprep.subr.bf16.mxu0 %v897
      %1196 = vmatpush1.bf16.msra.mxu0 %v896
      %1197 = vmatprep.subr.bf16.mxu0 %v899
      %1198 = vmatpush1.bf16.msra.mxu0 %v898
      %1199 = vmatprep.subr.bf16.mxu0 %v901
      %1200 = vmatpush1.bf16.msra.mxu0 %v900
      %1201 = vmatprep.subr.bf16.mxu0 %v903
      %1202 = vmatpush1.bf16.msra.mxu0 %v902
      %1203 = vmatprep.subr.bf16.mxu0 %v905
      %1204 = vmatpush1.bf16.msra.mxu0 %v904
      %1205 = vmatprep.subr.bf16.mxu0 %v907
      %1206 = vmatpush1.bf16.msra.mxu0 %v906
      %1207 = vmatprep.subr.bf16.mxu0 %v909
      %1208 = vmatpush1.bf16.msra.mxu0 %v908
      %1209 = vmatprep.subr.bf16.mxu0 %v911
      %1210 = vmatpush1.bf16.msra.mxu0 %v910
      %1211 = vmatprep.subr.bf16.mxu0 %v913
      %1212 = vmatpush1.bf16.msra.mxu0 %v912
      %1213 = vmatprep.subr.bf16.mxu0 %v915
      %1214 = vmatpush1.bf16.msra.mxu0 %v914
      %1215 = vmatprep.subr.bf16.mxu0 %v917
      %1216 = vmatpush1.bf16.msra.mxu0 %v916
      %1217 = vmatprep.subr.bf16.mxu0 %v919
      %1218 = vmatpush1.bf16.msra.mxu0 %v918
      %1219 = vmatprep.subr.bf16.mxu0 %v921
      %1220 = vmatpush1.bf16.msra.mxu0 %v920
      %1221 = vmatprep.subr.bf16.mxu0 %v923
      %1222 = vmatpush1.bf16.msra.mxu0 %v922
      %1223 = vmatprep.subr.bf16.mxu0 %v925
      %1224 = vmatpush1.bf16.msra.mxu0 %v924
      %1225 = vmatprep.subr.bf16.mxu0 %v927
      %1226 = vmatpush1.bf16.msra.mxu0 %v926
      %1227 = vmatprep.mubr.bf16.mxu0 %v417
      %1228 = vmatmul.mubr.bf16.gmra.mrb[0].mxu0 %v416
      %v1229 = vpop.f32.mrb[0].mxu0
      %v1230 = vadd.f32 %v1187, %v1229
      %v1231 = vpop.f32.mrb[0].mxu0
      %v1232 = vadd.f32 %v1189, %v1231
      %v1233 = vpop.f32.mrb[0].mxu0
      %v1234 = vadd.f32 %v1191, %v1233
      %v1235 = vpop.f32.mrb[0].mxu0
      %v1236 = vadd.f32 %v1193, %v1235
      %1237 = vdwg.mxu0
      %1238 = vmatprep.subr.bf16.mxu0 %v929
      %1239 = vmatpush1.bf16.msra.mxu0 %v928
      %1240 = vmatprep.subr.bf16.mxu0 %v931
      %1241 = vmatpush1.bf16.msra.mxu0 %v930
      %1242 = vmatprep.subr.bf16.mxu0 %v933
      %1243 = vmatpush1.bf16.msra.mxu0 %v932
      %1244 = vmatprep.subr.bf16.mxu0 %v935
      %1245 = vmatpush1.bf16.msra.mxu0 %v934
      %1246 = vmatprep.subr.bf16.mxu0 %v937
      %1247 = vmatpush1.bf16.msra.mxu0 %v936
      %1248 = vmatprep.subr.bf16.mxu0 %v939
      %1249 = vmatpush1.bf16.msra.mxu0 %v938
      %1250 = vmatprep.subr.bf16.mxu0 %v941
      %1251 = vmatpush1.bf16.msra.mxu0 %v940
      %1252 = vmatprep.subr.bf16.mxu0 %v943
      %1253 = vmatpush1.bf16.msra.mxu0 %v942
      %1254 = vmatprep.subr.bf16.mxu0 %v945
      %1255 = vmatpush1.bf16.msra.mxu0 %v944
      %1256 = vmatprep.subr.bf16.mxu0 %v947
      %1257 = vmatpush1.bf16.msra.mxu0 %v946
      %1258 = vmatprep.subr.bf16.mxu0 %v949
      %1259 = vmatpush1.bf16.msra.mxu0 %v948
      %1260 = vmatprep.subr.bf16.mxu0 %v951
      %1261 = vmatpush1.bf16.msra.mxu0 %v950
      %1262 = vmatprep.subr.bf16.mxu0 %v953
      %1263 = vmatpush1.bf16.msra.mxu0 %v952
      %1264 = vmatprep.subr.bf16.mxu0 %v955
      %1265 = vmatpush1.bf16.msra.mxu0 %v954
      %1266 = vmatprep.subr.bf16.mxu0 %v957
      %1267 = vmatpush1.bf16.msra.mxu0 %v956
      %1268 = vmatprep.subr.bf16.mxu0 %v959
      %1269 = vmatpush1.bf16.msra.mxu0 %v958
      %1270 = vmatprep.mubr.bf16.mxu0 %v419
      %1271 = vmatmul.mubr.bf16.gmra.mrb[0].mxu0 %v418
      %v1272 = vpop.f32.mrb[0].mxu0
      %v1273 = vadd.f32 %v1230, %v1272
      %v1274 = vpop.f32.mrb[0].mxu0
      %v1275 = vadd.f32 %v1232, %v1274
      %v1276 = vpop.f32.mrb[0].mxu0
      %v1277 = vadd.f32 %v1234, %v1276
      %v1278 = vpop.f32.mrb[0].mxu0
      %v1279 = vadd.f32 %v1236, %v1278
      %1280 = vdwg.mxu0
      %1281 = vmatprep.subr.bf16.mxu0 %v961
      %1282 = vmatpush1.bf16.msra.mxu0 %v960
      %1283 = vmatprep.subr.bf16.mxu0 %v963
      %1284 = vmatpush1.bf16.msra.mxu0 %v962
      %1285 = vmatprep.subr.bf16.mxu0 %v965
      %1286 = vmatpush1.bf16.msra.mxu0 %v964
      %1287 = vmatprep.subr.bf16.mxu0 %v967
      %1288 = vmatpush1.bf16.msra.mxu0 %v966
      %1289 = vmatprep.subr.bf16.mxu0 %v969
      %1290 = vmatpush1.bf16.msra.mxu0 %v968
      %1291 = vmatprep.subr.bf16.mxu0 %v971
      %1292 = vmatpush1.bf16.msra.mxu0 %v970
      %1293 = vmatprep.subr.bf16.mxu0 %v973
      %1294 = vmatpush1.bf16.msra.mxu0 %v972
      %1295 = vmatprep.subr.bf16.mxu0 %v975
      %1296 = vmatpush1.bf16.msra.mxu0 %v974
      %1297 = vmatprep.subr.bf16.mxu0 %v977
      %1298 = vmatpush1.bf16.msra.mxu0 %v976
      %1299 = vmatprep.subr.bf16.mxu0 %v979
      %1300 = vmatpush1.bf16.msra.mxu0 %v978
      %1301 = vmatprep.subr.bf16.mxu0 %v981
      %1302 = vmatpush1.bf16.msra.mxu0 %v980
      %1303 = vmatprep.subr.bf16.mxu0 %v983
      %1304 = vmatpush1.bf16.msra.mxu0 %v982
      %1305 = vmatprep.subr.bf16.mxu0 %v985
      %1306 = vmatpush1.bf16.msra.mxu0 %v984
      %1307 = vmatprep.subr.bf16.mxu0 %v987
      %1308 = vmatpush1.bf16.msra.mxu0 %v986
      %1309 = vmatprep.subr.bf16.mxu0 %v989
      %1310 = vmatpush1.bf16.msra.mxu0 %v988
      %1311 = vmatprep.subr.bf16.mxu0 %v991
      %1312 = vmatpush1.bf16.msra.mxu0 %v990
      %1313 = vmatprep.mubr.bf16.mxu0 %v421
      %1314 = vmatmul.mubr.bf16.gmra.mrb[0].mxu0 %v420
      %v1315 = vpop.f32.mrb[0].mxu0
      %v1316 = vadd.f32 %v1273, %v1315
      %v1317 = vpop.f32.mrb[0].mxu0
      %v1318 = vadd.f32 %v1275, %v1317
      %v1319 = vpop.f32.mrb[0].mxu0
      %v1320 = vadd.f32 %v1277, %v1319
      %v1321 = vpop.f32.mrb[0].mxu0
      %v1322 = vadd.f32 %v1279, %v1321
      %1323 = vdwg.mxu0
      %1324 = vmatprep.subr.bf16.mxu0 %v993
      %1325 = vmatpush1.bf16.msra.mxu0 %v992
      %1326 = vmatprep.subr.bf16.mxu0 %v995
      %1327 = vmatpush1.bf16.msra.mxu0 %v994
      %1328 = vmatprep.subr.bf16.mxu0 %v997
      %1329 = vmatpush1.bf16.msra.mxu0 %v996
      %1330 = vmatprep.subr.bf16.mxu0 %v999
      %1331 = vmatpush1.bf16.msra.mxu0 %v998
      %1332 = vmatprep.subr.bf16.mxu0 %v1001
      %1333 = vmatpush1.bf16.msra.mxu0 %v1000
      %1334 = vmatprep.subr.bf16.mxu0 %v1003
      %1335 = vmatpush1.bf16.msra.mxu0 %v1002
      %1336 = vmatprep.subr.bf16.mxu0 %v1005
      %1337 = vmatpush1.bf16.msra.mxu0 %v1004
      %1338 = vmatprep.subr.bf16.mxu0 %v1007
      %1339 = vmatpush1.bf16.msra.mxu0 %v1006
      %1340 = vmatprep.subr.bf16.mxu0 0
      %1341 = vmatpush1.bf16.msra.mxu0 0
      %1342 = vmatprep.subr.bf16.mxu0 0
      %1343 = vmatpush1.bf16.msra.mxu0 0
      %1344 = vmatprep.subr.bf16.mxu0 0
      %1345 = vmatpush1.bf16.msra.mxu0 0
      %1346 = vmatprep.subr.bf16.mxu0 0
      %1347 = vmatpush1.bf16.msra.mxu0 0
      %1348 = vmatprep.subr.bf16.mxu0 0
      %1349 = vmatpush1.bf16.msra.mxu0 0
      %1350 = vmatprep.subr.bf16.mxu0 0
      %1351 = vmatpush1.bf16.msra.mxu0 0
      %1352 = vmatprep.subr.bf16.mxu0 0
      %1353 = vmatpush1.bf16.msra.mxu0 0
      %1354 = vmatprep.subr.bf16.mxu0 0
      %1355 = vmatpush1.bf16.msra.mxu0 0
      %1356 = vmatprep.mubr.bf16.mxu0 0
      %1357 = vmatmul.mubr.bf16.gmra.mrb[0].mxu0 %v422
      %v1358 = vpop.f32.mrb[0].mxu0
      %v1359 = vadd.f32 %v1316, %v1358
      %v1360 = vpop.f32.mrb[0].mxu0
      %v1361 = vadd.f32 %v1318, %v1360
      %v1362 = vpop.f32.mrb[0].mxu0
      %v1363 = vadd.f32 %v1320, %v1362
      %v1364 = vpop.f32.mrb[0].mxu0
      %v1365 = vadd.f32 %v1322, %v1364
      %1366 = vdwg.mxu0
      %v1367 = vpack.c.bf16 %v1363, %v1359
      %v1368 = vpack.c.bf16 %v1365, %v1361
      %v1371 = vunpack.c.l.b16 %v1367
      %v1372 = vunpack.c.l.b16 %v1368
      %v1373 = vunpack.c.h.b16 %v1367
      %v1374 = vunpack.c.h.b16 %v1368
      %v1375 = vpack.c.b16 %v1372, %v1371
      %v1376 = vpack.c.b16 %v1374, %v1373
      %1379 = vst [vmem:[%s219] sm:$0xff] %v1375
      %1380 = vst [vmem:[%s219 + $0x8] sm:$0xff] %v1376
      %v1381 = vadd.f32 %v1359, %v1363
      %v1382 = vadd.f32 %v1361, %v1365
      %1383 = vst [vmem:[%s225] sm:$0xff] %v1381
      %1384 = vst [vmem:[%s225 + $0x8] sm:$0xff] %v1382
      %v1385 = vmul.f32 %v1359, %v1359
      %v1386 = vmul.f32 %v1361, %v1361
      %v1387 = vmul.f32 %v1363, %v1363
      %v1388 = vmul.f32 %v1365, %v1365
      %v1389 = vadd.f32 %v1385, %v1387
      %v1390 = vadd.f32 %v1386, %v1388
      %1391 = vst [vmem:[%s230] sm:$0xff] %v1389
      %1392 = vst [vmem:[%s230 + $0x8] sm:$0xff] %v1390
      %s1393 = smul.u32 2, %s16
      %p1394 = scmp.lt.s32.totalorder %s1393, 3
      %s1395 = scalar_select %p1394, %s1393, 3
      %s1396 = smul.addr %s1395, 2
      %s1397 = smul.addr %s1396, 4
      %s1398 = scalar_lea.vmem %s2, %s1397
      %p1399 = scmp.lt.s32.totalorder %s16, 1
      %s1400 = scalar_select %p1399, %s16, 1
      %s1401 = smul.addr %s1400, 2
      %s1402 = smul.addr %s1401, 8
      %s1403 = scalar_lea.vmem %s3, %s1402
      %p1404 = scmp.lt.s32.totalorder %s16, 1
      %s1405 = scalar_select %p1404, %s16, 1
      %s1406 = smul.addr %s1405, 2
      %s1407 = smul.addr %s1406, 8
      %s1408 = scalar_lea.vmem %s4, %s1407
      // Predicated region
      $region29: #{_lambda_.11} parent=27 // pred_check
        %p1409 = pneg %p81
      $region30: #{_lambda_.11} parent=27 // pred_check_branch
        %1411 = sbr.rel (%p1409) target = $region32
      $region31: #{_lambda_.11} parent=27 // pred_region
        %s1412 = smul.u32 2, %s16
      $region32: #{_lambda_.11} parent=27 // pred_fallthru
        _
      // Predicated region
      $region33: #{_lambda_.11} parent=27 // pred_check
        %p1413 = pneg %p107
      $region34: #{_lambda_.11} parent=27 // pred_check_branch
        %1415 = sbr.rel (%p1413) target = $region36
      $region35: #{_lambda_.11} parent=27 // pred_region
        _
      $region36: #{_lambda_.11} parent=27 // pred_fallthru
        _
      // Predicated region
      $region37: #{_lambda_.11} parent=27 // pred_check
        %p1416 = pneg %p133
      $region38: #{_lambda_.11} parent=27 // pred_check_branch
        %1418 = sbr.rel (%p1416) target = $region40
      $region39: #{_lambda_.11} parent=27 // pred_region
        _
      $region40: #{_lambda_.11} parent=27 // pred_fallthru
        _
    $region28: #{_lambda_.11} parent=5 // pred_fallthru
      _
    %p1419 = scmp.le.s32.totalorder 2, %s11
    // Predicated region
    $region41: #{_lambda_.11} parent=5 // pred_check
      %p1420 = pneg %p1419
    $region42: #{_lambda_.11} parent=5 // pred_check_branch
      %1422 = sbr.rel (%p1420) target = $region44
    $region43: #{_lambda_.11} parent=5 // pred_region
      %s1423 = ssub.s32 %s11, 2
      // Predicated region
      $region45: #{_lambda_.11} parent=43 // pred_check
        %p1424 = pneg %p87
      $region46: #{_lambda_.11} parent=43 // pred_check_branch
        %1426 = sbr.rel (%p1424) target = $region48
      $region47: #{_lambda_.11} parent=43 // pred_region
        %s1427 = smul.u32 2, %s17
        %p1428 = scmp.lt.s32.totalorder %s1427, 3
        %s1429 = scalar_select %p1428, %s1427, 3
        %s1430 = smul.addr %s1429, 2
        %s1431 = smul.addr %s1430, 4
        %s1432 = scalar_lea.vmem %s2, %s1431
      $region48: #{_lambda_.11} parent=43 // pred_fallthru
        _
      // Predicated region
      $region49: #{_lambda_.11} parent=43 // pred_check
        %p1433 = pneg %p113
      $region50: #{_lambda_.11} parent=43 // pred_check_branch
        %1435 = sbr.rel (%p1433) target = $region52
      $region51: #{_lambda_.11} parent=43 // pred_region
        %p1436 = scmp.lt.s32.totalorder %s17, 1
        %s1437 = scalar_select %p1436, %s17, 1
        %s1438 = smul.addr %s1437, 2
        %s1439 = smul.addr %s1438, 8
        %s1440 = scalar_lea.vmem %s3, %s1439
      $region52: #{_lambda_.11} parent=43 // pred_fallthru
        _
      // Predicated region
      $region53: #{_lambda_.11} parent=43 // pred_check
        %p1441 = pneg %p139
      $region54: #{_lambda_.11} parent=43 // pred_check_branch
        %1443 = sbr.rel (%p1441) target = $region56
      $region55: #{_lambda_.11} parent=43 // pred_region
        %p1444 = scmp.lt.s32.totalorder %s17, 1
        %s1445 = scalar_select %p1444, %s17, 1
        %s1446 = smul.addr %s1445, 2
        %s1447 = smul.addr %s1446, 8
        %s1448 = scalar_lea.vmem %s4, %s1447
      $region56: #{_lambda_.11} parent=43 // pred_fallthru
        _
    $region44: #{_lambda_.11} parent=5 // pred_fallthru
      _
  $region6: #{_lambda_.11} parent=0 // loop_footer
    %s15 = sadd.s32 1, %s11
  $region7: #{_lambda_.11} parent=0 // loop_footer_branch
    %10 = sbr.rel target = $region3
  $region8: #{_lambda_.11} parent=0 // loop_exit
    _

// kernel: tile.48
$region0: #{tile.48}
  #allocation0 [shape = 's32[1]{0}', space=sflag, size = 0x4, scoped, tag = 'scoped memory for tile.48']
  %s0 = inlined_call_operand.vmem [shape: f32[32], index: 0, kind: input, shape index: {}]
  %s1 = inlined_call_operand.vmem [shape: f32[4,32], index: 1, kind: output, shape index: {}]
  // Predicated region
  $region2: #{tile.48} parent=0 // pred_check
    _
  $region3: #{tile.48} parent=0 // pred_check_branch
    %3 = sbr.rel (0) target = $region5
  $region4: #{tile.48} parent=0 // pred_region
    _
  $region5: #{tile.48} parent=0 // pred_fallthru
    _
  %v4 = vld [vmem:[%s0] ss:$0 sm:$0xff]
  %5 = vst [vmem:[%s1] sm:$0xf] %v4

// kernel: _lambda_.13
$region0: #{_lambda_.13}
  #allocation0 [shape = 'u32[]', space=smem, size = 0x4, offset = 0x4, fixed_abs, tag = 'smem constant byte address 0x4 - core index']
  #allocation1 [shape = 'u32[144,128]{1,0:T(1,128)}', space=vmem, size = 0x12000, scoped, tag = 'internal scratch']
  %s0 = inlined_call_operand.vmem [shape: bf16[128,576], index: 0, kind: input, shape index: {}]
  %s1 = inlined_call_operand.hbm [shape: bf16[576,128], index: 1, kind: input, shape index: {}]
  %s2 = inlined_call_operand.vmem [shape: bf16[128,128], index: 2, kind: output, shape index: {0}]
  %s3 = inlined_call_operand.vmem [shape: f32[2,8,128], index: 3, kind: output, shape index: {1}]
  %s4 = inlined_call_operand.vmem [shape: f32[2,8,128], index: 4, kind: output, shape index: {2}]
  %5 = xla_tuple %s2, %s3, %s4
  %s6 = sld [smem:[#allocation0]]
  $region61: #{_lambda_.13} parent=0
    _
  %s8 = ssub.s32 1, %s6
  %s9 = scalar_select 0, %s8, %s6
  $region1: #{_lambda_.13} parent=0
    #allocation2 [shape = 'u8[147456]{0}', space=vmem, size = 0x24000, scoped, tag = 'input window, operand 1, single buffered']
    #allocation3 [shape = 's32[2]{0}', space=sflag, size = 0x8, scoped, tag = 'scoped memory for _lambda_.13']
    %10 = vsyncpa [#allocation3], 0
    loop: start=0, step=1, limit=4
    $region2: #{_lambda_.13} parent=1 // loop_pre_header
      _
    $region3: #{_lambda_.13} parent=1 // loop_header
      %s12 = sphi 0, %s16
      %p13 = scmp.ge.s32.totalorder %s12, 4
      %s22 = sphi 0, %s24
      %s25 = sphi 0, %s22
      %s26 = sphi 0, %s25
      %s42 = sphi 0, %s26
      %s46 = sphi 0, %s46
      %s48 = sphi 0, %s46
      %s49 = sphi 0, %s48
      %s63 = sphi 0, %s49
      %s69 = sphi 0, %s71
      %s72 = sphi 0, %s69
      %s73 = sphi 0, %s72
      %s89 = sphi 0, %s73
      %s95 = sphi 0, %s97
      %s98 = sphi 0, %s95
      %s99 = sphi 0, %s98
      %s115 = sphi 0, %s99
      %s121 = sphi 0, %s123
      %s124 = sphi 0, %s121
      %s125 = sphi 0, %s124
      %s141 = sphi 0, %s125
    $region4: #{_lambda_.13} parent=1 // loop_header_branch
      %15 = sbr.rel (%p13) target = $region8
    $region5: #{_lambda_.13} parent=1 // loop_body
      %s17 = ssub.s32 %s12, 1
      %s18 = ssub.s32 %s12, 2
      %s19 = sadd.s32 %s12, 1
      %s20 = ssub.s32 %s12, %s19
      %p21 = scmp.eq.s32.totalorder %s20, 0
      %s23 = sadd.s32 %s22, 1
      %s24 = scalar_select %p21, %s22, %s23
      %p27 = pneg %p21
      %p28 = scmp.eq.s32.totalorder %s12, 1
      %p29 = por %p27, %p28
      %p30 = scmp.ne.s32.totalorder %s22, %s25
      %p31 = scmp.eq.s32.totalorder %s12, 0
      %p32 = por %p30, %p31
      %p33 = scmp.ne.s32.totalorder %s22, %s25
      %p34 = scmp.eq.s32.totalorder %s17, 1
      %p35 = por %p33, %p34
      %p36 = scmp.ne.s32.totalorder %s25, %s26
      %p37 = scmp.eq.s32.totalorder %s17, 0
      %p38 = por %p36, %p37
      %p39 = scmp.ne.s32.totalorder %s25, %s26
      %p40 = scmp.eq.s32.totalorder %s18, 1
      %p41 = por %p39, %p40
      %p43 = scmp.ne.s32.totalorder %s26, %s42
      %p44 = scmp.eq.s32.totalorder %s18, 0
      %p45 = por %p43, %p44
      %s47 = sadd.s32 %s46, 1
      %p50 = scmp.eq.s32.totalorder %s12, 1
      %p51 = scmp.ne.s32.totalorder %s46, %s48
      %p52 = scmp.eq.s32.totalorder %s12, 0
      %p53 = por %p51, %p52
      %p54 = scmp.ne.s32.totalorder %s46, %s48
      %p55 = scmp.eq.s32.totalorder %s17, 1
      %p56 = por %p54, %p55
      %p57 = scmp.ne.s32.totalorder %s48, %s49
      %p58 = scmp.eq.s32.totalorder %s17, 0
      %p59 = por %p57, %p58
      %p60 = scmp.ne.s32.totalorder %s48, %s49
      %p61 = scmp.eq.s32.totalorder %s18, 1
      %p62 = por %p60, %p61
      %p64 = scmp.ne.s32.totalorder %s49, %s63
      %p65 = scmp.eq.s32.totalorder %s18, 0
      %p66 = por %p64, %p65
      %s67 = ssub.s32 %s12, %s19
      %p68 = scmp.eq.s32.totalorder %s67, 0
      %s70 = sadd.s32 %s69, 1
      %s71 = scalar_select %p68, %s69, %s70
      %p74 = pneg %p68
      %p75 = scmp.eq.s32.totalorder %s12, 1
      %p76 = por %p74, %p75
      %p77 = scmp.ne.s32.totalorder %s69, %s72
      %p78 = scmp.eq.s32.totalorder %s12, 0
      %p79 = por %p77, %p78
      %p80 = scmp.ne.s32.totalorder %s69, %s72
      %p81 = scmp.eq.s32.totalorder %s17, 1
      %p82 = por %p80, %p81
      %p83 = scmp.ne.s32.totalorder %s72, %s73
      %p84 = scmp.eq.s32.totalorder %s17, 0
      %p85 = por %p83, %p84
      %p86 = scmp.ne.s32.totalorder %s72, %s73
      %p87 = scmp.eq.s32.totalorder %s18, 1
      %p88 = por %p86, %p87
      %p90 = scmp.ne.s32.totalorder %s73, %s89
      %p91 = scmp.eq.s32.totalorder %s18, 0
      %p92 = por %p90, %p91
      %s93 = ssub.s32 %s12, %s19
      %p94 = scmp.eq.s32.totalorder %s93, 0
      %s96 = sadd.s32 %s95, 1
      %s97 = scalar_select %p94, %s95, %s96
      %p100 = pneg %p94
      %p101 = scmp.eq.s32.totalorder %s12, 1
      %p102 = por %p100, %p101
      %p103 = scmp.ne.s32.totalorder %s95, %s98
      %p104 = scmp.eq.s32.totalorder %s12, 0
      %p105 = por %p103, %p104
      %p106 = scmp.ne.s32.totalorder %s95, %s98
      %p107 = scmp.eq.s32.totalorder %s17, 1
      %p108 = por %p106, %p107
      %p109 = scmp.ne.s32.totalorder %s98, %s99
      %p110 = scmp.eq.s32.totalorder %s17, 0
      %p111 = por %p109, %p110
      %p112 = scmp.ne.s32.totalorder %s98, %s99
      %p113 = scmp.eq.s32.totalorder %s18, 1
      %p114 = por %p112, %p113
      %p116 = scmp.ne.s32.totalorder %s99, %s115
      %p117 = scmp.eq.s32.totalorder %s18, 0
      %p118 = por %p116, %p117
      %s119 = ssub.s32 %s12, %s19
      %p120 = scmp.eq.s32.totalorder %s119, 0
      %s122 = sadd.s32 %s121, 1
      %s123 = scalar_select %p120, %s121, %s122
      %p126 = pneg %p120
      %p127 = scmp.eq.s32.totalorder %s12, 1
      %p128 = por %p126, %p127
      %p129 = scmp.ne.s32.totalorder %s121, %s124
      %p130 = scmp.eq.s32.totalorder %s12, 0
      %p131 = por %p129, %p130
      %p132 = scmp.ne.s32.totalorder %s121, %s124
      %p133 = scmp.eq.s32.totalorder %s17, 1
      %p134 = por %p132, %p133
      %p135 = scmp.ne.s32.totalorder %s124, %s125
      %p136 = scmp.eq.s32.totalorder %s17, 0
      %p137 = por %p135, %p136
      %p138 = scmp.ne.s32.totalorder %s124, %s125
      %p139 = scmp.eq.s32.totalorder %s18, 1
      %p140 = por %p138, %p139
      %p142 = scmp.ne.s32.totalorder %s125, %s141
      %p143 = scmp.eq.s32.totalorder %s18, 0
      %p144 = por %p142, %p143
      %p145 = scmp.le.s32.totalorder 1, %s12
      %p146 = scmp.lt.s32.totalorder %s12, 3
      %p147 = pnand %p145, %p146
      %p148 = pneg %p147
      // Predicated region
      $region9: #{_lambda_.13} parent=5 // pred_check
        _
      $region10: #{_lambda_.13} parent=5 // pred_check_branch
        %150 = sbr.rel (%p147) target = $region12
      $region11: #{_lambda_.13} parent=5 // pred_region
        %s151 = ssub.s32 %s12, 1
        // Predicated region
        $region13: #{_lambda_.13} parent=11 // pred_check
          %p152 = pneg %p59
        $region14: #{_lambda_.13} parent=11 // pred_check_branch
          %154 = sbr.rel (%p152) target = $region16
        $region15: #{_lambda_.13} parent=11 // pred_region
          %s156 = ssub.s32 4608, 4608
          %157 = vsyncadd [#allocation3], %s156
          %s158 = sshll.u32 [#allocation2], 4
          %s159 = int_to_ptr.vmem [resolvable:$true] %s158
          %164 = dma.hbm_to_vmem [thread:$0]  %s1, 4608, %s159, [#allocation3], 64, 64, 4
        $region16: #{_lambda_.13} parent=11 // pred_fallthru
          _
      $region12: #{_lambda_.13} parent=5 // pred_fallthru
        _
      %p165 = scmp.lt.s32.totalorder %s12, 2
      // Predicated region
      $region17: #{_lambda_.13} parent=5 // pred_check
        %p166 = pneg %p165
      $region18: #{_lambda_.13} parent=5 // pred_check_branch
        %168 = sbr.rel (%p166) target = $region20
      $region19: #{_lambda_.13} parent=5 // pred_region
        // Predicated region
        $region21: #{_lambda_.13} parent=19 // pred_check
          %p169 = pneg %p32
        $region22: #{_lambda_.13} parent=19 // pred_check_branch
          %171 = sbr.rel (%p169) target = $region24
        $region23: #{_lambda_.13} parent=19 // pred_region
          %s172 = smul.u32 8, %s12
          %p173 = scmp.lt.s32.totalorder %s172, 15
          %s174 = scalar_select %p173, %s172, 15
          %s175 = smul.addr %s174, 5
          %s176 = smul.addr %s175, 4
          %s177 = scalar_lea.vmem %s0, %s176
          %s178 = smul.u32 8, %s12
        $region24: #{_lambda_.13} parent=19 // pred_fallthru
          _
      $region20: #{_lambda_.13} parent=5 // pred_fallthru
        _
      %p179 = scmp.le.s32.totalorder 1, %s12
      %p180 = scmp.lt.s32.totalorder %s12, 3
      %p181 = pnand %p179, %p180
      %p182 = pneg %p181
      // Predicated region
      $region25: #{_lambda_.13} parent=5 // pred_check
        _
      $region26: #{_lambda_.13} parent=5 // pred_check_branch
        %184 = sbr.rel (%p181) target = $region28
      $region27: #{_lambda_.13} parent=5 // pred_region
        %s185 = ssub.s32 %s12, 1
        // Predicated region
        $region29: #{_lambda_.13} parent=27 // pred_check
          %p186 = pneg %p59
        $region30: #{_lambda_.13} parent=27 // pred_check_branch
          %188 = sbr.rel (%p186) target = $region32
        $region31: #{_lambda_.13} parent=27 // pred_region
          %189 = dma.done [#allocation3], 4608
        $region32: #{_lambda_.13} parent=27 // pred_fallthru
          _
        %s190 = smul.u32 8, %s17
        %p191 = scmp.lt.s32.totalorder %s190, 15
        %s192 = scalar_select %p191, %s190, 15
        %s193 = smul.addr %s192, 5
        %s194 = smul.addr %s193, 4
        %s195 = scalar_lea.vmem %s0, %s194
        %p196 = pneg %p38
        %p197 = pneg %p35
        %p198 = pneg %p59
        %p199 = pneg %p56
        %p200 = pneg %p85
        %p201 = pneg %p82
        %s202 = smul.u32 8, %s17
        %p203 = scmp.lt.s32.totalorder %s202, 15
        %s204 = scalar_select %p203, %s202, 15
        %s205 = smul.addr %s204, 4
        %s206 = scalar_lea.vmem %s2, %s205
        %p207 = pneg %p111
        %p208 = pneg %p108
        %p209 = scmp.lt.s32.totalorder %s17, 1
        %s210 = scalar_select %p209, %s17, 1
        %s211 = smul.addr %s210, 8
        %s212 = scalar_lea.vmem %s3, %s211
        %p213 = pneg %p137
        %p214 = pneg %p134
        %p215 = scmp.lt.s32.totalorder %s17, 1
        %s216 = scalar_select %p215, %s17, 1
        %s217 = smul.addr %s216, 8
        %s218 = scalar_lea.vmem %s4, %s217
        %s219 = smul.u32 8, %s17
        %p220 = scmp.lt.s32.totalorder %s219, 15
        %s221 = scalar_select %p220, %s219, 15
        %s222 = smul.addr %s221, 5
        %s223 = smul.addr %s222, 4
        %s224 = scalar_lea.vmem %s0, %s223
        %s225 = smul.u32 8, %s17
        %s226 = smul.u32 8, %s17
        %p227 = scmp.lt.s32.totalorder %s226, 15
        %s228 = scalar_select %p227, %s226, 15
        %s229 = smul.addr %s228, 4
        %s230 = scalar_lea.vmem %s2, %s229
        %s231 = smul.u32 8, %s17
        %p232 = scmp.lt.s32.totalorder %s17, 1
        %s233 = scalar_select %p232, %s17, 1
        %s234 = smul.addr %s233, 8
        %s235 = scalar_lea.vmem %s3, %s234
        %p236 = scmp.lt.s32.totalorder %s17, 1
        %s237 = scalar_select %p236, %s17, 1
        %s238 = smul.addr %s237, 8
        %s239 = scalar_lea.vmem %s4, %s238
        %v241 = vld [vmem:[%s224] sm:$0xff]
        %v242 = vld [vmem:[%s224 + $0x8] sm:$0xff]
        %v243 = vld [vmem:[%s224 + $0x10] sm:$0xf]
        %v244 = vld [vmem:[%s224 + $0x14] sm:$0xff]
        %v245 = vld [vmem:[%s224 + $0x1c] sm:$0xff]
        %v246 = vld [vmem:[%s224 + $0x24] sm:$0xf]
        %v247 = vld [vmem:[%s224 + $0x28] sm:$0xff]
        %v248 = vld [vmem:[%s224 + $0x30] sm:$0xff]
        %v249 = vld [vmem:[%s224 + $0x38] sm:$0xf]
        %v250 = vld [vmem:[%s224 + $0x3c] sm:$0xff]
        %v251 = vld [vmem:[%s224 + $0x44] sm:$0xff]
        %v252 = vld [vmem:[%s224 + $0x4c] sm:$0xf]
        %v253 = vld [vmem:[%s224 + $0x50] sm:$0xff]
        %v254 = vld [vmem:[%s224 + $0x58] sm:$0xff]
        %v255 = vld [vmem:[%s224 + $0x60] sm:$0xf]
        %v256 = vld [vmem:[%s224 + $0x64] sm:$0xff]
        %v257 = vld [vmem:[%s224 + $0x6c] sm:$0xff]
        %v258 = vld [vmem:[%s224 + $0x74] sm:$0xf]
        %v259 = vld [vmem:[%s224 + $0x78] sm:$0xff]
        %v260 = vld [vmem:[%s224 + $0x80] sm:$0xff]
        %v261 = vld [vmem:[%s224 + $0x88] sm:$0xf]
        %v262 = vld [vmem:[%s224 + $0x8c] sm:$0xff]
        %v263 = vld [vmem:[%s224 + $0x94] sm:$0xff]
        %v264 = vld [vmem:[%s224 + $0x9c] sm:$0xf]
        %v265 = vld [vmem:[#allocation2] sm:$0xf]
        %v266 = vld [vmem:[#allocation2 + $0x4] sm:$0xf]
        %v267 = vld [vmem:[#allocation2 + $0x8] sm:$0xf]
        %v268 = vld [vmem:[#allocation2 + $0xc] sm:$0xf]
        %v269 = vld [vmem:[#allocation2 + $0x10] sm:$0xf]
        %v270 = vld [vmem:[#allocation2 + $0x14] sm:$0xf]
        %v271 = vld [vmem:[#allocation2 + $0x18] sm:$0xf]
        %v272 = vld [vmem:[#allocation2 + $0x1c] sm:$0xf]
        %v273 = vld [vmem:[#allocation2 + $0x20] sm:$0xf]
        %v274 = vld [vmem:[#allocation2 + $0x24] sm:$0xf]
        %v275 = vld [vmem:[#allocation2 + $0x28] sm:$0xf]
        %v276 = vld [vmem:[#allocation2 + $0x2c] sm:$0xf]
        %v277 = vld [vmem:[#allocation2 + $0x30] sm:$0xf]
        %v278 = vld [vmem:[#allocation2 + $0x34] sm:$0xf]
        %v279 = vld [vmem:[#allocation2 + $0x38] sm:$0xf]
        %v280 = vld [vmem:[#allocation2 + $0x3c] sm:$0xf]
        %v281 = vld [vmem:[#allocation2 + $0x40] sm:$0xf]
        %v282 = vld [vmem:[#allocation2 + $0x44] sm:$0xf]
        %v283 = vld [vmem:[#allocation2 + $0x48] sm:$0xf]
        %v284 = vld [vmem:[#allocation2 + $0x4c] sm:$0xf]
        %v285 = vld [vmem:[#allocation2 + $0x50] sm:$0xf]
        %v286 = vld [vmem:[#allocation2 + $0x54] sm:$0xf]
        %v287 = vld [vmem:[#allocation2 + $0x58] sm:$0xf]
        %v288 = vld [vmem:[#allocation2 + $0x5c] sm:$0xf]
        %v289 = vld [vmem:[#allocation2 + $0x60] sm:$0xf]
        %v290 = vld [vmem:[#allocation2 + $0x64] sm:$0xf]
        %v291 = vld [vmem:[#allocation2 + $0x68] sm:$0xf]
        %v292 = vld [vmem:[#allocation2 + $0x6c] sm:$0xf]
        %v293 = vld [vmem:[#allocation2 + $0x70] sm:$0xf]
        %v294 = vld [vmem:[#allocation2 + $0x74] sm:$0xf]
        %v295 = vld [vmem:[#allocation2 + $0x78] sm:$0xf]
        %v296 = vld [vmem:[#allocation2 + $0x7c] sm:$0xf]
        %v297 = vld [vmem:[#allocation2 + $0x80] sm:$0xf]
        %v298 = vld [vmem:[#allocation2 + $0x84] sm:$0xf]
        %v299 = vld [vmem:[#allocation2 + $0x88] sm:$0xf]
        %v300 = vld [vmem:[#allocation2 + $0x8c] sm:$0xf]
        %v301 = vld [vmem:[#allocation2 + $0x90] sm:$0xf]
        %v302 = vld [vmem:[#allocation2 + $0x94] sm:$0xf]
        %v303 = vld [vmem:[#allocation2 + $0x98] sm:$0xf]
        %v304 = vld [vmem:[#allocation2 + $0x9c] sm:$0xf]
        %v305 = vld [vmem:[#allocation2 + $0xa0] sm:$0xf]
        %v306 = vld [vmem:[#allocation2 + $0xa4] sm:$0xf]
        %v307 = vld [vmem:[#allocation2 + $0xa8] sm:$0xf]
        %v308 = vld [vmem:[#allocation2 + $0xac] sm:$0xf]
        %v309 = vld [vmem:[#allocation2 + $0xb0] sm:$0xf]
        %v310 = vld [vmem:[#allocation2 + $0xb4] sm:$0xf]
        %v311 = vld [vmem:[#allocation2 + $0xb8] sm:$0xf]
        %v312 = vld [vmem:[#allocation2 + $0xbc] sm:$0xf]
        %v313 = vld [vmem:[#allocation2 + $0xc0] sm:$0xf]
        %v314 = vld [vmem:[#allocation2 + $0xc4] sm:$0xf]
        %v315 = vld [vmem:[#allocation2 + $0xc8] sm:$0xf]
        %v316 = vld [vmem:[#allocation2 + $0xcc] sm:$0xf]
        %v317 = vld [vmem:[#allocation2 + $0xd0] sm:$0xf]
        %v318 = vld [vmem:[#allocation2 + $0xd4] sm:$0xf]
        %v319 = vld [vmem:[#allocation2 + $0xd8] sm:$0xf]
        %v320 = vld [vmem:[#allocation2 + $0xdc] sm:$0xf]
        %v321 = vld [vmem:[#allocation2 + $0xe0] sm:$0xf]
        %v322 = vld [vmem:[#allocation2 + $0xe4] sm:$0xf]
        %v323 = vld [vmem:[#allocation2 + $0xe8] sm:$0xf]
        %v324 = vld [vmem:[#allocation2 + $0xec] sm:$0xf]
        %v325 = vld [vmem:[#allocation2 + $0xf0] sm:$0xf]
        %v326 = vld [vmem:[#allocation2 + $0xf4] sm:$0xf]
        %v327 = vld [vmem:[#allocation2 + $0xf8] sm:$0xf]
        %v328 = vld [vmem:[#allocation2 + $0xfc] sm:$0xf]
        %v329 = vld [vmem:[#allocation2 + $0x100] sm:$0xf]
        %v330 = vld [vmem:[#allocation2 + $0x104] sm:$0xf]
        %v331 = vld [vmem:[#allocation2 + $0x108] sm:$0xf]
        %v332 = vld [vmem:[#allocation2 + $0x10c] sm:$0xf]
        %v333 = vld [vmem:[#allocation2 + $0x110] sm:$0xf]
        %v334 = vld [vmem:[#allocation2 + $0x114] sm:$0xf]
        %v335 = vld [vmem:[#allocation2 + $0x118] sm:$0xf]
        %v336 = vld [vmem:[#allocation2 + $0x11c] sm:$0xf]
        %v361 = vunpack.c.l.b16 %v241
        %v362 = vunpack.c.h.b16 %v241
        %v363 = vunpack.c.l.b16 %v242
        %v364 = vunpack.c.h.b16 %v242
        %v365 = vunpack.c.l.b16 %v243
        %v366 = vunpack.c.l.b16 %v244
        %v367 = vunpack.c.h.b16 %v244
        %v368 = vunpack.c.l.b16 %v245
        %v369 = vunpack.c.h.b16 %v245
        %v370 = vunpack.c.l.b16 %v246
        %v371 = vunpack.c.l.b16 %v247
        %v372 = vunpack.c.h.b16 %v247
        %v373 = vunpack.c.l.b16 %v248
        %v374 = vunpack.c.h.b16 %v248
        %v375 = vunpack.c.l.b16 %v249
        %v376 = vunpack.c.l.b16 %v250
        %v377 = vunpack.c.h.b16 %v250
        %v378 = vunpack.c.l.b16 %v251
        %v379 = vunpack.c.h.b16 %v251
        %v380 = vunpack.c.l.b16 %v252
        %v381 = vunpack.c.l.b16 %v253
        %v382 = vunpack.c.h.b16 %v253
        %v383 = vunpack.c.l.b16 %v254
        %v384 = vunpack.c.h.b16 %v254
        %v385 = vunpack.c.l.b16 %v255
        %v386 = vunpack.c.l.b16 %v256
        %v387 = vunpack.c.h.b16 %v256
        %v388 = vunpack.c.l.b16 %v257
        %v389 = vunpack.c.h.b16 %v257
        %v390 = vunpack.c.l.b16 %v258
        %v391 = vunpack.c.l.b16 %v259
        %v392 = vunpack.c.h.b16 %v259
        %v393 = vunpack.c.l.b16 %v260
        %v394 = vunpack.c.h.b16 %v260
        %v395 = vunpack.c.l.b16 %v261
        %v396 = vunpack.c.l.b16 %v262
        %v397 = vunpack.c.h.b16 %v262
        %v398 = vunpack.c.l.b16 %v263
        %v399 = vunpack.c.h.b16 %v263
        %v400 = vunpack.c.l.b16 %v264
        %v401 = vpack.c.b16 %v366, %v361
        %v402 = vpack.c.b16 %v367, %v362
        %v403 = vpack.c.b16 %v368, %v363
        %v404 = vpack.c.b16 %v369, %v364
        %v405 = vpack.c.b16 %v370, %v365
        %v406 = vpack.c.b16 %v376, %v371
        %v407 = vpack.c.b16 %v377, %v372
        %v408 = vpack.c.b16 %v378, %v373
        %v409 = vpack.c.b16 %v379, %v374
        %v410 = vpack.c.b16 %v380, %v375
        %v411 = vpack.c.b16 %v386, %v381
        %v412 = vpack.c.b16 %v387, %v382
        %v413 = vpack.c.b16 %v388, %v383
        %v414 = vpack.c.b16 %v389, %v384
        %v415 = vpack.c.b16 %v390, %v385
        %v416 = vpack.c.b16 %v396, %v391
        %v417 = vpack.c.b16 %v397, %v392
        %v418 = vpack.c.b16 %v398, %v393
        %v419 = vpack.c.b16 %v399, %v394
        %v420 = vpack.c.b16 %v400, %v395
        %v509 = vunpack.c.l.b16 %v265
        %v510 = vunpack.c.l.b16 %v266
        %v511 = vunpack.c.l.b16 %v267
        %v512 = vunpack.c.l.b16 %v268
        %v513 = vunpack.c.l.b16 %v269
        %v514 = vunpack.c.l.b16 %v270
        %v515 = vunpack.c.l.b16 %v271
        %v516 = vunpack.c.l.b16 %v272
        %v517 = vunpack.c.l.b16 %v273
        %v518 = vunpack.c.l.b16 %v274
        %v519 = vunpack.c.l.b16 %v275
        %v520 = vunpack.c.l.b16 %v276
        %v521 = vunpack.c.l.b16 %v277
        %v522 = vunpack.c.l.b16 %v278
        %v523 = vunpack.c.l.b16 %v279
        %v524 = vunpack.c.l.b16 %v280
        %v525 = vunpack.c.l.b16 %v281
        %v526 = vunpack.c.l.b16 %v282
        %v527 = vunpack.c.l.b16 %v283
        %v528 = vunpack.c.l.b16 %v284
        %v529 = vunpack.c.l.b16 %v285
        %v530 = vunpack.c.l.b16 %v286
        %v531 = vunpack.c.l.b16 %v287
        %v532 = vunpack.c.l.b16 %v288
        %v533 = vunpack.c.l.b16 %v289
        %v534 = vunpack.c.l.b16 %v290
        %v535 = vunpack.c.l.b16 %v291
        %v536 = vunpack.c.l.b16 %v292
        %v537 = vunpack.c.l.b16 %v293
        %v538 = vunpack.c.l.b16 %v294
        %v539 = vunpack.c.l.b16 %v295
        %v540 = vunpack.c.l.b16 %v296
        %v541 = vunpack.c.l.b16 %v297
        %v542 = vunpack.c.l.b16 %v298
        %v543 = vunpack.c.l.b16 %v299
        %v544 = vunpack.c.l.b16 %v300
        %v545 = vunpack.c.l.b16 %v301
        %v546 = vunpack.c.l.b16 %v302
        %v547 = vunpack.c.l.b16 %v303
        %v548 = vunpack.c.l.b16 %v304
        %v549 = vunpack.c.l.b16 %v305
        %v550 = vunpack.c.l.b16 %v306
        %v551 = vunpack.c.l.b16 %v307
        %v552 = vunpack.c.l.b16 %v308
        %v553 = vunpack.c.l.b16 %v309
        %v554 = vunpack.c.l.b16 %v310
        %v555 = vunpack.c.l.b16 %v311
        %v556 = vunpack.c.l.b16 %v312
        %v557 = vunpack.c.l.b16 %v313
        %v558 = vunpack.c.l.b16 %v314
        %v559 = vunpack.c.l.b16 %v315
        %v560 = vunpack.c.l.b16 %v316
        %v561 = vunpack.c.l.b16 %v317
        %v562 = vunpack.c.l.b16 %v318
        %v563 = vunpack.c.l.b16 %v319
        %v564 = vunpack.c.l.b16 %v320
        %v565 = vunpack.c.l.b16 %v321
        %v566 = vunpack.c.l.b16 %v322
        %v567 = vunpack.c.l.b16 %v323
        %v568 = vunpack.c.l.b16 %v324
        %v569 = vunpack.c.l.b16 %v325
        %v570 = vunpack.c.l.b16 %v326
        %v571 = vunpack.c.l.b16 %v327
        %v572 = vunpack.c.l.b16 %v328
        %v573 = vunpack.c.l.b16 %v329
        %v574 = vunpack.c.l.b16 %v330
        %v575 = vunpack.c.l.b16 %v331
        %v576 = vunpack.c.l.b16 %v332
        %v577 = vunpack.c.l.b16 %v333
        %v578 = vunpack.c.l.b16 %v334
        %v579 = vunpack.c.l.b16 %v335
        %v580 = vunpack.c.l.b16 %v336
        %v581 = vpack.c.b16 %v510, %v509
        %v582 = vpack.c.b16 %v512, %v511
        %v583 = vpack.c.b16 %v514, %v513
        %v584 = vpack.c.b16 %v516, %v515
        %v585 = vpack.c.b16 %v518, %v517
        %v586 = vpack.c.b16 %v520, %v519
        %v587 = vpack.c.b16 %v522, %v521
        %v588 = vpack.c.b16 %v524, %v523
        %v589 = vpack.c.b16 %v526, %v525
        %v590 = vpack.c.b16 %v528, %v527
        %v591 = vpack.c.b16 %v530, %v529
        %v592 = vpack.c.b16 %v532, %v531
        %v593 = vpack.c.b16 %v534, %v533
        %v594 = vpack.c.b16 %v536, %v535
        %v595 = vpack.c.b16 %v538, %v537
        %v596 = vpack.c.b16 %v540, %v539
        %v597 = vpack.c.b16 %v542, %v541
        %v598 = vpack.c.b16 %v544, %v543
        %v599 = vpack.c.b16 %v546, %v545
        %v600 = vpack.c.b16 %v548, %v547
        %v601 = vpack.c.b16 %v550, %v549
        %v602 = vpack.c.b16 %v552, %v551
        %v603 = vpack.c.b16 %v554, %v553
        %v604 = vpack.c.b16 %v556, %v555
        %v605 = vpack.c.b16 %v558, %v557
        %v606 = vpack.c.b16 %v560, %v559
        %v607 = vpack.c.b16 %v562, %v561
        %v608 = vpack.c.b16 %v564, %v563
        %v609 = vpack.c.b16 %v566, %v565
        %v610 = vpack.c.b16 %v568, %v567
        %v611 = vpack.c.b16 %v570, %v569
        %v612 = vpack.c.b16 %v572, %v571
        %v613 = vpack.c.b16 %v574, %v573
        %v614 = vpack.c.b16 %v576, %v575
        %v615 = vpack.c.b16 %v578, %v577
        %v616 = vpack.c.b16 %v580, %v579
        %vm653 = vcmask 523264
        %v655 = vsel %vm653, %v405, 0
        %v658 = vsel %vm653, %v410, 0
        %v661 = vsel %vm653, %v415, 0
        %v664 = vsel %vm653, %v420, 0
        %666 = vmatprep.subr.bf16.mxu0 0
        %667 = vmatpush1.bf16.msra.mxu0 %v581
        %668 = vmatprep.subr.bf16.mxu0 0
        %669 = vmatpush1.bf16.msra.mxu0 %v582
        %670 = vmatprep.subr.bf16.mxu0 0
        %671 = vmatpush1.bf16.msra.mxu0 %v583
        %672 = vmatprep.subr.bf16.mxu0 0
        %673 = vmatpush1.bf16.msra.mxu0 %v584
        %674 = vmatprep.subr.bf16.mxu0 0
        %675 = vmatpush1.bf16.msra.mxu0 %v585
        %676 = vmatprep.subr.bf16.mxu0 0
        %677 = vmatpush1.bf16.msra.mxu0 %v586
        %678 = vmatprep.subr.bf16.mxu0 0
        %679 = vmatpush1.bf16.msra.mxu0 %v587
        %680 = vmatprep.subr.bf16.mxu0 0
        %681 = vmatpush1.bf16.msra.mxu0 %v588
        %682 = vmatprep.subr.bf16.mxu0 0
        %683 = vmatpush1.bf16.msra.mxu0 %v589
        %684 = vmatprep.subr.bf16.mxu0 0
        %685 = vmatpush1.bf16.msra.mxu0 %v590
        %686 = vmatprep.subr.bf16.mxu0 0
        %687 = vmatpush1.bf16.msra.mxu0 %v591
        %688 = vmatprep.subr.bf16.mxu0 0
        %689 = vmatpush1.bf16.msra.mxu0 %v592
        %690 = vmatprep.subr.bf16.mxu0 0
        %691 = vmatpush1.bf16.msra.mxu0 %v593
        %692 = vmatprep.subr.bf16.mxu0 0
        %693 = vmatpush1.bf16.msra.mxu0 %v594
        %694 = vmatprep.subr.bf16.mxu0 0
        %695 = vmatpush1.bf16.msra.mxu0 %v595
        %696 = vmatprep.subr.bf16.mxu0 0
        %697 = vmatpush1.bf16.msra.mxu0 %v596
        %698 = vmatprep.mubr.bf16.mxu0 %v402
        %699 = vmatmul.mubr.bf16.gmra.mrb[0].mxu0 %v401
        %v700 = vpop.f32.mrb[0].mxu0
        %v701 = vadd.f32 0.0, %v700
        %v702 = vpop.f32.mrb[0].mxu0
        %v703 = vpop.f32.mrb[0].mxu0
        %v704 = vadd.f32 0.0, %v703
        %v705 = vpop.f32.mrb[0].mxu0
        %706 = vmatprep.mubr.bf16.mxu0 %v407
        %707 = vmatmul.mubr.bf16.gmra.mrb[0].mxu0 %v406
        %v708 = vpop.f32.mrb[0].mxu0
        %v709 = vadd.f32 0.0, %v708
        %v710 = vpop.f32.mrb[0].mxu0
        %v711 = vpop.f32.mrb[0].mxu0
        %v712 = vadd.f32 0.0, %v711
        %v713 = vpop.f32.mrb[0].mxu0
        %714 = vmatprep.mubr.bf16.mxu0 %v412
        %715 = vmatmul.mubr.bf16.gmra.mrb[0].mxu0 %v411
        %v716 = vpop.f32.mrb[0].mxu0
        %v717 = vadd.f32 0.0, %v716
        %v718 = vpop.f32.mrb[0].mxu0
        %v719 = vpop.f32.mrb[0].mxu0
        %v720 = vadd.f32 0.0, %v719
        %v721 = vpop.f32.mrb[0].mxu0
        %722 = vmatprep.mubr.bf16.mxu0 %v417
        %723 = vmatmul.mubr.bf16.gmra.mrb[0].mxu0 %v416
        %v724 = vpop.f32.mrb[0].mxu0
        %v725 = vadd.f32 0.0, %v724
        %v726 = vpop.f32.mrb[0].mxu0
        %v727 = vpop.f32.mrb[0].mxu0
        %v728 = vadd.f32 0.0, %v727
        %v729 = vpop.f32.mrb[0].mxu0
        %730 = vdwg.mxu0
        %731 = vmatprep.subr.bf16.mxu0 0
        %732 = vmatpush1.bf16.msra.mxu0 %v597
        %733 = vmatprep.subr.bf16.mxu0 0
        %734 = vmatpush1.bf16.msra.mxu0 %v598
        %735 = vmatprep.subr.bf16.mxu0 0
        %736 = vmatpush1.bf16.msra.mxu0 %v599
        %737 = vmatprep.subr.bf16.mxu0 0
        %738 = vmatpush1.bf16.msra.mxu0 %v600
        %739 = vmatprep.subr.bf16.mxu0 0
        %740 = vmatpush1.bf16.msra.mxu0 %v601
        %741 = vmatprep.subr.bf16.mxu0 0
        %742 = vmatpush1.bf16.msra.mxu0 %v602
        %743 = vmatprep.subr.bf16.mxu0 0
        %744 = vmatpush1.bf16.msra.mxu0 %v603
        %745 = vmatprep.subr.bf16.mxu0 0
        %746 = vmatpush1.bf16.msra.mxu0 %v604
        %747 = vmatprep.subr.bf16.mxu0 0
        %748 = vmatpush1.bf16.msra.mxu0 %v605
        %749 = vmatprep.subr.bf16.mxu0 0
        %750 = vmatpush1.bf16.msra.mxu0 %v606
        %751 = vmatprep.subr.bf16.mxu0 0
        %752 = vmatpush1.bf16.msra.mxu0 %v607
        %753 = vmatprep.subr.bf16.mxu0 0
        %754 = vmatpush1.bf16.msra.mxu0 %v608
        %755 = vmatprep.subr.bf16.mxu0 0
        %756 = vmatpush1.bf16.msra.mxu0 %v609
        %757 = vmatprep.subr.bf16.mxu0 0
        %758 = vmatpush1.bf16.msra.mxu0 %v610
        %759 = vmatprep.subr.bf16.mxu0 0
        %760 = vmatpush1.bf16.msra.mxu0 %v611
        %761 = vmatprep.subr.bf16.mxu0 0
        %762 = vmatpush1.bf16.msra.mxu0 %v612
        %763 = vmatprep.mubr.bf16.mxu0 %v404
        %764 = vmatmul.mubr.bf16.gmra.mrb[0].mxu0 %v403
        %v765 = vpop.f32.mrb[0].mxu0
        %v766 = vadd.f32 %v701, %v765
        %v767 = vpop.f32.mrb[0].mxu0
        %v768 = vpop.f32.mrb[0].mxu0
        %v769 = vadd.f32 %v704, %v768
        %v770 = vpop.f32.mrb[0].mxu0
        %771 = vmatprep.mubr.bf16.mxu0 %v409
        %772 = vmatmul.mubr.bf16.gmra.mrb[0].mxu0 %v408
        %v773 = vpop.f32.mrb[0].mxu0
        %v774 = vadd.f32 %v709, %v773
        %v775 = vpop.f32.mrb[0].mxu0
        %v776 = vpop.f32.mrb[0].mxu0
        %v777 = vadd.f32 %v712, %v776
        %v778 = vpop.f32.mrb[0].mxu0
        %779 = vmatprep.mubr.bf16.mxu0 %v414
        %780 = vmatmul.mubr.bf16.gmra.mrb[0].mxu0 %v413
        %v781 = vpop.f32.mrb[0].mxu0
        %v782 = vadd.f32 %v717, %v781
        %v783 = vpop.f32.mrb[0].mxu0
        %v784 = vpop.f32.mrb[0].mxu0
        %v785 = vadd.f32 %v720, %v784
        %v786 = vpop.f32.mrb[0].mxu0
        %787 = vmatprep.mubr.bf16.mxu0 %v419
        %788 = vmatmul.mubr.bf16.gmra.mrb[0].mxu0 %v418
        %v789 = vpop.f32.mrb[0].mxu0
        %v790 = vadd.f32 %v725, %v789
        %v791 = vpop.f32.mrb[0].mxu0
        %v792 = vpop.f32.mrb[0].mxu0
        %v793 = vadd.f32 %v728, %v792
        %v794 = vpop.f32.mrb[0].mxu0
        %795 = vdwg.mxu0
        %796 = vmatprep.subr.bf16.mxu0 0
        %797 = vmatpush1.bf16.msra.mxu0 %v613
        %798 = vmatprep.subr.bf16.mxu0 0
        %799 = vmatpush1.bf16.msra.mxu0 %v614
        %800 = vmatprep.subr.bf16.mxu0 0
        %801 = vmatpush1.bf16.msra.mxu0 %v615
        %802 = vmatprep.subr.bf16.mxu0 0
        %803 = vmatpush1.bf16.msra.mxu0 %v616
        %804 = vmatprep.subr.bf16.mxu0 0
        %805 = vmatpush1.bf16.msra.mxu0 0
        %806 = vmatprep.subr.bf16.mxu0 0
        %807 = vmatpush1.bf16.msra.mxu0 0
        %808 = vmatprep.subr.bf16.mxu0 0
        %809 = vmatpush1.bf16.msra.mxu0 0
        %810 = vmatprep.subr.bf16.mxu0 0
        %811 = vmatpush1.bf16.msra.mxu0 0
        %812 = vmatprep.subr.bf16.mxu0 0
        %813 = vmatpush1.bf16.msra.mxu0 0
        %814 = vmatprep.subr.bf16.mxu0 0
        %815 = vmatpush1.bf16.msra.mxu0 0
        %816 = vmatprep.subr.bf16.mxu0 0
        %817 = vmatpush1.bf16.msra.mxu0 0
        %818 = vmatprep.subr.bf16.mxu0 0
        %819 = vmatpush1.bf16.msra.mxu0 0
        %820 = vmatprep.subr.bf16.mxu0 0
        %821 = vmatpush1.bf16.msra.mxu0 0
        %822 = vmatprep.subr.bf16.mxu0 0
        %823 = vmatpush1.bf16.msra.mxu0 0
        %824 = vmatprep.subr.bf16.mxu0 0
        %825 = vmatpush1.bf16.msra.mxu0 0
        %826 = vmatprep.subr.bf16.mxu0 0
        %827 = vmatpush1.bf16.msra.mxu0 0
        %828 = vmatprep.mubr.bf16.mxu0 0
        %829 = vmatmul.mubr.bf16.gmra.mrb[0].mxu0 %v655
        %v830 = vpop.f32.mrb[0].mxu0
        %v831 = vadd.f32 %v766, %v830
        %v832 = vpop.f32.mrb[0].mxu0
        %v833 = vpop.f32.mrb[0].mxu0
        %v834 = vadd.f32 %v769, %v833
        %v835 = vpop.f32.mrb[0].mxu0
        %836 = vmatprep.mubr.bf16.mxu0 0
        %837 = vmatmul.mubr.bf16.gmra.mrb[0].mxu0 %v658
        %v838 = vpop.f32.mrb[0].mxu0
        %v839 = vadd.f32 %v774, %v838
        %v840 = vpop.f32.mrb[0].mxu0
        %v841 = vpop.f32.mrb[0].mxu0
        %v842 = vadd.f32 %v777, %v841
        %v843 = vpop.f32.mrb[0].mxu0
        %844 = vmatprep.mubr.bf16.mxu0 0
        %845 = vmatmul.mubr.bf16.gmra.mrb[0].mxu0 %v661
        %v846 = vpop.f32.mrb[0].mxu0
        %v847 = vadd.f32 %v782, %v846
        %v848 = vpop.f32.mrb[0].mxu0
        %v849 = vpop.f32.mrb[0].mxu0
        %v850 = vadd.f32 %v785, %v849
        %v851 = vpop.f32.mrb[0].mxu0
        %852 = vmatprep.mubr.bf16.mxu0 0
        %853 = vmatmul.mubr.bf16.gmra.mrb[0].mxu0 %v664
        %v854 = vpop.f32.mrb[0].mxu0
        %v855 = vadd.f32 %v790, %v854
        %v856 = vpop.f32.mrb[0].mxu0
        %v857 = vpop.f32.mrb[0].mxu0
        %v858 = vadd.f32 %v793, %v857
        %v859 = vpop.f32.mrb[0].mxu0
        %860 = vdwg.mxu0
        %v861 = vpack.c.bf16 %v834, %v831
        %v862 = vpack.c.bf16 %v842, %v839
        %v863 = vpack.c.bf16 %v850, %v847
        %v864 = vpack.c.bf16 %v858, %v855
        %v869 = vunpack.c.l.b16 %v861
        %v870 = vunpack.c.h.b16 %v861
        %v871 = vunpack.c.l.b16 %v862
        %v872 = vunpack.c.h.b16 %v862
        %v873 = vunpack.c.l.b16 %v863
        %v874 = vunpack.c.h.b16 %v863
        %v875 = vunpack.c.l.b16 %v864
        %v876 = vunpack.c.h.b16 %v864
        %v877 = vpack.c.b16 %v869, %v869
        %v878 = vpack.c.b16 %v870, %v870
        %v879 = vpack.c.b16 %v871, %v871
        %v880 = vpack.c.b16 %v872, %v872
        %v881 = vpack.c.b16 %v873, %v873
        %v882 = vpack.c.b16 %v874, %v874
        %v883 = vpack.c.b16 %v875, %v875
        %v884 = vpack.c.b16 %v876, %v876
        %893 = vst [vmem:[%s230] sm:$0xf] %v877
        %894 = vst [vmem:[%s230 + $0x4] sm:$0xf] %v878
        %895 = vst [vmem:[%s230 + $0x8] sm:$0xf] %v879
        %896 = vst [vmem:[%s230 + $0xc] sm:$0xf] %v880
        %897 = vst [vmem:[%s230 + $0x10] sm:$0xf] %v881
        %898 = vst [vmem:[%s230 + $0x14] sm:$0xf] %v882
        %899 = vst [vmem:[%s230 + $0x18] sm:$0xf] %v883
        %900 = vst [vmem:[%s230 + $0x1c] sm:$0xf] %v884
        %v901 = vadd.f32 %v831, %v834
        %v902 = vadd.f32 %v901, %v839
        %v903 = vadd.f32 %v902, %v842
        %v904 = vadd.f32 %v903, %v847
        %v905 = vadd.f32 %v904, %v850
        %v906 = vadd.f32 %v905, %v855
        %v907 = vadd.f32 %v906, %v858
        %908 = vst [vmem:[%s235] sm:$0xff] %v907
        %v909 = vmul.f32 %v831, %v831
        %v910 = vmul.f32 %v834, %v834
        %v911 = vmul.f32 %v839, %v839
        %v912 = vmul.f32 %v842, %v842
        %v913 = vmul.f32 %v847, %v847
        %v914 = vmul.f32 %v850, %v850
        %v915 = vmul.f32 %v855, %v855
        %v916 = vmul.f32 %v858, %v858
        %v917 = vadd.f32 %v909, %v910
        %v918 = vadd.f32 %v917, %v911
        %v919 = vadd.f32 %v918, %v912
        %v920 = vadd.f32 %v919, %v913
        %v921 = vadd.f32 %v920, %v914
        %v922 = vadd.f32 %v921, %v915
        %v923 = vadd.f32 %v922, %v916
        %924 = vst [vmem:[%s239] sm:$0xff] %v923
        %s925 = smul.u32 8, %s17
        %p926 = scmp.lt.s32.totalorder %s925, 15
        %s927 = scalar_select %p926, %s925, 15
        %s928 = smul.addr %s927, 4
        %s929 = scalar_lea.vmem %s2, %s928
        %p930 = scmp.lt.s32.totalorder %s17, 1
        %s931 = scalar_select %p930, %s17, 1
        %s932 = smul.addr %s931, 8
        %s933 = scalar_lea.vmem %s3, %s932
        %p934 = scmp.lt.s32.totalorder %s17, 1
        %s935 = scalar_select %p934, %s17, 1
        %s936 = smul.addr %s935, 8
        %s937 = scalar_lea.vmem %s4, %s936
        // Predicated region
        $region33: #{_lambda_.13} parent=27 // pred_check
          %p938 = pneg %p82
        $region34: #{_lambda_.13} parent=27 // pred_check_branch
          %940 = sbr.rel (%p938) target = $region36
        $region35: #{_lambda_.13} parent=27 // pred_region
          %s941 = smul.u32 8, %s17
        $region36: #{_lambda_.13} parent=27 // pred_fallthru
          _
        // Predicated region
        $region37: #{_lambda_.13} parent=27 // pred_check
          %p942 = pneg %p108
        $region38: #{_lambda_.13} parent=27 // pred_check_branch
          %944 = sbr.rel (%p942) target = $region40
        $region39: #{_lambda_.13} parent=27 // pred_region
          _
        $region40: #{_lambda_.13} parent=27 // pred_fallthru
          _
        // Predicated region
        $region41: #{_lambda_.13} parent=27 // pred_check
          %p945 = pneg %p134
        $region42: #{_lambda_.13} parent=27 // pred_check_branch
          %947 = sbr.rel (%p945) target = $region44
        $region43: #{_lambda_.13} parent=27 // pred_region
          _
        $region44: #{_lambda_.13} parent=27 // pred_fallthru
          _
      $region28: #{_lambda_.13} parent=5 // pred_fallthru
        _
      %p948 = scmp.le.s32.totalorder 2, %s12
      // Predicated region
      $region45: #{_lambda_.13} parent=5 // pred_check
        %p949 = pneg %p948
      $region46: #{_lambda_.13} parent=5 // pred_check_branch
        %951 = sbr.rel (%p949) target = $region48
      $region47: #{_lambda_.13} parent=5 // pred_region
        %s952 = ssub.s32 %s12, 2
        // Predicated region
        $region49: #{_lambda_.13} parent=47 // pred_check
          %p953 = pneg %p88
        $region50: #{_lambda_.13} parent=47 // pred_check_branch
          %955 = sbr.rel (%p953) target = $region52
        $region51: #{_lambda_.13} parent=47 // pred_region
          %s956 = smul.u32 8, %s18
          %p957 = scmp.lt.s32.totalorder %s956, 15
          %s958 = scalar_select %p957, %s956, 15
          %s959 = smul.addr %s958, 4
          %s960 = scalar_lea.vmem %s2, %s959
        $region52: #{_lambda_.13} parent=47 // pred_fallthru
          _
        // Predicated region
        $region53: #{_lambda_.13} parent=47 // pred_check
          %p961 = pneg %p114
        $region54: #{_lambda_.13} parent=47 // pred_check_branch
          %963 = sbr.rel (%p961) target = $region56
        $region55: #{_lambda_.13} parent=47 // pred_region
          %p964 = scmp.lt.s32.totalorder %s18, 1
          %s965 = scalar_select %p964, %s18, 1
          %s966 = smul.addr %s965, 8
          %s967 = scalar_lea.vmem %s3, %s966
        $region56: #{_lambda_.13} parent=47 // pred_fallthru
          _
        // Predicated region
        $region57: #{_lambda_.13} parent=47 // pred_check
          %p968 = pneg %p140
        $region58: #{_lambda_.13} parent=47 // pred_check_branch
          %970 = sbr.rel (%p968) target = $region60
        $region59: #{_lambda_.13} parent=47 // pred_region
          %p971 = scmp.lt.s32.totalorder %s18, 1
          %s972 = scalar_select %p971, %s18, 1
          %s973 = smul.addr %s972, 8
          %s974 = scalar_lea.vmem %s4, %s973
        $region60: #{_lambda_.13} parent=47 // pred_fallthru
          _
      $region48: #{_lambda_.13} parent=5 // pred_fallthru
        _
    $region6: #{_lambda_.13} parent=1 // loop_footer
      %s16 = sadd.s32 1, %s12
    $region7: #{_lambda_.13} parent=1 // loop_footer_branch
      %11 = sbr.rel target = $region3
    $region8: #{_lambda_.13} parent=1 // loop_exit
      _
    %975 = vsyncpa [#allocation3], 1
    %s976 = scalar_lea.sflag [#allocation3], 1
    %977 = vsyncpa %s976, 1

// kernel: _lambda_.14
$region0: #{_lambda_.14}
  #allocation0 [shape = 'u32[]', space=smem, size = 0x4, offset = 0x4, fixed_abs, tag = 'smem constant byte address 0x4 - core index']
  #allocation1 [shape = 'u32[144,128]{1,0:T(1,128)}', space=vmem, size = 0x12000, scoped, tag = 'internal scratch']
  %s0 = inlined_call_operand.vmem [shape: bf16[128,128], index: 0, kind: input, shape index: {}]
  %s1 = inlined_call_operand.vmem [shape: f32[1,128], index: 1, kind: input, shape index: {}]
  %s2 = inlined_call_operand.vmem [shape: f32[1,128], index: 2, kind: input, shape index: {}]
  %s3 = inlined_call_operand.vmem [shape: bf16[128,128], index: 3, kind: output, shape index: {}]
  %s4 = sld [smem:[#allocation0]]
  $region45: #{_lambda_.14} parent=0
    _
  %s6 = ssub.s32 1, %s4
  %s7 = scalar_select 0, %s6, %s4
  loop: start=0, step=1, limit=4
  $region2: #{_lambda_.14} parent=0 // loop_pre_header
    _
  $region3: #{_lambda_.14} parent=0 // loop_header
    %s9 = sphi 0, %s13
    %p10 = scmp.ge.s32.totalorder %s9, 4
    %s19 = sphi 0, %s21
    %s22 = sphi 0, %s19
    %s23 = sphi 0, %s22
    %s39 = sphi 0, %s23
    %s43 = sphi 0, %s43
    %s45 = sphi 0, %s43
    %s46 = sphi 0, %s45
    %s60 = sphi 0, %s46
    %s64 = sphi 0, %s64
    %s66 = sphi 0, %s64
    %s67 = sphi 0, %s66
    %s81 = sphi 0, %s67
    %s87 = sphi 0, %s89
    %s90 = sphi 0, %s87
    %s91 = sphi 0, %s90
    %s107 = sphi 0, %s91
  $region4: #{_lambda_.14} parent=0 // loop_header_branch
    %12 = sbr.rel (%p10) target = $region8
  $region5: #{_lambda_.14} parent=0 // loop_body
    %s14 = ssub.s32 %s9, 1
    %s15 = ssub.s32 %s9, 2
    %s16 = sadd.s32 %s9, 1
    %s17 = ssub.s32 %s9, %s16
    %p18 = scmp.eq.s32.totalorder %s17, 0
    %s20 = sadd.s32 %s19, 1
    %s21 = scalar_select %p18, %s19, %s20
    %p24 = pneg %p18
    %p25 = scmp.eq.s32.totalorder %s9, 1
    %p26 = por %p24, %p25
    %p27 = scmp.ne.s32.totalorder %s19, %s22
    %p28 = scmp.eq.s32.totalorder %s9, 0
    %p29 = por %p27, %p28
    %p30 = scmp.ne.s32.totalorder %s19, %s22
    %p31 = scmp.eq.s32.totalorder %s14, 1
    %p32 = por %p30, %p31
    %p33 = scmp.ne.s32.totalorder %s22, %s23
    %p34 = scmp.eq.s32.totalorder %s14, 0
    %p35 = por %p33, %p34
    %p36 = scmp.ne.s32.totalorder %s22, %s23
    %p37 = scmp.eq.s32.totalorder %s15, 1
    %p38 = por %p36, %p37
    %p40 = scmp.ne.s32.totalorder %s23, %s39
    %p41 = scmp.eq.s32.totalorder %s15, 0
    %p42 = por %p40, %p41
    %s44 = sadd.s32 %s43, 1
    %p47 = scmp.eq.s32.totalorder %s9, 1
    %p48 = scmp.ne.s32.totalorder %s43, %s45
    %p49 = scmp.eq.s32.totalorder %s9, 0
    %p50 = por %p48, %p49
    %p51 = scmp.ne.s32.totalorder %s43, %s45
    %p52 = scmp.eq.s32.totalorder %s14, 1
    %p53 = por %p51, %p52
    %p54 = scmp.ne.s32.totalorder %s45, %s46
    %p55 = scmp.eq.s32.totalorder %s14, 0
    %p56 = por %p54, %p55
    %p57 = scmp.ne.s32.totalorder %s45, %s46
    %p58 = scmp.eq.s32.totalorder %s15, 1
    %p59 = por %p57, %p58
    %p61 = scmp.ne.s32.totalorder %s46, %s60
    %p62 = scmp.eq.s32.totalorder %s15, 0
    %p63 = por %p61, %p62
    %s65 = sadd.s32 %s64, 1
    %p68 = scmp.eq.s32.totalorder %s9, 1
    %p69 = scmp.ne.s32.totalorder %s64, %s66
    %p70 = scmp.eq.s32.totalorder %s9, 0
    %p71 = por %p69, %p70
    %p72 = scmp.ne.s32.totalorder %s64, %s66
    %p73 = scmp.eq.s32.totalorder %s14, 1
    %p74 = por %p72, %p73
    %p75 = scmp.ne.s32.totalorder %s66, %s67
    %p76 = scmp.eq.s32.totalorder %s14, 0
    %p77 = por %p75, %p76
    %p78 = scmp.ne.s32.totalorder %s66, %s67
    %p79 = scmp.eq.s32.totalorder %s15, 1
    %p80 = por %p78, %p79
    %p82 = scmp.ne.s32.totalorder %s67, %s81
    %p83 = scmp.eq.s32.totalorder %s15, 0
    %p84 = por %p82, %p83
    %s85 = ssub.s32 %s9, %s16
    %p86 = scmp.eq.s32.totalorder %s85, 0
    %s88 = sadd.s32 %s87, 1
    %s89 = scalar_select %p86, %s87, %s88
    %p92 = pneg %p86
    %p93 = scmp.eq.s32.totalorder %s9, 1
    %p94 = por %p92, %p93
    %p95 = scmp.ne.s32.totalorder %s87, %s90
    %p96 = scmp.eq.s32.totalorder %s9, 0
    %p97 = por %p95, %p96
    %p98 = scmp.ne.s32.totalorder %s87, %s90
    %p99 = scmp.eq.s32.totalorder %s14, 1
    %p100 = por %p98, %p99
    %p101 = scmp.ne.s32.totalorder %s90, %s91
    %p102 = scmp.eq.s32.totalorder %s14, 0
    %p103 = por %p101, %p102
    %p104 = scmp.ne.s32.totalorder %s90, %s91
    %p105 = scmp.eq.s32.totalorder %s15, 1
    %p106 = por %p104, %p105
    %p108 = scmp.ne.s32.totalorder %s91, %s107
    %p109 = scmp.eq.s32.totalorder %s15, 0
    %p110 = por %p108, %p109
    %p111 = scmp.le.s32.totalorder 1, %s9
    %p112 = scmp.lt.s32.totalorder %s9, 3
    %p113 = pnand %p111, %p112
    %p114 = pneg %p113
    // Predicated region
    $region9: #{_lambda_.14} parent=5 // pred_check
      _
    $region10: #{_lambda_.14} parent=5 // pred_check_branch
      %116 = sbr.rel (%p113) target = $region12
    $region11: #{_lambda_.14} parent=5 // pred_region
      %s117 = ssub.s32 %s9, 1
      // Predicated region
      $region13: #{_lambda_.14} parent=11 // pred_check
        %p118 = pneg %p56
      $region14: #{_lambda_.14} parent=11 // pred_check_branch
        %120 = sbr.rel (%p118) target = $region16
      $region15: #{_lambda_.14} parent=11 // pred_region
        _
      $region16: #{_lambda_.14} parent=11 // pred_fallthru
        _
      // Predicated region
      $region17: #{_lambda_.14} parent=11 // pred_check
        %p121 = pneg %p77
      $region18: #{_lambda_.14} parent=11 // pred_check_branch
        %123 = sbr.rel (%p121) target = $region20
      $region19: #{_lambda_.14} parent=11 // pred_region
        _
      $region20: #{_lambda_.14} parent=11 // pred_fallthru
        _
    $region12: #{_lambda_.14} parent=5 // pred_fallthru
      _
    %p124 = scmp.lt.s32.totalorder %s9, 2
    // Predicated region
    $region21: #{_lambda_.14} parent=5 // pred_check
      %p125 = pneg %p124
    $region22: #{_lambda_.14} parent=5 // pred_check_branch
      %127 = sbr.rel (%p125) target = $region24
    $region23: #{_lambda_.14} parent=5 // pred_region
      // Predicated region
      $region25: #{_lambda_.14} parent=23 // pred_check
        %p128 = pneg %p29
      $region26: #{_lambda_.14} parent=23 // pred_check_branch
        %130 = sbr.rel (%p128) target = $region28
      $region27: #{_lambda_.14} parent=23 // pred_region
        %s131 = smul.u32 8, %s9
        %p132 = scmp.lt.s32.totalorder %s131, 15
        %s133 = scalar_select %p132, %s131, 15
        %s134 = smul.addr %s133, 4
        %s135 = scalar_lea.vmem %s0, %s134
        %s136 = smul.u32 8, %s9
      $region28: #{_lambda_.14} parent=23 // pred_fallthru
        _
    $region24: #{_lambda_.14} parent=5 // pred_fallthru
      _
    %p137 = scmp.le.s32.totalorder 1, %s9
    %p138 = scmp.lt.s32.totalorder %s9, 3
    %p139 = pnand %p137, %p138
    %p140 = pneg %p139
    // Predicated region
    $region29: #{_lambda_.14} parent=5 // pred_check
      _
    $region30: #{_lambda_.14} parent=5 // pred_check_branch
      %142 = sbr.rel (%p139) target = $region32
    $region31: #{_lambda_.14} parent=5 // pred_region
      %s143 = ssub.s32 %s9, 1
      %s144 = smul.u32 8, %s14
      %p145 = scmp.lt.s32.totalorder %s144, 15
      %s146 = scalar_select %p145, %s144, 15
      %s147 = smul.addr %s146, 4
      %s148 = scalar_lea.vmem %s0, %s147
      %p149 = pneg %p35
      %p150 = pneg %p32
      %p151 = pneg %p56
      %p152 = pneg %p53
      %p153 = pneg %p77
      %p154 = pneg %p74
      %p155 = pneg %p103
      %p156 = pneg %p100
      %s157 = smul.u32 8, %s14
      %p158 = scmp.lt.s32.totalorder %s157, 15
      %s159 = scalar_select %p158, %s157, 15
      %s160 = smul.addr %s159, 4
      %s161 = scalar_lea.vmem %s3, %s160
      %s162 = smul.u32 8, %s14
      %p163 = scmp.lt.s32.totalorder %s162, 15
      %s164 = scalar_select %p163, %s162, 15
      %s165 = smul.addr %s164, 4
      %s166 = scalar_lea.vmem %s0, %s165
      %s167 = smul.u32 8, %s14
      %s168 = smul.u32 8, %s14
      %p169 = scmp.lt.s32.totalorder %s168, 15
      %s170 = scalar_select %p169, %s168, 15
      %s171 = smul.addr %s170, 4
      %s172 = scalar_lea.vmem %s3, %s171
      %s173 = smul.u32 8, %s14
      %v174 = vld [vmem:[%s166] sm:$0xf]
      %v175 = vld [vmem:[%s166 + $0x4] sm:$0xf]
      %v176 = vld [vmem:[%s166 + $0x8] sm:$0xf]
      %v177 = vld [vmem:[%s166 + $0xc] sm:$0xf]
      %v178 = vld [vmem:[%s166 + $0x10] sm:$0xf]
      %v179 = vld [vmem:[%s166 + $0x14] sm:$0xf]
      %v180 = vld [vmem:[%s166 + $0x18] sm:$0xf]
      %v181 = vld [vmem:[%s166 + $0x1c] sm:$0xf]
      %v182 = vunpack.c.l.bf16 %v174
      %v183 = vunpack.c.l.bf16 %v175
      %v184 = vunpack.c.l.bf16 %v176
      %v185 = vunpack.c.l.bf16 %v177
      %v186 = vunpack.c.l.bf16 %v178
      %v187 = vunpack.c.l.bf16 %v179
      %v188 = vunpack.c.l.bf16 %v180
      %v189 = vunpack.c.l.bf16 %v181
      %v190 = vld [vmem:[%s1] sm:$0x1]
      %v192 = vlaneseq
      %v193 = vshrl.u32 %v192, 7
      %v194 = vsub.s32 0, %v193
      %v195 = vrot.slane %v190, %v194
      %v197 = vmul.f32 %v182, %v195
      %v198 = vmul.f32 %v183, %v195
      %v199 = vmul.f32 %v184, %v195
      %v200 = vmul.f32 %v185, %v195
      %v201 = vmul.f32 %v186, %v195
      %v202 = vmul.f32 %v187, %v195
      %v203 = vmul.f32 %v188, %v195
      %v204 = vmul.f32 %v189, %v195
      %v205 = vld [vmem:[%s2] sm:$0x1]
      %v207 = vlaneseq
      %v208 = vshrl.u32 %v207, 7
      %v209 = vsub.s32 0, %v208
      %v210 = vrot.slane %v205, %v209
      %v212 = vadd.f32 %v197, %v210
      %v213 = vadd.f32 %v198, %v210
      %v214 = vadd.f32 %v199, %v210
      %v215 = vadd.f32 %v200, %v210
      %v216 = vadd.f32 %v201, %v210
      %v217 = vadd.f32 %v202, %v210
      %v218 = vadd.f32 %v203, %v210
      %v219 = vadd.f32 %v204, %v210
      %v220 = vmax.f32 %v212, 0.0
      %v221 = vmax.f32 %v213, 0.0
      %v222 = vmax.f32 %v214, 0.0
      %v223 = vmax.f32 %v215, 0.0
      %v224 = vmax.f32 %v216, 0.0
      %v225 = vmax.f32 %v217, 0.0
      %v226 = vmax.f32 %v218, 0.0
      %v227 = vmax.f32 %v219, 0.0
      %v228 = vpack.c.bf16 %v221, %v220
      %v229 = vpack.c.bf16 %v223, %v222
      %v230 = vpack.c.bf16 %v225, %v224
      %v231 = vpack.c.bf16 %v227, %v226
      %v236 = vunpack.c.l.b16 %v228
      %v237 = vunpack.c.h.b16 %v228
      %v238 = vunpack.c.l.b16 %v229
      %v239 = vunpack.c.h.b16 %v229
      %v240 = vunpack.c.l.b16 %v230
      %v241 = vunpack.c.h.b16 %v230
      %v242 = vunpack.c.l.b16 %v231
      %v243 = vunpack.c.h.b16 %v231
      %v244 = vpack.c.b16 %v236, %v236
      %v245 = vpack.c.b16 %v237, %v237
      %v246 = vpack.c.b16 %v238, %v238
      %v247 = vpack.c.b16 %v239, %v239
      %v248 = vpack.c.b16 %v240, %v240
      %v249 = vpack.c.b16 %v241, %v241
      %v250 = vpack.c.b16 %v242, %v242
      %v251 = vpack.c.b16 %v243, %v243
      %260 = vst [vmem:[%s172] sm:$0xf] %v244
      %261 = vst [vmem:[%s172 + $0x4] sm:$0xf] %v245
      %262 = vst [vmem:[%s172 + $0x8] sm:$0xf] %v246
      %263 = vst [vmem:[%s172 + $0xc] sm:$0xf] %v247
      %264 = vst [vmem:[%s172 + $0x10] sm:$0xf] %v248
      %265 = vst [vmem:[%s172 + $0x14] sm:$0xf] %v249
      %266 = vst [vmem:[%s172 + $0x18] sm:$0xf] %v250
      %267 = vst [vmem:[%s172 + $0x1c] sm:$0xf] %v251
      %s268 = smul.u32 8, %s14
      %p269 = scmp.lt.s32.totalorder %s268, 15
      %s270 = scalar_select %p269, %s268, 15
      %s271 = smul.addr %s270, 4
      %s272 = scalar_lea.vmem %s3, %s271
      // Predicated region
      $region33: #{_lambda_.14} parent=31 // pred_check
        %p273 = pneg %p100
      $region34: #{_lambda_.14} parent=31 // pred_check_branch
        %275 = sbr.rel (%p273) target = $region36
      $region35: #{_lambda_.14} parent=31 // pred_region
        %s276 = smul.u32 8, %s14
      $region36: #{_lambda_.14} parent=31 // pred_fallthru
        _
    $region32: #{_lambda_.14} parent=5 // pred_fallthru
      _
    %p277 = scmp.le.s32.totalorder 2, %s9
    // Predicated region
    $region37: #{_lambda_.14} parent=5 // pred_check
      %p278 = pneg %p277
    $region38: #{_lambda_.14} parent=5 // pred_check_branch
      %280 = sbr.rel (%p278) target = $region40
    $region39: #{_lambda_.14} parent=5 // pred_region
      %s281 = ssub.s32 %s9, 2
      // Predicated region
      $region41: #{_lambda_.14} parent=39 // pred_check
        %p282 = pneg %p106
      $region42: #{_lambda_.14} parent=39 // pred_check_branch
        %284 = sbr.rel (%p282) target = $region44
      $region43: #{_lambda_.14} parent=39 // pred_region
        %s285 = smul.u32 8, %s15
        %p286 = scmp.lt.s32.totalorder %s285, 15
        %s287 = scalar_select %p286, %s285, 15
        %s288 = smul.addr %s287, 4
        %s289 = scalar_lea.vmem %s3, %s288
      $region44: #{_lambda_.14} parent=39 // pred_fallthru
        _
    $region40: #{_lambda_.14} parent=5 // pred_fallthru
      _
  $region6: #{_lambda_.14} parent=0 // loop_footer
    %s13 = sadd.s32 1, %s9
  $region7: #{_lambda_.14} parent=0 // loop_footer_branch
    %8 = sbr.rel target = $region3
  $region8: #{_lambda_.14} parent=0 // loop_exit
    _

// kernel: tile.58
$region0: #{tile.58}
  #allocation0 [shape = 's32[1]{0}', space=sflag, size = 0x4, scoped, tag = 'scoped memory for tile.58']
  %s0 = inlined_call_operand.vmem [shape: f32[16], index: 0, kind: input, shape index: {}]
  %s1 = inlined_call_operand.vmem [shape: f32[4,16], index: 1, kind: output, shape index: {}]
  // Predicated region
  $region2: #{tile.58} parent=0 // pred_check
    _
  $region3: #{tile.58} parent=0 // pred_check_branch
    %3 = sbr.rel (0) target = $region5
  $region4: #{tile.58} parent=0 // pred_region
    _
  $region5: #{tile.58} parent=0 // pred_fallthru
    _
  %v4 = vld [vmem:[%s0] ss:$0 sm:$0xff]
  %5 = vst [vmem:[%s1] sm:$0xf] %v4

// kernel: tile.59
$region0: #{tile.59}
  %s0 = inlined_call_operand.vmem [shape: f32[4,16], index: 0, kind: input, shape index: {}]
  %s1 = inlined_call_operand.vmem [shape: f32[64], index: 1, kind: output, shape index: {}]
  $region1: #{tile.59} parent=0
    #allocation0 [shape = 'u8[4096]{0}', space=vmem, size = 0x1000, scoped, tag = 'scoped mem for output reshape']
    #allocation1 [shape = 'u8[4096]{0}', space=vmem, size = 0x1000, scoped, tag = 'scoped mem for input reshape']
    %s3 = sshllo.u32 0, 4
    %v4 = vld [vmem:[%s0] sm:%s3]
    %5 = vst [vmem:[#allocation1] sm:%s3] %v4
    %v6 = vld [vmem:[#allocation1] sm:$0x1]
    %vm7 = vcmask 130048
    %8 = vst.msk [vmem:[#allocation0] sm:$0x1] %vm7, %v6
    %s9 = scalar_lea.vmem [#allocation1], 3
    %v10 = vld [vmem:[%s9] sm:$0x1]
    %11 = vrot.lane.b32.xlu0 %v10, 48
    %v12 = vpop.permute.xlu0 %11
    %vm13 = vcmask 523648
    %14 = vst.msk [vmem:[#allocation0] sm:$0x1] %vm13, %v12
    %s15 = scalar_lea.vmem [#allocation1], 2
    %v16 = vld [vmem:[%s15] sm:$0x1]
    %17 = vrot.lane.b32.xlu0 %v16, 32
    %v18 = vpop.permute.xlu0 %17
    %vm19 = vcmask 392448
    %20 = vst.msk [vmem:[#allocation0] sm:$0x1] %vm19, %v18
    %s21 = scalar_lea.vmem [#allocation1], 1
    %v22 = vld [vmem:[%s21] sm:$0x1]
    %23 = vrot.lane.b32.xlu0 %v22, 16
    %v24 = vpop.permute.xlu0 %23
    %vm25 = vcmask 261248
    %26 = vst.msk [vmem:[#allocation0] sm:$0x1] %vm25, %v24
    %s28 = sshllo.u32 0, 1
    %v30 = vld [vmem:[#allocation0] sm:%s28]
    %s31 = sshllo.u32 0, 1
    %32 = vst [vmem:[%s1] sm:%s31] %v30

// kernel: _lambda_.16
$region0: #{_lambda_.16}
  #allocation0 [shape = 'u32[]', space=smem, size = 0x4, offset = 0x4, fixed_abs, tag = 'smem constant byte address 0x4 - core index']
  #allocation1 [shape = 'u32[144,128]{1,0:T(1,128)}', space=vmem, size = 0x12000, scoped, tag = 'internal scratch']
  %s0 = inlined_call_operand.vmem [shape: bf16[512,128], index: 0, kind: input, shape index: {}]
  %s1 = inlined_call_operand.vmem [shape: f32[1,128], index: 1, kind: input, shape index: {}]
  %s2 = inlined_call_operand.vmem [shape: f32[1,128], index: 2, kind: input, shape index: {}]
  %s3 = inlined_call_operand.vmem [shape: bf16[512,128], index: 3, kind: output, shape index: {}]
  %s4 = sld [smem:[#allocation0]]
  $region45: #{_lambda_.16} parent=0
    _
  %s6 = ssub.s32 1, %s4
  %s7 = scalar_select 0, %s6, %s4
  loop: start=0, step=1, limit=4
  $region2: #{_lambda_.16} parent=0 // loop_pre_header
    _
  $region3: #{_lambda_.16} parent=0 // loop_header
    %s9 = sphi 0, %s13
    %p10 = scmp.ge.s32.totalorder %s9, 4
    %s19 = sphi 0, %s21
    %s22 = sphi 0, %s19
    %s23 = sphi 0, %s22
    %s39 = sphi 0, %s23
    %s43 = sphi 0, %s43
    %s45 = sphi 0, %s43
    %s46 = sphi 0, %s45
    %s60 = sphi 0, %s46
    %s64 = sphi 0, %s64
    %s66 = sphi 0, %s64
    %s67 = sphi 0, %s66
    %s81 = sphi 0, %s67
    %s87 = sphi 0, %s89
    %s90 = sphi 0, %s87
    %s91 = sphi 0, %s90
    %s107 = sphi 0, %s91
  $region4: #{_lambda_.16} parent=0 // loop_header_branch
    %12 = sbr.rel (%p10) target = $region8
  $region5: #{_lambda_.16} parent=0 // loop_body
    %s14 = ssub.s32 %s9, 1
    %s15 = ssub.s32 %s9, 2
    %s16 = sadd.s32 %s9, 1
    %s17 = ssub.s32 %s9, %s16
    %p18 = scmp.eq.s32.totalorder %s17, 0
    %s20 = sadd.s32 %s19, 1
    %s21 = scalar_select %p18, %s19, %s20
    %p24 = pneg %p18
    %p25 = scmp.eq.s32.totalorder %s9, 1
    %p26 = por %p24, %p25
    %p27 = scmp.ne.s32.totalorder %s19, %s22
    %p28 = scmp.eq.s32.totalorder %s9, 0
    %p29 = por %p27, %p28
    %p30 = scmp.ne.s32.totalorder %s19, %s22
    %p31 = scmp.eq.s32.totalorder %s14, 1
    %p32 = por %p30, %p31
    %p33 = scmp.ne.s32.totalorder %s22, %s23
    %p34 = scmp.eq.s32.totalorder %s14, 0
    %p35 = por %p33, %p34
    %p36 = scmp.ne.s32.totalorder %s22, %s23
    %p37 = scmp.eq.s32.totalorder %s15, 1
    %p38 = por %p36, %p37
    %p40 = scmp.ne.s32.totalorder %s23, %s39
    %p41 = scmp.eq.s32.totalorder %s15, 0
    %p42 = por %p40, %p41
    %s44 = sadd.s32 %s43, 1
    %p47 = scmp.eq.s32.totalorder %s9, 1
    %p48 = scmp.ne.s32.totalorder %s43, %s45
    %p49 = scmp.eq.s32.totalorder %s9, 0
    %p50 = por %p48, %p49
    %p51 = scmp.ne.s32.totalorder %s43, %s45
    %p52 = scmp.eq.s32.totalorder %s14, 1
    %p53 = por %p51, %p52
    %p54 = scmp.ne.s32.totalorder %s45, %s46
    %p55 = scmp.eq.s32.totalorder %s14, 0
    %p56 = por %p54, %p55
    %p57 = scmp.ne.s32.totalorder %s45, %s46
    %p58 = scmp.eq.s32.totalorder %s15, 1
    %p59 = por %p57, %p58
    %p61 = scmp.ne.s32.totalorder %s46, %s60
    %p62 = scmp.eq.s32.totalorder %s15, 0
    %p63 = por %p61, %p62
    %s65 = sadd.s32 %s64, 1
    %p68 = scmp.eq.s32.totalorder %s9, 1
    %p69 = scmp.ne.s32.totalorder %s64, %s66
    %p70 = scmp.eq.s32.totalorder %s9, 0
    %p71 = por %p69, %p70
    %p72 = scmp.ne.s32.totalorder %s64, %s66
    %p73 = scmp.eq.s32.totalorder %s14, 1
    %p74 = por %p72, %p73
    %p75 = scmp.ne.s32.totalorder %s66, %s67
    %p76 = scmp.eq.s32.totalorder %s14, 0
    %p77 = por %p75, %p76
    %p78 = scmp.ne.s32.totalorder %s66, %s67
    %p79 = scmp.eq.s32.totalorder %s15, 1
    %p80 = por %p78, %p79
    %p82 = scmp.ne.s32.totalorder %s67, %s81
    %p83 = scmp.eq.s32.totalorder %s15, 0
    %p84 = por %p82, %p83
    %s85 = ssub.s32 %s9, %s16
    %p86 = scmp.eq.s32.totalorder %s85, 0
    %s88 = sadd.s32 %s87, 1
    %s89 = scalar_select %p86, %s87, %s88
    %p92 = pneg %p86
    %p93 = scmp.eq.s32.totalorder %s9, 1
    %p94 = por %p92, %p93
    %p95 = scmp.ne.s32.totalorder %s87, %s90
    %p96 = scmp.eq.s32.totalorder %s9, 0
    %p97 = por %p95, %p96
    %p98 = scmp.ne.s32.totalorder %s87, %s90
    %p99 = scmp.eq.s32.totalorder %s14, 1
    %p100 = por %p98, %p99
    %p101 = scmp.ne.s32.totalorder %s90, %s91
    %p102 = scmp.eq.s32.totalorder %s14, 0
    %p103 = por %p101, %p102
    %p104 = scmp.ne.s32.totalorder %s90, %s91
    %p105 = scmp.eq.s32.totalorder %s15, 1
    %p106 = por %p104, %p105
    %p108 = scmp.ne.s32.totalorder %s91, %s107
    %p109 = scmp.eq.s32.totalorder %s15, 0
    %p110 = por %p108, %p109
    %p111 = scmp.le.s32.totalorder 1, %s9
    %p112 = scmp.lt.s32.totalorder %s9, 3
    %p113 = pnand %p111, %p112
    %p114 = pneg %p113
    // Predicated region
    $region9: #{_lambda_.16} parent=5 // pred_check
      _
    $region10: #{_lambda_.16} parent=5 // pred_check_branch
      %116 = sbr.rel (%p113) target = $region12
    $region11: #{_lambda_.16} parent=5 // pred_region
      %s117 = ssub.s32 %s9, 1
      // Predicated region
      $region13: #{_lambda_.16} parent=11 // pred_check
        %p118 = pneg %p56
      $region14: #{_lambda_.16} parent=11 // pred_check_branch
        %120 = sbr.rel (%p118) target = $region16
      $region15: #{_lambda_.16} parent=11 // pred_region
        _
      $region16: #{_lambda_.16} parent=11 // pred_fallthru
        _
      // Predicated region
      $region17: #{_lambda_.16} parent=11 // pred_check
        %p121 = pneg %p77
      $region18: #{_lambda_.16} parent=11 // pred_check_branch
        %123 = sbr.rel (%p121) target = $region20
      $region19: #{_lambda_.16} parent=11 // pred_region
        _
      $region20: #{_lambda_.16} parent=11 // pred_fallthru
        _
    $region12: #{_lambda_.16} parent=5 // pred_fallthru
      _
    %p124 = scmp.lt.s32.totalorder %s9, 2
    // Predicated region
    $region21: #{_lambda_.16} parent=5 // pred_check
      %p125 = pneg %p124
    $region22: #{_lambda_.16} parent=5 // pred_check_branch
      %127 = sbr.rel (%p125) target = $region24
    $region23: #{_lambda_.16} parent=5 // pred_region
      // Predicated region
      $region25: #{_lambda_.16} parent=23 // pred_check
        %p128 = pneg %p29
      $region26: #{_lambda_.16} parent=23 // pred_check_branch
        %130 = sbr.rel (%p128) target = $region28
      $region27: #{_lambda_.16} parent=23 // pred_region
        %s131 = smul.u32 32, %s9
        %p132 = scmp.lt.s32.totalorder %s131, 63
        %s133 = scalar_select %p132, %s131, 63
        %s134 = smul.addr %s133, 4
        %s135 = scalar_lea.vmem %s0, %s134
        %s136 = smul.u32 32, %s9
      $region28: #{_lambda_.16} parent=23 // pred_fallthru
        _
    $region24: #{_lambda_.16} parent=5 // pred_fallthru
      _
    %p137 = scmp.le.s32.totalorder 1, %s9
    %p138 = scmp.lt.s32.totalorder %s9, 3
    %p139 = pnand %p137, %p138
    %p140 = pneg %p139
    // Predicated region
    $region29: #{_lambda_.16} parent=5 // pred_check
      _
    $region30: #{_lambda_.16} parent=5 // pred_check_branch
      %142 = sbr.rel (%p139) target = $region32
    $region31: #{_lambda_.16} parent=5 // pred_region
      %s143 = ssub.s32 %s9, 1
      %s144 = smul.u32 32, %s14
      %p145 = scmp.lt.s32.totalorder %s144, 63
      %s146 = scalar_select %p145, %s144, 63
      %s147 = smul.addr %s146, 4
      %s148 = scalar_lea.vmem %s0, %s147
      %p149 = pneg %p35
      %p150 = pneg %p32
      %p151 = pneg %p56
      %p152 = pneg %p53
      %p153 = pneg %p77
      %p154 = pneg %p74
      %p155 = pneg %p103
      %p156 = pneg %p100
      %s157 = smul.u32 32, %s14
      %p158 = scmp.lt.s32.totalorder %s157, 63
      %s159 = scalar_select %p158, %s157, 63
      %s160 = smul.addr %s159, 4
      %s161 = scalar_lea.vmem %s3, %s160
      %s162 = smul.u32 32, %s14
      %p163 = scmp.lt.s32.totalorder %s162, 63
      %s164 = scalar_select %p163, %s162, 63
      %s165 = smul.addr %s164, 4
      %s166 = scalar_lea.vmem %s0, %s165
      %s167 = smul.u32 32, %s14
      %s168 = smul.u32 32, %s14
      %p169 = scmp.lt.s32.totalorder %s168, 63
      %s170 = scalar_select %p169, %s168, 63
      %s171 = smul.addr %s170, 4
      %s172 = scalar_lea.vmem %s3, %s171
      %s173 = smul.u32 32, %s14
      %v174 = vld [vmem:[%s166] sm:$0xf]
      %v175 = vld [vmem:[%s166 + $0x4] sm:$0xf]
      %v176 = vld [vmem:[%s166 + $0x8] sm:$0xf]
      %v177 = vld [vmem:[%s166 + $0xc] sm:$0xf]
      %v178 = vld [vmem:[%s166 + $0x10] sm:$0xf]
      %v179 = vld [vmem:[%s166 + $0x14] sm:$0xf]
      %v180 = vld [vmem:[%s166 + $0x18] sm:$0xf]
      %v181 = vld [vmem:[%s166 + $0x1c] sm:$0xf]
      %v182 = vld [vmem:[%s166 + $0x20] sm:$0xf]
      %v183 = vld [vmem:[%s166 + $0x24] sm:$0xf]
      %v184 = vld [vmem:[%s166 + $0x28] sm:$0xf]
      %v185 = vld [vmem:[%s166 + $0x2c] sm:$0xf]
      %v186 = vld [vmem:[%s166 + $0x30] sm:$0xf]
      %v187 = vld [vmem:[%s166 + $0x34] sm:$0xf]
      %v188 = vld [vmem:[%s166 + $0x38] sm:$0xf]
      %v189 = vld [vmem:[%s166 + $0x3c] sm:$0xf]
      %v190 = vld [vmem:[%s166 + $0x40] sm:$0xf]
      %v191 = vld [vmem:[%s166 + $0x44] sm:$0xf]
      %v192 = vld [vmem:[%s166 + $0x48] sm:$0xf]
      %v193 = vld [vmem:[%s166 + $0x4c] sm:$0xf]
      %v194 = vld [vmem:[%s166 + $0x50] sm:$0xf]
      %v195 = vld [vmem:[%s166 + $0x54] sm:$0xf]
      %v196 = vld [vmem:[%s166 + $0x58] sm:$0xf]
      %v197 = vld [vmem:[%s166 + $0x5c] sm:$0xf]
      %v198 = vld [vmem:[%s166 + $0x60] sm:$0xf]
      %v199 = vld [vmem:[%s166 + $0x64] sm:$0xf]
      %v200 = vld [vmem:[%s166 + $0x68] sm:$0xf]
      %v201 = vld [vmem:[%s166 + $0x6c] sm:$0xf]
      %v202 = vld [vmem:[%s166 + $0x70] sm:$0xf]
      %v203 = vld [vmem:[%s166 + $0x74] sm:$0xf]
      %v204 = vld [vmem:[%s166 + $0x78] sm:$0xf]
      %v205 = vld [vmem:[%s166 + $0x7c] sm:$0xf]
      %v206 = vunpack.c.l.bf16 %v174
      %v207 = vunpack.c.l.bf16 %v175
      %v208 = vunpack.c.l.bf16 %v176
      %v209 = vunpack.c.l.bf16 %v177
      %v210 = vunpack.c.l.bf16 %v178
      %v211 = vunpack.c.l.bf16 %v179
      %v212 = vunpack.c.l.bf16 %v180
      %v213 = vunpack.c.l.bf16 %v181
      %v214 = vunpack.c.l.bf16 %v182
      %v215 = vunpack.c.l.bf16 %v183
      %v216 = vunpack.c.l.bf16 %v184
      %v217 = vunpack.c.l.bf16 %v185
      %v218 = vunpack.c.l.bf16 %v186
      %v219 = vunpack.c.l.bf16 %v187
      %v220 = vunpack.c.l.bf16 %v188
      %v221 = vunpack.c.l.bf16 %v189
      %v222 = vunpack.c.l.bf16 %v190
      %v223 = vunpack.c.l.bf16 %v191
      %v224 = vunpack.c.l.bf16 %v192
      %v225 = vunpack.c.l.bf16 %v193
      %v226 = vunpack.c.l.bf16 %v194
      %v227 = vunpack.c.l.bf16 %v195
      %v228 = vunpack.c.l.bf16 %v196
      %v229 = vunpack.c.l.bf16 %v197
      %v230 = vunpack.c.l.bf16 %v198
      %v231 = vunpack.c.l.bf16 %v199
      %v232 = vunpack.c.l.bf16 %v200
      %v233 = vunpack.c.l.bf16 %v201
      %v234 = vunpack.c.l.bf16 %v202
      %v235 = vunpack.c.l.bf16 %v203
      %v236 = vunpack.c.l.bf16 %v204
      %v237 = vunpack.c.l.bf16 %v205
      %v238 = vld [vmem:[%s1] sm:$0x1]
      %v240 = vlaneseq
      %v241 = vshrl.u32 %v240, 7
      %v242 = vsub.s32 0, %v241
      %v243 = vrot.slane %v238, %v242
      %v245 = vmul.f32 %v206, %v243
      %v246 = vmul.f32 %v207, %v243
      %v247 = vmul.f32 %v208, %v243
      %v248 = vmul.f32 %v209, %v243
      %v249 = vmul.f32 %v210, %v243
      %v250 = vmul.f32 %v211, %v243
      %v251 = vmul.f32 %v212, %v243
      %v252 = vmul.f32 %v213, %v243
      %v253 = vmul.f32 %v214, %v243
      %v254 = vmul.f32 %v215, %v243
      %v255 = vmul.f32 %v216, %v243
      %v256 = vmul.f32 %v217, %v243
      %v257 = vmul.f32 %v218, %v243
      %v258 = vmul.f32 %v219, %v243
      %v259 = vmul.f32 %v220, %v243
      %v260 = vmul.f32 %v221, %v243
      %v261 = vmul.f32 %v222, %v243
      %v262 = vmul.f32 %v223, %v243
      %v263 = vmul.f32 %v224, %v243
      %v264 = vmul.f32 %v225, %v243
      %v265 = vmul.f32 %v226, %v243
      %v266 = vmul.f32 %v227, %v243
      %v267 = vmul.f32 %v228, %v243
      %v268 = vmul.f32 %v229, %v243
      %v269 = vmul.f32 %v230, %v243
      %v270 = vmul.f32 %v231, %v243
      %v271 = vmul.f32 %v232, %v243
      %v272 = vmul.f32 %v233, %v243
      %v273 = vmul.f32 %v234, %v243
      %v274 = vmul.f32 %v235, %v243
      %v275 = vmul.f32 %v236, %v243
      %v276 = vmul.f32 %v237, %v243
      %v277 = vld [vmem:[%s2] sm:$0x1]
      %v279 = vlaneseq
      %v280 = vshrl.u32 %v279, 7
      %v281 = vsub.s32 0, %v280
      %v282 = vrot.slane %v277, %v281
      %v284 = vadd.f32 %v245, %v282
      %v285 = vadd.f32 %v246, %v282
      %v286 = vadd.f32 %v247, %v282
      %v287 = vadd.f32 %v248, %v282
      %v288 = vadd.f32 %v249, %v282
      %v289 = vadd.f32 %v250, %v282
      %v290 = vadd.f32 %v251, %v282
      %v291 = vadd.f32 %v252, %v282
      %v292 = vadd.f32 %v253, %v282
      %v293 = vadd.f32 %v254, %v282
      %v294 = vadd.f32 %v255, %v282
      %v295 = vadd.f32 %v256, %v282
      %v296 = vadd.f32 %v257, %v282
      %v297 = vadd.f32 %v258, %v282
      %v298 = vadd.f32 %v259, %v282
      %v299 = vadd.f32 %v260, %v282
      %v300 = vadd.f32 %v261, %v282
      %v301 = vadd.f32 %v262, %v282
      %v302 = vadd.f32 %v263, %v282
      %v303 = vadd.f32 %v264, %v282
      %v304 = vadd.f32 %v265, %v282
      %v305 = vadd.f32 %v266, %v282
      %v306 = vadd.f32 %v267, %v282
      %v307 = vadd.f32 %v268, %v282
      %v308 = vadd.f32 %v269, %v282
      %v309 = vadd.f32 %v270, %v282
      %v310 = vadd.f32 %v271, %v282
      %v311 = vadd.f32 %v272, %v282
      %v312 = vadd.f32 %v273, %v282
      %v313 = vadd.f32 %v274, %v282
      %v314 = vadd.f32 %v275, %v282
      %v315 = vadd.f32 %v276, %v282
      %v316 = vmax.f32 %v284, 0.0
      %v317 = vmax.f32 %v285, 0.0
      %v318 = vmax.f32 %v286, 0.0
      %v319 = vmax.f32 %v287, 0.0
      %v320 = vmax.f32 %v288, 0.0
      %v321 = vmax.f32 %v289, 0.0
      %v322 = vmax.f32 %v290, 0.0
      %v323 = vmax.f32 %v291, 0.0
      %v324 = vmax.f32 %v292, 0.0
      %v325 = vmax.f32 %v293, 0.0
      %v326 = vmax.f32 %v294, 0.0
      %v327 = vmax.f32 %v295, 0.0
      %v328 = vmax.f32 %v296, 0.0
      %v329 = vmax.f32 %v297, 0.0
      %v330 = vmax.f32 %v298, 0.0
      %v331 = vmax.f32 %v299, 0.0
      %v332 = vmax.f32 %v300, 0.0
      %v333 = vmax.f32 %v301, 0.0
      %v334 = vmax.f32 %v302, 0.0
      %v335 = vmax.f32 %v303, 0.0
      %v336 = vmax.f32 %v304, 0.0
      %v337 = vmax.f32 %v305, 0.0
      %v338 = vmax.f32 %v306, 0.0
      %v339 = vmax.f32 %v307, 0.0
      %v340 = vmax.f32 %v308, 0.0
      %v341 = vmax.f32 %v309, 0.0
      %v342 = vmax.f32 %v310, 0.0
      %v343 = vmax.f32 %v311, 0.0
      %v344 = vmax.f32 %v312, 0.0
      %v345 = vmax.f32 %v313, 0.0
      %v346 = vmax.f32 %v314, 0.0
      %v347 = vmax.f32 %v315, 0.0
      %v348 = vpack.c.bf16 %v317, %v316
      %v349 = vpack.c.bf16 %v319, %v318
      %v350 = vpack.c.bf16 %v321, %v320
      %v351 = vpack.c.bf16 %v323, %v322
      %v352 = vpack.c.bf16 %v325, %v324
      %v353 = vpack.c.bf16 %v327, %v326
      %v354 = vpack.c.bf16 %v329, %v328
      %v355 = vpack.c.bf16 %v331, %v330
      %v356 = vpack.c.bf16 %v333, %v332
      %v357 = vpack.c.bf16 %v335, %v334
      %v358 = vpack.c.bf16 %v337, %v336
      %v359 = vpack.c.bf16 %v339, %v338
      %v360 = vpack.c.bf16 %v341, %v340
      %v361 = vpack.c.bf16 %v343, %v342
      %v362 = vpack.c.bf16 %v345, %v344
      %v363 = vpack.c.bf16 %v347, %v346
      %v380 = vunpack.c.l.b16 %v348
      %v381 = vunpack.c.h.b16 %v348
      %v382 = vunpack.c.l.b16 %v349
      %v383 = vunpack.c.h.b16 %v349
      %v384 = vunpack.c.l.b16 %v350
      %v385 = vunpack.c.h.b16 %v350
      %v386 = vunpack.c.l.b16 %v351
      %v387 = vunpack.c.h.b16 %v351
      %v388 = vunpack.c.l.b16 %v352
      %v389 = vunpack.c.h.b16 %v352
      %v390 = vunpack.c.l.b16 %v353
      %v391 = vunpack.c.h.b16 %v353
      %v392 = vunpack.c.l.b16 %v354
      %v393 = vunpack.c.h.b16 %v354
      %v394 = vunpack.c.l.b16 %v355
      %v395 = vunpack.c.h.b16 %v355
      %v396 = vunpack.c.l.b16 %v356
      %v397 = vunpack.c.h.b16 %v356
      %v398 = vunpack.c.l.b16 %v357
      %v399 = vunpack.c.h.b16 %v357
      %v400 = vunpack.c.l.b16 %v358
      %v401 = vunpack.c.h.b16 %v358
      %v402 = vunpack.c.l.b16 %v359
      %v403 = vunpack.c.h.b16 %v359
      %v404 = vunpack.c.l.b16 %v360
      %v405 = vunpack.c.h.b16 %v360
      %v406 = vunpack.c.l.b16 %v361
      %v407 = vunpack.c.h.b16 %v361
      %v408 = vunpack.c.l.b16 %v362
      %v409 = vunpack.c.h.b16 %v362
      %v410 = vunpack.c.l.b16 %v363
      %v411 = vunpack.c.h.b16 %v363
      %v412 = vpack.c.b16 %v380, %v380
      %v413 = vpack.c.b16 %v381, %v381
      %v414 = vpack.c.b16 %v382, %v382
      %v415 = vpack.c.b16 %v383, %v383
      %v416 = vpack.c.b16 %v384, %v384
      %v417 = vpack.c.b16 %v385, %v385
      %v418 = vpack.c.b16 %v386, %v386
      %v419 = vpack.c.b16 %v387, %v387
      %v420 = vpack.c.b16 %v388, %v388
      %v421 = vpack.c.b16 %v389, %v389
      %v422 = vpack.c.b16 %v390, %v390
      %v423 = vpack.c.b16 %v391, %v391
      %v424 = vpack.c.b16 %v392, %v392
      %v425 = vpack.c.b16 %v393, %v393
      %v426 = vpack.c.b16 %v394, %v394
      %v427 = vpack.c.b16 %v395, %v395
      %v428 = vpack.c.b16 %v396, %v396
      %v429 = vpack.c.b16 %v397, %v397
      %v430 = vpack.c.b16 %v398, %v398
      %v431 = vpack.c.b16 %v399, %v399
      %v432 = vpack.c.b16 %v400, %v400
      %v433 = vpack.c.b16 %v401, %v401
      %v434 = vpack.c.b16 %v402, %v402
      %v435 = vpack.c.b16 %v403, %v403
      %v436 = vpack.c.b16 %v404, %v404
      %v437 = vpack.c.b16 %v405, %v405
      %v438 = vpack.c.b16 %v406, %v406
      %v439 = vpack.c.b16 %v407, %v407
      %v440 = vpack.c.b16 %v408, %v408
      %v441 = vpack.c.b16 %v409, %v409
      %v442 = vpack.c.b16 %v410, %v410
      %v443 = vpack.c.b16 %v411, %v411
      %476 = vst [vmem:[%s172] sm:$0xf] %v412
      %477 = vst [vmem:[%s172 + $0x4] sm:$0xf] %v413
      %478 = vst [vmem:[%s172 + $0x8] sm:$0xf] %v414
      %479 = vst [vmem:[%s172 + $0xc] sm:$0xf] %v415
      %480 = vst [vmem:[%s172 + $0x10] sm:$0xf] %v416
      %481 = vst [vmem:[%s172 + $0x14] sm:$0xf] %v417
      %482 = vst [vmem:[%s172 + $0x18] sm:$0xf] %v418
      %483 = vst [vmem:[%s172 + $0x1c] sm:$0xf] %v419
      %484 = vst [vmem:[%s172 + $0x20] sm:$0xf] %v420
      %485 = vst [vmem:[%s172 + $0x24] sm:$0xf] %v421
      %486 = vst [vmem:[%s172 + $0x28] sm:$0xf] %v422
      %487 = vst [vmem:[%s172 + $0x2c] sm:$0xf] %v423
      %488 = vst [vmem:[%s172 + $0x30] sm:$0xf] %v424
      %489 = vst [vmem:[%s172 + $0x34] sm:$0xf] %v425
      %490 = vst [vmem:[%s172 + $0x38] sm:$0xf] %v426
      %491 = vst [vmem:[%s172 + $0x3c] sm:$0xf] %v427
      %492 = vst [vmem:[%s172 + $0x40] sm:$0xf] %v428
      %493 = vst [vmem:[%s172 + $0x44] sm:$0xf] %v429
      %494 = vst [vmem:[%s172 + $0x48] sm:$0xf] %v430
      %495 = vst [vmem:[%s172 + $0x4c] sm:$0xf] %v431
      %496 = vst [vmem:[%s172 + $0x50] sm:$0xf] %v432
      %497 = vst [vmem:[%s172 + $0x54] sm:$0xf] %v433
      %498 = vst [vmem:[%s172 + $0x58] sm:$0xf] %v434
      %499 = vst [vmem:[%s172 + $0x5c] sm:$0xf] %v435
      %500 = vst [vmem:[%s172 + $0x60] sm:$0xf] %v436
      %501 = vst [vmem:[%s172 + $0x64] sm:$0xf] %v437
      %502 = vst [vmem:[%s172 + $0x68] sm:$0xf] %v438
      %503 = vst [vmem:[%s172 + $0x6c] sm:$0xf] %v439
      %504 = vst [vmem:[%s172 + $0x70] sm:$0xf] %v440
      %505 = vst [vmem:[%s172 + $0x74] sm:$0xf] %v441
      %506 = vst [vmem:[%s172 + $0x78] sm:$0xf] %v442
      %507 = vst [vmem:[%s172 + $0x7c] sm:$0xf] %v443
      %s508 = smul.u32 32, %s14
      %p509 = scmp.lt.s32.totalorder %s508, 63
      %s510 = scalar_select %p509, %s508, 63
      %s511 = smul.addr %s510, 4
      %s512 = scalar_lea.vmem %s3, %s511
      // Predicated region
      $region33: #{_lambda_.16} parent=31 // pred_check
        %p513 = pneg %p100
      $region34: #{_lambda_.16} parent=31 // pred_check_branch
        %515 = sbr.rel (%p513) target = $region36
      $region35: #{_lambda_.16} parent=31 // pred_region
        %s516 = smul.u32 32, %s14
      $region36: #{_lambda_.16} parent=31 // pred_fallthru
        _
    $region32: #{_lambda_.16} parent=5 // pred_fallthru
      _
    %p517 = scmp.le.s32.totalorder 2, %s9
    // Predicated region
    $region37: #{_lambda_.16} parent=5 // pred_check
      %p518 = pneg %p517
    $region38: #{_lambda_.16} parent=5 // pred_check_branch
      %520 = sbr.rel (%p518) target = $region40
    $region39: #{_lambda_.16} parent=5 // pred_region
      %s521 = ssub.s32 %s9, 2
      // Predicated region
      $region41: #{_lambda_.16} parent=39 // pred_check
        %p522 = pneg %p106
      $region42: #{_lambda_.16} parent=39 // pred_check_branch
        %524 = sbr.rel (%p522) target = $region44
      $region43: #{_lambda_.16} parent=39 // pred_region
        %s525 = smul.u32 32, %s15
        %p526 = scmp.lt.s32.totalorder %s525, 63
        %s527 = scalar_select %p526, %s525, 63
        %s528 = smul.addr %s527, 4
        %s529 = scalar_lea.vmem %s3, %s528
      $region44: #{_lambda_.16} parent=39 // pred_fallthru
        _
    $region40: #{_lambda_.16} parent=5 // pred_fallthru
      _
  $region6: #{_lambda_.16} parent=0 // loop_footer
    %s13 = sadd.s32 1, %s9
  $region7: #{_lambda_.16} parent=0 // loop_footer_branch
    %8 = sbr.rel target = $region3
  $region8: #{_lambda_.16} parent=0 // loop_exit
    _

// kernel: _lambda_.15
$region0: #{_lambda_.15}
  #allocation0 [shape = 'u32[]', space=smem, size = 0x4, offset = 0x4, fixed_abs, tag = 'smem constant byte address 0x4 - core index']
  #allocation1 [shape = 'u32[144,128]{1,0:T(1,128)}', space=vmem, size = 0x12000, scoped, tag = 'internal scratch']
  %s0 = inlined_call_operand.vmem [shape: bf16[512,288], index: 0, kind: input, shape index: {}]
  %s1 = inlined_call_operand.vmem [shape: bf16[288,128], index: 1, kind: input, shape index: {}]
  %s2 = inlined_call_operand.vmem [shape: bf16[512,128], index: 2, kind: output, shape index: {0}]
  %s3 = inlined_call_operand.vmem [shape: f32[2,8,128], index: 3, kind: output, shape index: {1}]
  %s4 = inlined_call_operand.vmem [shape: f32[2,8,128], index: 4, kind: output, shape index: {2}]
  %5 = xla_tuple %s2, %s3, %s4
  %s6 = sld [smem:[#allocation0]]
  $region57: #{_lambda_.15} parent=0
    _
  %s8 = ssub.s32 1, %s6
  %s9 = scalar_select 0, %s8, %s6
  loop: start=0, step=1, limit=4
  $region2: #{_lambda_.15} parent=0 // loop_pre_header
    _
  $region3: #{_lambda_.15} parent=0 // loop_header
    %s11 = sphi 0, %s15
    %p12 = scmp.ge.s32.totalorder %s11, 4
    %s21 = sphi 0, %s23
    %s24 = sphi 0, %s21
    %s25 = sphi 0, %s24
    %s41 = sphi 0, %s25
    %s45 = sphi 0, %s45
    %s47 = sphi 0, %s45
    %s48 = sphi 0, %s47
    %s62 = sphi 0, %s48
    %s68 = sphi 0, %s70
    %s71 = sphi 0, %s68
    %s72 = sphi 0, %s71
    %s88 = sphi 0, %s72
    %s94 = sphi 0, %s96
    %s97 = sphi 0, %s94
    %s98 = sphi 0, %s97
    %s114 = sphi 0, %s98
    %s120 = sphi 0, %s122
    %s123 = sphi 0, %s120
    %s124 = sphi 0, %s123
    %s140 = sphi 0, %s124
  $region4: #{_lambda_.15} parent=0 // loop_header_branch
    %14 = sbr.rel (%p12) target = $region8
  $region5: #{_lambda_.15} parent=0 // loop_body
    %s16 = ssub.s32 %s11, 1
    %s17 = ssub.s32 %s11, 2
    %s18 = sadd.s32 %s11, 1
    %s19 = ssub.s32 %s11, %s18
    %p20 = scmp.eq.s32.totalorder %s19, 0
    %s22 = sadd.s32 %s21, 1
    %s23 = scalar_select %p20, %s21, %s22
    %p26 = pneg %p20
    %p27 = scmp.eq.s32.totalorder %s11, 1
    %p28 = por %p26, %p27
    %p29 = scmp.ne.s32.totalorder %s21, %s24
    %p30 = scmp.eq.s32.totalorder %s11, 0
    %p31 = por %p29, %p30
    %p32 = scmp.ne.s32.totalorder %s21, %s24
    %p33 = scmp.eq.s32.totalorder %s16, 1
    %p34 = por %p32, %p33
    %p35 = scmp.ne.s32.totalorder %s24, %s25
    %p36 = scmp.eq.s32.totalorder %s16, 0
    %p37 = por %p35, %p36
    %p38 = scmp.ne.s32.totalorder %s24, %s25
    %p39 = scmp.eq.s32.totalorder %s17, 1
    %p40 = por %p38, %p39
    %p42 = scmp.ne.s32.totalorder %s25, %s41
    %p43 = scmp.eq.s32.totalorder %s17, 0
    %p44 = por %p42, %p43
    %s46 = sadd.s32 %s45, 1
    %p49 = scmp.eq.s32.totalorder %s11, 1
    %p50 = scmp.ne.s32.totalorder %s45, %s47
    %p51 = scmp.eq.s32.totalorder %s11, 0
    %p52 = por %p50, %p51
    %p53 = scmp.ne.s32.totalorder %s45, %s47
    %p54 = scmp.eq.s32.totalorder %s16, 1
    %p55 = por %p53, %p54
    %p56 = scmp.ne.s32.totalorder %s47, %s48
    %p57 = scmp.eq.s32.totalorder %s16, 0
    %p58 = por %p56, %p57
    %p59 = scmp.ne.s32.totalorder %s47, %s48
    %p60 = scmp.eq.s32.totalorder %s17, 1
    %p61 = por %p59, %p60
    %p63 = scmp.ne.s32.totalorder %s48, %s62
    %p64 = scmp.eq.s32.totalorder %s17, 0
    %p65 = por %p63, %p64
    %s66 = ssub.s32 %s11, %s18
    %p67 = scmp.eq.s32.totalorder %s66, 0
    %s69 = sadd.s32 %s68, 1
    %s70 = scalar_select %p67, %s68, %s69
    %p73 = pneg %p67
    %p74 = scmp.eq.s32.totalorder %s11, 1
    %p75 = por %p73, %p74
    %p76 = scmp.ne.s32.totalorder %s68, %s71
    %p77 = scmp.eq.s32.totalorder %s11, 0
    %p78 = por %p76, %p77
    %p79 = scmp.ne.s32.totalorder %s68, %s71
    %p80 = scmp.eq.s32.totalorder %s16, 1
    %p81 = por %p79, %p80
    %p82 = scmp.ne.s32.totalorder %s71, %s72
    %p83 = scmp.eq.s32.totalorder %s16, 0
    %p84 = por %p82, %p83
    %p85 = scmp.ne.s32.totalorder %s71, %s72
    %p86 = scmp.eq.s32.totalorder %s17, 1
    %p87 = por %p85, %p86
    %p89 = scmp.ne.s32.totalorder %s72, %s88
    %p90 = scmp.eq.s32.totalorder %s17, 0
    %p91 = por %p89, %p90
    %s92 = ssub.s32 %s11, %s18
    %p93 = scmp.eq.s32.totalorder %s92, 0
    %s95 = sadd.s32 %s94, 1
    %s96 = scalar_select %p93, %s94, %s95
    %p99 = pneg %p93
    %p100 = scmp.eq.s32.totalorder %s11, 1
    %p101 = por %p99, %p100
    %p102 = scmp.ne.s32.totalorder %s94, %s97
    %p103 = scmp.eq.s32.totalorder %s11, 0
    %p104 = por %p102, %p103
    %p105 = scmp.ne.s32.totalorder %s94, %s97
    %p106 = scmp.eq.s32.totalorder %s16, 1
    %p107 = por %p105, %p106
    %p108 = scmp.ne.s32.totalorder %s97, %s98
    %p109 = scmp.eq.s32.totalorder %s16, 0
    %p110 = por %p108, %p109
    %p111 = scmp.ne.s32.totalorder %s97, %s98
    %p112 = scmp.eq.s32.totalorder %s17, 1
    %p113 = por %p111, %p112
    %p115 = scmp.ne.s32.totalorder %s98, %s114
    %p116 = scmp.eq.s32.totalorder %s17, 0
    %p117 = por %p115, %p116
    %s118 = ssub.s32 %s11, %s18
    %p119 = scmp.eq.s32.totalorder %s118, 0
    %s121 = sadd.s32 %s120, 1
    %s122 = scalar_select %p119, %s120, %s121
    %p125 = pneg %p119
    %p126 = scmp.eq.s32.totalorder %s11, 1
    %p127 = por %p125, %p126
    %p128 = scmp.ne.s32.totalorder %s120, %s123
    %p129 = scmp.eq.s32.totalorder %s11, 0
    %p130 = por %p128, %p129
    %p131 = scmp.ne.s32.totalorder %s120, %s123
    %p132 = scmp.eq.s32.totalorder %s16, 1
    %p133 = por %p131, %p132
    %p134 = scmp.ne.s32.totalorder %s123, %s124
    %p135 = scmp.eq.s32.totalorder %s16, 0
    %p136 = por %p134, %p135
    %p137 = scmp.ne.s32.totalorder %s123, %s124
    %p138 = scmp.eq.s32.totalorder %s17, 1
    %p139 = por %p137, %p138
    %p141 = scmp.ne.s32.totalorder %s124, %s140
    %p142 = scmp.eq.s32.totalorder %s17, 0
    %p143 = por %p141, %p142
    %p144 = scmp.le.s32.totalorder 1, %s11
    %p145 = scmp.lt.s32.totalorder %s11, 3
    %p146 = pnand %p144, %p145
    %p147 = pneg %p146
    // Predicated region
    $region9: #{_lambda_.15} parent=5 // pred_check
      _
    $region10: #{_lambda_.15} parent=5 // pred_check_branch
      %149 = sbr.rel (%p146) target = $region12
    $region11: #{_lambda_.15} parent=5 // pred_region
      %s150 = ssub.s32 %s11, 1
      // Predicated region
      $region13: #{_lambda_.15} parent=11 // pred_check
        %p151 = pneg %p58
      $region14: #{_lambda_.15} parent=11 // pred_check_branch
        %153 = sbr.rel (%p151) target = $region16
      $region15: #{_lambda_.15} parent=11 // pred_region
        _
      $region16: #{_lambda_.15} parent=11 // pred_fallthru
        _
    $region12: #{_lambda_.15} parent=5 // pred_fallthru
      _
    %p154 = scmp.lt.s32.totalorder %s11, 2
    // Predicated region
    $region17: #{_lambda_.15} parent=5 // pred_check
      %p155 = pneg %p154
    $region18: #{_lambda_.15} parent=5 // pred_check_branch
      %157 = sbr.rel (%p155) target = $region20
    $region19: #{_lambda_.15} parent=5 // pred_region
      // Predicated region
      $region21: #{_lambda_.15} parent=19 // pred_check
        %p158 = pneg %p31
      $region22: #{_lambda_.15} parent=19 // pred_check_branch
        %160 = sbr.rel (%p158) target = $region24
      $region23: #{_lambda_.15} parent=19 // pred_region
        %s161 = smul.u32 32, %s11
        %p162 = scmp.lt.s32.totalorder %s161, 63
        %s163 = scalar_select %p162, %s161, 63
        %s164 = smul.addr %s163, 3
        %s165 = smul.addr %s164, 4
        %s166 = scalar_lea.vmem %s0, %s165
        %s167 = smul.u32 32, %s11
      $region24: #{_lambda_.15} parent=19 // pred_fallthru
        _
    $region20: #{_lambda_.15} parent=5 // pred_fallthru
      _
    %p168 = scmp.le.s32.totalorder 1, %s11
    %p169 = scmp.lt.s32.totalorder %s11, 3
    %p170 = pnand %p168, %p169
    %p171 = pneg %p170
    // Predicated region
    $region25: #{_lambda_.15} parent=5 // pred_check
      _
    $region26: #{_lambda_.15} parent=5 // pred_check_branch
      %173 = sbr.rel (%p170) target = $region28
    $region27: #{_lambda_.15} parent=5 // pred_region
      %s174 = ssub.s32 %s11, 1
      %s175 = smul.u32 32, %s16
      %p176 = scmp.lt.s32.totalorder %s175, 63
      %s177 = scalar_select %p176, %s175, 63
      %s178 = smul.addr %s177, 3
      %s179 = smul.addr %s178, 4
      %s180 = scalar_lea.vmem %s0, %s179
      %p181 = pneg %p37
      %p182 = pneg %p34
      %p183 = pneg %p58
      %p184 = pneg %p55
      %p185 = pneg %p84
      %p186 = pneg %p81
      %s187 = smul.u32 32, %s16
      %p188 = scmp.lt.s32.totalorder %s187, 63
      %s189 = scalar_select %p188, %s187, 63
      %s190 = smul.addr %s189, 4
      %s191 = scalar_lea.vmem %s2, %s190
      %p192 = pneg %p110
      %p193 = pneg %p107
      %p194 = scmp.lt.s32.totalorder %s16, 1
      %s195 = scalar_select %p194, %s16, 1
      %s196 = smul.addr %s195, 8
      %s197 = scalar_lea.vmem %s3, %s196
      %p198 = pneg %p136
      %p199 = pneg %p133
      %p200 = scmp.lt.s32.totalorder %s16, 1
      %s201 = scalar_select %p200, %s16, 1
      %s202 = smul.addr %s201, 8
      %s203 = scalar_lea.vmem %s4, %s202
      %s204 = smul.u32 32, %s16
      %p205 = scmp.lt.s32.totalorder %s204, 63
      %s206 = scalar_select %p205, %s204, 63
      %s207 = smul.addr %s206, 3
      %s208 = smul.addr %s207, 4
      %s209 = scalar_lea.vmem %s0, %s208
      %s210 = smul.u32 32, %s16
      %s211 = smul.u32 32, %s16
      %p212 = scmp.lt.s32.totalorder %s211, 63
      %s213 = scalar_select %p212, %s211, 63
      %s214 = smul.addr %s213, 4
      %s215 = scalar_lea.vmem %s2, %s214
      %s216 = smul.u32 32, %s16
      %p217 = scmp.lt.s32.totalorder %s16, 1
      %s218 = scalar_select %p217, %s16, 1
      %s219 = smul.addr %s218, 8
      %s220 = scalar_lea.vmem %s3, %s219
      %p221 = scmp.lt.s32.totalorder %s16, 1
      %s222 = scalar_select %p221, %s16, 1
      %s223 = smul.addr %s222, 8
      %s224 = scalar_lea.vmem %s4, %s223
      %v226 = vld [vmem:[%s209] sm:$0xff]
      %v227 = vld [vmem:[%s209 + $0x8] sm:$0xf]
      %v228 = vld [vmem:[%s209 + $0xc] sm:$0xff]
      %v229 = vld [vmem:[%s209 + $0x14] sm:$0xf]
      %v230 = vld [vmem:[%s209 + $0x18] sm:$0xff]
      %v231 = vld [vmem:[%s209 + $0x20] sm:$0xf]
      %v232 = vld [vmem:[%s209 + $0x24] sm:$0xff]
      %v233 = vld [vmem:[%s209 + $0x2c] sm:$0xf]
      %v234 = vld [vmem:[%s209 + $0x30] sm:$0xff]
      %v235 = vld [vmem:[%s209 + $0x38] sm:$0xf]
      %v236 = vld [vmem:[%s209 + $0x3c] sm:$0xff]
      %v237 = vld [vmem:[%s209 + $0x44] sm:$0xf]
      %v238 = vld [vmem:[%s209 + $0x48] sm:$0xff]
      %v239 = vld [vmem:[%s209 + $0x50] sm:$0xf]
      %v240 = vld [vmem:[%s209 + $0x54] sm:$0xff]
      %v241 = vld [vmem:[%s209 + $0x5c] sm:$0xf]
      %v242 = vld [vmem:[%s209 + $0x60] sm:$0xff]
      %v243 = vld [vmem:[%s209 + $0x68] sm:$0xf]
      %v244 = vld [vmem:[%s209 + $0x6c] sm:$0xff]
      %v245 = vld [vmem:[%s209 + $0x74] sm:$0xf]
      %v246 = vld [vmem:[%s209 + $0x78] sm:$0xff]
      %v247 = vld [vmem:[%s209 + $0x80] sm:$0xf]
      %v248 = vld [vmem:[%s209 + $0x84] sm:$0xff]
      %v249 = vld [vmem:[%s209 + $0x8c] sm:$0xf]
      %v250 = vld [vmem:[%s209 + $0x90] sm:$0xff]
      %v251 = vld [vmem:[%s209 + $0x98] sm:$0xf]
      %v252 = vld [vmem:[%s209 + $0x9c] sm:$0xff]
      %v253 = vld [vmem:[%s209 + $0xa4] sm:$0xf]
      %v254 = vld [vmem:[%s209 + $0xa8] sm:$0xff]
      %v255 = vld [vmem:[%s209 + $0xb0] sm:$0xf]
      %v256 = vld [vmem:[%s209 + $0xb4] sm:$0xff]
      %v257 = vld [vmem:[%s209 + $0xbc] sm:$0xf]
      %v258 = vld [vmem:[%s209 + $0xc0] sm:$0xff]
      %v259 = vld [vmem:[%s209 + $0xc8] sm:$0xf]
      %v260 = vld [vmem:[%s209 + $0xcc] sm:$0xff]
      %v261 = vld [vmem:[%s209 + $0xd4] sm:$0xf]
      %v262 = vld [vmem:[%s209 + $0xd8] sm:$0xff]
      %v263 = vld [vmem:[%s209 + $0xe0] sm:$0xf]
      %v264 = vld [vmem:[%s209 + $0xe4] sm:$0xff]
      %v265 = vld [vmem:[%s209 + $0xec] sm:$0xf]
      %v266 = vld [vmem:[%s209 + $0xf0] sm:$0xff]
      %v267 = vld [vmem:[%s209 + $0xf8] sm:$0xf]
      %v268 = vld [vmem:[%s209 + $0xfc] sm:$0xff]
      %v269 = vld [vmem:[%s209 + $0x104] sm:$0xf]
      %v270 = vld [vmem:[%s209 + $0x108] sm:$0xff]
      %v271 = vld [vmem:[%s209 + $0x110] sm:$0xf]
      %v272 = vld [vmem:[%s209 + $0x114] sm:$0xff]
      %v273 = vld [vmem:[%s209 + $0x11c] sm:$0xf]
      %v274 = vld [vmem:[%s209 + $0x120] sm:$0xff]
      %v275 = vld [vmem:[%s209 + $0x128] sm:$0xf]
      %v276 = vld [vmem:[%s209 + $0x12c] sm:$0xff]
      %v277 = vld [vmem:[%s209 + $0x134] sm:$0xf]
      %v278 = vld [vmem:[%s209 + $0x138] sm:$0xff]
      %v279 = vld [vmem:[%s209 + $0x140] sm:$0xf]
      %v280 = vld [vmem:[%s209 + $0x144] sm:$0xff]
      %v281 = vld [vmem:[%s209 + $0x14c] sm:$0xf]
      %v282 = vld [vmem:[%s209 + $0x150] sm:$0xff]
      %v283 = vld [vmem:[%s209 + $0x158] sm:$0xf]
      %v284 = vld [vmem:[%s209 + $0x15c] sm:$0xff]
      %v285 = vld [vmem:[%s209 + $0x164] sm:$0xf]
      %v286 = vld [vmem:[%s209 + $0x168] sm:$0xff]
      %v287 = vld [vmem:[%s209 + $0x170] sm:$0xf]
      %v288 = vld [vmem:[%s209 + $0x174] sm:$0xff]
      %v289 = vld [vmem:[%s209 + $0x17c] sm:$0xf]
      %v290 = vld [vmem:[%s1] sm:$0xf]
      %v291 = vld [vmem:[%s1 + $0x4] sm:$0xf]
      %v292 = vld [vmem:[%s1 + $0x8] sm:$0xf]
      %v293 = vld [vmem:[%s1 + $0xc] sm:$0xf]
      %v294 = vld [vmem:[%s1 + $0x10] sm:$0xf]
      %v295 = vld [vmem:[%s1 + $0x14] sm:$0xf]
      %v296 = vld [vmem:[%s1 + $0x18] sm:$0xf]
      %v297 = vld [vmem:[%s1 + $0x1c] sm:$0xf]
      %v298 = vld [vmem:[%s1 + $0x20] sm:$0xf]
      %v299 = vld [vmem:[%s1 + $0x24] sm:$0xf]
      %v300 = vld [vmem:[%s1 + $0x28] sm:$0xf]
      %v301 = vld [vmem:[%s1 + $0x2c] sm:$0xf]
      %v302 = vld [vmem:[%s1 + $0x30] sm:$0xf]
      %v303 = vld [vmem:[%s1 + $0x34] sm:$0xf]
      %v304 = vld [vmem:[%s1 + $0x38] sm:$0xf]
      %v305 = vld [vmem:[%s1 + $0x3c] sm:$0xf]
      %v306 = vld [vmem:[%s1 + $0x40] sm:$0xf]
      %v307 = vld [vmem:[%s1 + $0x44] sm:$0xf]
      %v308 = vld [vmem:[%s1 + $0x48] sm:$0xf]
      %v309 = vld [vmem:[%s1 + $0x4c] sm:$0xf]
      %v310 = vld [vmem:[%s1 + $0x50] sm:$0xf]
      %v311 = vld [vmem:[%s1 + $0x54] sm:$0xf]
      %v312 = vld [vmem:[%s1 + $0x58] sm:$0xf]
      %v313 = vld [vmem:[%s1 + $0x5c] sm:$0xf]
      %v314 = vld [vmem:[%s1 + $0x60] sm:$0xf]
      %v315 = vld [vmem:[%s1 + $0x64] sm:$0xf]
      %v316 = vld [vmem:[%s1 + $0x68] sm:$0xf]
      %v317 = vld [vmem:[%s1 + $0x6c] sm:$0xf]
      %v318 = vld [vmem:[%s1 + $0x70] sm:$0xf]
      %v319 = vld [vmem:[%s1 + $0x74] sm:$0xf]
      %v320 = vld [vmem:[%s1 + $0x78] sm:$0xf]
      %v321 = vld [vmem:[%s1 + $0x7c] sm:$0xf]
      %v322 = vld [vmem:[%s1 + $0x80] sm:$0xf]
      %v323 = vld [vmem:[%s1 + $0x84] sm:$0xf]
      %v324 = vld [vmem:[%s1 + $0x88] sm:$0xf]
      %v325 = vld [vmem:[%s1 + $0x8c] sm:$0xf]
      %v390 = vunpack.c.l.b16 %v226
      %v391 = vunpack.c.h.b16 %v226
      %v392 = vunpack.c.l.b16 %v227
      %v393 = vunpack.c.l.b16 %v228
      %v394 = vunpack.c.h.b16 %v228
      %v395 = vunpack.c.l.b16 %v229
      %v396 = vunpack.c.l.b16 %v230
      %v397 = vunpack.c.h.b16 %v230
      %v398 = vunpack.c.l.b16 %v231
      %v399 = vunpack.c.l.b16 %v232
      %v400 = vunpack.c.h.b16 %v232
      %v401 = vunpack.c.l.b16 %v233
      %v402 = vunpack.c.l.b16 %v234
      %v403 = vunpack.c.h.b16 %v234
      %v404 = vunpack.c.l.b16 %v235
      %v405 = vunpack.c.l.b16 %v236
      %v406 = vunpack.c.h.b16 %v236
      %v407 = vunpack.c.l.b16 %v237
      %v408 = vunpack.c.l.b16 %v238
      %v409 = vunpack.c.h.b16 %v238
      %v410 = vunpack.c.l.b16 %v239
      %v411 = vunpack.c.l.b16 %v240
      %v412 = vunpack.c.h.b16 %v240
      %v413 = vunpack.c.l.b16 %v241
      %v414 = vunpack.c.l.b16 %v242
      %v415 = vunpack.c.h.b16 %v242
      %v416 = vunpack.c.l.b16 %v243
      %v417 = vunpack.c.l.b16 %v244
      %v418 = vunpack.c.h.b16 %v244
      %v419 = vunpack.c.l.b16 %v245
      %v420 = vunpack.c.l.b16 %v246
      %v421 = vunpack.c.h.b16 %v246
      %v422 = vunpack.c.l.b16 %v247
      %v423 = vunpack.c.l.b16 %v248
      %v424 = vunpack.c.h.b16 %v248
      %v425 = vunpack.c.l.b16 %v249
      %v426 = vunpack.c.l.b16 %v250
      %v427 = vunpack.c.h.b16 %v250
      %v428 = vunpack.c.l.b16 %v251
      %v429 = vunpack.c.l.b16 %v252
      %v430 = vunpack.c.h.b16 %v252
      %v431 = vunpack.c.l.b16 %v253
      %v432 = vunpack.c.l.b16 %v254
      %v433 = vunpack.c.h.b16 %v254
      %v434 = vunpack.c.l.b16 %v255
      %v435 = vunpack.c.l.b16 %v256
      %v436 = vunpack.c.h.b16 %v256
      %v437 = vunpack.c.l.b16 %v257
      %v438 = vunpack.c.l.b16 %v258
      %v439 = vunpack.c.h.b16 %v258
      %v440 = vunpack.c.l.b16 %v259
      %v441 = vunpack.c.l.b16 %v260
      %v442 = vunpack.c.h.b16 %v260
      %v443 = vunpack.c.l.b16 %v261
      %v444 = vunpack.c.l.b16 %v262
      %v445 = vunpack.c.h.b16 %v262
      %v446 = vunpack.c.l.b16 %v263
      %v447 = vunpack.c.l.b16 %v264
      %v448 = vunpack.c.h.b16 %v264
      %v449 = vunpack.c.l.b16 %v265
      %v450 = vunpack.c.l.b16 %v266
      %v451 = vunpack.c.h.b16 %v266
      %v452 = vunpack.c.l.b16 %v267
      %v453 = vunpack.c.l.b16 %v268
      %v454 = vunpack.c.h.b16 %v268
      %v455 = vunpack.c.l.b16 %v269
      %v456 = vunpack.c.l.b16 %v270
      %v457 = vunpack.c.h.b16 %v270
      %v458 = vunpack.c.l.b16 %v271
      %v459 = vunpack.c.l.b16 %v272
      %v460 = vunpack.c.h.b16 %v272
      %v461 = vunpack.c.l.b16 %v273
      %v462 = vunpack.c.l.b16 %v274
      %v463 = vunpack.c.h.b16 %v274
      %v464 = vunpack.c.l.b16 %v275
      %v465 = vunpack.c.l.b16 %v276
      %v466 = vunpack.c.h.b16 %v276
      %v467 = vunpack.c.l.b16 %v277
      %v468 = vunpack.c.l.b16 %v278
      %v469 = vunpack.c.h.b16 %v278
      %v470 = vunpack.c.l.b16 %v279
      %v471 = vunpack.c.l.b16 %v280
      %v472 = vunpack.c.h.b16 %v280
      %v473 = vunpack.c.l.b16 %v281
      %v474 = vunpack.c.l.b16 %v282
      %v475 = vunpack.c.h.b16 %v282
      %v476 = vunpack.c.l.b16 %v283
      %v477 = vunpack.c.l.b16 %v284
      %v478 = vunpack.c.h.b16 %v284
      %v479 = vunpack.c.l.b16 %v285
      %v480 = vunpack.c.l.b16 %v286
      %v481 = vunpack.c.h.b16 %v286
      %v482 = vunpack.c.l.b16 %v287
      %v483 = vunpack.c.l.b16 %v288
      %v484 = vunpack.c.h.b16 %v288
      %v485 = vunpack.c.l.b16 %v289
      %v486 = vpack.c.b16 %v393, %v390
      %v487 = vpack.c.b16 %v394, %v391
      %v488 = vpack.c.b16 %v395, %v392
      %v489 = vpack.c.b16 %v399, %v396
      %v490 = vpack.c.b16 %v400, %v397
      %v491 = vpack.c.b16 %v401, %v398
      %v492 = vpack.c.b16 %v405, %v402
      %v493 = vpack.c.b16 %v406, %v403
      %v494 = vpack.c.b16 %v407, %v404
      %v495 = vpack.c.b16 %v411, %v408
      %v496 = vpack.c.b16 %v412, %v409
      %v497 = vpack.c.b16 %v413, %v410
      %v498 = vpack.c.b16 %v417, %v414
      %v499 = vpack.c.b16 %v418, %v415
      %v500 = vpack.c.b16 %v419, %v416
      %v501 = vpack.c.b16 %v423, %v420
      %v502 = vpack.c.b16 %v424, %v421
      %v503 = vpack.c.b16 %v425, %v422
      %v504 = vpack.c.b16 %v429, %v426
      %v505 = vpack.c.b16 %v430, %v427
      %v506 = vpack.c.b16 %v431, %v428
      %v507 = vpack.c.b16 %v435, %v432
      %v508 = vpack.c.b16 %v436, %v433
      %v509 = vpack.c.b16 %v437, %v434
      %v510 = vpack.c.b16 %v441, %v438
      %v511 = vpack.c.b16 %v442, %v439
      %v512 = vpack.c.b16 %v443, %v440
      %v513 = vpack.c.b16 %v447, %v444
      %v514 = vpack.c.b16 %v448, %v445
      %v515 = vpack.c.b16 %v449, %v446
      %v516 = vpack.c.b16 %v453, %v450
      %v517 = vpack.c.b16 %v454, %v451
      %v518 = vpack.c.b16 %v455, %v452
      %v519 = vpack.c.b16 %v459, %v456
      %v520 = vpack.c.b16 %v460, %v457
      %v521 = vpack.c.b16 %v461, %v458
      %v522 = vpack.c.b16 %v465, %v462
      %v523 = vpack.c.b16 %v466, %v463
      %v524 = vpack.c.b16 %v467, %v464
      %v525 = vpack.c.b16 %v471, %v468
      %v526 = vpack.c.b16 %v472, %v469
      %v527 = vpack.c.b16 %v473, %v470
      %v528 = vpack.c.b16 %v477, %v474
      %v529 = vpack.c.b16 %v478, %v475
      %v530 = vpack.c.b16 %v479, %v476
      %v531 = vpack.c.b16 %v483, %v480
      %v532 = vpack.c.b16 %v484, %v481
      %v533 = vpack.c.b16 %v485, %v482
      %v602 = vunpack.c.l.b16 %v290
      %v603 = vunpack.c.l.b16 %v291
      %v604 = vunpack.c.l.b16 %v292
      %v605 = vunpack.c.l.b16 %v293
      %v606 = vunpack.c.l.b16 %v294
      %v607 = vunpack.c.l.b16 %v295
      %v608 = vunpack.c.l.b16 %v296
      %v609 = vunpack.c.l.b16 %v297
      %v610 = vunpack.c.l.b16 %v298
      %v611 = vunpack.c.l.b16 %v299
      %v612 = vunpack.c.l.b16 %v300
      %v613 = vunpack.c.l.b16 %v301
      %v614 = vunpack.c.l.b16 %v302
      %v615 = vunpack.c.l.b16 %v303
      %v616 = vunpack.c.l.b16 %v304
      %v617 = vunpack.c.l.b16 %v305
      %v618 = vunpack.c.l.b16 %v306
      %v619 = vunpack.c.l.b16 %v307
      %v620 = vunpack.c.l.b16 %v308
      %v621 = vunpack.c.l.b16 %v309
      %v622 = vunpack.c.l.b16 %v310
      %v623 = vunpack.c.l.b16 %v311
      %v624 = vunpack.c.l.b16 %v312
      %v625 = vunpack.c.l.b16 %v313
      %v626 = vunpack.c.l.b16 %v314
      %v627 = vunpack.c.l.b16 %v315
      %v628 = vunpack.c.l.b16 %v316
      %v629 = vunpack.c.l.b16 %v317
      %v630 = vunpack.c.l.b16 %v318
      %v631 = vunpack.c.l.b16 %v319
      %v632 = vunpack.c.l.b16 %v320
      %v633 = vunpack.c.l.b16 %v321
      %v634 = vunpack.c.l.b16 %v322
      %v635 = vunpack.c.l.b16 %v323
      %v636 = vunpack.c.l.b16 %v324
      %v637 = vunpack.c.l.b16 %v325
      %v638 = vpack.c.b16 %v603, %v602
      %v639 = vpack.c.b16 %v605, %v604
      %v640 = vpack.c.b16 %v607, %v606
      %v641 = vpack.c.b16 %v609, %v608
      %v642 = vpack.c.b16 %v611, %v610
      %v643 = vpack.c.b16 %v613, %v612
      %v644 = vpack.c.b16 %v615, %v614
      %v645 = vpack.c.b16 %v617, %v616
      %v646 = vpack.c.b16 %v619, %v618
      %v647 = vpack.c.b16 %v621, %v620
      %v648 = vpack.c.b16 %v623, %v622
      %v649 = vpack.c.b16 %v625, %v624
      %v650 = vpack.c.b16 %v627, %v626
      %v651 = vpack.c.b16 %v629, %v628
      %v652 = vpack.c.b16 %v631, %v630
      %v653 = vpack.c.b16 %v633, %v632
      %v654 = vpack.c.b16 %v635, %v634
      %v655 = vpack.c.b16 %v637, %v636
      %vm674 = vcmask 261120
      %v676 = vsel %vm674, %v488, 0
      %v679 = vsel %vm674, %v491, 0
      %v682 = vsel %vm674, %v494, 0
      %v685 = vsel %vm674, %v497, 0
      %v688 = vsel %vm674, %v500, 0
      %v691 = vsel %vm674, %v503, 0
      %v694 = vsel %vm674, %v506, 0
      %v697 = vsel %vm674, %v509, 0
      %v700 = vsel %vm674, %v512, 0
      %v703 = vsel %vm674, %v515, 0
      %v706 = vsel %vm674, %v518, 0
      %v709 = vsel %vm674, %v521, 0
      %v712 = vsel %vm674, %v524, 0
      %v715 = vsel %vm674, %v527, 0
      %v718 = vsel %vm674, %v530, 0
      %v721 = vsel %vm674, %v533, 0
      %723 = vmatprep.subr.bf16.mxu0 0
      %724 = vmatpush1.bf16.msra.mxu0 %v638
      %725 = vmatprep.subr.bf16.mxu0 0
      %726 = vmatpush1.bf16.msra.mxu0 %v639
      %727 = vmatprep.subr.bf16.mxu0 0
      %728 = vmatpush1.bf16.msra.mxu0 %v640
      %729 = vmatprep.subr.bf16.mxu0 0
      %730 = vmatpush1.bf16.msra.mxu0 %v641
      %731 = vmatprep.subr.bf16.mxu0 0
      %732 = vmatpush1.bf16.msra.mxu0 %v642
      %733 = vmatprep.subr.bf16.mxu0 0
      %734 = vmatpush1.bf16.msra.mxu0 %v643
      %735 = vmatprep.subr.bf16.mxu0 0
      %736 = vmatpush1.bf16.msra.mxu0 %v644
      %737 = vmatprep.subr.bf16.mxu0 0
      %738 = vmatpush1.bf16.msra.mxu0 %v645
      %739 = vmatprep.subr.bf16.mxu0 0
      %740 = vmatpush1.bf16.msra.mxu0 %v646
      %741 = vmatprep.subr.bf16.mxu0 0
      %742 = vmatpush1.bf16.msra.mxu0 %v647
      %743 = vmatprep.subr.bf16.mxu0 0
      %744 = vmatpush1.bf16.msra.mxu0 %v648
      %745 = vmatprep.subr.bf16.mxu0 0
      %746 = vmatpush1.bf16.msra.mxu0 %v649
      %747 = vmatprep.subr.bf16.mxu0 0
      %748 = vmatpush1.bf16.msra.mxu0 %v650
      %749 = vmatprep.subr.bf16.mxu0 0
      %750 = vmatpush1.bf16.msra.mxu0 %v651
      %751 = vmatprep.subr.bf16.mxu0 0
      %752 = vmatpush1.bf16.msra.mxu0 %v652
      %753 = vmatprep.subr.bf16.mxu0 0
      %754 = vmatpush1.bf16.msra.mxu0 %v653
      %755 = vmatprep.mubr.bf16.mxu0 %v487
      %756 = vmatmul.mubr.bf16.gmra.mrb[0].mxu0 %v486
      %v757 = vpop.f32.mrb[0].mxu0
      %v758 = vadd.f32 0.0, %v757
      %v759 = vpop.f32.mrb[0].mxu0
      %v760 = vpop.f32.mrb[0].mxu0
      %v761 = vadd.f32 0.0, %v760
      %v762 = vpop.f32.mrb[0].mxu0
      %763 = vmatprep.mubr.bf16.mxu0 %v490
      %764 = vmatmul.mubr.bf16.gmra.mrb[0].mxu0 %v489
      %v765 = vpop.f32.mrb[0].mxu0
      %v766 = vadd.f32 0.0, %v765
      %v767 = vpop.f32.mrb[0].mxu0
      %v768 = vpop.f32.mrb[0].mxu0
      %v769 = vadd.f32 0.0, %v768
      %v770 = vpop.f32.mrb[0].mxu0
      %771 = vmatprep.mubr.bf16.mxu0 %v493
      %772 = vmatmul.mubr.bf16.gmra.mrb[0].mxu0 %v492
      %v773 = vpop.f32.mrb[0].mxu0
      %v774 = vadd.f32 0.0, %v773
      %v775 = vpop.f32.mrb[0].mxu0
      %v776 = vpop.f32.mrb[0].mxu0
      %v777 = vadd.f32 0.0, %v776
      %v778 = vpop.f32.mrb[0].mxu0
      %779 = vmatprep.mubr.bf16.mxu0 %v496
      %780 = vmatmul.mubr.bf16.gmra.mrb[0].mxu0 %v495
      %v781 = vpop.f32.mrb[0].mxu0
      %v782 = vadd.f32 0.0, %v781
      %v783 = vpop.f32.mrb[0].mxu0
      %v784 = vpop.f32.mrb[0].mxu0
      %v785 = vadd.f32 0.0, %v784
      %v786 = vpop.f32.mrb[0].mxu0
      %787 = vmatprep.mubr.bf16.mxu0 %v499
      %788 = vmatmul.mubr.bf16.gmra.mrb[0].mxu0 %v498
      %v789 = vpop.f32.mrb[0].mxu0
      %v790 = vadd.f32 0.0, %v789
      %v791 = vpop.f32.mrb[0].mxu0
      %v792 = vpop.f32.mrb[0].mxu0
      %v793 = vadd.f32 0.0, %v792
      %v794 = vpop.f32.mrb[0].mxu0
      %795 = vmatprep.mubr.bf16.mxu0 %v502
      %796 = vmatmul.mubr.bf16.gmra.mrb[0].mxu0 %v501
      %v797 = vpop.f32.mrb[0].mxu0
      %v798 = vadd.f32 0.0, %v797
      %v799 = vpop.f32.mrb[0].mxu0
      %v800 = vpop.f32.mrb[0].mxu0
      %v801 = vadd.f32 0.0, %v800
      %v802 = vpop.f32.mrb[0].mxu0
      %803 = vmatprep.mubr.bf16.mxu0 %v505
      %804 = vmatmul.mubr.bf16.gmra.mrb[0].mxu0 %v504
      %v805 = vpop.f32.mrb[0].mxu0
      %v806 = vadd.f32 0.0, %v805
      %v807 = vpop.f32.mrb[0].mxu0
      %v808 = vpop.f32.mrb[0].mxu0
      %v809 = vadd.f32 0.0, %v808
      %v810 = vpop.f32.mrb[0].mxu0
      %811 = vmatprep.mubr.bf16.mxu0 %v508
      %812 = vmatmul.mubr.bf16.gmra.mrb[0].mxu0 %v507
      %v813 = vpop.f32.mrb[0].mxu0
      %v814 = vadd.f32 0.0, %v813
      %v815 = vpop.f32.mrb[0].mxu0
      %v816 = vpop.f32.mrb[0].mxu0
      %v817 = vadd.f32 0.0, %v816
      %v818 = vpop.f32.mrb[0].mxu0
      %819 = vmatprep.mubr.bf16.mxu0 %v511
      %820 = vmatmul.mubr.bf16.gmra.mrb[0].mxu0 %v510
      %v821 = vpop.f32.mrb[0].mxu0
      %v822 = vadd.f32 0.0, %v821
      %v823 = vpop.f32.mrb[0].mxu0
      %v824 = vpop.f32.mrb[0].mxu0
      %v825 = vadd.f32 0.0, %v824
      %v826 = vpop.f32.mrb[0].mxu0
      %827 = vmatprep.mubr.bf16.mxu0 %v514
      %828 = vmatmul.mubr.bf16.gmra.mrb[0].mxu0 %v513
      %v829 = vpop.f32.mrb[0].mxu0
      %v830 = vadd.f32 0.0, %v829
      %v831 = vpop.f32.mrb[0].mxu0
      %v832 = vpop.f32.mrb[0].mxu0
      %v833 = vadd.f32 0.0, %v832
      %v834 = vpop.f32.mrb[0].mxu0
      %835 = vmatprep.mubr.bf16.mxu0 %v517
      %836 = vmatmul.mubr.bf16.gmra.mrb[0].mxu0 %v516
      %v837 = vpop.f32.mrb[0].mxu0
      %v838 = vadd.f32 0.0, %v837
      %v839 = vpop.f32.mrb[0].mxu0
      %v840 = vpop.f32.mrb[0].mxu0
      %v841 = vadd.f32 0.0, %v840
      %v842 = vpop.f32.mrb[0].mxu0
      %843 = vmatprep.mubr.bf16.mxu0 %v520
      %844 = vmatmul.mubr.bf16.gmra.mrb[0].mxu0 %v519
      %v845 = vpop.f32.mrb[0].mxu0
      %v846 = vadd.f32 0.0, %v845
      %v847 = vpop.f32.mrb[0].mxu0
      %v848 = vpop.f32.mrb[0].mxu0
      %v849 = vadd.f32 0.0, %v848
      %v850 = vpop.f32.mrb[0].mxu0
      %851 = vmatprep.mubr.bf16.mxu0 %v523
      %852 = vmatmul.mubr.bf16.gmra.mrb[0].mxu0 %v522
      %v853 = vpop.f32.mrb[0].mxu0
      %v854 = vadd.f32 0.0, %v853
      %v855 = vpop.f32.mrb[0].mxu0
      %v856 = vpop.f32.mrb[0].mxu0
      %v857 = vadd.f32 0.0, %v856
      %v858 = vpop.f32.mrb[0].mxu0
      %859 = vmatprep.mubr.bf16.mxu0 %v526
      %860 = vmatmul.mubr.bf16.gmra.mrb[0].mxu0 %v525
      %v861 = vpop.f32.mrb[0].mxu0
      %v862 = vadd.f32 0.0, %v861
      %v863 = vpop.f32.mrb[0].mxu0
      %v864 = vpop.f32.mrb[0].mxu0
      %v865 = vadd.f32 0.0, %v864
      %v866 = vpop.f32.mrb[0].mxu0
      %867 = vmatprep.mubr.bf16.mxu0 %v529
      %868 = vmatmul.mubr.bf16.gmra.mrb[0].mxu0 %v528
      %v869 = vpop.f32.mrb[0].mxu0
      %v870 = vadd.f32 0.0, %v869
      %v871 = vpop.f32.mrb[0].mxu0
      %v872 = vpop.f32.mrb[0].mxu0
      %v873 = vadd.f32 0.0, %v872
      %v874 = vpop.f32.mrb[0].mxu0
      %875 = vmatprep.mubr.bf16.mxu0 %v532
      %876 = vmatmul.mubr.bf16.gmra.mrb[0].mxu0 %v531
      %v877 = vpop.f32.mrb[0].mxu0
      %v878 = vadd.f32 0.0, %v877
      %v879 = vpop.f32.mrb[0].mxu0
      %v880 = vpop.f32.mrb[0].mxu0
      %v881 = vadd.f32 0.0, %v880
      %v882 = vpop.f32.mrb[0].mxu0
      %883 = vdwg.mxu0
      %884 = vmatprep.subr.bf16.mxu0 0
      %885 = vmatpush1.bf16.msra.mxu0 %v654
      %886 = vmatprep.subr.bf16.mxu0 0
      %887 = vmatpush1.bf16.msra.mxu0 %v655
      %888 = vmatprep.subr.bf16.mxu0 0
      %889 = vmatpush1.bf16.msra.mxu0 0
      %890 = vmatprep.subr.bf16.mxu0 0
      %891 = vmatpush1.bf16.msra.mxu0 0
      %892 = vmatprep.subr.bf16.mxu0 0
      %893 = vmatpush1.bf16.msra.mxu0 0
      %894 = vmatprep.subr.bf16.mxu0 0
      %895 = vmatpush1.bf16.msra.mxu0 0
      %896 = vmatprep.subr.bf16.mxu0 0
      %897 = vmatpush1.bf16.msra.mxu0 0
      %898 = vmatprep.subr.bf16.mxu0 0
      %899 = vmatpush1.bf16.msra.mxu0 0
      %900 = vmatprep.subr.bf16.mxu0 0
      %901 = vmatpush1.bf16.msra.mxu0 0
      %902 = vmatprep.subr.bf16.mxu0 0
      %903 = vmatpush1.bf16.msra.mxu0 0
      %904 = vmatprep.subr.bf16.mxu0 0
      %905 = vmatpush1.bf16.msra.mxu0 0
      %906 = vmatprep.subr.bf16.mxu0 0
      %907 = vmatpush1.bf16.msra.mxu0 0
      %908 = vmatprep.subr.bf16.mxu0 0
      %909 = vmatpush1.bf16.msra.mxu0 0
      %910 = vmatprep.subr.bf16.mxu0 0
      %911 = vmatpush1.bf16.msra.mxu0 0
      %912 = vmatprep.subr.bf16.mxu0 0
      %913 = vmatpush1.bf16.msra.mxu0 0
      %914 = vmatprep.subr.bf16.mxu0 0
      %915 = vmatpush1.bf16.msra.mxu0 0
      %916 = vmatprep.mubr.bf16.mxu0 0
      %917 = vmatmul.mubr.bf16.gmra.mrb[0].mxu0 %v676
      %v918 = vpop.f32.mrb[0].mxu0
      %v919 = vadd.f32 %v758, %v918
      %v920 = vpop.f32.mrb[0].mxu0
      %v921 = vpop.f32.mrb[0].mxu0
      %v922 = vadd.f32 %v761, %v921
      %v923 = vpop.f32.mrb[0].mxu0
      %924 = vmatprep.mubr.bf16.mxu0 0
      %925 = vmatmul.mubr.bf16.gmra.mrb[0].mxu0 %v679
      %v926 = vpop.f32.mrb[0].mxu0
      %v927 = vadd.f32 %v766, %v926
      %v928 = vpop.f32.mrb[0].mxu0
      %v929 = vpop.f32.mrb[0].mxu0
      %v930 = vadd.f32 %v769, %v929
      %v931 = vpop.f32.mrb[0].mxu0
      %932 = vmatprep.mubr.bf16.mxu0 0
      %933 = vmatmul.mubr.bf16.gmra.mrb[0].mxu0 %v682
      %v934 = vpop.f32.mrb[0].mxu0
      %v935 = vadd.f32 %v774, %v934
      %v936 = vpop.f32.mrb[0].mxu0
      %v937 = vpop.f32.mrb[0].mxu0
      %v938 = vadd.f32 %v777, %v937
      %v939 = vpop.f32.mrb[0].mxu0
      %940 = vmatprep.mubr.bf16.mxu0 0
      %941 = vmatmul.mubr.bf16.gmra.mrb[0].mxu0 %v685
      %v942 = vpop.f32.mrb[0].mxu0
      %v943 = vadd.f32 %v782, %v942
      %v944 = vpop.f32.mrb[0].mxu0
      %v945 = vpop.f32.mrb[0].mxu0
      %v946 = vadd.f32 %v785, %v945
      %v947 = vpop.f32.mrb[0].mxu0
      %948 = vmatprep.mubr.bf16.mxu0 0
      %949 = vmatmul.mubr.bf16.gmra.mrb[0].mxu0 %v688
      %v950 = vpop.f32.mrb[0].mxu0
      %v951 = vadd.f32 %v790, %v950
      %v952 = vpop.f32.mrb[0].mxu0
      %v953 = vpop.f32.mrb[0].mxu0
      %v954 = vadd.f32 %v793, %v953
      %v955 = vpop.f32.mrb[0].mxu0
      %956 = vmatprep.mubr.bf16.mxu0 0
      %957 = vmatmul.mubr.bf16.gmra.mrb[0].mxu0 %v691
      %v958 = vpop.f32.mrb[0].mxu0
      %v959 = vadd.f32 %v798, %v958
      %v960 = vpop.f32.mrb[0].mxu0
      %v961 = vpop.f32.mrb[0].mxu0
      %v962 = vadd.f32 %v801, %v961
      %v963 = vpop.f32.mrb[0].mxu0
      %964 = vmatprep.mubr.bf16.mxu0 0
      %965 = vmatmul.mubr.bf16.gmra.mrb[0].mxu0 %v694
      %v966 = vpop.f32.mrb[0].mxu0
      %v967 = vadd.f32 %v806, %v966
      %v968 = vpop.f32.mrb[0].mxu0
      %v969 = vpop.f32.mrb[0].mxu0
      %v970 = vadd.f32 %v809, %v969
      %v971 = vpop.f32.mrb[0].mxu0
      %972 = vmatprep.mubr.bf16.mxu0 0
      %973 = vmatmul.mubr.bf16.gmra.mrb[0].mxu0 %v697
      %v974 = vpop.f32.mrb[0].mxu0
      %v975 = vadd.f32 %v814, %v974
      %v976 = vpop.f32.mrb[0].mxu0
      %v977 = vpop.f32.mrb[0].mxu0
      %v978 = vadd.f32 %v817, %v977
      %v979 = vpop.f32.mrb[0].mxu0
      %980 = vmatprep.mubr.bf16.mxu0 0
      %981 = vmatmul.mubr.bf16.gmra.mrb[0].mxu0 %v700
      %v982 = vpop.f32.mrb[0].mxu0
      %v983 = vadd.f32 %v822, %v982
      %v984 = vpop.f32.mrb[0].mxu0
      %v985 = vpop.f32.mrb[0].mxu0
      %v986 = vadd.f32 %v825, %v985
      %v987 = vpop.f32.mrb[0].mxu0
      %988 = vmatprep.mubr.bf16.mxu0 0
      %989 = vmatmul.mubr.bf16.gmra.mrb[0].mxu0 %v703
      %v990 = vpop.f32.mrb[0].mxu0
      %v991 = vadd.f32 %v830, %v990
      %v992 = vpop.f32.mrb[0].mxu0
      %v993 = vpop.f32.mrb[0].mxu0
      %v994 = vadd.f32 %v833, %v993
      %v995 = vpop.f32.mrb[0].mxu0
      %996 = vmatprep.mubr.bf16.mxu0 0
      %997 = vmatmul.mubr.bf16.gmra.mrb[0].mxu0 %v706
      %v998 = vpop.f32.mrb[0].mxu0
      %v999 = vadd.f32 %v838, %v998
      %v1000 = vpop.f32.mrb[0].mxu0
      %v1001 = vpop.f32.mrb[0].mxu0
      %v1002 = vadd.f32 %v841, %v1001
      %v1003 = vpop.f32.mrb[0].mxu0
      %1004 = vmatprep.mubr.bf16.mxu0 0
      %1005 = vmatmul.mubr.bf16.gmra.mrb[0].mxu0 %v709
      %v1006 = vpop.f32.mrb[0].mxu0
      %v1007 = vadd.f32 %v846, %v1006
      %v1008 = vpop.f32.mrb[0].mxu0
      %v1009 = vpop.f32.mrb[0].mxu0
      %v1010 = vadd.f32 %v849, %v1009
      %v1011 = vpop.f32.mrb[0].mxu0
      %1012 = vmatprep.mubr.bf16.mxu0 0
      %1013 = vmatmul.mubr.bf16.gmra.mrb[0].mxu0 %v712
      %v1014 = vpop.f32.mrb[0].mxu0
      %v1015 = vadd.f32 %v854, %v1014
      %v1016 = vpop.f32.mrb[0].mxu0
      %v1017 = vpop.f32.mrb[0].mxu0
      %v1018 = vadd.f32 %v857, %v1017
      %v1019 = vpop.f32.mrb[0].mxu0
      %1020 = vmatprep.mubr.bf16.mxu0 0
      %1021 = vmatmul.mubr.bf16.gmra.mrb[0].mxu0 %v715
      %v1022 = vpop.f32.mrb[0].mxu0
      %v1023 = vadd.f32 %v862, %v1022
      %v1024 = vpop.f32.mrb[0].mxu0
      %v1025 = vpop.f32.mrb[0].mxu0
      %v1026 = vadd.f32 %v865, %v1025
      %v1027 = vpop.f32.mrb[0].mxu0
      %1028 = vmatprep.mubr.bf16.mxu0 0
      %1029 = vmatmul.mubr.bf16.gmra.mrb[0].mxu0 %v718
      %v1030 = vpop.f32.mrb[0].mxu0
      %v1031 = vadd.f32 %v870, %v1030
      %v1032 = vpop.f32.mrb[0].mxu0
      %v1033 = vpop.f32.mrb[0].mxu0
      %v1034 = vadd.f32 %v873, %v1033
      %v1035 = vpop.f32.mrb[0].mxu0
      %1036 = vmatprep.mubr.bf16.mxu0 0
      %1037 = vmatmul.mubr.bf16.gmra.mrb[0].mxu0 %v721
      %v1038 = vpop.f32.mrb[0].mxu0
      %v1039 = vadd.f32 %v878, %v1038
      %v1040 = vpop.f32.mrb[0].mxu0
      %v1041 = vpop.f32.mrb[0].mxu0
      %v1042 = vadd.f32 %v881, %v1041
      %v1043 = vpop.f32.mrb[0].mxu0
      %1044 = vdwg.mxu0
      %v1045 = vpack.c.bf16 %v922, %v919
      %v1046 = vpack.c.bf16 %v930, %v927
      %v1047 = vpack.c.bf16 %v938, %v935
      %v1048 = vpack.c.bf16 %v946, %v943
      %v1049 = vpack.c.bf16 %v954, %v951
      %v1050 = vpack.c.bf16 %v962, %v959
      %v1051 = vpack.c.bf16 %v970, %v967
      %v1052 = vpack.c.bf16 %v978, %v975
      %v1053 = vpack.c.bf16 %v986, %v983
      %v1054 = vpack.c.bf16 %v994, %v991
      %v1055 = vpack.c.bf16 %v1002, %v999
      %v1056 = vpack.c.bf16 %v1010, %v1007
      %v1057 = vpack.c.bf16 %v1018, %v1015
      %v1058 = vpack.c.bf16 %v1026, %v1023
      %v1059 = vpack.c.bf16 %v1034, %v1031
      %v1060 = vpack.c.bf16 %v1042, %v1039
      %v1077 = vunpack.c.l.b16 %v1045
      %v1078 = vunpack.c.h.b16 %v1045
      %v1079 = vunpack.c.l.b16 %v1046
      %v1080 = vunpack.c.h.b16 %v1046
      %v1081 = vunpack.c.l.b16 %v1047
      %v1082 = vunpack.c.h.b16 %v1047
      %v1083 = vunpack.c.l.b16 %v1048
      %v1084 = vunpack.c.h.b16 %v1048
      %v1085 = vunpack.c.l.b16 %v1049
      %v1086 = vunpack.c.h.b16 %v1049
      %v1087 = vunpack.c.l.b16 %v1050
      %v1088 = vunpack.c.h.b16 %v1050
      %v1089 = vunpack.c.l.b16 %v1051
      %v1090 = vunpack.c.h.b16 %v1051
      %v1091 = vunpack.c.l.b16 %v1052
      %v1092 = vunpack.c.h.b16 %v1052
      %v1093 = vunpack.c.l.b16 %v1053
      %v1094 = vunpack.c.h.b16 %v1053
      %v1095 = vunpack.c.l.b16 %v1054
      %v1096 = vunpack.c.h.b16 %v1054
      %v1097 = vunpack.c.l.b16 %v1055
      %v1098 = vunpack.c.h.b16 %v1055
      %v1099 = vunpack.c.l.b16 %v1056
      %v1100 = vunpack.c.h.b16 %v1056
      %v1101 = vunpack.c.l.b16 %v1057
      %v1102 = vunpack.c.h.b16 %v1057
      %v1103 = vunpack.c.l.b16 %v1058
      %v1104 = vunpack.c.h.b16 %v1058
      %v1105 = vunpack.c.l.b16 %v1059
      %v1106 = vunpack.c.h.b16 %v1059
      %v1107 = vunpack.c.l.b16 %v1060
      %v1108 = vunpack.c.h.b16 %v1060
      %v1109 = vpack.c.b16 %v1077, %v1077
      %v1110 = vpack.c.b16 %v1078, %v1078
      %v1111 = vpack.c.b16 %v1079, %v1079
      %v1112 = vpack.c.b16 %v1080, %v1080
      %v1113 = vpack.c.b16 %v1081, %v1081
      %v1114 = vpack.c.b16 %v1082, %v1082
      %v1115 = vpack.c.b16 %v1083, %v1083
      %v1116 = vpack.c.b16 %v1084, %v1084
      %v1117 = vpack.c.b16 %v1085, %v1085
      %v1118 = vpack.c.b16 %v1086, %v1086
      %v1119 = vpack.c.b16 %v1087, %v1087
      %v1120 = vpack.c.b16 %v1088, %v1088
      %v1121 = vpack.c.b16 %v1089, %v1089
      %v1122 = vpack.c.b16 %v1090, %v1090
      %v1123 = vpack.c.b16 %v1091, %v1091
      %v1124 = vpack.c.b16 %v1092, %v1092
      %v1125 = vpack.c.b16 %v1093, %v1093
      %v1126 = vpack.c.b16 %v1094, %v1094
      %v1127 = vpack.c.b16 %v1095, %v1095
      %v1128 = vpack.c.b16 %v1096, %v1096
      %v1129 = vpack.c.b16 %v1097, %v1097
      %v1130 = vpack.c.b16 %v1098, %v1098
      %v1131 = vpack.c.b16 %v1099, %v1099
      %v1132 = vpack.c.b16 %v1100, %v1100
      %v1133 = vpack.c.b16 %v1101, %v1101
      %v1134 = vpack.c.b16 %v1102, %v1102
      %v1135 = vpack.c.b16 %v1103, %v1103
      %v1136 = vpack.c.b16 %v1104, %v1104
      %v1137 = vpack.c.b16 %v1105, %v1105
      %v1138 = vpack.c.b16 %v1106, %v1106
      %v1139 = vpack.c.b16 %v1107, %v1107
      %v1140 = vpack.c.b16 %v1108, %v1108
      %1173 = vst [vmem:[%s215] sm:$0xf] %v1109
      %1174 = vst [vmem:[%s215 + $0x4] sm:$0xf] %v1110
      %1175 = vst [vmem:[%s215 + $0x8] sm:$0xf] %v1111
      %1176 = vst [vmem:[%s215 + $0xc] sm:$0xf] %v1112
      %1177 = vst [vmem:[%s215 + $0x10] sm:$0xf] %v1113
      %1178 = vst [vmem:[%s215 + $0x14] sm:$0xf] %v1114
      %1179 = vst [vmem:[%s215 + $0x18] sm:$0xf] %v1115
      %1180 = vst [vmem:[%s215 + $0x1c] sm:$0xf] %v1116
      %1181 = vst [vmem:[%s215 + $0x20] sm:$0xf] %v1117
      %1182 = vst [vmem:[%s215 + $0x24] sm:$0xf] %v1118
      %1183 = vst [vmem:[%s215 + $0x28] sm:$0xf] %v1119
      %1184 = vst [vmem:[%s215 + $0x2c] sm:$0xf] %v1120
      %1185 = vst [vmem:[%s215 + $0x30] sm:$0xf] %v1121
      %1186 = vst [vmem:[%s215 + $0x34] sm:$0xf] %v1122
      %1187 = vst [vmem:[%s215 + $0x38] sm:$0xf] %v1123
      %1188 = vst [vmem:[%s215 + $0x3c] sm:$0xf] %v1124
      %1189 = vst [vmem:[%s215 + $0x40] sm:$0xf] %v1125
      %1190 = vst [vmem:[%s215 + $0x44] sm:$0xf] %v1126
      %1191 = vst [vmem:[%s215 + $0x48] sm:$0xf] %v1127
      %1192 = vst [vmem:[%s215 + $0x4c] sm:$0xf] %v1128
      %1193 = vst [vmem:[%s215 + $0x50] sm:$0xf] %v1129
      %1194 = vst [vmem:[%s215 + $0x54] sm:$0xf] %v1130
      %1195 = vst [vmem:[%s215 + $0x58] sm:$0xf] %v1131
      %1196 = vst [vmem:[%s215 + $0x5c] sm:$0xf] %v1132
      %1197 = vst [vmem:[%s215 + $0x60] sm:$0xf] %v1133
      %1198 = vst [vmem:[%s215 + $0x64] sm:$0xf] %v1134
      %1199 = vst [vmem:[%s215 + $0x68] sm:$0xf] %v1135
      %1200 = vst [vmem:[%s215 + $0x6c] sm:$0xf] %v1136
      %1201 = vst [vmem:[%s215 + $0x70] sm:$0xf] %v1137
      %1202 = vst [vmem:[%s215 + $0x74] sm:$0xf] %v1138
      %1203 = vst [vmem:[%s215 + $0x78] sm:$0xf] %v1139
      %1204 = vst [vmem:[%s215 + $0x7c] sm:$0xf] %v1140
      %v1205 = vadd.f32 %v919, %v922
      %v1206 = vadd.f32 %v1205, %v927
      %v1207 = vadd.f32 %v1206, %v930
      %v1208 = vadd.f32 %v1207, %v935
      %v1209 = vadd.f32 %v1208, %v938
      %v1210 = vadd.f32 %v1209, %v943
      %v1211 = vadd.f32 %v1210, %v946
      %v1212 = vadd.f32 %v1211, %v951
      %v1213 = vadd.f32 %v1212, %v954
      %v1214 = vadd.f32 %v1213, %v959
      %v1215 = vadd.f32 %v1214, %v962
      %v1216 = vadd.f32 %v1215, %v967
      %v1217 = vadd.f32 %v1216, %v970
      %v1218 = vadd.f32 %v1217, %v975
      %v1219 = vadd.f32 %v1218, %v978
      %v1220 = vadd.f32 %v1219, %v983
      %v1221 = vadd.f32 %v1220, %v986
      %v1222 = vadd.f32 %v1221, %v991
      %v1223 = vadd.f32 %v1222, %v994
      %v1224 = vadd.f32 %v1223, %v999
      %v1225 = vadd.f32 %v1224, %v1002
      %v1226 = vadd.f32 %v1225, %v1007
      %v1227 = vadd.f32 %v1226, %v1010
      %v1228 = vadd.f32 %v1227, %v1015
      %v1229 = vadd.f32 %v1228, %v1018
      %v1230 = vadd.f32 %v1229, %v1023
      %v1231 = vadd.f32 %v1230, %v1026
      %v1232 = vadd.f32 %v1231, %v1031
      %v1233 = vadd.f32 %v1232, %v1034
      %v1234 = vadd.f32 %v1233, %v1039
      %v1235 = vadd.f32 %v1234, %v1042
      %1236 = vst [vmem:[%s220] sm:$0xff] %v1235
      %v1237 = vmul.f32 %v919, %v919
      %v1238 = vmul.f32 %v922, %v922
      %v1239 = vmul.f32 %v927, %v927
      %v1240 = vmul.f32 %v930, %v930
      %v1241 = vmul.f32 %v935, %v935
      %v1242 = vmul.f32 %v938, %v938
      %v1243 = vmul.f32 %v943, %v943
      %v1244 = vmul.f32 %v946, %v946
      %v1245 = vmul.f32 %v951, %v951
      %v1246 = vmul.f32 %v954, %v954
      %v1247 = vmul.f32 %v959, %v959
      %v1248 = vmul.f32 %v962, %v962
      %v1249 = vmul.f32 %v967, %v967
      %v1250 = vmul.f32 %v970, %v970
      %v1251 = vmul.f32 %v975, %v975
      %v1252 = vmul.f32 %v978, %v978
      %v1253 = vmul.f32 %v983, %v983
      %v1254 = vmul.f32 %v986, %v986
      %v1255 = vmul.f32 %v991, %v991
      %v1256 = vmul.f32 %v994, %v994
      %v1257 = vmul.f32 %v999, %v999
      %v1258 = vmul.f32 %v1002, %v1002
      %v1259 = vmul.f32 %v1007, %v1007
      %v1260 = vmul.f32 %v1010, %v1010
      %v1261 = vmul.f32 %v1015, %v1015
      %v1262 = vmul.f32 %v1018, %v1018
      %v1263 = vmul.f32 %v1023, %v1023
      %v1264 = vmul.f32 %v1026, %v1026
      %v1265 = vmul.f32 %v1031, %v1031
      %v1266 = vmul.f32 %v1034, %v1034
      %v1267 = vmul.f32 %v1039, %v1039
      %v1268 = vmul.f32 %v1042, %v1042
      %v1269 = vadd.f32 %v1237, %v1238
      %v1270 = vadd.f32 %v1269, %v1239
      %v1271 = vadd.f32 %v1270, %v1240
      %v1272 = vadd.f32 %v1271, %v1241
      %v1273 = vadd.f32 %v1272, %v1242
      %v1274 = vadd.f32 %v1273, %v1243
      %v1275 = vadd.f32 %v1274, %v1244
      %v1276 = vadd.f32 %v1275, %v1245
      %v1277 = vadd.f32 %v1276, %v1246
      %v1278 = vadd.f32 %v1277, %v1247
      %v1279 = vadd.f32 %v1278, %v1248
      %v1280 = vadd.f32 %v1279, %v1249
      %v1281 = vadd.f32 %v1280, %v1250
      %v1282 = vadd.f32 %v1281, %v1251
      %v1283 = vadd.f32 %v1282, %v1252
      %v1284 = vadd.f32 %v1283, %v1253
      %v1285 = vadd.f32 %v1284, %v1254
      %v1286 = vadd.f32 %v1285, %v1255
      %v1287 = vadd.f32 %v1286, %v1256
      %v1288 = vadd.f32 %v1287, %v1257
      %v1289 = vadd.f32 %v1288, %v1258
      %v1290 = vadd.f32 %v1289, %v1259
      %v1291 = vadd.f32 %v1290, %v1260
      %v1292 = vadd.f32 %v1291, %v1261
      %v1293 = vadd.f32 %v1292, %v1262
      %v1294 = vadd.f32 %v1293, %v1263
      %v1295 = vadd.f32 %v1294, %v1264
      %v1296 = vadd.f32 %v1295, %v1265
      %v1297 = vadd.f32 %v1296, %v1266
      %v1298 = vadd.f32 %v1297, %v1267
      %v1299 = vadd.f32 %v1298, %v1268
      %1300 = vst [vmem:[%s224] sm:$0xff] %v1299
      %s1301 = smul.u32 32, %s16
      %p1302 = scmp.lt.s32.totalorder %s1301, 63
      %s1303 = scalar_select %p1302, %s1301, 63
      %s1304 = smul.addr %s1303, 4
      %s1305 = scalar_lea.vmem %s2, %s1304
      %p1306 = scmp.lt.s32.totalorder %s16, 1
      %s1307 = scalar_select %p1306, %s16, 1
      %s1308 = smul.addr %s1307, 8
      %s1309 = scalar_lea.vmem %s3, %s1308
      %p1310 = scmp.lt.s32.totalorder %s16, 1
      %s1311 = scalar_select %p1310, %s16, 1
      %s1312 = smul.addr %s1311, 8
      %s1313 = scalar_lea.vmem %s4, %s1312
      // Predicated region
      $region29: #{_lambda_.15} parent=27 // pred_check
        %p1314 = pneg %p81
      $region30: #{_lambda_.15} parent=27 // pred_check_branch
        %1316 = sbr.rel (%p1314) target = $region32
      $region31: #{_lambda_.15} parent=27 // pred_region
        %s1317 = smul.u32 32, %s16
      $region32: #{_lambda_.15} parent=27 // pred_fallthru
        _
      // Predicated region
      $region33: #{_lambda_.15} parent=27 // pred_check
        %p1318 = pneg %p107
      $region34: #{_lambda_.15} parent=27 // pred_check_branch
        %1320 = sbr.rel (%p1318) target = $region36
      $region35: #{_lambda_.15} parent=27 // pred_region
        _
      $region36: #{_lambda_.15} parent=27 // pred_fallthru
        _
      // Predicated region
      $region37: #{_lambda_.15} parent=27 // pred_check
        %p1321 = pneg %p133
      $region38: #{_lambda_.15} parent=27 // pred_check_branch
        %1323 = sbr.rel (%p1321) target = $region40
      $region39: #{_lambda_.15} parent=27 // pred_region
        _
      $region40: #{_lambda_.15} parent=27 // pred_fallthru
        _
    $region28: #{_lambda_.15} parent=5 // pred_fallthru
      _
    %p1324 = scmp.le.s32.totalorder 2, %s11
    // Predicated region
    $region41: #{_lambda_.15} parent=5 // pred_check
      %p1325 = pneg %p1324
    $region42: #{_lambda_.15} parent=5 // pred_check_branch
      %1327 = sbr.rel (%p1325) target = $region44
    $region43: #{_lambda_.15} parent=5 // pred_region
      %s1328 = ssub.s32 %s11, 2
      // Predicated region
      $region45: #{_lambda_.15} parent=43 // pred_check
        %p1329 = pneg %p87
      $region46: #{_lambda_.15} parent=43 // pred_check_branch
        %1331 = sbr.rel (%p1329) target = $region48
      $region47: #{_lambda_.15} parent=43 // pred_region
        %s1332 = smul.u32 32, %s17
        %p1333 = scmp.lt.s32.totalorder %s1332, 63
        %s1334 = scalar_select %p1333, %s1332, 63
        %s1335 = smul.addr %s1334, 4
        %s1336 = scalar_lea.vmem %s2, %s1335
      $region48: #{_lambda_.15} parent=43 // pred_fallthru
        _
      // Predicated region
      $region49: #{_lambda_.15} parent=43 // pred_check
        %p1337 = pneg %p113
      $region50: #{_lambda_.15} parent=43 // pred_check_branch
        %1339 = sbr.rel (%p1337) target = $region52
      $region51: #{_lambda_.15} parent=43 // pred_region
        %p1340 = scmp.lt.s32.totalorder %s17, 1
        %s1341 = scalar_select %p1340, %s17, 1
        %s1342 = smul.addr %s1341, 8
        %s1343 = scalar_lea.vmem %s3, %s1342
      $region52: #{_lambda_.15} parent=43 // pred_fallthru
        _
      // Predicated region
      $region53: #{_lambda_.15} parent=43 // pred_check
        %p1344 = pneg %p139
      $region54: #{_lambda_.15} parent=43 // pred_check_branch
        %1346 = sbr.rel (%p1344) target = $region56
      $region55: #{_lambda_.15} parent=43 // pred_region
        %p1347 = scmp.lt.s32.totalorder %s17, 1
        %s1348 = scalar_select %p1347, %s17, 1
        %s1349 = smul.addr %s1348, 8
        %s1350 = scalar_lea.vmem %s4, %s1349
      $region56: #{_lambda_.15} parent=43 // pred_fallthru
        _
    $region44: #{_lambda_.15} parent=5 // pred_fallthru
      _
  $region6: #{_lambda_.15} parent=0 // loop_footer
    %s15 = sadd.s32 1, %s11
  $region7: #{_lambda_.15} parent=0 // loop_footer_branch
    %10 = sbr.rel target = $region3
  $region8: #{_lambda_.15} parent=0 // loop_exit
    _

// kernel: _lambda_.17
$region0: #{_lambda_.17}
  #allocation0 [shape = 'u32[]', space=smem, size = 0x4, offset = 0x4, fixed_abs, tag = 'smem constant byte address 0x4 - core index']
  #allocation1 [shape = 'u32[144,128]{1,0:T(1,128)}', space=vmem, size = 0x12000, scoped, tag = 'internal scratch']
  %s0 = inlined_call_operand.vmem [shape: bf16[2048,144], index: 0, kind: input, shape index: {}]
  %s1 = inlined_call_operand.vmem [shape: bf16[144,128], index: 1, kind: input, shape index: {}]
  %s2 = inlined_call_operand.vmem [shape: f32[1,128], index: 2, kind: input, shape index: {}]
  %s3 = inlined_call_operand.vmem [shape: f32[2048,128], index: 3, kind: output, shape index: {}]
  %s4 = sld [smem:[#allocation0]]
  $region45: #{_lambda_.17} parent=0
    _
  %s6 = ssub.s32 1, %s4
  %s7 = scalar_select 0, %s6, %s4
  loop: start=0, step=1, limit=6
  $region2: #{_lambda_.17} parent=0 // loop_pre_header
    _
  $region3: #{_lambda_.17} parent=0 // loop_header
    %s9 = sphi 0, %s13
    %p10 = scmp.ge.s32.totalorder %s9, 6
    %s19 = sphi 0, %s21
    %s22 = sphi 0, %s19
    %s23 = sphi 0, %s22
    %s39 = sphi 0, %s23
    %s43 = sphi 0, %s43
    %s45 = sphi 0, %s43
    %s46 = sphi 0, %s45
    %s60 = sphi 0, %s46
    %s64 = sphi 0, %s64
    %s66 = sphi 0, %s64
    %s67 = sphi 0, %s66
    %s81 = sphi 0, %s67
    %s87 = sphi 0, %s89
    %s90 = sphi 0, %s87
    %s91 = sphi 0, %s90
    %s107 = sphi 0, %s91
  $region4: #{_lambda_.17} parent=0 // loop_header_branch
    %12 = sbr.rel (%p10) target = $region8
  $region5: #{_lambda_.17} parent=0 // loop_body
    %s14 = ssub.s32 %s9, 1
    %s15 = ssub.s32 %s9, 2
    %s16 = sadd.s32 %s9, 1
    %s17 = ssub.s32 %s9, %s16
    %p18 = scmp.eq.s32.totalorder %s17, 0
    %s20 = sadd.s32 %s19, 1
    %s21 = scalar_select %p18, %s19, %s20
    %p24 = pneg %p18
    %p25 = scmp.eq.s32.totalorder %s9, 3
    %p26 = por %p24, %p25
    %p27 = scmp.ne.s32.totalorder %s19, %s22
    %p28 = scmp.eq.s32.totalorder %s9, 0
    %p29 = por %p27, %p28
    %p30 = scmp.ne.s32.totalorder %s19, %s22
    %p31 = scmp.eq.s32.totalorder %s14, 3
    %p32 = por %p30, %p31
    %p33 = scmp.ne.s32.totalorder %s22, %s23
    %p34 = scmp.eq.s32.totalorder %s14, 0
    %p35 = por %p33, %p34
    %p36 = scmp.ne.s32.totalorder %s22, %s23
    %p37 = scmp.eq.s32.totalorder %s15, 3
    %p38 = por %p36, %p37
    %p40 = scmp.ne.s32.totalorder %s23, %s39
    %p41 = scmp.eq.s32.totalorder %s15, 0
    %p42 = por %p40, %p41
    %s44 = sadd.s32 %s43, 1
    %p47 = scmp.eq.s32.totalorder %s9, 3
    %p48 = scmp.ne.s32.totalorder %s43, %s45
    %p49 = scmp.eq.s32.totalorder %s9, 0
    %p50 = por %p48, %p49
    %p51 = scmp.ne.s32.totalorder %s43, %s45
    %p52 = scmp.eq.s32.totalorder %s14, 3
    %p53 = por %p51, %p52
    %p54 = scmp.ne.s32.totalorder %s45, %s46
    %p55 = scmp.eq.s32.totalorder %s14, 0
    %p56 = por %p54, %p55
    %p57 = scmp.ne.s32.totalorder %s45, %s46
    %p58 = scmp.eq.s32.totalorder %s15, 3
    %p59 = por %p57, %p58
    %p61 = scmp.ne.s32.totalorder %s46, %s60
    %p62 = scmp.eq.s32.totalorder %s15, 0
    %p63 = por %p61, %p62
    %s65 = sadd.s32 %s64, 1
    %p68 = scmp.eq.s32.totalorder %s9, 3
    %p69 = scmp.ne.s32.totalorder %s64, %s66
    %p70 = scmp.eq.s32.totalorder %s9, 0
    %p71 = por %p69, %p70
    %p72 = scmp.ne.s32.totalorder %s64, %s66
    %p73 = scmp.eq.s32.totalorder %s14, 3
    %p74 = por %p72, %p73
    %p75 = scmp.ne.s32.totalorder %s66, %s67
    %p76 = scmp.eq.s32.totalorder %s14, 0
    %p77 = por %p75, %p76
    %p78 = scmp.ne.s32.totalorder %s66, %s67
    %p79 = scmp.eq.s32.totalorder %s15, 3
    %p80 = por %p78, %p79
    %p82 = scmp.ne.s32.totalorder %s67, %s81
    %p83 = scmp.eq.s32.totalorder %s15, 0
    %p84 = por %p82, %p83
    %s85 = ssub.s32 %s9, %s16
    %p86 = scmp.eq.s32.totalorder %s85, 0
    %s88 = sadd.s32 %s87, 1
    %s89 = scalar_select %p86, %s87, %s88
    %p92 = pneg %p86
    %p93 = scmp.eq.s32.totalorder %s9, 3
    %p94 = por %p92, %p93
    %p95 = scmp.ne.s32.totalorder %s87, %s90
    %p96 = scmp.eq.s32.totalorder %s9, 0
    %p97 = por %p95, %p96
    %p98 = scmp.ne.s32.totalorder %s87, %s90
    %p99 = scmp.eq.s32.totalorder %s14, 3
    %p100 = por %p98, %p99
    %p101 = scmp.ne.s32.totalorder %s90, %s91
    %p102 = scmp.eq.s32.totalorder %s14, 0
    %p103 = por %p101, %p102
    %p104 = scmp.ne.s32.totalorder %s90, %s91
    %p105 = scmp.eq.s32.totalorder %s15, 3
    %p106 = por %p104, %p105
    %p108 = scmp.ne.s32.totalorder %s91, %s107
    %p109 = scmp.eq.s32.totalorder %s15, 0
    %p110 = por %p108, %p109
    %p111 = scmp.le.s32.totalorder 1, %s9
    %p112 = scmp.lt.s32.totalorder %s9, 5
    %p113 = pnand %p111, %p112
    %p114 = pneg %p113
    // Predicated region
    $region9: #{_lambda_.17} parent=5 // pred_check
      _
    $region10: #{_lambda_.17} parent=5 // pred_check_branch
      %116 = sbr.rel (%p113) target = $region12
    $region11: #{_lambda_.17} parent=5 // pred_region
      %s117 = ssub.s32 %s9, 1
      // Predicated region
      $region13: #{_lambda_.17} parent=11 // pred_check
        %p118 = pneg %p56
      $region14: #{_lambda_.17} parent=11 // pred_check_branch
        %120 = sbr.rel (%p118) target = $region16
      $region15: #{_lambda_.17} parent=11 // pred_region
        _
      $region16: #{_lambda_.17} parent=11 // pred_fallthru
        _
      // Predicated region
      $region17: #{_lambda_.17} parent=11 // pred_check
        %p121 = pneg %p77
      $region18: #{_lambda_.17} parent=11 // pred_check_branch
        %123 = sbr.rel (%p121) target = $region20
      $region19: #{_lambda_.17} parent=11 // pred_region
        _
      $region20: #{_lambda_.17} parent=11 // pred_fallthru
        _
    $region12: #{_lambda_.17} parent=5 // pred_fallthru
      _
    %p124 = scmp.lt.s32.totalorder %s9, 4
    // Predicated region
    $region21: #{_lambda_.17} parent=5 // pred_check
      %p125 = pneg %p124
    $region22: #{_lambda_.17} parent=5 // pred_check_branch
      %127 = sbr.rel (%p125) target = $region24
    $region23: #{_lambda_.17} parent=5 // pred_region
      // Predicated region
      $region25: #{_lambda_.17} parent=23 // pred_check
        %p128 = pneg %p29
      $region26: #{_lambda_.17} parent=23 // pred_check_branch
        %130 = sbr.rel (%p128) target = $region28
      $region27: #{_lambda_.17} parent=23 // pred_region
        %s131 = smul.u32 64, %s9
        %p132 = scmp.lt.s32.totalorder %s131, 255
        %s133 = scalar_select %p132, %s131, 255
        %s134 = smul.addr %s133, 2
        %s135 = smul.addr %s134, 4
        %s136 = scalar_lea.vmem %s0, %s135
        %s137 = smul.u32 64, %s9
      $region28: #{_lambda_.17} parent=23 // pred_fallthru
        _
    $region24: #{_lambda_.17} parent=5 // pred_fallthru
      _
    %p138 = scmp.le.s32.totalorder 1, %s9
    %p139 = scmp.lt.s32.totalorder %s9, 5
    %p140 = pnand %p138, %p139
    %p141 = pneg %p140
    // Predicated region
    $region29: #{_lambda_.17} parent=5 // pred_check
      _
    $region30: #{_lambda_.17} parent=5 // pred_check_branch
      %143 = sbr.rel (%p140) target = $region32
    $region31: #{_lambda_.17} parent=5 // pred_region
      %s144 = ssub.s32 %s9, 1
      %s145 = smul.u32 64, %s14
      %p146 = scmp.lt.s32.totalorder %s145, 255
      %s147 = scalar_select %p146, %s145, 255
      %s148 = smul.addr %s147, 2
      %s149 = smul.addr %s148, 4
      %s150 = scalar_lea.vmem %s0, %s149
      %p151 = pneg %p35
      %p152 = pneg %p32
      %p153 = pneg %p56
      %p154 = pneg %p53
      %p155 = pneg %p77
      %p156 = pneg %p74
      %p157 = pneg %p103
      %p158 = pneg %p100
      %s159 = smul.u32 64, %s14
      %p160 = scmp.lt.s32.totalorder %s159, 255
      %s161 = scalar_select %p160, %s159, 255
      %s162 = smul.addr %s161, 8
      %s163 = scalar_lea.vmem %s3, %s162
      %s164 = smul.u32 64, %s14
      %p165 = scmp.lt.s32.totalorder %s164, 255
      %s166 = scalar_select %p165, %s164, 255
      %s167 = smul.addr %s166, 2
      %s168 = smul.addr %s167, 4
      %s169 = scalar_lea.vmem %s0, %s168
      %s170 = smul.u32 64, %s14
      %s171 = smul.u32 64, %s14
      %p172 = scmp.lt.s32.totalorder %s171, 255
      %s173 = scalar_select %p172, %s171, 255
      %s174 = smul.addr %s173, 8
      %s175 = scalar_lea.vmem %s3, %s174
      %s176 = smul.u32 64, %s14
      %v178 = vld [vmem:[%s169] sm:$0xff]
      %v179 = vld [vmem:[%s169 + $0x8] sm:$0xff]
      %v180 = vld [vmem:[%s169 + $0x10] sm:$0xff]
      %v181 = vld [vmem:[%s169 + $0x18] sm:$0xff]
      %v182 = vld [vmem:[%s169 + $0x20] sm:$0xff]
      %v183 = vld [vmem:[%s169 + $0x28] sm:$0xff]
      %v184 = vld [vmem:[%s169 + $0x30] sm:$0xff]
      %v185 = vld [vmem:[%s169 + $0x38] sm:$0xff]
      %v186 = vld [vmem:[%s169 + $0x40] sm:$0xff]
      %v187 = vld [vmem:[%s169 + $0x48] sm:$0xff]
      %v188 = vld [vmem:[%s169 + $0x50] sm:$0xff]
      %v189 = vld [vmem:[%s169 + $0x58] sm:$0xff]
      %v190 = vld [vmem:[%s169 + $0x60] sm:$0xff]
      %v191 = vld [vmem:[%s169 + $0x68] sm:$0xff]
      %v192 = vld [vmem:[%s169 + $0x70] sm:$0xff]
      %v193 = vld [vmem:[%s169 + $0x78] sm:$0xff]
      %v194 = vld [vmem:[%s169 + $0x80] sm:$0xff]
      %v195 = vld [vmem:[%s169 + $0x88] sm:$0xff]
      %v196 = vld [vmem:[%s169 + $0x90] sm:$0xff]
      %v197 = vld [vmem:[%s169 + $0x98] sm:$0xff]
      %v198 = vld [vmem:[%s169 + $0xa0] sm:$0xff]
      %v199 = vld [vmem:[%s169 + $0xa8] sm:$0xff]
      %v200 = vld [vmem:[%s169 + $0xb0] sm:$0xff]
      %v201 = vld [vmem:[%s169 + $0xb8] sm:$0xff]
      %v202 = vld [vmem:[%s169 + $0xc0] sm:$0xff]
      %v203 = vld [vmem:[%s169 + $0xc8] sm:$0xff]
      %v204 = vld [vmem:[%s169 + $0xd0] sm:$0xff]
      %v205 = vld [vmem:[%s169 + $0xd8] sm:$0xff]
      %v206 = vld [vmem:[%s169 + $0xe0] sm:$0xff]
      %v207 = vld [vmem:[%s169 + $0xe8] sm:$0xff]
      %v208 = vld [vmem:[%s169 + $0xf0] sm:$0xff]
      %v209 = vld [vmem:[%s169 + $0xf8] sm:$0xff]
      %v210 = vld [vmem:[%s169 + $0x100] sm:$0xff]
      %v211 = vld [vmem:[%s169 + $0x108] sm:$0xff]
      %v212 = vld [vmem:[%s169 + $0x110] sm:$0xff]
      %v213 = vld [vmem:[%s169 + $0x118] sm:$0xff]
      %v214 = vld [vmem:[%s169 + $0x120] sm:$0xff]
      %v215 = vld [vmem:[%s169 + $0x128] sm:$0xff]
      %v216 = vld [vmem:[%s169 + $0x130] sm:$0xff]
      %v217 = vld [vmem:[%s169 + $0x138] sm:$0xff]
      %v218 = vld [vmem:[%s169 + $0x140] sm:$0xff]
      %v219 = vld [vmem:[%s169 + $0x148] sm:$0xff]
      %v220 = vld [vmem:[%s169 + $0x150] sm:$0xff]
      %v221 = vld [vmem:[%s169 + $0x158] sm:$0xff]
      %v222 = vld [vmem:[%s169 + $0x160] sm:$0xff]
      %v223 = vld [vmem:[%s169 + $0x168] sm:$0xff]
      %v224 = vld [vmem:[%s169 + $0x170] sm:$0xff]
      %v225 = vld [vmem:[%s169 + $0x178] sm:$0xff]
      %v226 = vld [vmem:[%s169 + $0x180] sm:$0xff]
      %v227 = vld [vmem:[%s169 + $0x188] sm:$0xff]
      %v228 = vld [vmem:[%s169 + $0x190] sm:$0xff]
      %v229 = vld [vmem:[%s169 + $0x198] sm:$0xff]
      %v230 = vld [vmem:[%s169 + $0x1a0] sm:$0xff]
      %v231 = vld [vmem:[%s169 + $0x1a8] sm:$0xff]
      %v232 = vld [vmem:[%s169 + $0x1b0] sm:$0xff]
      %v233 = vld [vmem:[%s169 + $0x1b8] sm:$0xff]
      %v234 = vld [vmem:[%s169 + $0x1c0] sm:$0xff]
      %v235 = vld [vmem:[%s169 + $0x1c8] sm:$0xff]
      %v236 = vld [vmem:[%s169 + $0x1d0] sm:$0xff]
      %v237 = vld [vmem:[%s169 + $0x1d8] sm:$0xff]
      %v238 = vld [vmem:[%s169 + $0x1e0] sm:$0xff]
      %v239 = vld [vmem:[%s169 + $0x1e8] sm:$0xff]
      %v240 = vld [vmem:[%s169 + $0x1f0] sm:$0xff]
      %v241 = vld [vmem:[%s169 + $0x1f8] sm:$0xff]
      %v242 = vld [vmem:[%s1] sm:$0xf]
      %v243 = vld [vmem:[%s1 + $0x4] sm:$0xf]
      %v244 = vld [vmem:[%s1 + $0x8] sm:$0xf]
      %v245 = vld [vmem:[%s1 + $0xc] sm:$0xf]
      %v246 = vld [vmem:[%s1 + $0x10] sm:$0xf]
      %v247 = vld [vmem:[%s1 + $0x14] sm:$0xf]
      %v248 = vld [vmem:[%s1 + $0x18] sm:$0xf]
      %v249 = vld [vmem:[%s1 + $0x1c] sm:$0xf]
      %v250 = vld [vmem:[%s1 + $0x20] sm:$0xf]
      %v251 = vld [vmem:[%s1 + $0x24] sm:$0xf]
      %v252 = vld [vmem:[%s1 + $0x28] sm:$0xf]
      %v253 = vld [vmem:[%s1 + $0x2c] sm:$0xf]
      %v254 = vld [vmem:[%s1 + $0x30] sm:$0xf]
      %v255 = vld [vmem:[%s1 + $0x34] sm:$0xf]
      %v256 = vld [vmem:[%s1 + $0x38] sm:$0xf]
      %v257 = vld [vmem:[%s1 + $0x3c] sm:$0xf]
      %v258 = vld [vmem:[%s1 + $0x40] sm:$0xf]
      %v259 = vld [vmem:[%s1 + $0x44] sm:$0xf]
      %v260 = vld [vmem:[%s2] sm:$0x1]
      %v262 = vlaneseq
      %v263 = vshrl.u32 %v262, 7
      %v264 = vsub.s32 0, %v263
      %v265 = vrot.slane %v260, %v264
      %v331 = vunpack.c.l.b16 %v178
      %v332 = vunpack.c.h.b16 %v178
      %v333 = vunpack.c.l.b16 %v179
      %v334 = vunpack.c.h.b16 %v179
      %v335 = vunpack.c.l.b16 %v180
      %v336 = vunpack.c.h.b16 %v180
      %v337 = vunpack.c.l.b16 %v181
      %v338 = vunpack.c.h.b16 %v181
      %v339 = vunpack.c.l.b16 %v182
      %v340 = vunpack.c.h.b16 %v182
      %v341 = vunpack.c.l.b16 %v183
      %v342 = vunpack.c.h.b16 %v183
      %v343 = vunpack.c.l.b16 %v184
      %v344 = vunpack.c.h.b16 %v184
      %v345 = vunpack.c.l.b16 %v185
      %v346 = vunpack.c.h.b16 %v185
      %v347 = vunpack.c.l.b16 %v186
      %v348 = vunpack.c.h.b16 %v186
      %v349 = vunpack.c.l.b16 %v187
      %v350 = vunpack.c.h.b16 %v187
      %v351 = vunpack.c.l.b16 %v188
      %v352 = vunpack.c.h.b16 %v188
      %v353 = vunpack.c.l.b16 %v189
      %v354 = vunpack.c.h.b16 %v189
      %v355 = vunpack.c.l.b16 %v190
      %v356 = vunpack.c.h.b16 %v190
      %v357 = vunpack.c.l.b16 %v191
      %v358 = vunpack.c.h.b16 %v191
      %v359 = vunpack.c.l.b16 %v192
      %v360 = vunpack.c.h.b16 %v192
      %v361 = vunpack.c.l.b16 %v193
      %v362 = vunpack.c.h.b16 %v193
      %v363 = vunpack.c.l.b16 %v194
      %v364 = vunpack.c.h.b16 %v194
      %v365 = vunpack.c.l.b16 %v195
      %v366 = vunpack.c.h.b16 %v195
      %v367 = vunpack.c.l.b16 %v196
      %v368 = vunpack.c.h.b16 %v196
      %v369 = vunpack.c.l.b16 %v197
      %v370 = vunpack.c.h.b16 %v197
      %v371 = vunpack.c.l.b16 %v198
      %v372 = vunpack.c.h.b16 %v198
      %v373 = vunpack.c.l.b16 %v199
      %v374 = vunpack.c.h.b16 %v199
      %v375 = vunpack.c.l.b16 %v200
      %v376 = vunpack.c.h.b16 %v200
      %v377 = vunpack.c.l.b16 %v201
      %v378 = vunpack.c.h.b16 %v201
      %v379 = vunpack.c.l.b16 %v202
      %v380 = vunpack.c.h.b16 %v202
      %v381 = vunpack.c.l.b16 %v203
      %v382 = vunpack.c.h.b16 %v203
      %v383 = vunpack.c.l.b16 %v204
      %v384 = vunpack.c.h.b16 %v204
      %v385 = vunpack.c.l.b16 %v205
      %v386 = vunpack.c.h.b16 %v205
      %v387 = vunpack.c.l.b16 %v206
      %v388 = vunpack.c.h.b16 %v206
      %v389 = vunpack.c.l.b16 %v207
      %v390 = vunpack.c.h.b16 %v207
      %v391 = vunpack.c.l.b16 %v208
      %v392 = vunpack.c.h.b16 %v208
      %v393 = vunpack.c.l.b16 %v209
      %v394 = vunpack.c.h.b16 %v209
      %v395 = vunpack.c.l.b16 %v210
      %v396 = vunpack.c.h.b16 %v210
      %v397 = vunpack.c.l.b16 %v211
      %v398 = vunpack.c.h.b16 %v211
      %v399 = vunpack.c.l.b16 %v212
      %v400 = vunpack.c.h.b16 %v212
      %v401 = vunpack.c.l.b16 %v213
      %v402 = vunpack.c.h.b16 %v213
      %v403 = vunpack.c.l.b16 %v214
      %v404 = vunpack.c.h.b16 %v214
      %v405 = vunpack.c.l.b16 %v215
      %v406 = vunpack.c.h.b16 %v215
      %v407 = vunpack.c.l.b16 %v216
      %v408 = vunpack.c.h.b16 %v216
      %v409 = vunpack.c.l.b16 %v217
      %v410 = vunpack.c.h.b16 %v217
      %v411 = vunpack.c.l.b16 %v218
      %v412 = vunpack.c.h.b16 %v218
      %v413 = vunpack.c.l.b16 %v219
      %v414 = vunpack.c.h.b16 %v219
      %v415 = vunpack.c.l.b16 %v220
      %v416 = vunpack.c.h.b16 %v220
      %v417 = vunpack.c.l.b16 %v221
      %v418 = vunpack.c.h.b16 %v221
      %v419 = vunpack.c.l.b16 %v222
      %v420 = vunpack.c.h.b16 %v222
      %v421 = vunpack.c.l.b16 %v223
      %v422 = vunpack.c.h.b16 %v223
      %v423 = vunpack.c.l.b16 %v224
      %v424 = vunpack.c.h.b16 %v224
      %v425 = vunpack.c.l.b16 %v225
      %v426 = vunpack.c.h.b16 %v225
      %v427 = vunpack.c.l.b16 %v226
      %v428 = vunpack.c.h.b16 %v226
      %v429 = vunpack.c.l.b16 %v227
      %v430 = vunpack.c.h.b16 %v227
      %v431 = vunpack.c.l.b16 %v228
      %v432 = vunpack.c.h.b16 %v228
      %v433 = vunpack.c.l.b16 %v229
      %v434 = vunpack.c.h.b16 %v229
      %v435 = vunpack.c.l.b16 %v230
      %v436 = vunpack.c.h.b16 %v230
      %v437 = vunpack.c.l.b16 %v231
      %v438 = vunpack.c.h.b16 %v231
      %v439 = vunpack.c.l.b16 %v232
      %v440 = vunpack.c.h.b16 %v232
      %v441 = vunpack.c.l.b16 %v233
      %v442 = vunpack.c.h.b16 %v233
      %v443 = vunpack.c.l.b16 %v234
      %v444 = vunpack.c.h.b16 %v234
      %v445 = vunpack.c.l.b16 %v235
      %v446 = vunpack.c.h.b16 %v235
      %v447 = vunpack.c.l.b16 %v236
      %v448 = vunpack.c.h.b16 %v236
      %v449 = vunpack.c.l.b16 %v237
      %v450 = vunpack.c.h.b16 %v237
      %v451 = vunpack.c.l.b16 %v238
      %v452 = vunpack.c.h.b16 %v238
      %v453 = vunpack.c.l.b16 %v239
      %v454 = vunpack.c.h.b16 %v239
      %v455 = vunpack.c.l.b16 %v240
      %v456 = vunpack.c.h.b16 %v240
      %v457 = vunpack.c.l.b16 %v241
      %v458 = vunpack.c.h.b16 %v241
      %v459 = vpack.c.b16 %v333, %v331
      %v460 = vpack.c.b16 %v334, %v332
      %v461 = vpack.c.b16 %v337, %v335
      %v462 = vpack.c.b16 %v338, %v336
      %v463 = vpack.c.b16 %v341, %v339
      %v464 = vpack.c.b16 %v342, %v340
      %v465 = vpack.c.b16 %v345, %v343
      %v466 = vpack.c.b16 %v346, %v344
      %v467 = vpack.c.b16 %v349, %v347
      %v468 = vpack.c.b16 %v350, %v348
      %v469 = vpack.c.b16 %v353, %v351
      %v470 = vpack.c.b16 %v354, %v352
      %v471 = vpack.c.b16 %v357, %v355
      %v472 = vpack.c.b16 %v358, %v356
      %v473 = vpack.c.b16 %v361, %v359
      %v474 = vpack.c.b16 %v362, %v360
      %v475 = vpack.c.b16 %v365, %v363
      %v476 = vpack.c.b16 %v366, %v364
      %v477 = vpack.c.b16 %v369, %v367
      %v478 = vpack.c.b16 %v370, %v368
      %v479 = vpack.c.b16 %v373, %v371
      %v480 = vpack.c.b16 %v374, %v372
      %v481 = vpack.c.b16 %v377, %v375
      %v482 = vpack.c.b16 %v378, %v376
      %v483 = vpack.c.b16 %v381, %v379
      %v484 = vpack.c.b16 %v382, %v380
      %v485 = vpack.c.b16 %v385, %v383
      %v486 = vpack.c.b16 %v386, %v384
      %v487 = vpack.c.b16 %v389, %v387
      %v488 = vpack.c.b16 %v390, %v388
      %v489 = vpack.c.b16 %v393, %v391
      %v490 = vpack.c.b16 %v394, %v392
      %v491 = vpack.c.b16 %v397, %v395
      %v492 = vpack.c.b16 %v398, %v396
      %v493 = vpack.c.b16 %v401, %v399
      %v494 = vpack.c.b16 %v402, %v400
      %v495 = vpack.c.b16 %v405, %v403
      %v496 = vpack.c.b16 %v406, %v404
      %v497 = vpack.c.b16 %v409, %v407
      %v498 = vpack.c.b16 %v410, %v408
      %v499 = vpack.c.b16 %v413, %v411
      %v500 = vpack.c.b16 %v414, %v412
      %v501 = vpack.c.b16 %v417, %v415
      %v502 = vpack.c.b16 %v418, %v416
      %v503 = vpack.c.b16 %v421, %v419
      %v504 = vpack.c.b16 %v422, %v420
      %v505 = vpack.c.b16 %v425, %v423
      %v506 = vpack.c.b16 %v426, %v424
      %v507 = vpack.c.b16 %v429, %v427
      %v508 = vpack.c.b16 %v430, %v428
      %v509 = vpack.c.b16 %v433, %v431
      %v510 = vpack.c.b16 %v434, %v432
      %v511 = vpack.c.b16 %v437, %v435
      %v512 = vpack.c.b16 %v438, %v436
      %v513 = vpack.c.b16 %v441, %v439
      %v514 = vpack.c.b16 %v442, %v440
      %v515 = vpack.c.b16 %v445, %v443
      %v516 = vpack.c.b16 %v446, %v444
      %v517 = vpack.c.b16 %v449, %v447
      %v518 = vpack.c.b16 %v450, %v448
      %v519 = vpack.c.b16 %v453, %v451
      %v520 = vpack.c.b16 %v454, %v452
      %v521 = vpack.c.b16 %v457, %v455
      %v522 = vpack.c.b16 %v458, %v456
      %v573 = vunpack.c.l.b16 %v242
      %v574 = vunpack.c.l.b16 %v243
      %v575 = vunpack.c.l.b16 %v244
      %v576 = vunpack.c.l.b16 %v245
      %v577 = vunpack.c.l.b16 %v246
      %v578 = vunpack.c.l.b16 %v247
      %v579 = vunpack.c.l.b16 %v248
      %v580 = vunpack.c.l.b16 %v249
      %v581 = vunpack.c.l.b16 %v250
      %v582 = vunpack.c.l.b16 %v251
      %v583 = vunpack.c.l.b16 %v252
      %v584 = vunpack.c.l.b16 %v253
      %v585 = vunpack.c.l.b16 %v254
      %v586 = vunpack.c.l.b16 %v255
      %v587 = vunpack.c.l.b16 %v256
      %v588 = vunpack.c.l.b16 %v257
      %v589 = vunpack.c.l.b16 %v258
      %v590 = vunpack.c.l.b16 %v259
      %v591 = vpack.c.b16 %v574, %v573
      %v592 = vpack.c.b16 %v576, %v575
      %v593 = vpack.c.b16 %v578, %v577
      %v594 = vpack.c.b16 %v580, %v579
      %v595 = vpack.c.b16 %v582, %v581
      %v596 = vpack.c.b16 %v584, %v583
      %v597 = vpack.c.b16 %v586, %v585
      %v598 = vpack.c.b16 %v588, %v587
      %v599 = vpack.c.b16 %v590, %v589
      %vm609 = vcmask 130048
      %v611 = vsel %vm609, %v460, 0
      %v614 = vsel %vm609, %v462, 0
      %v617 = vsel %vm609, %v464, 0
      %v620 = vsel %vm609, %v466, 0
      %v623 = vsel %vm609, %v468, 0
      %v626 = vsel %vm609, %v470, 0
      %v629 = vsel %vm609, %v472, 0
      %v632 = vsel %vm609, %v474, 0
      %v635 = vsel %vm609, %v476, 0
      %v638 = vsel %vm609, %v478, 0
      %v641 = vsel %vm609, %v480, 0
      %v644 = vsel %vm609, %v482, 0
      %v647 = vsel %vm609, %v484, 0
      %v650 = vsel %vm609, %v486, 0
      %v653 = vsel %vm609, %v488, 0
      %v656 = vsel %vm609, %v490, 0
      %v659 = vsel %vm609, %v492, 0
      %v662 = vsel %vm609, %v494, 0
      %v665 = vsel %vm609, %v496, 0
      %v668 = vsel %vm609, %v498, 0
      %v671 = vsel %vm609, %v500, 0
      %v674 = vsel %vm609, %v502, 0
      %v677 = vsel %vm609, %v504, 0
      %v680 = vsel %vm609, %v506, 0
      %v683 = vsel %vm609, %v508, 0
      %v686 = vsel %vm609, %v510, 0
      %v689 = vsel %vm609, %v512, 0
      %v692 = vsel %vm609, %v514, 0
      %v695 = vsel %vm609, %v516, 0
      %v698 = vsel %vm609, %v518, 0
      %v701 = vsel %vm609, %v520, 0
      %v704 = vsel %vm609, %v522, 0
      %706 = vmatprep.subr.bf16.mxu0 0
      %707 = vmatpush1.bf16.msra.mxu0 %v591
      %708 = vmatprep.subr.bf16.mxu0 0
      %709 = vmatpush1.bf16.msra.mxu0 %v592
      %710 = vmatprep.subr.bf16.mxu0 0
      %711 = vmatpush1.bf16.msra.mxu0 %v593
      %712 = vmatprep.subr.bf16.mxu0 0
      %713 = vmatpush1.bf16.msra.mxu0 %v594
      %714 = vmatprep.subr.bf16.mxu0 0
      %715 = vmatpush1.bf16.msra.mxu0 %v595
      %716 = vmatprep.subr.bf16.mxu0 0
      %717 = vmatpush1.bf16.msra.mxu0 %v596
      %718 = vmatprep.subr.bf16.mxu0 0
      %719 = vmatpush1.bf16.msra.mxu0 %v597
      %720 = vmatprep.subr.bf16.mxu0 0
      %721 = vmatpush1.bf16.msra.mxu0 %v598
      %722 = vmatprep.subr.bf16.mxu0 0
      %723 = vmatpush1.bf16.msra.mxu0 %v599
      %724 = vmatprep.subr.bf16.mxu0 0
      %725 = vmatpush1.bf16.msra.mxu0 0
      %726 = vmatprep.subr.bf16.mxu0 0
      %727 = vmatpush1.bf16.msra.mxu0 0
      %728 = vmatprep.subr.bf16.mxu0 0
      %729 = vmatpush1.bf16.msra.mxu0 0
      %730 = vmatprep.subr.bf16.mxu0 0
      %731 = vmatpush1.bf16.msra.mxu0 0
      %732 = vmatprep.subr.bf16.mxu0 0
      %733 = vmatpush1.bf16.msra.mxu0 0
      %734 = vmatprep.subr.bf16.mxu0 0
      %735 = vmatpush1.bf16.msra.mxu0 0
      %736 = vmatprep.subr.bf16.mxu0 0
      %737 = vmatpush1.bf16.msra.mxu0 0
      %738 = vmatprep.mubr.bf16.mxu0 %v611
      %739 = vmatmul.mubr.bf16.gmra.mrb[0].mxu0 %v459
      %v740 = vpop.f32.mrb[0].mxu0
      %v741 = vadd.f32 %v265, %v740
      %v742 = vpop.f32.mrb[0].mxu0
      %v743 = vpop.f32.mrb[0].mxu0
      %v744 = vadd.f32 %v265, %v743
      %v745 = vpop.f32.mrb[0].mxu0
      %746 = vmatprep.mubr.bf16.mxu0 %v614
      %747 = vmatmul.mubr.bf16.gmra.mrb[0].mxu0 %v461
      %v748 = vpop.f32.mrb[0].mxu0
      %v749 = vadd.f32 %v265, %v748
      %v750 = vpop.f32.mrb[0].mxu0
      %v751 = vpop.f32.mrb[0].mxu0
      %v752 = vadd.f32 %v265, %v751
      %v753 = vpop.f32.mrb[0].mxu0
      %754 = vmatprep.mubr.bf16.mxu0 %v617
      %755 = vmatmul.mubr.bf16.gmra.mrb[0].mxu0 %v463
      %v756 = vpop.f32.mrb[0].mxu0
      %v757 = vadd.f32 %v265, %v756
      %v758 = vpop.f32.mrb[0].mxu0
      %v759 = vpop.f32.mrb[0].mxu0
      %v760 = vadd.f32 %v265, %v759
      %v761 = vpop.f32.mrb[0].mxu0
      %762 = vmatprep.mubr.bf16.mxu0 %v620
      %763 = vmatmul.mubr.bf16.gmra.mrb[0].mxu0 %v465
      %v764 = vpop.f32.mrb[0].mxu0
      %v765 = vadd.f32 %v265, %v764
      %v766 = vpop.f32.mrb[0].mxu0
      %v767 = vpop.f32.mrb[0].mxu0
      %v768 = vadd.f32 %v265, %v767
      %v769 = vpop.f32.mrb[0].mxu0
      %770 = vmatprep.mubr.bf16.mxu0 %v623
      %771 = vmatmul.mubr.bf16.gmra.mrb[0].mxu0 %v467
      %v772 = vpop.f32.mrb[0].mxu0
      %v773 = vadd.f32 %v265, %v772
      %v774 = vpop.f32.mrb[0].mxu0
      %v775 = vpop.f32.mrb[0].mxu0
      %v776 = vadd.f32 %v265, %v775
      %v777 = vpop.f32.mrb[0].mxu0
      %778 = vmatprep.mubr.bf16.mxu0 %v626
      %779 = vmatmul.mubr.bf16.gmra.mrb[0].mxu0 %v469
      %v780 = vpop.f32.mrb[0].mxu0
      %v781 = vadd.f32 %v265, %v780
      %v782 = vpop.f32.mrb[0].mxu0
      %v783 = vpop.f32.mrb[0].mxu0
      %v784 = vadd.f32 %v265, %v783
      %v785 = vpop.f32.mrb[0].mxu0
      %786 = vmatprep.mubr.bf16.mxu0 %v629
      %787 = vmatmul.mubr.bf16.gmra.mrb[0].mxu0 %v471
      %v788 = vpop.f32.mrb[0].mxu0
      %v789 = vadd.f32 %v265, %v788
      %v790 = vpop.f32.mrb[0].mxu0
      %v791 = vpop.f32.mrb[0].mxu0
      %v792 = vadd.f32 %v265, %v791
      %v793 = vpop.f32.mrb[0].mxu0
      %794 = vmatprep.mubr.bf16.mxu0 %v632
      %795 = vmatmul.mubr.bf16.gmra.mrb[0].mxu0 %v473
      %v796 = vpop.f32.mrb[0].mxu0
      %v797 = vadd.f32 %v265, %v796
      %v798 = vpop.f32.mrb[0].mxu0
      %v799 = vpop.f32.mrb[0].mxu0
      %v800 = vadd.f32 %v265, %v799
      %v801 = vpop.f32.mrb[0].mxu0
      %802 = vmatprep.mubr.bf16.mxu0 %v635
      %803 = vmatmul.mubr.bf16.gmra.mrb[0].mxu0 %v475
      %v804 = vpop.f32.mrb[0].mxu0
      %v805 = vadd.f32 %v265, %v804
      %v806 = vpop.f32.mrb[0].mxu0
      %v807 = vpop.f32.mrb[0].mxu0
      %v808 = vadd.f32 %v265, %v807
      %v809 = vpop.f32.mrb[0].mxu0
      %810 = vmatprep.mubr.bf16.mxu0 %v638
      %811 = vmatmul.mubr.bf16.gmra.mrb[0].mxu0 %v477
      %v812 = vpop.f32.mrb[0].mxu0
      %v813 = vadd.f32 %v265, %v812
      %v814 = vpop.f32.mrb[0].mxu0
      %v815 = vpop.f32.mrb[0].mxu0
      %v816 = vadd.f32 %v265, %v815
      %v817 = vpop.f32.mrb[0].mxu0
      %818 = vmatprep.mubr.bf16.mxu0 %v641
      %819 = vmatmul.mubr.bf16.gmra.mrb[0].mxu0 %v479
      %v820 = vpop.f32.mrb[0].mxu0
      %v821 = vadd.f32 %v265, %v820
      %v822 = vpop.f32.mrb[0].mxu0
      %v823 = vpop.f32.mrb[0].mxu0
      %v824 = vadd.f32 %v265, %v823
      %v825 = vpop.f32.mrb[0].mxu0
      %826 = vmatprep.mubr.bf16.mxu0 %v644
      %827 = vmatmul.mubr.bf16.gmra.mrb[0].mxu0 %v481
      %v828 = vpop.f32.mrb[0].mxu0
      %v829 = vadd.f32 %v265, %v828
      %v830 = vpop.f32.mrb[0].mxu0
      %v831 = vpop.f32.mrb[0].mxu0
      %v832 = vadd.f32 %v265, %v831
      %v833 = vpop.f32.mrb[0].mxu0
      %834 = vmatprep.mubr.bf16.mxu0 %v647
      %835 = vmatmul.mubr.bf16.gmra.mrb[0].mxu0 %v483
      %v836 = vpop.f32.mrb[0].mxu0
      %v837 = vadd.f32 %v265, %v836
      %v838 = vpop.f32.mrb[0].mxu0
      %v839 = vpop.f32.mrb[0].mxu0
      %v840 = vadd.f32 %v265, %v839
      %v841 = vpop.f32.mrb[0].mxu0
      %842 = vmatprep.mubr.bf16.mxu0 %v650
      %843 = vmatmul.mubr.bf16.gmra.mrb[0].mxu0 %v485
      %v844 = vpop.f32.mrb[0].mxu0
      %v845 = vadd.f32 %v265, %v844
      %v846 = vpop.f32.mrb[0].mxu0
      %v847 = vpop.f32.mrb[0].mxu0
      %v848 = vadd.f32 %v265, %v847
      %v849 = vpop.f32.mrb[0].mxu0
      %850 = vmatprep.mubr.bf16.mxu0 %v653
      %851 = vmatmul.mubr.bf16.gmra.mrb[0].mxu0 %v487
      %v852 = vpop.f32.mrb[0].mxu0
      %v853 = vadd.f32 %v265, %v852
      %v854 = vpop.f32.mrb[0].mxu0
      %v855 = vpop.f32.mrb[0].mxu0
      %v856 = vadd.f32 %v265, %v855
      %v857 = vpop.f32.mrb[0].mxu0
      %858 = vmatprep.mubr.bf16.mxu0 %v656
      %859 = vmatmul.mubr.bf16.gmra.mrb[0].mxu0 %v489
      %v860 = vpop.f32.mrb[0].mxu0
      %v861 = vadd.f32 %v265, %v860
      %v862 = vpop.f32.mrb[0].mxu0
      %v863 = vpop.f32.mrb[0].mxu0
      %v864 = vadd.f32 %v265, %v863
      %v865 = vpop.f32.mrb[0].mxu0
      %866 = vmatprep.mubr.bf16.mxu0 %v659
      %867 = vmatmul.mubr.bf16.gmra.mrb[0].mxu0 %v491
      %v868 = vpop.f32.mrb[0].mxu0
      %v869 = vadd.f32 %v265, %v868
      %v870 = vpop.f32.mrb[0].mxu0
      %v871 = vpop.f32.mrb[0].mxu0
      %v872 = vadd.f32 %v265, %v871
      %v873 = vpop.f32.mrb[0].mxu0
      %874 = vmatprep.mubr.bf16.mxu0 %v662
      %875 = vmatmul.mubr.bf16.gmra.mrb[0].mxu0 %v493
      %v876 = vpop.f32.mrb[0].mxu0
      %v877 = vadd.f32 %v265, %v876
      %v878 = vpop.f32.mrb[0].mxu0
      %v879 = vpop.f32.mrb[0].mxu0
      %v880 = vadd.f32 %v265, %v879
      %v881 = vpop.f32.mrb[0].mxu0
      %882 = vmatprep.mubr.bf16.mxu0 %v665
      %883 = vmatmul.mubr.bf16.gmra.mrb[0].mxu0 %v495
      %v884 = vpop.f32.mrb[0].mxu0
      %v885 = vadd.f32 %v265, %v884
      %v886 = vpop.f32.mrb[0].mxu0
      %v887 = vpop.f32.mrb[0].mxu0
      %v888 = vadd.f32 %v265, %v887
      %v889 = vpop.f32.mrb[0].mxu0
      %890 = vmatprep.mubr.bf16.mxu0 %v668
      %891 = vmatmul.mubr.bf16.gmra.mrb[0].mxu0 %v497
      %v892 = vpop.f32.mrb[0].mxu0
      %v893 = vadd.f32 %v265, %v892
      %v894 = vpop.f32.mrb[0].mxu0
      %v895 = vpop.f32.mrb[0].mxu0
      %v896 = vadd.f32 %v265, %v895
      %v897 = vpop.f32.mrb[0].mxu0
      %898 = vmatprep.mubr.bf16.mxu0 %v671
      %899 = vmatmul.mubr.bf16.gmra.mrb[0].mxu0 %v499
      %v900 = vpop.f32.mrb[0].mxu0
      %v901 = vadd.f32 %v265, %v900
      %v902 = vpop.f32.mrb[0].mxu0
      %v903 = vpop.f32.mrb[0].mxu0
      %v904 = vadd.f32 %v265, %v903
      %v905 = vpop.f32.mrb[0].mxu0
      %906 = vmatprep.mubr.bf16.mxu0 %v674
      %907 = vmatmul.mubr.bf16.gmra.mrb[0].mxu0 %v501
      %v908 = vpop.f32.mrb[0].mxu0
      %v909 = vadd.f32 %v265, %v908
      %v910 = vpop.f32.mrb[0].mxu0
      %v911 = vpop.f32.mrb[0].mxu0
      %v912 = vadd.f32 %v265, %v911
      %v913 = vpop.f32.mrb[0].mxu0
      %914 = vmatprep.mubr.bf16.mxu0 %v677
      %915 = vmatmul.mubr.bf16.gmra.mrb[0].mxu0 %v503
      %v916 = vpop.f32.mrb[0].mxu0
      %v917 = vadd.f32 %v265, %v916
      %v918 = vpop.f32.mrb[0].mxu0
      %v919 = vpop.f32.mrb[0].mxu0
      %v920 = vadd.f32 %v265, %v919
      %v921 = vpop.f32.mrb[0].mxu0
      %922 = vmatprep.mubr.bf16.mxu0 %v680
      %923 = vmatmul.mubr.bf16.gmra.mrb[0].mxu0 %v505
      %v924 = vpop.f32.mrb[0].mxu0
      %v925 = vadd.f32 %v265, %v924
      %v926 = vpop.f32.mrb[0].mxu0
      %v927 = vpop.f32.mrb[0].mxu0
      %v928 = vadd.f32 %v265, %v927
      %v929 = vpop.f32.mrb[0].mxu0
      %930 = vmatprep.mubr.bf16.mxu0 %v683
      %931 = vmatmul.mubr.bf16.gmra.mrb[0].mxu0 %v507
      %v932 = vpop.f32.mrb[0].mxu0
      %v933 = vadd.f32 %v265, %v932
      %v934 = vpop.f32.mrb[0].mxu0
      %v935 = vpop.f32.mrb[0].mxu0
      %v936 = vadd.f32 %v265, %v935
      %v937 = vpop.f32.mrb[0].mxu0
      %938 = vmatprep.mubr.bf16.mxu0 %v686
      %939 = vmatmul.mubr.bf16.gmra.mrb[0].mxu0 %v509
      %v940 = vpop.f32.mrb[0].mxu0
      %v941 = vadd.f32 %v265, %v940
      %v942 = vpop.f32.mrb[0].mxu0
      %v943 = vpop.f32.mrb[0].mxu0
      %v944 = vadd.f32 %v265, %v943
      %v945 = vpop.f32.mrb[0].mxu0
      %946 = vmatprep.mubr.bf16.mxu0 %v689
      %947 = vmatmul.mubr.bf16.gmra.mrb[0].mxu0 %v511
      %v948 = vpop.f32.mrb[0].mxu0
      %v949 = vadd.f32 %v265, %v948
      %v950 = vpop.f32.mrb[0].mxu0
      %v951 = vpop.f32.mrb[0].mxu0
      %v952 = vadd.f32 %v265, %v951
      %v953 = vpop.f32.mrb[0].mxu0
      %954 = vmatprep.mubr.bf16.mxu0 %v692
      %955 = vmatmul.mubr.bf16.gmra.mrb[0].mxu0 %v513
      %v956 = vpop.f32.mrb[0].mxu0
      %v957 = vadd.f32 %v265, %v956
      %v958 = vpop.f32.mrb[0].mxu0
      %v959 = vpop.f32.mrb[0].mxu0
      %v960 = vadd.f32 %v265, %v959
      %v961 = vpop.f32.mrb[0].mxu0
      %962 = vmatprep.mubr.bf16.mxu0 %v695
      %963 = vmatmul.mubr.bf16.gmra.mrb[0].mxu0 %v515
      %v964 = vpop.f32.mrb[0].mxu0
      %v965 = vadd.f32 %v265, %v964
      %v966 = vpop.f32.mrb[0].mxu0
      %v967 = vpop.f32.mrb[0].mxu0
      %v968 = vadd.f32 %v265, %v967
      %v969 = vpop.f32.mrb[0].mxu0
      %970 = vmatprep.mubr.bf16.mxu0 %v698
      %971 = vmatmul.mubr.bf16.gmra.mrb[0].mxu0 %v517
      %v972 = vpop.f32.mrb[0].mxu0
      %v973 = vadd.f32 %v265, %v972
      %v974 = vpop.f32.mrb[0].mxu0
      %v975 = vpop.f32.mrb[0].mxu0
      %v976 = vadd.f32 %v265, %v975
      %v977 = vpop.f32.mrb[0].mxu0
      %978 = vmatprep.mubr.bf16.mxu0 %v701
      %979 = vmatmul.mubr.bf16.gmra.mrb[0].mxu0 %v519
      %v980 = vpop.f32.mrb[0].mxu0
      %v981 = vadd.f32 %v265, %v980
      %v982 = vpop.f32.mrb[0].mxu0
      %v983 = vpop.f32.mrb[0].mxu0
      %v984 = vadd.f32 %v265, %v983
      %v985 = vpop.f32.mrb[0].mxu0
      %986 = vmatprep.mubr.bf16.mxu0 %v704
      %987 = vmatmul.mubr.bf16.gmra.mrb[0].mxu0 %v521
      %v988 = vpop.f32.mrb[0].mxu0
      %v989 = vadd.f32 %v265, %v988
      %v990 = vpop.f32.mrb[0].mxu0
      %v991 = vpop.f32.mrb[0].mxu0
      %v992 = vadd.f32 %v265, %v991
      %v993 = vpop.f32.mrb[0].mxu0
      %994 = vdwg.mxu0
      %v995 = vtanh.pop %v741
      %v996 = vtanh.pop %v744
      %v997 = vtanh.pop %v749
      %v998 = vtanh.pop %v752
      %v999 = vtanh.pop %v757
      %v1000 = vtanh.pop %v760
      %v1001 = vtanh.pop %v765
      %v1002 = vtanh.pop %v768
      %v1003 = vtanh.pop %v773
      %v1004 = vtanh.pop %v776
      %v1005 = vtanh.pop %v781
      %v1006 = vtanh.pop %v784
      %v1007 = vtanh.pop %v789
      %v1008 = vtanh.pop %v792
      %v1009 = vtanh.pop %v797
      %v1010 = vtanh.pop %v800
      %v1011 = vtanh.pop %v805
      %v1012 = vtanh.pop %v808
      %v1013 = vtanh.pop %v813
      %v1014 = vtanh.pop %v816
      %v1015 = vtanh.pop %v821
      %v1016 = vtanh.pop %v824
      %v1017 = vtanh.pop %v829
      %v1018 = vtanh.pop %v832
      %v1019 = vtanh.pop %v837
      %v1020 = vtanh.pop %v840
      %v1021 = vtanh.pop %v845
      %v1022 = vtanh.pop %v848
      %v1023 = vtanh.pop %v853
      %v1024 = vtanh.pop %v856
      %v1025 = vtanh.pop %v861
      %v1026 = vtanh.pop %v864
      %v1027 = vtanh.pop %v869
      %v1028 = vtanh.pop %v872
      %v1029 = vtanh.pop %v877
      %v1030 = vtanh.pop %v880
      %v1031 = vtanh.pop %v885
      %v1032 = vtanh.pop %v888
      %v1033 = vtanh.pop %v893
      %v1034 = vtanh.pop %v896
      %v1035 = vtanh.pop %v901
      %v1036 = vtanh.pop %v904
      %v1037 = vtanh.pop %v909
      %v1038 = vtanh.pop %v912
      %v1039 = vtanh.pop %v917
      %v1040 = vtanh.pop %v920
      %v1041 = vtanh.pop %v925
      %v1042 = vtanh.pop %v928
      %v1043 = vtanh.pop %v933
      %v1044 = vtanh.pop %v936
      %v1045 = vtanh.pop %v941
      %v1046 = vtanh.pop %v944
      %v1047 = vtanh.pop %v949
      %v1048 = vtanh.pop %v952
      %v1049 = vtanh.pop %v957
      %v1050 = vtanh.pop %v960
      %v1051 = vtanh.pop %v965
      %v1052 = vtanh.pop %v968
      %v1053 = vtanh.pop %v973
      %v1054 = vtanh.pop %v976
      %v1055 = vtanh.pop %v981
      %v1056 = vtanh.pop %v984
      %v1057 = vtanh.pop %v989
      %v1058 = vtanh.pop %v992
      %1059 = vst [vmem:[%s175] sm:$0xff] %v995
      %1060 = vst [vmem:[%s175 + $0x8] sm:$0xff] %v996
      %1061 = vst [vmem:[%s175 + $0x10] sm:$0xff] %v997
      %1062 = vst [vmem:[%s175 + $0x18] sm:$0xff] %v998
      %1063 = vst [vmem:[%s175 + $0x20] sm:$0xff] %v999
      %1064 = vst [vmem:[%s175 + $0x28] sm:$0xff] %v1000
      %1065 = vst [vmem:[%s175 + $0x30] sm:$0xff] %v1001
      %1066 = vst [vmem:[%s175 + $0x38] sm:$0xff] %v1002
      %1067 = vst [vmem:[%s175 + $0x40] sm:$0xff] %v1003
      %1068 = vst [vmem:[%s175 + $0x48] sm:$0xff] %v1004
      %1069 = vst [vmem:[%s175 + $0x50] sm:$0xff] %v1005
      %1070 = vst [vmem:[%s175 + $0x58] sm:$0xff] %v1006
      %1071 = vst [vmem:[%s175 + $0x60] sm:$0xff] %v1007
      %1072 = vst [vmem:[%s175 + $0x68] sm:$0xff] %v1008
      %1073 = vst [vmem:[%s175 + $0x70] sm:$0xff] %v1009
      %1074 = vst [vmem:[%s175 + $0x78] sm:$0xff] %v1010
      %1075 = vst [vmem:[%s175 + $0x80] sm:$0xff] %v1011
      %1076 = vst [vmem:[%s175 + $0x88] sm:$0xff] %v1012
      %1077 = vst [vmem:[%s175 + $0x90] sm:$0xff] %v1013
      %1078 = vst [vmem:[%s175 + $0x98] sm:$0xff] %v1014
      %1079 = vst [vmem:[%s175 + $0xa0] sm:$0xff] %v1015
      %1080 = vst [vmem:[%s175 + $0xa8] sm:$0xff] %v1016
      %1081 = vst [vmem:[%s175 + $0xb0] sm:$0xff] %v1017
      %1082 = vst [vmem:[%s175 + $0xb8] sm:$0xff] %v1018
      %1083 = vst [vmem:[%s175 + $0xc0] sm:$0xff] %v1019
      %1084 = vst [vmem:[%s175 + $0xc8] sm:$0xff] %v1020
      %1085 = vst [vmem:[%s175 + $0xd0] sm:$0xff] %v1021
      %1086 = vst [vmem:[%s175 + $0xd8] sm:$0xff] %v1022
      %1087 = vst [vmem:[%s175 + $0xe0] sm:$0xff] %v1023
      %1088 = vst [vmem:[%s175 + $0xe8] sm:$0xff] %v1024
      %1089 = vst [vmem:[%s175 + $0xf0] sm:$0xff] %v1025
      %1090 = vst [vmem:[%s175 + $0xf8] sm:$0xff] %v1026
      %1091 = vst [vmem:[%s175 + $0x100] sm:$0xff] %v1027
      %1092 = vst [vmem:[%s175 + $0x108] sm:$0xff] %v1028
      %1093 = vst [vmem:[%s175 + $0x110] sm:$0xff] %v1029
      %1094 = vst [vmem:[%s175 + $0x118] sm:$0xff] %v1030
      %1095 = vst [vmem:[%s175 + $0x120] sm:$0xff] %v1031
      %1096 = vst [vmem:[%s175 + $0x128] sm:$0xff] %v1032
      %1097 = vst [vmem:[%s175 + $0x130] sm:$0xff] %v1033
      %1098 = vst [vmem:[%s175 + $0x138] sm:$0xff] %v1034
      %1099 = vst [vmem:[%s175 + $0x140] sm:$0xff] %v1035
      %1100 = vst [vmem:[%s175 + $0x148] sm:$0xff] %v1036
      %1101 = vst [vmem:[%s175 + $0x150] sm:$0xff] %v1037
      %1102 = vst [vmem:[%s175 + $0x158] sm:$0xff] %v1038
      %1103 = vst [vmem:[%s175 + $0x160] sm:$0xff] %v1039
      %1104 = vst [vmem:[%s175 + $0x168] sm:$0xff] %v1040
      %1105 = vst [vmem:[%s175 + $0x170] sm:$0xff] %v1041
      %1106 = vst [vmem:[%s175 + $0x178] sm:$0xff] %v1042
      %1107 = vst [vmem:[%s175 + $0x180] sm:$0xff] %v1043
      %1108 = vst [vmem:[%s175 + $0x188] sm:$0xff] %v1044
      %1109 = vst [vmem:[%s175 + $0x190] sm:$0xff] %v1045
      %1110 = vst [vmem:[%s175 + $0x198] sm:$0xff] %v1046
      %1111 = vst [vmem:[%s175 + $0x1a0] sm:$0xff] %v1047
      %1112 = vst [vmem:[%s175 + $0x1a8] sm:$0xff] %v1048
      %1113 = vst [vmem:[%s175 + $0x1b0] sm:$0xff] %v1049
      %1114 = vst [vmem:[%s175 + $0x1b8] sm:$0xff] %v1050
      %1115 = vst [vmem:[%s175 + $0x1c0] sm:$0xff] %v1051
      %1116 = vst [vmem:[%s175 + $0x1c8] sm:$0xff] %v1052
      %1117 = vst [vmem:[%s175 + $0x1d0] sm:$0xff] %v1053
      %1118 = vst [vmem:[%s175 + $0x1d8] sm:$0xff] %v1054
      %1119 = vst [vmem:[%s175 + $0x1e0] sm:$0xff] %v1055
      %1120 = vst [vmem:[%s175 + $0x1e8] sm:$0xff] %v1056
      %1121 = vst [vmem:[%s175 + $0x1f0] sm:$0xff] %v1057
      %1122 = vst [vmem:[%s175 + $0x1f8] sm:$0xff] %v1058
      %s1123 = smul.u32 64, %s14
      %p1124 = scmp.lt.s32.totalorder %s1123, 255
      %s1125 = scalar_select %p1124, %s1123, 255
      %s1126 = smul.addr %s1125, 8
      %s1127 = scalar_lea.vmem %s3, %s1126
      // Predicated region
      $region33: #{_lambda_.17} parent=31 // pred_check
        %p1128 = pneg %p100
      $region34: #{_lambda_.17} parent=31 // pred_check_branch
        %1130 = sbr.rel (%p1128) target = $region36
      $region35: #{_lambda_.17} parent=31 // pred_region
        %s1131 = smul.u32 64, %s14
      $region36: #{_lambda_.17} parent=31 // pred_fallthru
        _
    $region32: #{_lambda_.17} parent=5 // pred_fallthru
      _
    %p1132 = scmp.le.s32.totalorder 2, %s9
    // Predicated region
    $region37: #{_lambda_.17} parent=5 // pred_check
      %p1133 = pneg %p1132
    $region38: #{_lambda_.17} parent=5 // pred_check_branch
      %1135 = sbr.rel (%p1133) target = $region40
    $region39: #{_lambda_.17} parent=5 // pred_region
      %s1136 = ssub.s32 %s9, 2
      // Predicated region
      $region41: #{_lambda_.17} parent=39 // pred_check
        %p1137 = pneg %p106
      $region42: #{_lambda_.17} parent=39 // pred_check_branch
        %1139 = sbr.rel (%p1137) target = $region44
      $region43: #{_lambda_.17} parent=39 // pred_region
        %s1140 = smul.u32 64, %s15
        %p1141 = scmp.lt.s32.totalorder %s1140, 255
        %s1142 = scalar_select %p1141, %s1140, 255
        %s1143 = smul.addr %s1142, 8
        %s1144 = scalar_lea.vmem %s3, %s1143
      $region44: #{_lambda_.17} parent=39 // pred_fallthru
        _
    $region40: #{_lambda_.17} parent=5 // pred_fallthru
      _
  $region6: #{_lambda_.17} parent=0 // loop_footer
    %s13 = sadd.s32 1, %s9
  $region7: #{_lambda_.17} parent=0 // loop_footer_branch
    %8 = sbr.rel target = $region3
  $region8: #{_lambda_.17} parent=0 // loop_exit
    _

</llo_original>
